<compile_context>
chip_gen: v5e
topology: v5e:2x2
jax: 0.10.0
libtpu: 0.0.40
codegen_flags: <defaults>
</compile_context>

<pallas_src>
import functools

import jax
import jax.numpy as jnp
import numpy as np
from jax import lax
from jax.experimental import pallas as pl
from jax.experimental.pallas import tpu as pltpu

_KSIZE = 5
_BN_EPS = 1e-5
_CPAD = 128            # padded channel width (lane-dense everywhere)


def _round_up(x, m):
    return (x + m - 1) // m * m


def _imgs_per_step(n):
    """Images per grid step: amortize per-step overhead, but keep >=2 grid
    steps whenever N >= 2 so both v7x TensorCores stay busy."""
    if n <= 1:
        return max(n, 1)
    for imgs in (8, 4, 2, 1):
        if n % imgs == 0 and n // imgs >= 2:
            return imgs
    return 1


# ----------------------------------------------------------------------------
# One-time parameter prepacking (out of the hot path)
# ----------------------------------------------------------------------------
def prepack_params(params, cin_pads=(3, _CPAD), cout_pad=_CPAD):
    """Fold conv bias + eval-mode BN into an im2col-ready (K_pad, 128) bf16
    weight matrix per block (+ f32 bias row).

    Block 1: K = 5*5*3 = 75 zero-padded to 128, cout padded 32 -> 128.
    Block 2: cin zero-padded per tap to 128 (matches block-1's padded output),
             so K = 25*128 = 3200; cout padded 48 -> 128 for lane-dense stores.
    Tap ordering is (kh, kw, c) to match the patch builders."""
    packed = []
    for (w, b, gamma, beta, mean, var), cin_pad in zip(params, cin_pads):
        cout, cin, kh, kw = w.shape
        s = gamma / jnp.sqrt(var + _BN_EPS)                      # (cout,)
        bias = (b - mean) * s + beta                             # (cout,)
        w_hwio = jnp.transpose(w, (2, 3, 1, 0)) * s              # (kh,kw,cin,cout), BN scale folded
        w_hwio = jnp.pad(w_hwio, ((0, 0), (0, 0),
                                  (0, cin_pad - cin), (0, cout_pad - cout)))
        k = kh * kw * cin_pad
        k_pad = _round_up(k, 128)
        wf = w_hwio.reshape(k, cout_pad)
        wf = jnp.pad(wf, ((0, k_pad - k), (0, 0)))
        bias = jnp.pad(bias, (0, cout_pad - cout))
        packed.append((wf.astype(jnp.bfloat16),
                       bias.reshape(1, cout_pad).astype(jnp.float32)))
    return tuple(packed)


# ----------------------------------------------------------------------------
# Wrapper-side conv1 patch builder (XLA, not in the kernel hot path)
# ----------------------------------------------------------------------------
def _build_conv1_patches(x_nhwc, k_pad):
    """(N,H,W,C) bf16 -> (N, 4*Hp*Wp, k_pad) bf16 patch matrix.

    Rows are ordered phase-major (dh, dw, hp, wp) so the 2x2/2 max-pool inside
    the kernel is a max of four contiguous row-blocks (zero relayout)."""
    N, H, W, C = x_nhwc.shape
    Ho, Wo = H - _KSIZE + 1, W - _KSIZE + 1
    Hp, Wp = Ho // 2, Wo // 2
    pieces = [x_nhwc[:, kh:kh + Ho, kw:kw + Wo, :]
              for kh in range(_KSIZE) for kw in range(_KSIZE)]
    p = jnp.concatenate(pieces, axis=-1)                         # (N,Ho,Wo,75)
    k = _KSIZE * _KSIZE * C
    p = jnp.pad(p, ((0, 0), (0, 0), (0, 0), (0, k_pad - k)))     # (N,Ho,Wo,k_pad)
    # (n, h=2hp+dh, w=2wp+dw, k) -> (n, dh, dw, hp, wp, k)
    p = p.reshape(N, Hp, 2, Wp, 2, k_pad).transpose(0, 2, 4, 1, 3, 5)
    return p.reshape(N, 4 * Hp * Wp, k_pad)                      # (N, 784, 128)


# ----------------------------------------------------------------------------
# Forward wrapper + fused kernel
# ----------------------------------------------------------------------------
@functools.partial(jax.jit, static_argnames=("out_channels",))
def net_forward(x_nchw, packed, out_channels=48):
    """Full Net.forward. Input NCHW f32, output NCHW f32 (like PyTorch)."""
    (w1, b1), (w2, b2) = packed
    N, Cin, H, W = x_nchw.shape
    Ho1, Wo1 = H - _KSIZE + 1, W - _KSIZE + 1          # 28, 28
    Hp1, Wp1 = Ho1 // 2, Wo1 // 2                      # 14, 14
    Ho2, Wo2 = Hp1 - _KSIZE + 1, Wp1 - _KSIZE + 1      # 10, 10
    Hp2, Wp2 = Ho2 // 2, Wo2 // 2                      # 5, 5
    k1_pad = w1.shape[0]                               # 128
    cpad = w1.shape[1]                                 # 128
    m1 = 4 * Hp1 * Wp1                                 # 784
    m2 = Ho2 * Wo2                                     # 100

    # Early bf16 cast halves the input DMA + all patch bytes (MXU eats bf16).
    x = jnp.transpose(x_nchw, (0, 2, 3, 1)).astype(jnp.bfloat16)     # NHWC
    patches = _build_conv1_patches(x, k1_pad)                        # (N, m1, 128) bf16

    imgs = _imgs_per_step(N)
    grid = (N // imgs,)

    def kernel(p_ref, w1_ref, b1_ref, w2_ref, b2_ref, o_ref):
        # ---- Block 1: conv1 as one MXU matmul on the prepacked patch LHS ----
        lhs1 = p_ref[...].reshape(imgs * m1, k1_pad)                  # bf16
        acc1 = jnp.dot(lhs1, w1_ref[...], preferred_element_type=jnp.float32)
        y1 = jnp.maximum(acc1 + b1_ref[...], 0.0).astype(jnp.bfloat16)
        # 2x2/2 max-pool: pool phases are contiguous row-blocks (wrapper
        # reorder), so this is a pure VPU max over the leading phase axis.
        y1 = y1.reshape(imgs, 4, Hp1 * Wp1, cpad).max(axis=1)         # (imgs,196,128)
        y1 = y1.reshape(imgs, Hp1, Wp1, cpad)                         # (imgs,14,14,128)

        # ---- Block 2: lane-aligned im2col (every tap = full 128-lane slab) ----
        pieces = [y1[:, kh:kh + Ho2, kw:kw + Wo2, :]
                  for kh in range(_KSIZE) for kw in range(_KSIZE)]
        lhs2 = jnp.concatenate(pieces, axis=-1)                       # (imgs,10,10,3200)
        lhs2 = lhs2.reshape(imgs * m2, _KSIZE * _KSIZE * cpad)        # (imgs*100,3200)
        acc2 = jnp.dot(lhs2, w2_ref[...], preferred_element_type=jnp.float32)
        y2 = jnp.maximum(acc2 + b2_ref[...], 0.0)                     # f32

        # 2x2/2 max-pool on the small conv2 output:
        #   H-pool via a free leading-dim split, W-pool via a tiny sublane-pair
        #   reduce (25 KiB/img -> negligible).
        y2 = y2.reshape(imgs * Hp2, 2, Wo2, cpad).max(axis=1)         # (imgs*5,10,128)
        y2 = y2.reshape(imgs * Hp2, Wp2, 2, cpad).max(axis=2)         # (imgs*5,5,128)
        # Lane-dense (25,128) store slab per image.
        o_ref[...] = y2.reshape(imgs, Hp2 * Wp2, cpad)

    out = pl.pallas_call(
        kernel,
        out_shape=jax.ShapeDtypeStruct((N, Hp2 * Wp2, cpad), jnp.float32),
        grid=grid,
        in_specs=[
            pl.BlockSpec((imgs, m1, k1_pad), lambda b: (b, 0, 0)),
            pl.BlockSpec(w1.shape, lambda b: (0, 0)),
            pl.BlockSpec(b1.shape, lambda b: (0, 0)),
            pl.BlockSpec(w2.shape, lambda b: (0, 0)),
            pl.BlockSpec(b2.shape, lambda b: (0, 0)),
        ],
        out_specs=pl.BlockSpec((imgs, Hp2 * Wp2, cpad), lambda b: (b, 0, 0)),
        compiler_params=pltpu.CompilerParams(
            dimension_semantics=("parallel",)),     # >=2 steps -> both v7x TCs busy
    )(patches, w1, b1, w2, b2)

    out = out.reshape(N, Hp2, Wp2, cpad)[..., :out_channels]   # drop 128->48 lane pad
    return jnp.transpose(out, (0, 3, 1, 2))                    # NHWC -> NCHW


# ----------------------------------------------------------------------------
# Pure-JAX (XLA, f32) reference for correctness checking
# ----------------------------------------------------------------------------
def _reference_forward(x_nchw, params):
    x = x_nchw
    for (w, b, g, be, m, v) in params:
        y = lax.conv_general_dilated(
            x, w, window_strides=(1, 1), padding="VALID",
            dimension_numbers=("NCHW", "OIHW", "NCHW"),
            precision=lax.Precision.HIGHEST)
        y = y + b[None, :, None, None]
        y = (y - m[None, :, None, None]) / jnp.sqrt(v[None, :, None, None] + _BN_EPS)
        y = y * g[None, :, None, None] + be[None, :, None, None]
        y = jnp.maximum(y, 0.0)
        y = lax.reduce_window(y, -jnp.inf, lax.max,
                              window_dimensions=(1, 1, 2, 2),
                              window_strides=(1, 1, 2, 2), padding="VALID")
        x = y
    return x


def _make_block_params(key, cin, cout, ksize=_KSIZE):
    ks = jax.random.split(key, 6)
    w = 0.1 * jax.random.normal(ks[0], (cout, cin, ksize, ksize), jnp.float32)
    b = 0.1 * jax.random.normal(ks[1], (cout,), jnp.float32)
    gamma = 1.0 + 0.1 * jax.random.normal(ks[2], (cout,), jnp.float32)
    beta = 0.1 * jax.random.normal(ks[3], (cout,), jnp.float32)
    mean = 0.1 * jax.random.normal(ks[4], (cout,), jnp.float32)
    var = 0.5 + jnp.abs(jax.random.normal(ks[5], (cout,), jnp.float32))
    return (w, b, gamma, beta, mean, var)


if __name__ == "__main__":
    key = jax.random.PRNGKey(0)
    kx, k1, k2 = jax.random.split(key, 3)

    # Shapes implied by the module: 32x32 -> 28 -> 14 -> 10 -> 5.
    N, Cin, H, W = 2, 3, 32, 32
    x = jax.random.normal(kx, (N, Cin, H, W), jnp.float32)

    params = (
        _make_block_params(k1, 3, 32),
        _make_block_params(k2, 32, 48),
    )
    packed = prepack_params(params)     # one-time prepack (not in hot path)

    out = jax.block_until_ready(net_forward(x, packed))
    assert out.shape == (N, 48, 5, 5), out.shape

    ref = jax.block_until_ready(_reference_forward(x, params))
    # bf16 activations/weights through two conv layers (f32 accumulation) ->
    # tolerance sized for bf16 rounding; elementwise math is exact f32.
    np.testing.assert_allclose(np.asarray(out), np.asarray(ref),
                               rtol=5e-2, atol=5e-2)

    print("KERNEL_OK")
</pallas_src>

<mosaic_0001>
module attributes {stable_mosaic.version = 11 : i64} {
  func.func @kernel(%arg0: i32, %arg1: memref<1x784x128xbf16, #tpu.memory_space<vmem>>, %arg2: memref<128x128xbf16, #tpu.memory_space<vmem>>, %arg3: memref<1x128xf32, #tpu.memory_space<vmem>>, %arg4: memref<3200x128xbf16, #tpu.memory_space<vmem>>, %arg5: memref<1x128xf32, #tpu.memory_space<vmem>>, %arg6: memref<1x25x128xf32, #tpu.memory_space<vmem>>) attributes {dimension_semantics = [#tpu.dimension_semantics<parallel>], iteration_bounds = array<i64: 2>, scalar_prefetch = 0 : i64, scratch_operands = 0 : i64, tpu.core_type = #tpu.core_type<tc>, window_params = [{transform_indices = @transform_0, window_bounds = array<i64: 1, 784, 128>}, {pipeline_mode = #tpu.pipeline_mode<synchronous>, transform_indices = @transform_1, window_bounds = array<i64: 128, 128>}, {pipeline_mode = #tpu.pipeline_mode<synchronous>, transform_indices = @transform_2, window_bounds = array<i64: 1, 128>}, {pipeline_mode = #tpu.pipeline_mode<synchronous>, transform_indices = @transform_3, window_bounds = array<i64: 3200, 128>}, {pipeline_mode = #tpu.pipeline_mode<synchronous>, transform_indices = @transform_4, window_bounds = array<i64: 1, 128>}, {transform_indices = @transform_5, window_bounds = array<i64: 1, 25, 128>}]} {
    %c0 = arith.constant 0 : index
    %c0_0 = arith.constant 0 : index
    %c0_1 = arith.constant 0 : index
    %0 = vector.load %arg1[%c0, %c0_0, %c0_1] : memref<1x784x128xbf16, #tpu.memory_space<vmem>>, vector<1x784x128xbf16>
    %1 = vector.shape_cast %0 : vector<1x784x128xbf16> to vector<784x128xbf16>
    %c0_2 = arith.constant 0 : index
    %c0_3 = arith.constant 0 : index
    %2 = vector.load %arg2[%c0_2, %c0_3] : memref<128x128xbf16, #tpu.memory_space<vmem>>, vector<128x128xbf16>
    %cst = arith.constant dense<0.000000e+00> : vector<784x128xf32>
    %3 = tpu.matmul %1, %2, %cst {dimension_numbers = #tpu.dot_dimension_numbers<[1], [0], [0], [1], [0, 0, 1, 1], [], []>} : vector<784x128xbf16>, vector<128x128xbf16>, vector<784x128xf32> -> vector<784x128xf32>
    %c0_4 = arith.constant 0 : index
    %c0_5 = arith.constant 0 : index
    %4 = vector.load %arg3[%c0_4, %c0_5] : memref<1x128xf32, #tpu.memory_space<vmem>>, vector<1x128xf32>
    %5 = vector.broadcast %4 : vector<1x128xf32> to vector<784x128xf32>
    %6 = arith.addf %3, %5 : vector<784x128xf32>
    %cst_6 = arith.constant 0.000000e+00 : f32
    %7 = vector.broadcast %cst_6 : f32 to vector<784x128xf32>
    %8 = arith.maximumf %6, %7 : vector<784x128xf32>
    %9 = arith.truncf %8 : vector<784x128xf32> to vector<784x128xbf16>
    %10 = vector.shape_cast %9 : vector<784x128xbf16> to vector<1x4x196x128xbf16>
    %cst_7 = arith.constant dense<0xFF80> : vector<1x196x128xbf16>
    %11 = vector.multi_reduction <maximumf>, %10, %cst_7 [1] : vector<1x4x196x128xbf16> to vector<1x196x128xbf16>
    %12 = vector.shape_cast %11 : vector<1x196x128xbf16> to vector<1x14x14x128xbf16>
    %13 = vector.extract_strided_slice %12 {offsets = [0, 0, 0, 0], sizes = [1, 10, 10, 128], strides = [1, 1, 1, 1]} : vector<1x14x14x128xbf16> to vector<1x10x10x128xbf16>
    %14 = vector.extract_strided_slice %12 {offsets = [0, 0, 1, 0], sizes = [1, 10, 10, 128], strides = [1, 1, 1, 1]} : vector<1x14x14x128xbf16> to vector<1x10x10x128xbf16>
    %15 = vector.extract_strided_slice %12 {offsets = [0, 0, 2, 0], sizes = [1, 10, 10, 128], strides = [1, 1, 1, 1]} : vector<1x14x14x128xbf16> to vector<1x10x10x128xbf16>
    %16 = vector.extract_strided_slice %12 {offsets = [0, 0, 3, 0], sizes = [1, 10, 10, 128], strides = [1, 1, 1, 1]} : vector<1x14x14x128xbf16> to vector<1x10x10x128xbf16>
    %17 = vector.extract_strided_slice %12 {offsets = [0, 0, 4, 0], sizes = [1, 10, 10, 128], strides = [1, 1, 1, 1]} : vector<1x14x14x128xbf16> to vector<1x10x10x128xbf16>
    %18 = vector.extract_strided_slice %12 {offsets = [0, 1, 0, 0], sizes = [1, 10, 10, 128], strides = [1, 1, 1, 1]} : vector<1x14x14x128xbf16> to vector<1x10x10x128xbf16>
    %19 = vector.extract_strided_slice %12 {offsets = [0, 1, 1, 0], sizes = [1, 10, 10, 128], strides = [1, 1, 1, 1]} : vector<1x14x14x128xbf16> to vector<1x10x10x128xbf16>
    %20 = vector.extract_strided_slice %12 {offsets = [0, 1, 2, 0], sizes = [1, 10, 10, 128], strides = [1, 1, 1, 1]} : vector<1x14x14x128xbf16> to vector<1x10x10x128xbf16>
    %21 = vector.extract_strided_slice %12 {offsets = [0, 1, 3, 0], sizes = [1, 10, 10, 128], strides = [1, 1, 1, 1]} : vector<1x14x14x128xbf16> to vector<1x10x10x128xbf16>
    %22 = vector.extract_strided_slice %12 {offsets = [0, 1, 4, 0], sizes = [1, 10, 10, 128], strides = [1, 1, 1, 1]} : vector<1x14x14x128xbf16> to vector<1x10x10x128xbf16>
    %23 = vector.extract_strided_slice %12 {offsets = [0, 2, 0, 0], sizes = [1, 10, 10, 128], strides = [1, 1, 1, 1]} : vector<1x14x14x128xbf16> to vector<1x10x10x128xbf16>
    %24 = vector.extract_strided_slice %12 {offsets = [0, 2, 1, 0], sizes = [1, 10, 10, 128], strides = [1, 1, 1, 1]} : vector<1x14x14x128xbf16> to vector<1x10x10x128xbf16>
    %25 = vector.extract_strided_slice %12 {offsets = [0, 2, 2, 0], sizes = [1, 10, 10, 128], strides = [1, 1, 1, 1]} : vector<1x14x14x128xbf16> to vector<1x10x10x128xbf16>
    %26 = vector.extract_strided_slice %12 {offsets = [0, 2, 3, 0], sizes = [1, 10, 10, 128], strides = [1, 1, 1, 1]} : vector<1x14x14x128xbf16> to vector<1x10x10x128xbf16>
    %27 = vector.extract_strided_slice %12 {offsets = [0, 2, 4, 0], sizes = [1, 10, 10, 128], strides = [1, 1, 1, 1]} : vector<1x14x14x128xbf16> to vector<1x10x10x128xbf16>
    %28 = vector.extract_strided_slice %12 {offsets = [0, 3, 0, 0], sizes = [1, 10, 10, 128], strides = [1, 1, 1, 1]} : vector<1x14x14x128xbf16> to vector<1x10x10x128xbf16>
    %29 = vector.extract_strided_slice %12 {offsets = [0, 3, 1, 0], sizes = [1, 10, 10, 128], strides = [1, 1, 1, 1]} : vector<1x14x14x128xbf16> to vector<1x10x10x128xbf16>
    %30 = vector.extract_strided_slice %12 {offsets = [0, 3, 2, 0], sizes = [1, 10, 10, 128], strides = [1, 1, 1, 1]} : vector<1x14x14x128xbf16> to vector<1x10x10x128xbf16>
    %31 = vector.extract_strided_slice %12 {offsets = [0, 3, 3, 0], sizes = [1, 10, 10, 128], strides = [1, 1, 1, 1]} : vector<1x14x14x128xbf16> to vector<1x10x10x128xbf16>
    %32 = vector.extract_strided_slice %12 {offsets = [0, 3, 4, 0], sizes = [1, 10, 10, 128], strides = [1, 1, 1, 1]} : vector<1x14x14x128xbf16> to vector<1x10x10x128xbf16>
    %33 = vector.extract_strided_slice %12 {offsets = [0, 4, 0, 0], sizes = [1, 10, 10, 128], strides = [1, 1, 1, 1]} : vector<1x14x14x128xbf16> to vector<1x10x10x128xbf16>
    %34 = vector.extract_strided_slice %12 {offsets = [0, 4, 1, 0], sizes = [1, 10, 10, 128], strides = [1, 1, 1, 1]} : vector<1x14x14x128xbf16> to vector<1x10x10x128xbf16>
    %35 = vector.extract_strided_slice %12 {offsets = [0, 4, 2, 0], sizes = [1, 10, 10, 128], strides = [1, 1, 1, 1]} : vector<1x14x14x128xbf16> to vector<1x10x10x128xbf16>
    %36 = vector.extract_strided_slice %12 {offsets = [0, 4, 3, 0], sizes = [1, 10, 10, 128], strides = [1, 1, 1, 1]} : vector<1x14x14x128xbf16> to vector<1x10x10x128xbf16>
    %37 = vector.extract_strided_slice %12 {offsets = [0, 4, 4, 0], sizes = [1, 10, 10, 128], strides = [1, 1, 1, 1]} : vector<1x14x14x128xbf16> to vector<1x10x10x128xbf16>
    %38 = tpu.concatenate %13, %14, %15, %16, %17, %18, %19, %20, %21, %22, %23, %24, %25, %26, %27, %28 in 3 : vector<1x10x10x128xbf16>, vector<1x10x10x128xbf16>, vector<1x10x10x128xbf16>, vector<1x10x10x128xbf16>, vector<1x10x10x128xbf16>, vector<1x10x10x128xbf16>, vector<1x10x10x128xbf16>, vector<1x10x10x128xbf16>, vector<1x10x10x128xbf16>, vector<1x10x10x128xbf16>, vector<1x10x10x128xbf16>, vector<1x10x10x128xbf16>, vector<1x10x10x128xbf16>, vector<1x10x10x128xbf16>, vector<1x10x10x128xbf16>, vector<1x10x10x128xbf16> -> vector<1x10x10x2048xbf16>
    %39 = tpu.concatenate %29, %30, %31, %32, %33, %34, %35, %36, %37 in 3 : vector<1x10x10x128xbf16>, vector<1x10x10x128xbf16>, vector<1x10x10x128xbf16>, vector<1x10x10x128xbf16>, vector<1x10x10x128xbf16>, vector<1x10x10x128xbf16>, vector<1x10x10x128xbf16>, vector<1x10x10x128xbf16>, vector<1x10x10x128xbf16> -> vector<1x10x10x1152xbf16>
    %40 = tpu.concatenate %38, %39 in 3 : vector<1x10x10x2048xbf16>, vector<1x10x10x1152xbf16> -> vector<1x10x10x3200xbf16>
    %41 = vector.shape_cast %40 : vector<1x10x10x3200xbf16> to vector<100x3200xbf16>
    %c0_8 = arith.constant 0 : index
    %c0_9 = arith.constant 0 : index
    %42 = vector.load %arg4[%c0_8, %c0_9] : memref<3200x128xbf16, #tpu.memory_space<vmem>>, vector<3200x128xbf16>
    %cst_10 = arith.constant dense<0.000000e+00> : vector<100x128xf32>
    %43 = tpu.matmul %41, %42, %cst_10 {dimension_numbers = #tpu.dot_dimension_numbers<[1], [0], [0], [1], [0, 0, 1, 1], [], []>} : vector<100x3200xbf16>, vector<3200x128xbf16>, vector<100x128xf32> -> vector<100x128xf32>
    %c0_11 = arith.constant 0 : index
    %c0_12 = arith.constant 0 : index
    %44 = vector.load %arg5[%c0_11, %c0_12] : memref<1x128xf32, #tpu.memory_space<vmem>>, vector<1x128xf32>
    %45 = vector.broadcast %44 : vector<1x128xf32> to vector<100x128xf32>
    %46 = arith.addf %43, %45 : vector<100x128xf32>
    %cst_13 = arith.constant 0.000000e+00 : f32
    %47 = vector.broadcast %cst_13 : f32 to vector<100x128xf32>
    %48 = arith.maximumf %46, %47 : vector<100x128xf32>
    %49 = vector.shape_cast %48 : vector<100x128xf32> to vector<5x2x10x128xf32>
    %cst_14 = arith.constant dense<0xFF800000> : vector<5x10x128xf32>
    %50 = vector.multi_reduction <maximumf>, %49, %cst_14 [1] : vector<5x2x10x128xf32> to vector<5x10x128xf32>
    %51 = vector.shape_cast %50 : vector<5x10x128xf32> to vector<5x5x2x128xf32>
    %cst_15 = arith.constant dense<0xFF800000> : vector<5x5x128xf32>
    %52 = vector.multi_reduction <maximumf>, %51, %cst_15 [2] : vector<5x5x2x128xf32> to vector<5x5x128xf32>
    %53 = vector.shape_cast %52 : vector<5x5x128xf32> to vector<1x25x128xf32>
    %c0_16 = arith.constant 0 : index
    %c0_17 = arith.constant 0 : index
    %c0_18 = arith.constant 0 : index
    %54 = vector.load %arg6[%c0_16, %c0_17, %c0_18] : memref<1x25x128xf32, #tpu.memory_space<vmem>>, vector<1x25x128xf32>
    tpu.vector_store %arg6[%c0_16, %c0_17, %c0_18], %53 {strides = array<i32>} : memref<1x25x128xf32, #tpu.memory_space<vmem>>, vector<1x25x128xf32>,
    return
  }
  func.func @transform_0(%arg0: i32) -> (i32, i32, i32) {
    %c0_i32 = arith.constant 0 : i32
    %c0_i32_0 = arith.constant 0 : i32
    %c0_i32_1 = arith.constant 0 : i32
    return %arg0, %c0_i32, %c0_i32_0 : i32, i32, i32
  }
  func.func @transform_1(%arg0: i32) -> (i32, i32) {
    %c0_i32 = arith.constant 0 : i32
    %c0_i32_0 = arith.constant 0 : i32
    %c0_i32_1 = arith.constant 0 : i32
    return %c0_i32, %c0_i32_0 : i32, i32
  }
  func.func @transform_2(%arg0: i32) -> (i32, i32) {
    %c0_i32 = arith.constant 0 : i32
    %c0_i32_0 = arith.constant 0 : i32
    %c0_i32_1 = arith.constant 0 : i32
    return %c0_i32, %c0_i32_0 : i32, i32
  }
  func.func @transform_3(%arg0: i32) -> (i32, i32) {
    %c0_i32 = arith.constant 0 : i32
    %c0_i32_0 = arith.constant 0 : i32
    %c0_i32_1 = arith.constant 0 : i32
    return %c0_i32, %c0_i32_0 : i32, i32
  }
  func.func @transform_4(%arg0: i32) -> (i32, i32) {
    %c0_i32 = arith.constant 0 : i32
    %c0_i32_0 = arith.constant 0 : i32
    %c0_i32_1 = arith.constant 0 : i32
    return %c0_i32, %c0_i32_0 : i32, i32
  }
  func.func @transform_5(%arg0: i32) -> (i32, i32, i32) {
    %c0_i32 = arith.constant 0 : i32
    %c0_i32_0 = arith.constant 0 : i32
    %c0_i32_1 = arith.constant 0 : i32
    return %arg0, %c0_i32, %c0_i32_0 : i32, i32, i32
  }
}

</mosaic_0001>

<llo_original>
// kernel: net_forward.1
$region0: #{net_forward.1}
  #allocation0 [shape = 'u32[]', space=smem, size = 0x4, offset = 0x4, fixed_abs, tag = 'smem constant byte address 0x4 - core index']
  #allocation1 [shape = 'u32[72,128]{1,0:T(1,128)}', space=vmem, size = 0x9000, scoped, tag = 'internal scratch']
  %s0 = inlined_call_operand.vmem [shape: bf16[2,784,128], index: 0, kind: input, shape index: {}]
  %s1 = inlined_call_operand.vmem [shape: bf16[128,128], index: 1, kind: input, shape index: {}]
  %s2 = inlined_call_operand.vmem [shape: f32[1,128], index: 2, kind: input, shape index: {}]
  %s3 = inlined_call_operand.vmem [shape: bf16[3200,128], index: 3, kind: input, shape index: {}]
  %s4 = inlined_call_operand.vmem [shape: f32[1,128], index: 4, kind: input, shape index: {}]
  %s5 = inlined_call_operand.vmem [shape: f32[2,25,128], index: 5, kind: output, shape index: {}]
  %s6 = sld [smem:[#allocation0]]
  $region53: #{net_forward.1} parent=0
    _
  %s8 = ssub.s32 1, %s6
  %s9 = scalar_select 0, %s8, %s6
  loop: start=0, step=1, limit=4
  $region2: #{net_forward.1} parent=0 // loop_pre_header
    _
  $region3: #{net_forward.1} parent=0 // loop_header
    %s11 = sphi 0, %s15
    %p12 = scmp.ge.s32.totalorder %s11, 4
    %s21 = sphi 0, %s23
    %s24 = sphi 0, %s21
    %s25 = sphi 0, %s24
    %s41 = sphi 0, %s25
    %s45 = sphi 0, %s45
    %s47 = sphi 0, %s45
    %s48 = sphi 0, %s47
    %s62 = sphi 0, %s48
    %s66 = sphi 0, %s66
    %s68 = sphi 0, %s66
    %s69 = sphi 0, %s68
    %s83 = sphi 0, %s69
    %s87 = sphi 0, %s87
    %s89 = sphi 0, %s87
    %s90 = sphi 0, %s89
    %s104 = sphi 0, %s90
    %s108 = sphi 0, %s108
    %s110 = sphi 0, %s108
    %s111 = sphi 0, %s110
    %s125 = sphi 0, %s111
    %s131 = sphi 0, %s133
    %s134 = sphi 0, %s131
    %s135 = sphi 0, %s134
    %s151 = sphi 0, %s135
  $region4: #{net_forward.1} parent=0 // loop_header_branch
    %14 = sbr.rel (%p12) target = $region8
  $region5: #{net_forward.1} parent=0 // loop_body
    %s16 = ssub.s32 %s11, 1
    %s17 = ssub.s32 %s11, 2
    %s18 = sadd.s32 %s11, 1
    %s19 = ssub.s32 %s11, %s18
    %p20 = scmp.eq.s32.totalorder %s19, 0
    %s22 = sadd.s32 %s21, 1
    %s23 = scalar_select %p20, %s21, %s22
    %p26 = pneg %p20
    %p27 = scmp.eq.s32.totalorder %s11, 1
    %p28 = por %p26, %p27
    %p29 = scmp.ne.s32.totalorder %s21, %s24
    %p30 = scmp.eq.s32.totalorder %s11, 0
    %p31 = por %p29, %p30
    %p32 = scmp.ne.s32.totalorder %s21, %s24
    %p33 = scmp.eq.s32.totalorder %s16, 1
    %p34 = por %p32, %p33
    %p35 = scmp.ne.s32.totalorder %s24, %s25
    %p36 = scmp.eq.s32.totalorder %s16, 0
    %p37 = por %p35, %p36
    %p38 = scmp.ne.s32.totalorder %s24, %s25
    %p39 = scmp.eq.s32.totalorder %s17, 1
    %p40 = por %p38, %p39
    %p42 = scmp.ne.s32.totalorder %s25, %s41
    %p43 = scmp.eq.s32.totalorder %s17, 0
    %p44 = por %p42, %p43
    %s46 = sadd.s32 %s45, 1
    %p49 = scmp.eq.s32.totalorder %s11, 1
    %p50 = scmp.ne.s32.totalorder %s45, %s47
    %p51 = scmp.eq.s32.totalorder %s11, 0
    %p52 = por %p50, %p51
    %p53 = scmp.ne.s32.totalorder %s45, %s47
    %p54 = scmp.eq.s32.totalorder %s16, 1
    %p55 = por %p53, %p54
    %p56 = scmp.ne.s32.totalorder %s47, %s48
    %p57 = scmp.eq.s32.totalorder %s16, 0
    %p58 = por %p56, %p57
    %p59 = scmp.ne.s32.totalorder %s47, %s48
    %p60 = scmp.eq.s32.totalorder %s17, 1
    %p61 = por %p59, %p60
    %p63 = scmp.ne.s32.totalorder %s48, %s62
    %p64 = scmp.eq.s32.totalorder %s17, 0
    %p65 = por %p63, %p64
    %s67 = sadd.s32 %s66, 1
    %p70 = scmp.eq.s32.totalorder %s11, 1
    %p71 = scmp.ne.s32.totalorder %s66, %s68
    %p72 = scmp.eq.s32.totalorder %s11, 0
    %p73 = por %p71, %p72
    %p74 = scmp.ne.s32.totalorder %s66, %s68
    %p75 = scmp.eq.s32.totalorder %s16, 1
    %p76 = por %p74, %p75
    %p77 = scmp.ne.s32.totalorder %s68, %s69
    %p78 = scmp.eq.s32.totalorder %s16, 0
    %p79 = por %p77, %p78
    %p80 = scmp.ne.s32.totalorder %s68, %s69
    %p81 = scmp.eq.s32.totalorder %s17, 1
    %p82 = por %p80, %p81
    %p84 = scmp.ne.s32.totalorder %s69, %s83
    %p85 = scmp.eq.s32.totalorder %s17, 0
    %p86 = por %p84, %p85
    %s88 = sadd.s32 %s87, 1
    %p91 = scmp.eq.s32.totalorder %s11, 1
    %p92 = scmp.ne.s32.totalorder %s87, %s89
    %p93 = scmp.eq.s32.totalorder %s11, 0
    %p94 = por %p92, %p93
    %p95 = scmp.ne.s32.totalorder %s87, %s89
    %p96 = scmp.eq.s32.totalorder %s16, 1
    %p97 = por %p95, %p96
    %p98 = scmp.ne.s32.totalorder %s89, %s90
    %p99 = scmp.eq.s32.totalorder %s16, 0
    %p100 = por %p98, %p99
    %p101 = scmp.ne.s32.totalorder %s89, %s90
    %p102 = scmp.eq.s32.totalorder %s17, 1
    %p103 = por %p101, %p102
    %p105 = scmp.ne.s32.totalorder %s90, %s104
    %p106 = scmp.eq.s32.totalorder %s17, 0
    %p107 = por %p105, %p106
    %s109 = sadd.s32 %s108, 1
    %p112 = scmp.eq.s32.totalorder %s11, 1
    %p113 = scmp.ne.s32.totalorder %s108, %s110
    %p114 = scmp.eq.s32.totalorder %s11, 0
    %p115 = por %p113, %p114
    %p116 = scmp.ne.s32.totalorder %s108, %s110
    %p117 = scmp.eq.s32.totalorder %s16, 1
    %p118 = por %p116, %p117
    %p119 = scmp.ne.s32.totalorder %s110, %s111
    %p120 = scmp.eq.s32.totalorder %s16, 0
    %p121 = por %p119, %p120
    %p122 = scmp.ne.s32.totalorder %s110, %s111
    %p123 = scmp.eq.s32.totalorder %s17, 1
    %p124 = por %p122, %p123
    %p126 = scmp.ne.s32.totalorder %s111, %s125
    %p127 = scmp.eq.s32.totalorder %s17, 0
    %p128 = por %p126, %p127
    %s129 = ssub.s32 %s11, %s18
    %p130 = scmp.eq.s32.totalorder %s129, 0
    %s132 = sadd.s32 %s131, 1
    %s133 = scalar_select %p130, %s131, %s132
    %p136 = pneg %p130
    %p137 = scmp.eq.s32.totalorder %s11, 1
    %p138 = por %p136, %p137
    %p139 = scmp.ne.s32.totalorder %s131, %s134
    %p140 = scmp.eq.s32.totalorder %s11, 0
    %p141 = por %p139, %p140
    %p142 = scmp.ne.s32.totalorder %s131, %s134
    %p143 = scmp.eq.s32.totalorder %s16, 1
    %p144 = por %p142, %p143
    %p145 = scmp.ne.s32.totalorder %s134, %s135
    %p146 = scmp.eq.s32.totalorder %s16, 0
    %p147 = por %p145, %p146
    %p148 = scmp.ne.s32.totalorder %s134, %s135
    %p149 = scmp.eq.s32.totalorder %s17, 1
    %p150 = por %p148, %p149
    %p152 = scmp.ne.s32.totalorder %s135, %s151
    %p153 = scmp.eq.s32.totalorder %s17, 0
    %p154 = por %p152, %p153
    %p155 = scmp.le.s32.totalorder 1, %s11
    %p156 = scmp.lt.s32.totalorder %s11, 3
    %p157 = pnand %p155, %p156
    %p158 = pneg %p157
    // Predicated region
    $region9: #{net_forward.1} parent=5 // pred_check
      _
    $region10: #{net_forward.1} parent=5 // pred_check_branch
      %160 = sbr.rel (%p157) target = $region12
    $region11: #{net_forward.1} parent=5 // pred_region
      %s161 = ssub.s32 %s11, 1
      // Predicated region
      $region13: #{net_forward.1} parent=11 // pred_check
        %p162 = pneg %p58
      $region14: #{net_forward.1} parent=11 // pred_check_branch
        %164 = sbr.rel (%p162) target = $region16
      $region15: #{net_forward.1} parent=11 // pred_region
        _
      $region16: #{net_forward.1} parent=11 // pred_fallthru
        _
      // Predicated region
      $region17: #{net_forward.1} parent=11 // pred_check
        %p165 = pneg %p79
      $region18: #{net_forward.1} parent=11 // pred_check_branch
        %167 = sbr.rel (%p165) target = $region20
      $region19: #{net_forward.1} parent=11 // pred_region
        _
      $region20: #{net_forward.1} parent=11 // pred_fallthru
        _
      // Predicated region
      $region21: #{net_forward.1} parent=11 // pred_check
        %p168 = pneg %p100
      $region22: #{net_forward.1} parent=11 // pred_check_branch
        %170 = sbr.rel (%p168) target = $region24
      $region23: #{net_forward.1} parent=11 // pred_region
        _
      $region24: #{net_forward.1} parent=11 // pred_fallthru
        _
      // Predicated region
      $region25: #{net_forward.1} parent=11 // pred_check
        %p171 = pneg %p121
      $region26: #{net_forward.1} parent=11 // pred_check_branch
        %173 = sbr.rel (%p171) target = $region28
      $region27: #{net_forward.1} parent=11 // pred_region
        _
      $region28: #{net_forward.1} parent=11 // pred_fallthru
        _
    $region12: #{net_forward.1} parent=5 // pred_fallthru
      _
    %p174 = scmp.lt.s32.totalorder %s11, 2
    // Predicated region
    $region29: #{net_forward.1} parent=5 // pred_check
      %p175 = pneg %p174
    $region30: #{net_forward.1} parent=5 // pred_check_branch
      %177 = sbr.rel (%p175) target = $region32
    $region31: #{net_forward.1} parent=5 // pred_region
      // Predicated region
      $region33: #{net_forward.1} parent=31 // pred_check
        %p178 = pneg %p31
      $region34: #{net_forward.1} parent=31 // pred_check_branch
        %180 = sbr.rel (%p178) target = $region36
      $region35: #{net_forward.1} parent=31 // pred_region
        %p181 = scmp.lt.s32.totalorder %s11, 1
        %s182 = scalar_select %p181, %s11, 1
        %s183 = smul.addr %s182, 98
        %s184 = smul.addr %s183, 4
        %s185 = scalar_lea.vmem %s0, %s184
      $region36: #{net_forward.1} parent=31 // pred_fallthru
        _
    $region32: #{net_forward.1} parent=5 // pred_fallthru
      _
    %p186 = scmp.le.s32.totalorder 1, %s11
    %p187 = scmp.lt.s32.totalorder %s11, 3
    %p188 = pnand %p186, %p187
    %p189 = pneg %p188
    // Predicated region
    $region37: #{net_forward.1} parent=5 // pred_check
      _
    $region38: #{net_forward.1} parent=5 // pred_check_branch
      %191 = sbr.rel (%p188) target = $region40
    $region39: #{net_forward.1} parent=5 // pred_region
      %s192 = ssub.s32 %s11, 1
      %p193 = scmp.lt.s32.totalorder %s16, 1
      %s194 = scalar_select %p193, %s16, 1
      %s195 = smul.addr %s194, 98
      %s196 = smul.addr %s195, 4
      %s197 = scalar_lea.vmem %s0, %s196
      %p198 = pneg %p37
      %p199 = pneg %p34
      %p200 = pneg %p58
      %p201 = pneg %p55
      %p202 = pneg %p79
      %p203 = pneg %p76
      %p204 = pneg %p100
      %p205 = pneg %p97
      %p206 = pneg %p121
      %p207 = pneg %p118
      %p208 = pneg %p147
      %p209 = pneg %p144
      %p210 = scmp.lt.s32.totalorder %s16, 1
      %s211 = scalar_select %p210, %s16, 1
      %s212 = smul.addr %s211, 4
      %s213 = smul.addr %s212, 8
      %s214 = scalar_lea.vmem %s5, %s213
      %p215 = scmp.lt.s32.totalorder %s16, 1
      %s216 = scalar_select %p215, %s16, 1
      %s217 = smul.addr %s216, 98
      %s218 = smul.addr %s217, 4
      %s219 = scalar_lea.vmem %s0, %s218
      %p220 = scmp.lt.s32.totalorder %s16, 1
      %s221 = scalar_select %p220, %s16, 1
      %s222 = smul.addr %s221, 4
      %s223 = smul.addr %s222, 8
      %s224 = scalar_lea.vmem %s5, %s223
      %v225 = vld [vmem:[%s219] sm:$0xf]
      %v226 = vld [vmem:[%s219 + $0x4] sm:$0xf]
      %v227 = vld [vmem:[%s219 + $0x8] sm:$0xf]
      %v228 = vld [vmem:[%s219 + $0xc] sm:$0xf]
      %v229 = vld [vmem:[%s219 + $0x10] sm:$0xf]
      %v230 = vld [vmem:[%s219 + $0x14] sm:$0xf]
      %v231 = vld [vmem:[%s219 + $0x18] sm:$0xf]
      %v232 = vld [vmem:[%s219 + $0x1c] sm:$0xf]
      %v233 = vld [vmem:[%s219 + $0x20] sm:$0xf]
      %v234 = vld [vmem:[%s219 + $0x24] sm:$0xf]
      %v235 = vld [vmem:[%s219 + $0x28] sm:$0xf]
      %v236 = vld [vmem:[%s219 + $0x2c] sm:$0xf]
      %v237 = vld [vmem:[%s219 + $0x30] sm:$0xf]
      %v238 = vld [vmem:[%s219 + $0x34] sm:$0xf]
      %v239 = vld [vmem:[%s219 + $0x38] sm:$0xf]
      %v240 = vld [vmem:[%s219 + $0x3c] sm:$0xf]
      %v241 = vld [vmem:[%s219 + $0x40] sm:$0xf]
      %v242 = vld [vmem:[%s219 + $0x44] sm:$0xf]
      %v243 = vld [vmem:[%s219 + $0x48] sm:$0xf]
      %v244 = vld [vmem:[%s219 + $0x4c] sm:$0xf]
      %v245 = vld [vmem:[%s219 + $0x50] sm:$0xf]
      %v246 = vld [vmem:[%s219 + $0x54] sm:$0xf]
      %v247 = vld [vmem:[%s219 + $0x58] sm:$0xf]
      %v248 = vld [vmem:[%s219 + $0x5c] sm:$0xf]
      %v249 = vld [vmem:[%s219 + $0x60] sm:$0xf]
      %v250 = vld [vmem:[%s219 + $0x64] sm:$0xf]
      %v251 = vld [vmem:[%s219 + $0x68] sm:$0xf]
      %v252 = vld [vmem:[%s219 + $0x6c] sm:$0xf]
      %v253 = vld [vmem:[%s219 + $0x70] sm:$0xf]
      %v254 = vld [vmem:[%s219 + $0x74] sm:$0xf]
      %v255 = vld [vmem:[%s219 + $0x78] sm:$0xf]
      %v256 = vld [vmem:[%s219 + $0x7c] sm:$0xf]
      %v257 = vld [vmem:[%s219 + $0x80] sm:$0xf]
      %v258 = vld [vmem:[%s219 + $0x84] sm:$0xf]
      %v259 = vld [vmem:[%s219 + $0x88] sm:$0xf]
      %v260 = vld [vmem:[%s219 + $0x8c] sm:$0xf]
      %v261 = vld [vmem:[%s219 + $0x90] sm:$0xf]
      %v262 = vld [vmem:[%s219 + $0x94] sm:$0xf]
      %v263 = vld [vmem:[%s219 + $0x98] sm:$0xf]
      %v264 = vld [vmem:[%s219 + $0x9c] sm:$0xf]
      %v265 = vld [vmem:[%s219 + $0xa0] sm:$0xf]
      %v266 = vld [vmem:[%s219 + $0xa4] sm:$0xf]
      %v267 = vld [vmem:[%s219 + $0xa8] sm:$0xf]
      %v268 = vld [vmem:[%s219 + $0xac] sm:$0xf]
      %v269 = vld [vmem:[%s219 + $0xb0] sm:$0xf]
      %v270 = vld [vmem:[%s219 + $0xb4] sm:$0xf]
      %v271 = vld [vmem:[%s219 + $0xb8] sm:$0xf]
      %v272 = vld [vmem:[%s219 + $0xbc] sm:$0xf]
      %v273 = vld [vmem:[%s219 + $0xc0] sm:$0xf]
      %v274 = vld [vmem:[%s219 + $0xc4] sm:$0xf]
      %v275 = vld [vmem:[%s219 + $0xc8] sm:$0xf]
      %v276 = vld [vmem:[%s219 + $0xcc] sm:$0xf]
      %v277 = vld [vmem:[%s219 + $0xd0] sm:$0xf]
      %v278 = vld [vmem:[%s219 + $0xd4] sm:$0xf]
      %v279 = vld [vmem:[%s219 + $0xd8] sm:$0xf]
      %v280 = vld [vmem:[%s219 + $0xdc] sm:$0xf]
      %v281 = vld [vmem:[%s219 + $0xe0] sm:$0xf]
      %v282 = vld [vmem:[%s219 + $0xe4] sm:$0xf]
      %v283 = vld [vmem:[%s219 + $0xe8] sm:$0xf]
      %v284 = vld [vmem:[%s219 + $0xec] sm:$0xf]
      %v285 = vld [vmem:[%s219 + $0xf0] sm:$0xf]
      %v286 = vld [vmem:[%s219 + $0xf4] sm:$0xf]
      %v287 = vld [vmem:[%s219 + $0xf8] sm:$0xf]
      %v288 = vld [vmem:[%s219 + $0xfc] sm:$0xf]
      %v289 = vld [vmem:[%s219 + $0x100] sm:$0xf]
      %v290 = vld [vmem:[%s219 + $0x104] sm:$0xf]
      %v291 = vld [vmem:[%s219 + $0x108] sm:$0xf]
      %v292 = vld [vmem:[%s219 + $0x10c] sm:$0xf]
      %v293 = vld [vmem:[%s219 + $0x110] sm:$0xf]
      %v294 = vld [vmem:[%s219 + $0x114] sm:$0xf]
      %v295 = vld [vmem:[%s219 + $0x118] sm:$0xf]
      %v296 = vld [vmem:[%s219 + $0x11c] sm:$0xf]
      %v297 = vld [vmem:[%s219 + $0x120] sm:$0xf]
      %v298 = vld [vmem:[%s219 + $0x124] sm:$0xf]
      %v299 = vld [vmem:[%s219 + $0x128] sm:$0xf]
      %v300 = vld [vmem:[%s219 + $0x12c] sm:$0xf]
      %v301 = vld [vmem:[%s219 + $0x130] sm:$0xf]
      %v302 = vld [vmem:[%s219 + $0x134] sm:$0xf]
      %v303 = vld [vmem:[%s219 + $0x138] sm:$0xf]
      %v304 = vld [vmem:[%s219 + $0x13c] sm:$0xf]
      %v305 = vld [vmem:[%s219 + $0x140] sm:$0xf]
      %v306 = vld [vmem:[%s219 + $0x144] sm:$0xf]
      %v307 = vld [vmem:[%s219 + $0x148] sm:$0xf]
      %v308 = vld [vmem:[%s219 + $0x14c] sm:$0xf]
      %v309 = vld [vmem:[%s219 + $0x150] sm:$0xf]
      %v310 = vld [vmem:[%s219 + $0x154] sm:$0xf]
      %v311 = vld [vmem:[%s219 + $0x158] sm:$0xf]
      %v312 = vld [vmem:[%s219 + $0x15c] sm:$0xf]
      %v313 = vld [vmem:[%s219 + $0x160] sm:$0xf]
      %v314 = vld [vmem:[%s219 + $0x164] sm:$0xf]
      %v315 = vld [vmem:[%s219 + $0x168] sm:$0xf]
      %v316 = vld [vmem:[%s219 + $0x16c] sm:$0xf]
      %v317 = vld [vmem:[%s219 + $0x170] sm:$0xf]
      %v318 = vld [vmem:[%s219 + $0x174] sm:$0xf]
      %v319 = vld [vmem:[%s219 + $0x178] sm:$0xf]
      %v320 = vld [vmem:[%s219 + $0x17c] sm:$0xf]
      %v321 = vld [vmem:[%s219 + $0x180] sm:$0xf]
      %v322 = vld [vmem:[%s219 + $0x184] sm:$0xf]
      %v323 = vld [vmem:[%s1] sm:$0xf]
      %v324 = vld [vmem:[%s1 + $0x4] sm:$0xf]
      %v325 = vld [vmem:[%s1 + $0x8] sm:$0xf]
      %v326 = vld [vmem:[%s1 + $0xc] sm:$0xf]
      %v327 = vld [vmem:[%s1 + $0x10] sm:$0xf]
      %v328 = vld [vmem:[%s1 + $0x14] sm:$0xf]
      %v329 = vld [vmem:[%s1 + $0x18] sm:$0xf]
      %v330 = vld [vmem:[%s1 + $0x1c] sm:$0xf]
      %v331 = vld [vmem:[%s1 + $0x20] sm:$0xf]
      %v332 = vld [vmem:[%s1 + $0x24] sm:$0xf]
      %v333 = vld [vmem:[%s1 + $0x28] sm:$0xf]
      %v334 = vld [vmem:[%s1 + $0x2c] sm:$0xf]
      %v335 = vld [vmem:[%s1 + $0x30] sm:$0xf]
      %v336 = vld [vmem:[%s1 + $0x34] sm:$0xf]
      %v337 = vld [vmem:[%s1 + $0x38] sm:$0xf]
      %v338 = vld [vmem:[%s1 + $0x3c] sm:$0xf]
      %v339 = vld [vmem:[%s2] sm:$0x1]
      %v341 = vperm.slane %v339, 0
      %v441 = vunpack.c.l.b16 %v225
      %v442 = vunpack.c.l.b16 %v226
      %v443 = vunpack.c.l.b16 %v227
      %v444 = vunpack.c.l.b16 %v228
      %v445 = vunpack.c.l.b16 %v229
      %v446 = vunpack.c.l.b16 %v230
      %v447 = vunpack.c.l.b16 %v231
      %v448 = vunpack.c.l.b16 %v232
      %v449 = vunpack.c.l.b16 %v233
      %v450 = vunpack.c.l.b16 %v234
      %v451 = vunpack.c.l.b16 %v235
      %v452 = vunpack.c.l.b16 %v236
      %v453 = vunpack.c.l.b16 %v237
      %v454 = vunpack.c.l.b16 %v238
      %v455 = vunpack.c.l.b16 %v239
      %v456 = vunpack.c.l.b16 %v240
      %v457 = vunpack.c.l.b16 %v241
      %v458 = vunpack.c.l.b16 %v242
      %v459 = vunpack.c.l.b16 %v243
      %v460 = vunpack.c.l.b16 %v244
      %v461 = vunpack.c.l.b16 %v245
      %v462 = vunpack.c.l.b16 %v246
      %v463 = vunpack.c.l.b16 %v247
      %v464 = vunpack.c.l.b16 %v248
      %v465 = vunpack.c.l.b16 %v249
      %v466 = vunpack.c.l.b16 %v250
      %v467 = vunpack.c.l.b16 %v251
      %v468 = vunpack.c.l.b16 %v252
      %v469 = vunpack.c.l.b16 %v253
      %v470 = vunpack.c.l.b16 %v254
      %v471 = vunpack.c.l.b16 %v255
      %v472 = vunpack.c.l.b16 %v256
      %v473 = vunpack.c.l.b16 %v257
      %v474 = vunpack.c.l.b16 %v258
      %v475 = vunpack.c.l.b16 %v259
      %v476 = vunpack.c.l.b16 %v260
      %v477 = vunpack.c.l.b16 %v261
      %v478 = vunpack.c.l.b16 %v262
      %v479 = vunpack.c.l.b16 %v263
      %v480 = vunpack.c.l.b16 %v264
      %v481 = vunpack.c.l.b16 %v265
      %v482 = vunpack.c.l.b16 %v266
      %v483 = vunpack.c.l.b16 %v267
      %v484 = vunpack.c.l.b16 %v268
      %v485 = vunpack.c.l.b16 %v269
      %v486 = vunpack.c.l.b16 %v270
      %v487 = vunpack.c.l.b16 %v271
      %v488 = vunpack.c.l.b16 %v272
      %v489 = vunpack.c.l.b16 %v273
      %v490 = vunpack.c.l.b16 %v274
      %v491 = vunpack.c.l.b16 %v275
      %v492 = vunpack.c.l.b16 %v276
      %v493 = vunpack.c.l.b16 %v277
      %v494 = vunpack.c.l.b16 %v278
      %v495 = vunpack.c.l.b16 %v279
      %v496 = vunpack.c.l.b16 %v280
      %v497 = vunpack.c.l.b16 %v281
      %v498 = vunpack.c.l.b16 %v282
      %v499 = vunpack.c.l.b16 %v283
      %v500 = vunpack.c.l.b16 %v284
      %v501 = vunpack.c.l.b16 %v285
      %v502 = vunpack.c.l.b16 %v286
      %v503 = vunpack.c.l.b16 %v287
      %v504 = vunpack.c.l.b16 %v288
      %v505 = vunpack.c.l.b16 %v289
      %v506 = vunpack.c.l.b16 %v290
      %v507 = vunpack.c.l.b16 %v291
      %v508 = vunpack.c.l.b16 %v292
      %v509 = vunpack.c.l.b16 %v293
      %v510 = vunpack.c.l.b16 %v294
      %v511 = vunpack.c.l.b16 %v295
      %v512 = vunpack.c.l.b16 %v296
      %v513 = vunpack.c.l.b16 %v297
      %v514 = vunpack.c.l.b16 %v298
      %v515 = vunpack.c.l.b16 %v299
      %v516 = vunpack.c.l.b16 %v300
      %v517 = vunpack.c.l.b16 %v301
      %v518 = vunpack.c.l.b16 %v302
      %v519 = vunpack.c.l.b16 %v303
      %v520 = vunpack.c.l.b16 %v304
      %v521 = vunpack.c.l.b16 %v305
      %v522 = vunpack.c.l.b16 %v306
      %v523 = vunpack.c.l.b16 %v307
      %v524 = vunpack.c.l.b16 %v308
      %v525 = vunpack.c.l.b16 %v309
      %v526 = vunpack.c.l.b16 %v310
      %v527 = vunpack.c.l.b16 %v311
      %v528 = vunpack.c.l.b16 %v312
      %v529 = vunpack.c.l.b16 %v313
      %v530 = vunpack.c.l.b16 %v314
      %v531 = vunpack.c.l.b16 %v315
      %v532 = vunpack.c.l.b16 %v316
      %v533 = vunpack.c.l.b16 %v317
      %v534 = vunpack.c.l.b16 %v318
      %v535 = vunpack.c.l.b16 %v319
      %v536 = vunpack.c.l.b16 %v320
      %v537 = vunpack.c.l.b16 %v321
      %v538 = vunpack.c.l.b16 %v322
      %v539 = vpack.c.b16 %v442, %v441
      %v540 = vpack.c.b16 %v444, %v443
      %v541 = vpack.c.b16 %v446, %v445
      %v542 = vpack.c.b16 %v448, %v447
      %v543 = vpack.c.b16 %v450, %v449
      %v544 = vpack.c.b16 %v452, %v451
      %v545 = vpack.c.b16 %v454, %v453
      %v546 = vpack.c.b16 %v456, %v455
      %v547 = vpack.c.b16 %v458, %v457
      %v548 = vpack.c.b16 %v460, %v459
      %v549 = vpack.c.b16 %v462, %v461
      %v550 = vpack.c.b16 %v464, %v463
      %v551 = vpack.c.b16 %v466, %v465
      %v552 = vpack.c.b16 %v468, %v467
      %v553 = vpack.c.b16 %v470, %v469
      %v554 = vpack.c.b16 %v472, %v471
      %v555 = vpack.c.b16 %v474, %v473
      %v556 = vpack.c.b16 %v476, %v475
      %v557 = vpack.c.b16 %v478, %v477
      %v558 = vpack.c.b16 %v480, %v479
      %v559 = vpack.c.b16 %v482, %v481
      %v560 = vpack.c.b16 %v484, %v483
      %v561 = vpack.c.b16 %v486, %v485
      %v562 = vpack.c.b16 %v488, %v487
      %v563 = vpack.c.b16 %v490, %v489
      %v564 = vpack.c.b16 %v492, %v491
      %v565 = vpack.c.b16 %v494, %v493
      %v566 = vpack.c.b16 %v496, %v495
      %v567 = vpack.c.b16 %v498, %v497
      %v568 = vpack.c.b16 %v500, %v499
      %v569 = vpack.c.b16 %v502, %v501
      %v570 = vpack.c.b16 %v504, %v503
      %v571 = vpack.c.b16 %v506, %v505
      %v572 = vpack.c.b16 %v508, %v507
      %v573 = vpack.c.b16 %v510, %v509
      %v574 = vpack.c.b16 %v512, %v511
      %v575 = vpack.c.b16 %v514, %v513
      %v576 = vpack.c.b16 %v516, %v515
      %v577 = vpack.c.b16 %v518, %v517
      %v578 = vpack.c.b16 %v520, %v519
      %v579 = vpack.c.b16 %v522, %v521
      %v580 = vpack.c.b16 %v524, %v523
      %v581 = vpack.c.b16 %v526, %v525
      %v582 = vpack.c.b16 %v528, %v527
      %v583 = vpack.c.b16 %v530, %v529
      %v584 = vpack.c.b16 %v532, %v531
      %v585 = vpack.c.b16 %v534, %v533
      %v586 = vpack.c.b16 %v536, %v535
      %v587 = vpack.c.b16 %v538, %v537
      %v653 = vunpack.c.l.b16 %v323
      %v654 = vunpack.c.l.b16 %v324
      %v655 = vunpack.c.l.b16 %v325
      %v656 = vunpack.c.l.b16 %v326
      %v657 = vunpack.c.l.b16 %v327
      %v658 = vunpack.c.l.b16 %v328
      %v659 = vunpack.c.l.b16 %v329
      %v660 = vunpack.c.l.b16 %v330
      %v661 = vunpack.c.l.b16 %v331
      %v662 = vunpack.c.l.b16 %v332
      %v663 = vunpack.c.l.b16 %v333
      %v664 = vunpack.c.l.b16 %v334
      %v665 = vunpack.c.l.b16 %v335
      %v666 = vunpack.c.l.b16 %v336
      %v667 = vunpack.c.l.b16 %v337
      %v668 = vunpack.c.l.b16 %v338
      %v669 = vpack.c.b16 %v654, %v653
      %v670 = vpack.c.b16 %v656, %v655
      %v671 = vpack.c.b16 %v658, %v657
      %v672 = vpack.c.b16 %v660, %v659
      %v673 = vpack.c.b16 %v662, %v661
      %v674 = vpack.c.b16 %v664, %v663
      %v675 = vpack.c.b16 %v666, %v665
      %v676 = vpack.c.b16 %v668, %v667
      %685 = vmatpush.bf16.msra.mxu0 %v676
      %686 = vmatpush.bf16.msra.mxu0 %v675
      %687 = vmatpush.bf16.msra.mxu0 %v674
      %688 = vmatpush.bf16.msra.mxu0 %v673
      %689 = vmatpush.bf16.msra.mxu0 %v672
      %690 = vmatpush.bf16.msra.mxu0 %v671
      %691 = vmatpush.bf16.msra.mxu0 %v670
      %692 = vmatpush.bf16.msra.mxu0 %v669
      %693 = vmatmul.bf16.gmra.mxu0 %v539
      %v694 = vpop.f32.mrf.mxu0
      %v695 = vadd.f32 %v341, %v694
      %v696 = vpop.f32.mrf.mxu0
      %v697 = vadd.f32 %v341, %v696
      %698 = vmatmul.bf16.gmra.mxu0 %v540
      %v699 = vpop.f32.mrf.mxu0
      %v700 = vadd.f32 %v341, %v699
      %v701 = vpop.f32.mrf.mxu0
      %v702 = vadd.f32 %v341, %v701
      %703 = vmatmul.bf16.gmra.mxu0 %v541
      %v704 = vpop.f32.mrf.mxu0
      %v705 = vadd.f32 %v341, %v704
      %v706 = vpop.f32.mrf.mxu0
      %v707 = vadd.f32 %v341, %v706
      %708 = vmatmul.bf16.gmra.mxu0 %v542
      %v709 = vpop.f32.mrf.mxu0
      %v710 = vadd.f32 %v341, %v709
      %v711 = vpop.f32.mrf.mxu0
      %v712 = vadd.f32 %v341, %v711
      %713 = vmatmul.bf16.gmra.mxu0 %v543
      %v714 = vpop.f32.mrf.mxu0
      %v715 = vadd.f32 %v341, %v714
      %v716 = vpop.f32.mrf.mxu0
      %v717 = vadd.f32 %v341, %v716
      %718 = vmatmul.bf16.gmra.mxu0 %v544
      %v719 = vpop.f32.mrf.mxu0
      %v720 = vadd.f32 %v341, %v719
      %v721 = vpop.f32.mrf.mxu0
      %v722 = vadd.f32 %v341, %v721
      %723 = vmatmul.bf16.gmra.mxu0 %v545
      %v724 = vpop.f32.mrf.mxu0
      %v725 = vadd.f32 %v341, %v724
      %v726 = vpop.f32.mrf.mxu0
      %v727 = vadd.f32 %v341, %v726
      %728 = vmatmul.bf16.gmra.mxu0 %v546
      %v729 = vpop.f32.mrf.mxu0
      %v730 = vadd.f32 %v341, %v729
      %v731 = vpop.f32.mrf.mxu0
      %v732 = vadd.f32 %v341, %v731
      %733 = vmatmul.bf16.gmra.mxu0 %v547
      %v734 = vpop.f32.mrf.mxu0
      %v735 = vadd.f32 %v341, %v734
      %v736 = vpop.f32.mrf.mxu0
      %v737 = vadd.f32 %v341, %v736
      %738 = vmatmul.bf16.gmra.mxu0 %v548
      %v739 = vpop.f32.mrf.mxu0
      %v740 = vadd.f32 %v341, %v739
      %v741 = vpop.f32.mrf.mxu0
      %v742 = vadd.f32 %v341, %v741
      %743 = vmatmul.bf16.gmra.mxu0 %v549
      %v744 = vpop.f32.mrf.mxu0
      %v745 = vadd.f32 %v341, %v744
      %v746 = vpop.f32.mrf.mxu0
      %v747 = vadd.f32 %v341, %v746
      %748 = vmatmul.bf16.gmra.mxu0 %v550
      %v749 = vpop.f32.mrf.mxu0
      %v750 = vadd.f32 %v341, %v749
      %v751 = vpop.f32.mrf.mxu0
      %v752 = vadd.f32 %v341, %v751
      %753 = vmatmul.bf16.gmra.mxu0 %v551
      %v754 = vpop.f32.mrf.mxu0
      %v755 = vadd.f32 %v341, %v754
      %v756 = vpop.f32.mrf.mxu0
      %v757 = vadd.f32 %v341, %v756
      %758 = vmatmul.bf16.gmra.mxu0 %v552
      %v759 = vpop.f32.mrf.mxu0
      %v760 = vadd.f32 %v341, %v759
      %v761 = vpop.f32.mrf.mxu0
      %v762 = vadd.f32 %v341, %v761
      %763 = vmatmul.bf16.gmra.mxu0 %v553
      %v764 = vpop.f32.mrf.mxu0
      %v765 = vadd.f32 %v341, %v764
      %v766 = vpop.f32.mrf.mxu0
      %v767 = vadd.f32 %v341, %v766
      %768 = vmatmul.bf16.gmra.mxu0 %v554
      %v769 = vpop.f32.mrf.mxu0
      %v770 = vadd.f32 %v341, %v769
      %v771 = vpop.f32.mrf.mxu0
      %v772 = vadd.f32 %v341, %v771
      %773 = vmatmul.bf16.gmra.mxu0 %v555
      %v774 = vpop.f32.mrf.mxu0
      %v775 = vadd.f32 %v341, %v774
      %v776 = vpop.f32.mrf.mxu0
      %v777 = vadd.f32 %v341, %v776
      %778 = vmatmul.bf16.gmra.mxu0 %v556
      %v779 = vpop.f32.mrf.mxu0
      %v780 = vadd.f32 %v341, %v779
      %v781 = vpop.f32.mrf.mxu0
      %v782 = vadd.f32 %v341, %v781
      %783 = vmatmul.bf16.gmra.mxu0 %v557
      %v784 = vpop.f32.mrf.mxu0
      %v785 = vadd.f32 %v341, %v784
      %v786 = vpop.f32.mrf.mxu0
      %v787 = vadd.f32 %v341, %v786
      %788 = vmatmul.bf16.gmra.mxu0 %v558
      %v789 = vpop.f32.mrf.mxu0
      %v790 = vadd.f32 %v341, %v789
      %v791 = vpop.f32.mrf.mxu0
      %v792 = vadd.f32 %v341, %v791
      %793 = vmatmul.bf16.gmra.mxu0 %v559
      %v794 = vpop.f32.mrf.mxu0
      %v795 = vadd.f32 %v341, %v794
      %v796 = vpop.f32.mrf.mxu0
      %v797 = vadd.f32 %v341, %v796
      %798 = vmatmul.bf16.gmra.mxu0 %v560
      %v799 = vpop.f32.mrf.mxu0
      %v800 = vadd.f32 %v341, %v799
      %v801 = vpop.f32.mrf.mxu0
      %v802 = vadd.f32 %v341, %v801
      %803 = vmatmul.bf16.gmra.mxu0 %v561
      %v804 = vpop.f32.mrf.mxu0
      %v805 = vadd.f32 %v341, %v804
      %v806 = vpop.f32.mrf.mxu0
      %v807 = vadd.f32 %v341, %v806
      %808 = vmatmul.bf16.gmra.mxu0 %v562
      %v809 = vpop.f32.mrf.mxu0
      %v810 = vadd.f32 %v341, %v809
      %v811 = vpop.f32.mrf.mxu0
      %v812 = vadd.f32 %v341, %v811
      %813 = vmatmul.bf16.gmra.mxu0 %v563
      %v814 = vpop.f32.mrf.mxu0
      %v815 = vadd.f32 %v341, %v814
      %v816 = vpop.f32.mrf.mxu0
      %v817 = vadd.f32 %v341, %v816
      %818 = vmatmul.bf16.gmra.mxu0 %v564
      %v819 = vpop.f32.mrf.mxu0
      %v820 = vadd.f32 %v341, %v819
      %v821 = vpop.f32.mrf.mxu0
      %v822 = vadd.f32 %v341, %v821
      %823 = vmatmul.bf16.gmra.mxu0 %v565
      %v824 = vpop.f32.mrf.mxu0
      %v825 = vadd.f32 %v341, %v824
      %v826 = vpop.f32.mrf.mxu0
      %v827 = vadd.f32 %v341, %v826
      %828 = vmatmul.bf16.gmra.mxu0 %v566
      %v829 = vpop.f32.mrf.mxu0
      %v830 = vadd.f32 %v341, %v829
      %v831 = vpop.f32.mrf.mxu0
      %v832 = vadd.f32 %v341, %v831
      %833 = vmatmul.bf16.gmra.mxu0 %v567
      %v834 = vpop.f32.mrf.mxu0
      %v835 = vadd.f32 %v341, %v834
      %v836 = vpop.f32.mrf.mxu0
      %v837 = vadd.f32 %v341, %v836
      %838 = vmatmul.bf16.gmra.mxu0 %v568
      %v839 = vpop.f32.mrf.mxu0
      %v840 = vadd.f32 %v341, %v839
      %v841 = vpop.f32.mrf.mxu0
      %v842 = vadd.f32 %v341, %v841
      %843 = vmatmul.bf16.gmra.mxu0 %v569
      %v844 = vpop.f32.mrf.mxu0
      %v845 = vadd.f32 %v341, %v844
      %v846 = vpop.f32.mrf.mxu0
      %v847 = vadd.f32 %v341, %v846
      %848 = vmatmul.bf16.gmra.mxu0 %v570
      %v849 = vpop.f32.mrf.mxu0
      %v850 = vadd.f32 %v341, %v849
      %v851 = vpop.f32.mrf.mxu0
      %v852 = vadd.f32 %v341, %v851
      %853 = vmatmul.bf16.gmra.mxu0 %v571
      %v854 = vpop.f32.mrf.mxu0
      %v855 = vadd.f32 %v341, %v854
      %v856 = vpop.f32.mrf.mxu0
      %v857 = vadd.f32 %v341, %v856
      %858 = vmatmul.bf16.gmra.mxu0 %v572
      %v859 = vpop.f32.mrf.mxu0
      %v860 = vadd.f32 %v341, %v859
      %v861 = vpop.f32.mrf.mxu0
      %v862 = vadd.f32 %v341, %v861
      %863 = vmatmul.bf16.gmra.mxu0 %v573
      %v864 = vpop.f32.mrf.mxu0
      %v865 = vadd.f32 %v341, %v864
      %v866 = vpop.f32.mrf.mxu0
      %v867 = vadd.f32 %v341, %v866
      %868 = vmatmul.bf16.gmra.mxu0 %v574
      %v869 = vpop.f32.mrf.mxu0
      %v870 = vadd.f32 %v341, %v869
      %v871 = vpop.f32.mrf.mxu0
      %v872 = vadd.f32 %v341, %v871
      %873 = vmatmul.bf16.gmra.mxu0 %v575
      %v874 = vpop.f32.mrf.mxu0
      %v875 = vadd.f32 %v341, %v874
      %v876 = vpop.f32.mrf.mxu0
      %v877 = vadd.f32 %v341, %v876
      %878 = vmatmul.bf16.gmra.mxu0 %v576
      %v879 = vpop.f32.mrf.mxu0
      %v880 = vadd.f32 %v341, %v879
      %v881 = vpop.f32.mrf.mxu0
      %v882 = vadd.f32 %v341, %v881
      %883 = vmatmul.bf16.gmra.mxu0 %v577
      %v884 = vpop.f32.mrf.mxu0
      %v885 = vadd.f32 %v341, %v884
      %v886 = vpop.f32.mrf.mxu0
      %v887 = vadd.f32 %v341, %v886
      %888 = vmatmul.bf16.gmra.mxu0 %v578
      %v889 = vpop.f32.mrf.mxu0
      %v890 = vadd.f32 %v341, %v889
      %v891 = vpop.f32.mrf.mxu0
      %v892 = vadd.f32 %v341, %v891
      %893 = vmatmul.bf16.gmra.mxu0 %v579
      %v894 = vpop.f32.mrf.mxu0
      %v895 = vadd.f32 %v341, %v894
      %v896 = vpop.f32.mrf.mxu0
      %v897 = vadd.f32 %v341, %v896
      %898 = vmatmul.bf16.gmra.mxu0 %v580
      %v899 = vpop.f32.mrf.mxu0
      %v900 = vadd.f32 %v341, %v899
      %v901 = vpop.f32.mrf.mxu0
      %v902 = vadd.f32 %v341, %v901
      %903 = vmatmul.bf16.gmra.mxu0 %v581
      %v904 = vpop.f32.mrf.mxu0
      %v905 = vadd.f32 %v341, %v904
      %v906 = vpop.f32.mrf.mxu0
      %v907 = vadd.f32 %v341, %v906
      %908 = vmatmul.bf16.gmra.mxu0 %v582
      %v909 = vpop.f32.mrf.mxu0
      %v910 = vadd.f32 %v341, %v909
      %v911 = vpop.f32.mrf.mxu0
      %v912 = vadd.f32 %v341, %v911
      %913 = vmatmul.bf16.gmra.mxu0 %v583
      %v914 = vpop.f32.mrf.mxu0
      %v915 = vadd.f32 %v341, %v914
      %v916 = vpop.f32.mrf.mxu0
      %v917 = vadd.f32 %v341, %v916
      %918 = vmatmul.bf16.gmra.mxu0 %v584
      %v919 = vpop.f32.mrf.mxu0
      %v920 = vadd.f32 %v341, %v919
      %v921 = vpop.f32.mrf.mxu0
      %v922 = vadd.f32 %v341, %v921
      %923 = vmatmul.bf16.gmra.mxu0 %v585
      %v924 = vpop.f32.mrf.mxu0
      %v925 = vadd.f32 %v341, %v924
      %v926 = vpop.f32.mrf.mxu0
      %v927 = vadd.f32 %v341, %v926
      %928 = vmatmul.bf16.gmra.mxu0 %v586
      %v929 = vpop.f32.mrf.mxu0
      %v930 = vadd.f32 %v341, %v929
      %v931 = vpop.f32.mrf.mxu0
      %v932 = vadd.f32 %v341, %v931
      %933 = vmatmul.bf16.gmra.mxu0 %v587
      %v934 = vpop.f32.mrf.mxu0
      %v935 = vadd.f32 %v341, %v934
      %v936 = vpop.f32.mrf.mxu0
      %v937 = vadd.f32 %v341, %v936
      %938 = vdwg.mxu0
      %v939 = vmax.f32 %v695, 0.0
      %v940 = vmax.f32 %v697, 0.0
      %v941 = vmax.f32 %v700, 0.0
      %v942 = vmax.f32 %v702, 0.0
      %v943 = vmax.f32 %v705, 0.0
      %v944 = vmax.f32 %v707, 0.0
      %v945 = vmax.f32 %v710, 0.0
      %v946 = vmax.f32 %v712, 0.0
      %v947 = vmax.f32 %v715, 0.0
      %v948 = vmax.f32 %v717, 0.0
      %v949 = vmax.f32 %v720, 0.0
      %v950 = vmax.f32 %v722, 0.0
      %v951 = vmax.f32 %v725, 0.0
      %v952 = vmax.f32 %v727, 0.0
      %v953 = vmax.f32 %v730, 0.0
      %v954 = vmax.f32 %v732, 0.0
      %v955 = vmax.f32 %v735, 0.0
      %v956 = vmax.f32 %v737, 0.0
      %v957 = vmax.f32 %v740, 0.0
      %v958 = vmax.f32 %v742, 0.0
      %v959 = vmax.f32 %v745, 0.0
      %v960 = vmax.f32 %v747, 0.0
      %v961 = vmax.f32 %v750, 0.0
      %v962 = vmax.f32 %v752, 0.0
      %v963 = vmax.f32 %v755, 0.0
      %v964 = vmax.f32 %v757, 0.0
      %v965 = vmax.f32 %v760, 0.0
      %v966 = vmax.f32 %v762, 0.0
      %v967 = vmax.f32 %v765, 0.0
      %v968 = vmax.f32 %v767, 0.0
      %v969 = vmax.f32 %v770, 0.0
      %v970 = vmax.f32 %v772, 0.0
      %v971 = vmax.f32 %v775, 0.0
      %v972 = vmax.f32 %v777, 0.0
      %v973 = vmax.f32 %v780, 0.0
      %v974 = vmax.f32 %v782, 0.0
      %v975 = vmax.f32 %v785, 0.0
      %v976 = vmax.f32 %v787, 0.0
      %v977 = vmax.f32 %v790, 0.0
      %v978 = vmax.f32 %v792, 0.0
      %v979 = vmax.f32 %v795, 0.0
      %v980 = vmax.f32 %v797, 0.0
      %v981 = vmax.f32 %v800, 0.0
      %v982 = vmax.f32 %v802, 0.0
      %v983 = vmax.f32 %v805, 0.0
      %v984 = vmax.f32 %v807, 0.0
      %v985 = vmax.f32 %v810, 0.0
      %v986 = vmax.f32 %v812, 0.0
      %v987 = vmax.f32 %v815, 0.0
      %v988 = vmax.f32 %v817, 0.0
      %v989 = vmax.f32 %v820, 0.0
      %v990 = vmax.f32 %v822, 0.0
      %v991 = vmax.f32 %v825, 0.0
      %v992 = vmax.f32 %v827, 0.0
      %v993 = vmax.f32 %v830, 0.0
      %v994 = vmax.f32 %v832, 0.0
      %v995 = vmax.f32 %v835, 0.0
      %v996 = vmax.f32 %v837, 0.0
      %v997 = vmax.f32 %v840, 0.0
      %v998 = vmax.f32 %v842, 0.0
      %v999 = vmax.f32 %v845, 0.0
      %v1000 = vmax.f32 %v847, 0.0
      %v1001 = vmax.f32 %v850, 0.0
      %v1002 = vmax.f32 %v852, 0.0
      %v1003 = vmax.f32 %v855, 0.0
      %v1004 = vmax.f32 %v857, 0.0
      %v1005 = vmax.f32 %v860, 0.0
      %v1006 = vmax.f32 %v862, 0.0
      %v1007 = vmax.f32 %v865, 0.0
      %v1008 = vmax.f32 %v867, 0.0
      %v1009 = vmax.f32 %v870, 0.0
      %v1010 = vmax.f32 %v872, 0.0
      %v1011 = vmax.f32 %v875, 0.0
      %v1012 = vmax.f32 %v877, 0.0
      %v1013 = vmax.f32 %v880, 0.0
      %v1014 = vmax.f32 %v882, 0.0
      %v1015 = vmax.f32 %v885, 0.0
      %v1016 = vmax.f32 %v887, 0.0
      %v1017 = vmax.f32 %v890, 0.0
      %v1018 = vmax.f32 %v892, 0.0
      %v1019 = vmax.f32 %v895, 0.0
      %v1020 = vmax.f32 %v897, 0.0
      %v1021 = vmax.f32 %v900, 0.0
      %v1022 = vmax.f32 %v902, 0.0
      %v1023 = vmax.f32 %v905, 0.0
      %v1024 = vmax.f32 %v907, 0.0
      %v1025 = vmax.f32 %v910, 0.0
      %v1026 = vmax.f32 %v912, 0.0
      %v1027 = vmax.f32 %v915, 0.0
      %v1028 = vmax.f32 %v917, 0.0
      %v1029 = vmax.f32 %v920, 0.0
      %v1030 = vmax.f32 %v922, 0.0
      %v1031 = vmax.f32 %v925, 0.0
      %v1032 = vmax.f32 %v927, 0.0
      %v1033 = vmax.f32 %v930, 0.0
      %v1034 = vmax.f32 %v932, 0.0
      %v1035 = vmax.f32 %v935, 0.0
      %v1036 = vmax.f32 %v937, 0.0
      %v1037 = vpack.c.bf16 %v939, %v939
      %v1038 = vpack.c.bf16 %v940, %v940
      %v1039 = vpack.c.bf16 %v941, %v941
      %v1040 = vpack.c.bf16 %v942, %v942
      %v1041 = vpack.c.bf16 %v943, %v943
      %v1042 = vpack.c.bf16 %v944, %v944
      %v1043 = vpack.c.bf16 %v945, %v945
      %v1044 = vpack.c.bf16 %v946, %v946
      %v1045 = vpack.c.bf16 %v947, %v947
      %v1046 = vpack.c.bf16 %v948, %v948
      %v1047 = vpack.c.bf16 %v949, %v949
      %v1048 = vpack.c.bf16 %v950, %v950
      %v1049 = vpack.c.bf16 %v951, %v951
      %v1050 = vpack.c.bf16 %v952, %v952
      %v1051 = vpack.c.bf16 %v953, %v953
      %v1052 = vpack.c.bf16 %v954, %v954
      %v1053 = vpack.c.bf16 %v955, %v955
      %v1054 = vpack.c.bf16 %v956, %v956
      %v1055 = vpack.c.bf16 %v957, %v957
      %v1056 = vpack.c.bf16 %v958, %v958
      %v1057 = vpack.c.bf16 %v959, %v959
      %v1058 = vpack.c.bf16 %v960, %v960
      %v1059 = vpack.c.bf16 %v961, %v961
      %v1060 = vpack.c.bf16 %v962, %v962
      %v1061 = vpack.c.bf16 %v963, %v963
      %v1062 = vpack.c.bf16 %v964, %v964
      %v1063 = vpack.c.bf16 %v965, %v965
      %v1064 = vpack.c.bf16 %v966, %v966
      %v1065 = vpack.c.bf16 %v967, %v967
      %v1066 = vpack.c.bf16 %v968, %v968
      %v1067 = vpack.c.bf16 %v969, %v969
      %v1068 = vpack.c.bf16 %v970, %v970
      %v1069 = vpack.c.bf16 %v971, %v971
      %v1070 = vpack.c.bf16 %v972, %v972
      %v1071 = vpack.c.bf16 %v973, %v973
      %v1072 = vpack.c.bf16 %v974, %v974
      %v1073 = vpack.c.bf16 %v975, %v975
      %v1074 = vpack.c.bf16 %v976, %v976
      %v1075 = vpack.c.bf16 %v977, %v977
      %v1076 = vpack.c.bf16 %v978, %v978
      %v1077 = vpack.c.bf16 %v979, %v979
      %v1078 = vpack.c.bf16 %v980, %v980
      %v1079 = vpack.c.bf16 %v981, %v981
      %v1080 = vpack.c.bf16 %v982, %v982
      %v1081 = vpack.c.bf16 %v983, %v983
      %v1082 = vpack.c.bf16 %v984, %v984
      %v1083 = vpack.c.bf16 %v985, %v985
      %v1084 = vpack.c.bf16 %v986, %v986
      %v1085 = vpack.c.bf16 %v987, %v987
      %v1086 = vpack.c.bf16 %v988, %v988
      %v1087 = vpack.c.bf16 %v989, %v989
      %v1088 = vpack.c.bf16 %v990, %v990
      %v1089 = vpack.c.bf16 %v991, %v991
      %v1090 = vpack.c.bf16 %v992, %v992
      %v1091 = vpack.c.bf16 %v993, %v993
      %v1092 = vpack.c.bf16 %v994, %v994
      %v1093 = vpack.c.bf16 %v995, %v995
      %v1094 = vpack.c.bf16 %v996, %v996
      %v1095 = vpack.c.bf16 %v997, %v997
      %v1096 = vpack.c.bf16 %v998, %v998
      %v1097 = vpack.c.bf16 %v999, %v999
      %v1098 = vpack.c.bf16 %v1000, %v1000
      %v1099 = vpack.c.bf16 %v1001, %v1001
      %v1100 = vpack.c.bf16 %v1002, %v1002
      %v1101 = vpack.c.bf16 %v1003, %v1003
      %v1102 = vpack.c.bf16 %v1004, %v1004
      %v1103 = vpack.c.bf16 %v1005, %v1005
      %v1104 = vpack.c.bf16 %v1006, %v1006
      %v1105 = vpack.c.bf16 %v1007, %v1007
      %v1106 = vpack.c.bf16 %v1008, %v1008
      %v1107 = vpack.c.bf16 %v1009, %v1009
      %v1108 = vpack.c.bf16 %v1010, %v1010
      %v1109 = vpack.c.bf16 %v1011, %v1011
      %v1110 = vpack.c.bf16 %v1012, %v1012
      %v1111 = vpack.c.bf16 %v1013, %v1013
      %v1112 = vpack.c.bf16 %v1014, %v1014
      %v1113 = vpack.c.bf16 %v1015, %v1015
      %v1114 = vpack.c.bf16 %v1016, %v1016
      %v1115 = vpack.c.bf16 %v1017, %v1017
      %v1116 = vpack.c.bf16 %v1018, %v1018
      %v1117 = vpack.c.bf16 %v1019, %v1019
      %v1118 = vpack.c.bf16 %v1020, %v1020
      %v1119 = vpack.c.bf16 %v1021, %v1021
      %v1120 = vpack.c.bf16 %v1022, %v1022
      %v1121 = vpack.c.bf16 %v1023, %v1023
      %v1122 = vpack.c.bf16 %v1024, %v1024
      %v1123 = vpack.c.bf16 %v1025, %v1025
      %v1124 = vpack.c.bf16 %v1026, %v1026
      %v1125 = vpack.c.bf16 %v1027, %v1027
      %v1126 = vpack.c.bf16 %v1028, %v1028
      %v1127 = vpack.c.bf16 %v1029, %v1029
      %v1128 = vpack.c.bf16 %v1030, %v1030
      %v1129 = vpack.c.bf16 %v1031, %v1031
      %v1130 = vpack.c.bf16 %v1032, %v1032
      %v1131 = vpack.c.bf16 %v1033, %v1033
      %v1132 = vpack.c.bf16 %v1034, %v1034
      %v1133 = vpack.c.bf16 %v1035, %v1035
      %v1134 = vpack.c.bf16 %v1036, %v1036
      %v1233 = vrot.slane %v1037, 2
      %v1234 = vrot.slane %v1038, 2
      %v1235 = vrot.slane %v1039, 2
      %v1236 = vrot.slane %v1040, 2
      %v1237 = vrot.slane %v1041, 2
      %v1238 = vrot.slane %v1042, 2
      %v1239 = vrot.slane %v1043, 2
      %v1240 = vrot.slane %v1044, 2
      %v1241 = vrot.slane %v1045, 2
      %v1242 = vrot.slane %v1046, 2
      %v1243 = vrot.slane %v1047, 2
      %v1244 = vrot.slane %v1048, 2
      %v1245 = vrot.slane %v1049, 2
      %v1246 = vrot.slane %v1050, 2
      %v1247 = vrot.slane %v1051, 2
      %v1248 = vrot.slane %v1052, 2
      %v1249 = vrot.slane %v1053, 2
      %v1250 = vrot.slane %v1054, 2
      %v1251 = vrot.slane %v1055, 2
      %v1252 = vrot.slane %v1056, 2
      %v1253 = vrot.slane %v1057, 2
      %v1254 = vrot.slane %v1058, 2
      %v1255 = vrot.slane %v1059, 2
      %v1256 = vrot.slane %v1060, 2
      %v1257 = vrot.slane %v1061, 2
      %v1258 = vrot.slane %v1062, 2
      %v1259 = vrot.slane %v1063, 2
      %v1260 = vrot.slane %v1064, 2
      %v1261 = vrot.slane %v1065, 2
      %v1262 = vrot.slane %v1066, 2
      %v1263 = vrot.slane %v1067, 2
      %v1264 = vrot.slane %v1068, 2
      %v1265 = vrot.slane %v1069, 2
      %v1266 = vrot.slane %v1070, 2
      %v1267 = vrot.slane %v1071, 2
      %v1268 = vrot.slane %v1072, 2
      %v1269 = vrot.slane %v1073, 2
      %v1270 = vrot.slane %v1074, 2
      %v1271 = vrot.slane %v1075, 2
      %v1272 = vrot.slane %v1076, 2
      %v1273 = vrot.slane %v1077, 2
      %v1274 = vrot.slane %v1078, 2
      %v1275 = vrot.slane %v1079, 2
      %v1276 = vrot.slane %v1080, 2
      %v1277 = vrot.slane %v1081, 2
      %v1278 = vrot.slane %v1082, 2
      %v1279 = vrot.slane %v1083, 2
      %v1280 = vrot.slane %v1084, 2
      %v1281 = vrot.slane %v1085, 2
      %v1282 = vrot.slane %v1086, 2
      %v1283 = vrot.slane %v1087, 2
      %v1284 = vrot.slane %v1088, 2
      %v1285 = vrot.slane %v1089, 2
      %v1286 = vrot.slane %v1090, 2
      %v1287 = vrot.slane %v1091, 2
      %v1288 = vrot.slane %v1092, 2
      %v1289 = vrot.slane %v1093, 2
      %v1290 = vrot.slane %v1094, 2
      %v1291 = vrot.slane %v1095, 2
      %v1292 = vrot.slane %v1096, 2
      %v1293 = vrot.slane %v1097, 2
      %v1294 = vrot.slane %v1098, 2
      %v1295 = vrot.slane %v1099, 2
      %v1296 = vrot.slane %v1100, 2
      %v1297 = vrot.slane %v1101, 2
      %v1298 = vrot.slane %v1102, 2
      %v1299 = vrot.slane %v1103, 2
      %v1300 = vrot.slane %v1104, 2
      %v1301 = vrot.slane %v1105, 2
      %v1302 = vrot.slane %v1106, 2
      %v1303 = vrot.slane %v1107, 2
      %v1304 = vrot.slane %v1108, 2
      %v1305 = vrot.slane %v1109, 2
      %v1306 = vrot.slane %v1110, 2
      %v1307 = vrot.slane %v1111, 2
      %v1308 = vrot.slane %v1112, 2
      %v1309 = vrot.slane %v1113, 2
      %v1310 = vrot.slane %v1114, 2
      %v1311 = vrot.slane %v1115, 2
      %v1312 = vrot.slane %v1116, 2
      %v1313 = vrot.slane %v1117, 2
      %v1314 = vrot.slane %v1118, 2
      %v1315 = vrot.slane %v1119, 2
      %v1316 = vrot.slane %v1120, 2
      %v1317 = vrot.slane %v1121, 2
      %v1318 = vrot.slane %v1122, 2
      %v1319 = vrot.slane %v1123, 2
      %v1320 = vrot.slane %v1124, 2
      %v1321 = vrot.slane %v1125, 2
      %v1322 = vrot.slane %v1126, 2
      %v1323 = vrot.slane %v1127, 2
      %v1324 = vrot.slane %v1128, 2
      %v1325 = vrot.slane %v1129, 2
      %v1326 = vrot.slane %v1130, 2
      %v1327 = vrot.slane %v1131, 2
      %v1328 = vrot.slane %v1132, 2
      %v1329 = vrot.slane %v1133, 2
      %v1330 = vrot.slane %v1134, 2
      %vm1331 = vcmask 1041408
      %v1334 = vsel %vm1331, %v1037, %v1233
      %vm1335 = vcmask 1043458
      %v1336 = vsel %vm1335, %v1037, %v1233
      %v1338 = vrot.slane %v1336, 2
      %v1341 = vsel %vm1331, %v1038, %v1234
      %v1342 = vsel %vm1335, %v1038, %v1234
      %v1344 = vrot.slane %v1342, 2
      %v1347 = vsel %vm1331, %v1039, %v1235
      %v1348 = vsel %vm1335, %v1039, %v1235
      %v1350 = vrot.slane %v1348, 2
      %v1353 = vsel %vm1331, %v1040, %v1236
      %v1354 = vsel %vm1335, %v1040, %v1236
      %v1356 = vrot.slane %v1354, 2
      %v1359 = vsel %vm1331, %v1041, %v1237
      %v1360 = vsel %vm1335, %v1041, %v1237
      %v1362 = vrot.slane %v1360, 2
      %v1365 = vsel %vm1331, %v1042, %v1238
      %v1366 = vsel %vm1335, %v1042, %v1238
      %v1368 = vrot.slane %v1366, 2
      %v1371 = vsel %vm1331, %v1043, %v1239
      %v1372 = vsel %vm1335, %v1043, %v1239
      %v1374 = vrot.slane %v1372, 2
      %v1377 = vsel %vm1331, %v1044, %v1240
      %v1378 = vsel %vm1335, %v1044, %v1240
      %v1380 = vrot.slane %v1378, 2
      %v1383 = vsel %vm1331, %v1045, %v1241
      %v1384 = vsel %vm1335, %v1045, %v1241
      %v1386 = vrot.slane %v1384, 2
      %v1389 = vsel %vm1331, %v1046, %v1242
      %v1390 = vsel %vm1335, %v1046, %v1242
      %v1392 = vrot.slane %v1390, 2
      %v1395 = vsel %vm1331, %v1047, %v1243
      %v1396 = vsel %vm1335, %v1047, %v1243
      %v1398 = vrot.slane %v1396, 2
      %v1401 = vsel %vm1331, %v1048, %v1244
      %v1402 = vsel %vm1335, %v1048, %v1244
      %v1404 = vrot.slane %v1402, 2
      %v1407 = vsel %vm1331, %v1049, %v1245
      %v1408 = vsel %vm1335, %v1049, %v1245
      %v1410 = vrot.slane %v1408, 2
      %v1413 = vsel %vm1331, %v1050, %v1246
      %v1414 = vsel %vm1335, %v1050, %v1246
      %v1416 = vrot.slane %v1414, 2
      %v1419 = vsel %vm1331, %v1051, %v1247
      %v1420 = vsel %vm1335, %v1051, %v1247
      %v1422 = vrot.slane %v1420, 2
      %v1425 = vsel %vm1331, %v1052, %v1248
      %v1426 = vsel %vm1335, %v1052, %v1248
      %v1428 = vrot.slane %v1426, 2
      %v1431 = vsel %vm1331, %v1053, %v1249
      %v1432 = vsel %vm1335, %v1053, %v1249
      %v1434 = vrot.slane %v1432, 2
      %v1437 = vsel %vm1331, %v1054, %v1250
      %v1438 = vsel %vm1335, %v1054, %v1250
      %v1440 = vrot.slane %v1438, 2
      %v1443 = vsel %vm1331, %v1055, %v1251
      %v1444 = vsel %vm1335, %v1055, %v1251
      %v1446 = vrot.slane %v1444, 2
      %v1449 = vsel %vm1331, %v1056, %v1252
      %v1450 = vsel %vm1335, %v1056, %v1252
      %v1452 = vrot.slane %v1450, 2
      %v1455 = vsel %vm1331, %v1057, %v1253
      %v1456 = vsel %vm1335, %v1057, %v1253
      %v1458 = vrot.slane %v1456, 2
      %v1461 = vsel %vm1331, %v1058, %v1254
      %v1462 = vsel %vm1335, %v1058, %v1254
      %v1464 = vrot.slane %v1462, 2
      %v1467 = vsel %vm1331, %v1059, %v1255
      %v1468 = vsel %vm1335, %v1059, %v1255
      %v1470 = vrot.slane %v1468, 2
      %v1473 = vsel %vm1331, %v1060, %v1256
      %v1474 = vsel %vm1335, %v1060, %v1256
      %v1476 = vrot.slane %v1474, 2
      %v1479 = vsel %vm1331, %v1061, %v1257
      %v1480 = vsel %vm1335, %v1061, %v1257
      %v1482 = vrot.slane %v1480, 2
      %v1485 = vsel %vm1331, %v1062, %v1258
      %v1486 = vsel %vm1335, %v1062, %v1258
      %v1488 = vrot.slane %v1486, 2
      %v1491 = vsel %vm1331, %v1063, %v1259
      %v1492 = vsel %vm1335, %v1063, %v1259
      %v1494 = vrot.slane %v1492, 2
      %v1497 = vsel %vm1331, %v1064, %v1260
      %v1498 = vsel %vm1335, %v1064, %v1260
      %v1500 = vrot.slane %v1498, 2
      %v1503 = vsel %vm1331, %v1065, %v1261
      %v1504 = vsel %vm1335, %v1065, %v1261
      %v1506 = vrot.slane %v1504, 2
      %v1509 = vsel %vm1331, %v1066, %v1262
      %v1510 = vsel %vm1335, %v1066, %v1262
      %v1512 = vrot.slane %v1510, 2
      %v1515 = vsel %vm1331, %v1067, %v1263
      %v1516 = vsel %vm1335, %v1067, %v1263
      %v1518 = vrot.slane %v1516, 2
      %v1521 = vsel %vm1331, %v1068, %v1264
      %v1522 = vsel %vm1335, %v1068, %v1264
      %v1524 = vrot.slane %v1522, 2
      %v1527 = vsel %vm1331, %v1069, %v1265
      %v1528 = vsel %vm1335, %v1069, %v1265
      %v1530 = vrot.slane %v1528, 2
      %v1533 = vsel %vm1331, %v1070, %v1266
      %v1534 = vsel %vm1335, %v1070, %v1266
      %v1536 = vrot.slane %v1534, 2
      %v1539 = vsel %vm1331, %v1071, %v1267
      %v1540 = vsel %vm1335, %v1071, %v1267
      %v1542 = vrot.slane %v1540, 2
      %v1545 = vsel %vm1331, %v1072, %v1268
      %v1546 = vsel %vm1335, %v1072, %v1268
      %v1548 = vrot.slane %v1546, 2
      %v1551 = vsel %vm1331, %v1073, %v1269
      %v1552 = vsel %vm1335, %v1073, %v1269
      %v1554 = vrot.slane %v1552, 2
      %v1557 = vsel %vm1331, %v1074, %v1270
      %v1558 = vsel %vm1335, %v1074, %v1270
      %v1560 = vrot.slane %v1558, 2
      %v1563 = vsel %vm1331, %v1075, %v1271
      %v1564 = vsel %vm1335, %v1075, %v1271
      %v1566 = vrot.slane %v1564, 2
      %v1569 = vsel %vm1331, %v1076, %v1272
      %v1570 = vsel %vm1335, %v1076, %v1272
      %v1572 = vrot.slane %v1570, 2
      %v1575 = vsel %vm1331, %v1077, %v1273
      %v1576 = vsel %vm1335, %v1077, %v1273
      %v1578 = vrot.slane %v1576, 2
      %v1581 = vsel %vm1331, %v1078, %v1274
      %v1582 = vsel %vm1335, %v1078, %v1274
      %v1584 = vrot.slane %v1582, 2
      %v1587 = vsel %vm1331, %v1079, %v1275
      %v1588 = vsel %vm1335, %v1079, %v1275
      %v1590 = vrot.slane %v1588, 2
      %v1593 = vsel %vm1331, %v1080, %v1276
      %v1594 = vsel %vm1335, %v1080, %v1276
      %v1596 = vrot.slane %v1594, 2
      %v1599 = vsel %vm1331, %v1081, %v1277
      %v1600 = vsel %vm1335, %v1081, %v1277
      %v1602 = vrot.slane %v1600, 2
      %v1605 = vsel %vm1331, %v1082, %v1278
      %v1606 = vsel %vm1335, %v1082, %v1278
      %v1608 = vrot.slane %v1606, 2
      %v1611 = vsel %vm1331, %v1083, %v1279
      %v1612 = vsel %vm1335, %v1083, %v1279
      %v1614 = vrot.slane %v1612, 2
      %v1617 = vsel %vm1331, %v1084, %v1280
      %v1618 = vsel %vm1335, %v1084, %v1280
      %v1620 = vrot.slane %v1618, 2
      %v1623 = vsel %vm1331, %v1085, %v1281
      %v1624 = vsel %vm1335, %v1085, %v1281
      %v1626 = vrot.slane %v1624, 2
      %v1629 = vsel %vm1331, %v1086, %v1282
      %v1630 = vsel %vm1335, %v1086, %v1282
      %v1632 = vrot.slane %v1630, 2
      %v1635 = vsel %vm1331, %v1087, %v1283
      %v1636 = vsel %vm1335, %v1087, %v1283
      %v1638 = vrot.slane %v1636, 2
      %v1641 = vsel %vm1331, %v1088, %v1284
      %v1642 = vsel %vm1335, %v1088, %v1284
      %v1644 = vrot.slane %v1642, 2
      %v1647 = vsel %vm1331, %v1089, %v1285
      %v1648 = vsel %vm1335, %v1089, %v1285
      %v1650 = vrot.slane %v1648, 2
      %v1653 = vsel %vm1331, %v1090, %v1286
      %v1654 = vsel %vm1335, %v1090, %v1286
      %v1656 = vrot.slane %v1654, 2
      %v1659 = vsel %vm1331, %v1091, %v1287
      %v1660 = vsel %vm1335, %v1091, %v1287
      %v1662 = vrot.slane %v1660, 2
      %v1665 = vsel %vm1331, %v1092, %v1288
      %v1666 = vsel %vm1335, %v1092, %v1288
      %v1668 = vrot.slane %v1666, 2
      %v1671 = vsel %vm1331, %v1093, %v1289
      %v1672 = vsel %vm1335, %v1093, %v1289
      %v1674 = vrot.slane %v1672, 2
      %v1677 = vsel %vm1331, %v1094, %v1290
      %v1678 = vsel %vm1335, %v1094, %v1290
      %v1680 = vrot.slane %v1678, 2
      %v1683 = vsel %vm1331, %v1095, %v1291
      %v1684 = vsel %vm1335, %v1095, %v1291
      %v1686 = vrot.slane %v1684, 2
      %v1689 = vsel %vm1331, %v1096, %v1292
      %v1690 = vsel %vm1335, %v1096, %v1292
      %v1692 = vrot.slane %v1690, 2
      %v1695 = vsel %vm1331, %v1097, %v1293
      %v1696 = vsel %vm1335, %v1097, %v1293
      %v1698 = vrot.slane %v1696, 2
      %v1701 = vsel %vm1331, %v1098, %v1294
      %v1702 = vsel %vm1335, %v1098, %v1294
      %v1704 = vrot.slane %v1702, 2
      %v1707 = vsel %vm1331, %v1099, %v1295
      %v1708 = vsel %vm1335, %v1099, %v1295
      %v1710 = vrot.slane %v1708, 2
      %v1713 = vsel %vm1331, %v1100, %v1296
      %v1714 = vsel %vm1335, %v1100, %v1296
      %v1716 = vrot.slane %v1714, 2
      %v1719 = vsel %vm1331, %v1101, %v1297
      %v1720 = vsel %vm1335, %v1101, %v1297
      %v1722 = vrot.slane %v1720, 2
      %v1725 = vsel %vm1331, %v1102, %v1298
      %v1726 = vsel %vm1335, %v1102, %v1298
      %v1728 = vrot.slane %v1726, 2
      %v1731 = vsel %vm1331, %v1103, %v1299
      %v1732 = vsel %vm1335, %v1103, %v1299
      %v1734 = vrot.slane %v1732, 2
      %v1737 = vsel %vm1331, %v1104, %v1300
      %v1738 = vsel %vm1335, %v1104, %v1300
      %v1740 = vrot.slane %v1738, 2
      %v1743 = vsel %vm1331, %v1105, %v1301
      %v1744 = vsel %vm1335, %v1105, %v1301
      %v1746 = vrot.slane %v1744, 2
      %v1749 = vsel %vm1331, %v1106, %v1302
      %v1750 = vsel %vm1335, %v1106, %v1302
      %v1752 = vrot.slane %v1750, 2
      %v1755 = vsel %vm1331, %v1107, %v1303
      %v1756 = vsel %vm1335, %v1107, %v1303
      %v1758 = vrot.slane %v1756, 2
      %v1761 = vsel %vm1331, %v1108, %v1304
      %v1762 = vsel %vm1335, %v1108, %v1304
      %v1764 = vrot.slane %v1762, 2
      %v1767 = vsel %vm1331, %v1109, %v1305
      %v1768 = vsel %vm1335, %v1109, %v1305
      %v1770 = vrot.slane %v1768, 2
      %v1773 = vsel %vm1331, %v1110, %v1306
      %v1774 = vsel %vm1335, %v1110, %v1306
      %v1776 = vrot.slane %v1774, 2
      %v1779 = vsel %vm1331, %v1111, %v1307
      %v1780 = vsel %vm1335, %v1111, %v1307
      %v1782 = vrot.slane %v1780, 2
      %v1785 = vsel %vm1331, %v1112, %v1308
      %v1786 = vsel %vm1335, %v1112, %v1308
      %v1788 = vrot.slane %v1786, 2
      %v1791 = vsel %vm1331, %v1113, %v1309
      %v1792 = vsel %vm1335, %v1113, %v1309
      %v1794 = vrot.slane %v1792, 2
      %v1797 = vsel %vm1331, %v1114, %v1310
      %v1798 = vsel %vm1335, %v1114, %v1310
      %v1800 = vrot.slane %v1798, 2
      %v1803 = vsel %vm1331, %v1115, %v1311
      %v1804 = vsel %vm1335, %v1115, %v1311
      %v1806 = vrot.slane %v1804, 2
      %v1809 = vsel %vm1331, %v1116, %v1312
      %v1810 = vsel %vm1335, %v1116, %v1312
      %v1812 = vrot.slane %v1810, 2
      %v1815 = vsel %vm1331, %v1117, %v1313
      %v1816 = vsel %vm1335, %v1117, %v1313
      %v1818 = vrot.slane %v1816, 2
      %v1821 = vsel %vm1331, %v1118, %v1314
      %v1822 = vsel %vm1335, %v1118, %v1314
      %v1824 = vrot.slane %v1822, 2
      %v1827 = vsel %vm1331, %v1119, %v1315
      %v1828 = vsel %vm1335, %v1119, %v1315
      %v1830 = vrot.slane %v1828, 2
      %v1833 = vsel %vm1331, %v1120, %v1316
      %v1834 = vsel %vm1335, %v1120, %v1316
      %v1836 = vrot.slane %v1834, 2
      %v1839 = vsel %vm1331, %v1121, %v1317
      %v1840 = vsel %vm1335, %v1121, %v1317
      %v1842 = vrot.slane %v1840, 2
      %v1845 = vsel %vm1331, %v1122, %v1318
      %v1846 = vsel %vm1335, %v1122, %v1318
      %v1848 = vrot.slane %v1846, 2
      %v1851 = vsel %vm1331, %v1123, %v1319
      %v1852 = vsel %vm1335, %v1123, %v1319
      %v1854 = vrot.slane %v1852, 2
      %v1857 = vsel %vm1331, %v1124, %v1320
      %v1858 = vsel %vm1335, %v1124, %v1320
      %v1860 = vrot.slane %v1858, 2
      %v1863 = vsel %vm1331, %v1125, %v1321
      %v1864 = vsel %vm1335, %v1125, %v1321
      %v1866 = vrot.slane %v1864, 2
      %v1869 = vsel %vm1331, %v1126, %v1322
      %v1870 = vsel %vm1335, %v1126, %v1322
      %v1872 = vrot.slane %v1870, 2
      %v1875 = vsel %vm1331, %v1127, %v1323
      %v1876 = vsel %vm1335, %v1127, %v1323
      %v1878 = vrot.slane %v1876, 2
      %v1881 = vsel %vm1331, %v1128, %v1324
      %v1882 = vsel %vm1335, %v1128, %v1324
      %v1884 = vrot.slane %v1882, 2
      %v1887 = vsel %vm1331, %v1129, %v1325
      %v1888 = vsel %vm1335, %v1129, %v1325
      %v1890 = vrot.slane %v1888, 2
      %v1893 = vsel %vm1331, %v1130, %v1326
      %v1894 = vsel %vm1335, %v1130, %v1326
      %v1896 = vrot.slane %v1894, 2
      %v1899 = vsel %vm1331, %v1131, %v1327
      %v1900 = vsel %vm1335, %v1131, %v1327
      %v1902 = vrot.slane %v1900, 2
      %v1905 = vsel %vm1331, %v1132, %v1328
      %v1906 = vsel %vm1335, %v1132, %v1328
      %v1908 = vrot.slane %v1906, 2
      %v1911 = vsel %vm1331, %v1133, %v1329
      %v1912 = vsel %vm1335, %v1133, %v1329
      %v1914 = vrot.slane %v1912, 2
      %v1917 = vsel %vm1331, %v1134, %v1330
      %v1918 = vsel %vm1335, %v1134, %v1330
      %v1920 = vrot.slane %v1918, 2
      %v2117 = vunpack.c.l.bf16 %v1334
      %v2118 = vunpack.c.l.bf16 %v1338
      %v2119 = vunpack.c.l.bf16 %v1341
      %v2120 = vunpack.c.l.bf16 %v1344
      %v2121 = vunpack.c.l.bf16 %v1347
      %v2122 = vunpack.c.l.bf16 %v1350
      %v2123 = vunpack.c.l.bf16 %v1353
      %v2124 = vunpack.c.l.bf16 %v1356
      %v2125 = vunpack.c.l.bf16 %v1359
      %v2126 = vunpack.c.l.bf16 %v1362
      %v2127 = vunpack.c.l.bf16 %v1365
      %v2128 = vunpack.c.l.bf16 %v1368
      %v2129 = vunpack.c.l.bf16 %v1371
      %v2130 = vunpack.c.l.bf16 %v1374
      %v2131 = vunpack.c.l.bf16 %v1377
      %v2132 = vunpack.c.l.bf16 %v1380
      %v2133 = vunpack.c.l.bf16 %v1383
      %v2134 = vunpack.c.l.bf16 %v1386
      %v2135 = vunpack.c.l.bf16 %v1389
      %v2136 = vunpack.c.l.bf16 %v1392
      %v2137 = vunpack.c.l.bf16 %v1395
      %v2138 = vunpack.c.l.bf16 %v1398
      %v2139 = vunpack.c.l.bf16 %v1401
      %v2140 = vunpack.c.l.bf16 %v1404
      %v2141 = vunpack.c.l.bf16 %v1407
      %v2142 = vunpack.c.l.bf16 %v1410
      %v2143 = vunpack.c.l.bf16 %v1413
      %v2144 = vunpack.c.l.bf16 %v1416
      %v2145 = vunpack.c.l.bf16 %v1419
      %v2146 = vunpack.c.l.bf16 %v1422
      %v2147 = vunpack.c.l.bf16 %v1425
      %v2148 = vunpack.c.l.bf16 %v1428
      %v2149 = vunpack.c.l.bf16 %v1431
      %v2150 = vunpack.c.l.bf16 %v1434
      %v2151 = vunpack.c.l.bf16 %v1437
      %v2152 = vunpack.c.l.bf16 %v1440
      %v2153 = vunpack.c.l.bf16 %v1443
      %v2154 = vunpack.c.l.bf16 %v1446
      %v2155 = vunpack.c.l.bf16 %v1449
      %v2156 = vunpack.c.l.bf16 %v1452
      %v2157 = vunpack.c.l.bf16 %v1455
      %v2158 = vunpack.c.l.bf16 %v1458
      %v2159 = vunpack.c.l.bf16 %v1461
      %v2160 = vunpack.c.l.bf16 %v1464
      %v2161 = vunpack.c.l.bf16 %v1467
      %v2162 = vunpack.c.l.bf16 %v1470
      %v2163 = vunpack.c.l.bf16 %v1473
      %v2164 = vunpack.c.l.bf16 %v1476
      %v2165 = vunpack.c.l.bf16 %v1479
      %v2166 = vunpack.c.l.bf16 %v1482
      %v2167 = vunpack.c.l.bf16 %v1485
      %v2168 = vunpack.c.l.bf16 %v1488
      %v2169 = vunpack.c.l.bf16 %v1491
      %v2170 = vunpack.c.l.bf16 %v1494
      %v2171 = vunpack.c.l.bf16 %v1497
      %v2172 = vunpack.c.l.bf16 %v1500
      %v2173 = vunpack.c.l.bf16 %v1503
      %v2174 = vunpack.c.l.bf16 %v1506
      %v2175 = vunpack.c.l.bf16 %v1509
      %v2176 = vunpack.c.l.bf16 %v1512
      %v2177 = vunpack.c.l.bf16 %v1515
      %v2178 = vunpack.c.l.bf16 %v1518
      %v2179 = vunpack.c.l.bf16 %v1521
      %v2180 = vunpack.c.l.bf16 %v1524
      %v2181 = vunpack.c.l.bf16 %v1527
      %v2182 = vunpack.c.l.bf16 %v1530
      %v2183 = vunpack.c.l.bf16 %v1533
      %v2184 = vunpack.c.l.bf16 %v1536
      %v2185 = vunpack.c.l.bf16 %v1539
      %v2186 = vunpack.c.l.bf16 %v1542
      %v2187 = vunpack.c.l.bf16 %v1545
      %v2188 = vunpack.c.l.bf16 %v1548
      %v2189 = vunpack.c.l.bf16 %v1551
      %v2190 = vunpack.c.l.bf16 %v1554
      %v2191 = vunpack.c.l.bf16 %v1557
      %v2192 = vunpack.c.l.bf16 %v1560
      %v2193 = vunpack.c.l.bf16 %v1563
      %v2194 = vunpack.c.l.bf16 %v1566
      %v2195 = vunpack.c.l.bf16 %v1569
      %v2196 = vunpack.c.l.bf16 %v1572
      %v2197 = vunpack.c.l.bf16 %v1575
      %v2198 = vunpack.c.l.bf16 %v1578
      %v2199 = vunpack.c.l.bf16 %v1581
      %v2200 = vunpack.c.l.bf16 %v1584
      %v2201 = vunpack.c.l.bf16 %v1587
      %v2202 = vunpack.c.l.bf16 %v1590
      %v2203 = vunpack.c.l.bf16 %v1593
      %v2204 = vunpack.c.l.bf16 %v1596
      %v2205 = vunpack.c.l.bf16 %v1599
      %v2206 = vunpack.c.l.bf16 %v1602
      %v2207 = vunpack.c.l.bf16 %v1605
      %v2208 = vunpack.c.l.bf16 %v1608
      %v2209 = vunpack.c.l.bf16 %v1611
      %v2210 = vunpack.c.l.bf16 %v1614
      %v2211 = vunpack.c.l.bf16 %v1617
      %v2212 = vunpack.c.l.bf16 %v1620
      %v2213 = vunpack.c.l.bf16 %v1623
      %v2214 = vunpack.c.l.bf16 %v1626
      %v2215 = vunpack.c.l.bf16 %v1629
      %v2216 = vunpack.c.l.bf16 %v1632
      %v2217 = vunpack.c.l.bf16 %v1635
      %v2218 = vunpack.c.l.bf16 %v1638
      %v2219 = vunpack.c.l.bf16 %v1641
      %v2220 = vunpack.c.l.bf16 %v1644
      %v2221 = vunpack.c.l.bf16 %v1647
      %v2222 = vunpack.c.l.bf16 %v1650
      %v2223 = vunpack.c.l.bf16 %v1653
      %v2224 = vunpack.c.l.bf16 %v1656
      %v2225 = vunpack.c.l.bf16 %v1659
      %v2226 = vunpack.c.l.bf16 %v1662
      %v2227 = vunpack.c.l.bf16 %v1665
      %v2228 = vunpack.c.l.bf16 %v1668
      %v2229 = vunpack.c.l.bf16 %v1671
      %v2230 = vunpack.c.l.bf16 %v1674
      %v2231 = vunpack.c.l.bf16 %v1677
      %v2232 = vunpack.c.l.bf16 %v1680
      %v2233 = vunpack.c.l.bf16 %v1683
      %v2234 = vunpack.c.l.bf16 %v1686
      %v2235 = vunpack.c.l.bf16 %v1689
      %v2236 = vunpack.c.l.bf16 %v1692
      %v2237 = vunpack.c.l.bf16 %v1695
      %v2238 = vunpack.c.l.bf16 %v1698
      %v2239 = vunpack.c.l.bf16 %v1701
      %v2240 = vunpack.c.l.bf16 %v1704
      %v2241 = vunpack.c.l.bf16 %v1707
      %v2242 = vunpack.c.l.bf16 %v1710
      %v2243 = vunpack.c.l.bf16 %v1713
      %v2244 = vunpack.c.l.bf16 %v1716
      %v2245 = vunpack.c.l.bf16 %v1719
      %v2246 = vunpack.c.l.bf16 %v1722
      %v2247 = vunpack.c.l.bf16 %v1725
      %v2248 = vunpack.c.l.bf16 %v1728
      %v2249 = vunpack.c.l.bf16 %v1731
      %v2250 = vunpack.c.l.bf16 %v1734
      %v2251 = vunpack.c.l.bf16 %v1737
      %v2252 = vunpack.c.l.bf16 %v1740
      %v2253 = vunpack.c.l.bf16 %v1743
      %v2254 = vunpack.c.l.bf16 %v1746
      %v2255 = vunpack.c.l.bf16 %v1749
      %v2256 = vunpack.c.l.bf16 %v1752
      %v2257 = vunpack.c.l.bf16 %v1755
      %v2258 = vunpack.c.l.bf16 %v1758
      %v2259 = vunpack.c.l.bf16 %v1761
      %v2260 = vunpack.c.l.bf16 %v1764
      %v2261 = vunpack.c.l.bf16 %v1767
      %v2262 = vunpack.c.l.bf16 %v1770
      %v2263 = vunpack.c.l.bf16 %v1773
      %v2264 = vunpack.c.l.bf16 %v1776
      %v2265 = vunpack.c.l.bf16 %v1779
      %v2266 = vunpack.c.l.bf16 %v1782
      %v2267 = vunpack.c.l.bf16 %v1785
      %v2268 = vunpack.c.l.bf16 %v1788
      %v2269 = vunpack.c.l.bf16 %v1791
      %v2270 = vunpack.c.l.bf16 %v1794
      %v2271 = vunpack.c.l.bf16 %v1797
      %v2272 = vunpack.c.l.bf16 %v1800
      %v2273 = vunpack.c.l.bf16 %v1803
      %v2274 = vunpack.c.l.bf16 %v1806
      %v2275 = vunpack.c.l.bf16 %v1809
      %v2276 = vunpack.c.l.bf16 %v1812
      %v2277 = vunpack.c.l.bf16 %v1815
      %v2278 = vunpack.c.l.bf16 %v1818
      %v2279 = vunpack.c.l.bf16 %v1821
      %v2280 = vunpack.c.l.bf16 %v1824
      %v2281 = vunpack.c.l.bf16 %v1827
      %v2282 = vunpack.c.l.bf16 %v1830
      %v2283 = vunpack.c.l.bf16 %v1833
      %v2284 = vunpack.c.l.bf16 %v1836
      %v2285 = vunpack.c.l.bf16 %v1839
      %v2286 = vunpack.c.l.bf16 %v1842
      %v2287 = vunpack.c.l.bf16 %v1845
      %v2288 = vunpack.c.l.bf16 %v1848
      %v2289 = vunpack.c.l.bf16 %v1851
      %v2290 = vunpack.c.l.bf16 %v1854
      %v2291 = vunpack.c.l.bf16 %v1857
      %v2292 = vunpack.c.l.bf16 %v1860
      %v2293 = vunpack.c.l.bf16 %v1863
      %v2294 = vunpack.c.l.bf16 %v1866
      %v2295 = vunpack.c.l.bf16 %v1869
      %v2296 = vunpack.c.l.bf16 %v1872
      %v2297 = vunpack.c.l.bf16 %v1875
      %v2298 = vunpack.c.l.bf16 %v1878
      %v2299 = vunpack.c.l.bf16 %v1881
      %v2300 = vunpack.c.l.bf16 %v1884
      %v2301 = vunpack.c.l.bf16 %v1887
      %v2302 = vunpack.c.l.bf16 %v1890
      %v2303 = vunpack.c.l.bf16 %v1893
      %v2304 = vunpack.c.l.bf16 %v1896
      %v2305 = vunpack.c.l.bf16 %v1899
      %v2306 = vunpack.c.l.bf16 %v1902
      %v2307 = vunpack.c.l.bf16 %v1905
      %v2308 = vunpack.c.l.bf16 %v1908
      %v2309 = vunpack.c.l.bf16 %v1911
      %v2310 = vunpack.c.l.bf16 %v1914
      %v2311 = vunpack.c.l.bf16 %v1917
      %v2312 = vunpack.c.l.bf16 %v1920
      %vm2313 = vcmask 1043456
      %v2314 = vsel %vm2313, %v2117, -inf
      %v2315 = vsel %vm2313, %v2166, -inf
      %v2316 = vmax.f32 %v2314, %v2315
      %v2317 = vsel %vm2313, %v2215, -inf
      %v2318 = vmax.f32 %v2316, %v2317
      %v2319 = vsel %vm2313, %v2264, -inf
      %v2320 = vmax.f32 %v2318, %v2319
      %v2321 = vsel %vm2313, %v2118, -inf
      %v2322 = vsel %vm2313, %v2167, -inf
      %v2323 = vmax.f32 %v2321, %v2322
      %v2324 = vsel %vm2313, %v2216, -inf
      %v2325 = vmax.f32 %v2323, %v2324
      %v2326 = vsel %vm2313, %v2265, -inf
      %v2327 = vmax.f32 %v2325, %v2326
      %v2328 = vsel %vm2313, %v2119, -inf
      %v2329 = vsel %vm2313, %v2168, -inf
      %v2330 = vmax.f32 %v2328, %v2329
      %v2331 = vsel %vm2313, %v2217, -inf
      %v2332 = vmax.f32 %v2330, %v2331
      %v2333 = vsel %vm2313, %v2266, -inf
      %v2334 = vmax.f32 %v2332, %v2333
      %v2335 = vsel %vm2313, %v2120, -inf
      %v2336 = vsel %vm2313, %v2169, -inf
      %v2337 = vmax.f32 %v2335, %v2336
      %v2338 = vsel %vm2313, %v2218, -inf
      %v2339 = vmax.f32 %v2337, %v2338
      %v2340 = vsel %vm2313, %v2267, -inf
      %v2341 = vmax.f32 %v2339, %v2340
      %v2342 = vsel %vm2313, %v2121, -inf
      %v2343 = vsel %vm2313, %v2170, -inf
      %v2344 = vmax.f32 %v2342, %v2343
      %v2345 = vsel %vm2313, %v2219, -inf
      %v2346 = vmax.f32 %v2344, %v2345
      %v2347 = vsel %vm2313, %v2268, -inf
      %v2348 = vmax.f32 %v2346, %v2347
      %v2349 = vsel %vm2313, %v2122, -inf
      %v2350 = vsel %vm2313, %v2171, -inf
      %v2351 = vmax.f32 %v2349, %v2350
      %v2352 = vsel %vm2313, %v2220, -inf
      %v2353 = vmax.f32 %v2351, %v2352
      %v2354 = vsel %vm2313, %v2269, -inf
      %v2355 = vmax.f32 %v2353, %v2354
      %v2356 = vsel %vm2313, %v2123, -inf
      %v2357 = vsel %vm2313, %v2172, -inf
      %v2358 = vmax.f32 %v2356, %v2357
      %v2359 = vsel %vm2313, %v2221, -inf
      %v2360 = vmax.f32 %v2358, %v2359
      %v2361 = vsel %vm2313, %v2270, -inf
      %v2362 = vmax.f32 %v2360, %v2361
      %v2363 = vsel %vm2313, %v2124, -inf
      %v2364 = vsel %vm2313, %v2173, -inf
      %v2365 = vmax.f32 %v2363, %v2364
      %v2366 = vsel %vm2313, %v2222, -inf
      %v2367 = vmax.f32 %v2365, %v2366
      %v2368 = vsel %vm2313, %v2271, -inf
      %v2369 = vmax.f32 %v2367, %v2368
      %v2370 = vsel %vm2313, %v2125, -inf
      %v2371 = vsel %vm2313, %v2174, -inf
      %v2372 = vmax.f32 %v2370, %v2371
      %v2373 = vsel %vm2313, %v2223, -inf
      %v2374 = vmax.f32 %v2372, %v2373
      %v2375 = vsel %vm2313, %v2272, -inf
      %v2376 = vmax.f32 %v2374, %v2375
      %v2377 = vsel %vm2313, %v2126, -inf
      %v2378 = vsel %vm2313, %v2175, -inf
      %v2379 = vmax.f32 %v2377, %v2378
      %v2380 = vsel %vm2313, %v2224, -inf
      %v2381 = vmax.f32 %v2379, %v2380
      %v2382 = vsel %vm2313, %v2273, -inf
      %v2383 = vmax.f32 %v2381, %v2382
      %v2384 = vsel %vm2313, %v2127, -inf
      %v2385 = vsel %vm2313, %v2176, -inf
      %v2386 = vmax.f32 %v2384, %v2385
      %v2387 = vsel %vm2313, %v2225, -inf
      %v2388 = vmax.f32 %v2386, %v2387
      %v2389 = vsel %vm2313, %v2274, -inf
      %v2390 = vmax.f32 %v2388, %v2389
      %v2391 = vsel %vm2313, %v2128, -inf
      %v2392 = vsel %vm2313, %v2177, -inf
      %v2393 = vmax.f32 %v2391, %v2392
      %v2394 = vsel %vm2313, %v2226, -inf
      %v2395 = vmax.f32 %v2393, %v2394
      %v2396 = vsel %vm2313, %v2275, -inf
      %v2397 = vmax.f32 %v2395, %v2396
      %v2398 = vsel %vm2313, %v2129, -inf
      %v2399 = vsel %vm2313, %v2178, -inf
      %v2400 = vmax.f32 %v2398, %v2399
      %v2401 = vsel %vm2313, %v2227, -inf
      %v2402 = vmax.f32 %v2400, %v2401
      %v2403 = vsel %vm2313, %v2276, -inf
      %v2404 = vmax.f32 %v2402, %v2403
      %v2405 = vsel %vm2313, %v2130, -inf
      %v2406 = vsel %vm2313, %v2179, -inf
      %v2407 = vmax.f32 %v2405, %v2406
      %v2408 = vsel %vm2313, %v2228, -inf
      %v2409 = vmax.f32 %v2407, %v2408
      %v2410 = vsel %vm2313, %v2277, -inf
      %v2411 = vmax.f32 %v2409, %v2410
      %v2412 = vsel %vm2313, %v2131, -inf
      %v2413 = vsel %vm2313, %v2180, -inf
      %v2414 = vmax.f32 %v2412, %v2413
      %v2415 = vsel %vm2313, %v2229, -inf
      %v2416 = vmax.f32 %v2414, %v2415
      %v2417 = vsel %vm2313, %v2278, -inf
      %v2418 = vmax.f32 %v2416, %v2417
      %v2419 = vsel %vm2313, %v2132, -inf
      %v2420 = vsel %vm2313, %v2181, -inf
      %v2421 = vmax.f32 %v2419, %v2420
      %v2422 = vsel %vm2313, %v2230, -inf
      %v2423 = vmax.f32 %v2421, %v2422
      %v2424 = vsel %vm2313, %v2279, -inf
      %v2425 = vmax.f32 %v2423, %v2424
      %v2426 = vsel %vm2313, %v2133, -inf
      %v2427 = vsel %vm2313, %v2182, -inf
      %v2428 = vmax.f32 %v2426, %v2427
      %v2429 = vsel %vm2313, %v2231, -inf
      %v2430 = vmax.f32 %v2428, %v2429
      %v2431 = vsel %vm2313, %v2280, -inf
      %v2432 = vmax.f32 %v2430, %v2431
      %v2433 = vsel %vm2313, %v2134, -inf
      %v2434 = vsel %vm2313, %v2183, -inf
      %v2435 = vmax.f32 %v2433, %v2434
      %v2436 = vsel %vm2313, %v2232, -inf
      %v2437 = vmax.f32 %v2435, %v2436
      %v2438 = vsel %vm2313, %v2281, -inf
      %v2439 = vmax.f32 %v2437, %v2438
      %v2440 = vsel %vm2313, %v2135, -inf
      %v2441 = vsel %vm2313, %v2184, -inf
      %v2442 = vmax.f32 %v2440, %v2441
      %v2443 = vsel %vm2313, %v2233, -inf
      %v2444 = vmax.f32 %v2442, %v2443
      %v2445 = vsel %vm2313, %v2282, -inf
      %v2446 = vmax.f32 %v2444, %v2445
      %v2447 = vsel %vm2313, %v2136, -inf
      %v2448 = vsel %vm2313, %v2185, -inf
      %v2449 = vmax.f32 %v2447, %v2448
      %v2450 = vsel %vm2313, %v2234, -inf
      %v2451 = vmax.f32 %v2449, %v2450
      %v2452 = vsel %vm2313, %v2283, -inf
      %v2453 = vmax.f32 %v2451, %v2452
      %v2454 = vsel %vm2313, %v2137, -inf
      %v2455 = vsel %vm2313, %v2186, -inf
      %v2456 = vmax.f32 %v2454, %v2455
      %v2457 = vsel %vm2313, %v2235, -inf
      %v2458 = vmax.f32 %v2456, %v2457
      %v2459 = vsel %vm2313, %v2284, -inf
      %v2460 = vmax.f32 %v2458, %v2459
      %v2461 = vsel %vm2313, %v2138, -inf
      %v2462 = vsel %vm2313, %v2187, -inf
      %v2463 = vmax.f32 %v2461, %v2462
      %v2464 = vsel %vm2313, %v2236, -inf
      %v2465 = vmax.f32 %v2463, %v2464
      %v2466 = vsel %vm2313, %v2285, -inf
      %v2467 = vmax.f32 %v2465, %v2466
      %v2468 = vsel %vm2313, %v2139, -inf
      %v2469 = vsel %vm2313, %v2188, -inf
      %v2470 = vmax.f32 %v2468, %v2469
      %v2471 = vsel %vm2313, %v2237, -inf
      %v2472 = vmax.f32 %v2470, %v2471
      %v2473 = vsel %vm2313, %v2286, -inf
      %v2474 = vmax.f32 %v2472, %v2473
      %v2475 = vsel %vm2313, %v2140, -inf
      %v2476 = vsel %vm2313, %v2189, -inf
      %v2477 = vmax.f32 %v2475, %v2476
      %v2478 = vsel %vm2313, %v2238, -inf
      %v2479 = vmax.f32 %v2477, %v2478
      %v2480 = vsel %vm2313, %v2287, -inf
      %v2481 = vmax.f32 %v2479, %v2480
      %v2482 = vsel %vm2313, %v2141, -inf
      %v2483 = vsel %vm2313, %v2190, -inf
      %v2484 = vmax.f32 %v2482, %v2483
      %v2485 = vsel %vm2313, %v2239, -inf
      %v2486 = vmax.f32 %v2484, %v2485
      %v2487 = vsel %vm2313, %v2288, -inf
      %v2488 = vmax.f32 %v2486, %v2487
      %v2489 = vsel %vm2313, %v2142, -inf
      %v2490 = vsel %vm2313, %v2191, -inf
      %v2491 = vmax.f32 %v2489, %v2490
      %v2492 = vsel %vm2313, %v2240, -inf
      %v2493 = vmax.f32 %v2491, %v2492
      %v2494 = vsel %vm2313, %v2289, -inf
      %v2495 = vmax.f32 %v2493, %v2494
      %v2496 = vsel %vm2313, %v2143, -inf
      %v2497 = vsel %vm2313, %v2192, -inf
      %v2498 = vmax.f32 %v2496, %v2497
      %v2499 = vsel %vm2313, %v2241, -inf
      %v2500 = vmax.f32 %v2498, %v2499
      %v2501 = vsel %vm2313, %v2290, -inf
      %v2502 = vmax.f32 %v2500, %v2501
      %v2503 = vsel %vm2313, %v2144, -inf
      %v2504 = vsel %vm2313, %v2193, -inf
      %v2505 = vmax.f32 %v2503, %v2504
      %v2506 = vsel %vm2313, %v2242, -inf
      %v2507 = vmax.f32 %v2505, %v2506
      %v2508 = vsel %vm2313, %v2291, -inf
      %v2509 = vmax.f32 %v2507, %v2508
      %v2510 = vsel %vm2313, %v2145, -inf
      %v2511 = vsel %vm2313, %v2194, -inf
      %v2512 = vmax.f32 %v2510, %v2511
      %v2513 = vsel %vm2313, %v2243, -inf
      %v2514 = vmax.f32 %v2512, %v2513
      %v2515 = vsel %vm2313, %v2292, -inf
      %v2516 = vmax.f32 %v2514, %v2515
      %v2517 = vsel %vm2313, %v2146, -inf
      %v2518 = vsel %vm2313, %v2195, -inf
      %v2519 = vmax.f32 %v2517, %v2518
      %v2520 = vsel %vm2313, %v2244, -inf
      %v2521 = vmax.f32 %v2519, %v2520
      %v2522 = vsel %vm2313, %v2293, -inf
      %v2523 = vmax.f32 %v2521, %v2522
      %v2524 = vsel %vm2313, %v2147, -inf
      %v2525 = vsel %vm2313, %v2196, -inf
      %v2526 = vmax.f32 %v2524, %v2525
      %v2527 = vsel %vm2313, %v2245, -inf
      %v2528 = vmax.f32 %v2526, %v2527
      %v2529 = vsel %vm2313, %v2294, -inf
      %v2530 = vmax.f32 %v2528, %v2529
      %v2531 = vsel %vm2313, %v2148, -inf
      %v2532 = vsel %vm2313, %v2197, -inf
      %v2533 = vmax.f32 %v2531, %v2532
      %v2534 = vsel %vm2313, %v2246, -inf
      %v2535 = vmax.f32 %v2533, %v2534
      %v2536 = vsel %vm2313, %v2295, -inf
      %v2537 = vmax.f32 %v2535, %v2536
      %v2538 = vsel %vm2313, %v2149, -inf
      %v2539 = vsel %vm2313, %v2198, -inf
      %v2540 = vmax.f32 %v2538, %v2539
      %v2541 = vsel %vm2313, %v2247, -inf
      %v2542 = vmax.f32 %v2540, %v2541
      %v2543 = vsel %vm2313, %v2296, -inf
      %v2544 = vmax.f32 %v2542, %v2543
      %v2545 = vsel %vm2313, %v2150, -inf
      %v2546 = vsel %vm2313, %v2199, -inf
      %v2547 = vmax.f32 %v2545, %v2546
      %v2548 = vsel %vm2313, %v2248, -inf
      %v2549 = vmax.f32 %v2547, %v2548
      %v2550 = vsel %vm2313, %v2297, -inf
      %v2551 = vmax.f32 %v2549, %v2550
      %v2552 = vsel %vm2313, %v2151, -inf
      %v2553 = vsel %vm2313, %v2200, -inf
      %v2554 = vmax.f32 %v2552, %v2553
      %v2555 = vsel %vm2313, %v2249, -inf
      %v2556 = vmax.f32 %v2554, %v2555
      %v2557 = vsel %vm2313, %v2298, -inf
      %v2558 = vmax.f32 %v2556, %v2557
      %v2559 = vsel %vm2313, %v2152, -inf
      %v2560 = vsel %vm2313, %v2201, -inf
      %v2561 = vmax.f32 %v2559, %v2560
      %v2562 = vsel %vm2313, %v2250, -inf
      %v2563 = vmax.f32 %v2561, %v2562
      %v2564 = vsel %vm2313, %v2299, -inf
      %v2565 = vmax.f32 %v2563, %v2564
      %v2566 = vsel %vm2313, %v2153, -inf
      %v2567 = vsel %vm2313, %v2202, -inf
      %v2568 = vmax.f32 %v2566, %v2567
      %v2569 = vsel %vm2313, %v2251, -inf
      %v2570 = vmax.f32 %v2568, %v2569
      %v2571 = vsel %vm2313, %v2300, -inf
      %v2572 = vmax.f32 %v2570, %v2571
      %v2573 = vsel %vm2313, %v2154, -inf
      %v2574 = vsel %vm2313, %v2203, -inf
      %v2575 = vmax.f32 %v2573, %v2574
      %v2576 = vsel %vm2313, %v2252, -inf
      %v2577 = vmax.f32 %v2575, %v2576
      %v2578 = vsel %vm2313, %v2301, -inf
      %v2579 = vmax.f32 %v2577, %v2578
      %v2580 = vsel %vm2313, %v2155, -inf
      %v2581 = vsel %vm2313, %v2204, -inf
      %v2582 = vmax.f32 %v2580, %v2581
      %v2583 = vsel %vm2313, %v2253, -inf
      %v2584 = vmax.f32 %v2582, %v2583
      %v2585 = vsel %vm2313, %v2302, -inf
      %v2586 = vmax.f32 %v2584, %v2585
      %v2587 = vsel %vm2313, %v2156, -inf
      %v2588 = vsel %vm2313, %v2205, -inf
      %v2589 = vmax.f32 %v2587, %v2588
      %v2590 = vsel %vm2313, %v2254, -inf
      %v2591 = vmax.f32 %v2589, %v2590
      %v2592 = vsel %vm2313, %v2303, -inf
      %v2593 = vmax.f32 %v2591, %v2592
      %v2594 = vsel %vm2313, %v2157, -inf
      %v2595 = vsel %vm2313, %v2206, -inf
      %v2596 = vmax.f32 %v2594, %v2595
      %v2597 = vsel %vm2313, %v2255, -inf
      %v2598 = vmax.f32 %v2596, %v2597
      %v2599 = vsel %vm2313, %v2304, -inf
      %v2600 = vmax.f32 %v2598, %v2599
      %v2601 = vsel %vm2313, %v2158, -inf
      %v2602 = vsel %vm2313, %v2207, -inf
      %v2603 = vmax.f32 %v2601, %v2602
      %v2604 = vsel %vm2313, %v2256, -inf
      %v2605 = vmax.f32 %v2603, %v2604
      %v2606 = vsel %vm2313, %v2305, -inf
      %v2607 = vmax.f32 %v2605, %v2606
      %v2608 = vsel %vm2313, %v2159, -inf
      %v2609 = vsel %vm2313, %v2208, -inf
      %v2610 = vmax.f32 %v2608, %v2609
      %v2611 = vsel %vm2313, %v2257, -inf
      %v2612 = vmax.f32 %v2610, %v2611
      %v2613 = vsel %vm2313, %v2306, -inf
      %v2614 = vmax.f32 %v2612, %v2613
      %v2615 = vsel %vm2313, %v2160, -inf
      %v2616 = vsel %vm2313, %v2209, -inf
      %v2617 = vmax.f32 %v2615, %v2616
      %v2618 = vsel %vm2313, %v2258, -inf
      %v2619 = vmax.f32 %v2617, %v2618
      %v2620 = vsel %vm2313, %v2307, -inf
      %v2621 = vmax.f32 %v2619, %v2620
      %v2622 = vsel %vm2313, %v2161, -inf
      %v2623 = vsel %vm2313, %v2210, -inf
      %v2624 = vmax.f32 %v2622, %v2623
      %v2625 = vsel %vm2313, %v2259, -inf
      %v2626 = vmax.f32 %v2624, %v2625
      %v2627 = vsel %vm2313, %v2308, -inf
      %v2628 = vmax.f32 %v2626, %v2627
      %v2629 = vsel %vm2313, %v2162, -inf
      %v2630 = vsel %vm2313, %v2211, -inf
      %v2631 = vmax.f32 %v2629, %v2630
      %v2632 = vsel %vm2313, %v2260, -inf
      %v2633 = vmax.f32 %v2631, %v2632
      %v2634 = vsel %vm2313, %v2309, -inf
      %v2635 = vmax.f32 %v2633, %v2634
      %v2636 = vsel %vm2313, %v2163, -inf
      %v2637 = vsel %vm2313, %v2212, -inf
      %v2638 = vmax.f32 %v2636, %v2637
      %v2639 = vsel %vm2313, %v2261, -inf
      %v2640 = vmax.f32 %v2638, %v2639
      %v2641 = vsel %vm2313, %v2310, -inf
      %v2642 = vmax.f32 %v2640, %v2641
      %v2643 = vsel %vm2313, %v2164, -inf
      %v2644 = vsel %vm2313, %v2213, -inf
      %v2645 = vmax.f32 %v2643, %v2644
      %v2646 = vsel %vm2313, %v2262, -inf
      %v2647 = vmax.f32 %v2645, %v2646
      %v2648 = vsel %vm2313, %v2311, -inf
      %v2649 = vmax.f32 %v2647, %v2648
      %v2650 = vsel %vm2313, %v2165, -inf
      %v2651 = vsel %vm2313, %v2214, -inf
      %v2652 = vmax.f32 %v2650, %v2651
      %v2653 = vsel %vm2313, %v2263, -inf
      %v2654 = vmax.f32 %v2652, %v2653
      %v2655 = vsel %vm2313, %v2312, -inf
      %v2656 = vmax.f32 %v2654, %v2655
      %2706 = vst [vmem:[#allocation1] ss:$2 sm:$0xff] %v2320
      %s2707 = scalar_lea.vmem [#allocation1], 1
      %2708 = vst [vmem:[%s2707] ss:$2 sm:$0xff] %v2327
      %s2709 = scalar_lea.vmem [#allocation1], 16
      %2710 = vst [vmem:[%s2709] ss:$2 sm:$0xff] %v2334
      %s2711 = scalar_lea.vmem [#allocation1], 17
      %2712 = vst [vmem:[%s2711] ss:$2 sm:$0xff] %v2341
      %s2713 = scalar_lea.vmem [#allocation1], 32
      %2714 = vst [vmem:[%s2713] ss:$2 sm:$0xff] %v2348
      %s2715 = scalar_lea.vmem [#allocation1], 33
      %2716 = vst [vmem:[%s2715] ss:$2 sm:$0xff] %v2355
      %s2717 = scalar_lea.vmem [#allocation1], 48
      %2718 = vst [vmem:[%s2717] ss:$2 sm:$0xff] %v2362
      %s2719 = scalar_lea.vmem [#allocation1], 49
      %2720 = vst [vmem:[%s2719] ss:$2 sm:$0xff] %v2369
      %v2721 = vld.sshfl [vmem:[#allocation1] sm:$0xff pattern:$0x75316420]
      %v2722 = vld.sshfl [vmem:[#allocation1 + $0x10] sm:$0xff pattern:$0x75316420]
      %v2723 = vld.sshfl [vmem:[#allocation1 + $0x20] sm:$0xff pattern:$0x75316420]
      %v2724 = vld.sshfl [vmem:[#allocation1 + $0x30] sm:$0xff pattern:$0x75316420]
      %2725 = vst [vmem:[#allocation1] ss:$2 sm:$0xff] %v2376
      %2726 = vst [vmem:[%s2707] ss:$2 sm:$0xff] %v2383
      %2727 = vst [vmem:[%s2709] ss:$2 sm:$0xff] %v2390
      %2728 = vst [vmem:[%s2711] ss:$2 sm:$0xff] %v2397
      %2729 = vst [vmem:[%s2713] ss:$2 sm:$0xff] %v2404
      %2730 = vst [vmem:[%s2715] ss:$2 sm:$0xff] %v2411
      %2731 = vst [vmem:[%s2717] ss:$2 sm:$0xff] %v2418
      %2732 = vst [vmem:[%s2719] ss:$2 sm:$0xff] %v2425
      %v2733 = vld.sshfl [vmem:[#allocation1] sm:$0xff pattern:$0x75316420]
      %v2734 = vld.sshfl [vmem:[#allocation1 + $0x10] sm:$0xff pattern:$0x75316420]
      %v2735 = vld.sshfl [vmem:[#allocation1 + $0x20] sm:$0xff pattern:$0x75316420]
      %v2736 = vld.sshfl [vmem:[#allocation1 + $0x30] sm:$0xff pattern:$0x75316420]
      %2737 = vst [vmem:[#allocation1] ss:$2 sm:$0xff] %v2432
      %2738 = vst [vmem:[%s2707] ss:$2 sm:$0xff] %v2439
      %2739 = vst [vmem:[%s2709] ss:$2 sm:$0xff] %v2446
      %2740 = vst [vmem:[%s2711] ss:$2 sm:$0xff] %v2453
      %2741 = vst [vmem:[%s2713] ss:$2 sm:$0xff] %v2460
      %2742 = vst [vmem:[%s2715] ss:$2 sm:$0xff] %v2467
      %2743 = vst [vmem:[%s2717] ss:$2 sm:$0xff] %v2474
      %2744 = vst [vmem:[%s2719] ss:$2 sm:$0xff] %v2481
      %v2745 = vld.sshfl [vmem:[#allocation1] sm:$0xff pattern:$0x75316420]
      %v2746 = vld.sshfl [vmem:[#allocation1 + $0x10] sm:$0xff pattern:$0x75316420]
      %v2747 = vld.sshfl [vmem:[#allocation1 + $0x20] sm:$0xff pattern:$0x75316420]
      %v2748 = vld.sshfl [vmem:[#allocation1 + $0x30] sm:$0xff pattern:$0x75316420]
      %2749 = vst [vmem:[#allocation1] ss:$2 sm:$0xff] %v2488
      %2750 = vst [vmem:[%s2707] ss:$2 sm:$0xff] %v2495
      %2751 = vst [vmem:[%s2709] ss:$2 sm:$0xff] %v2502
      %2752 = vst [vmem:[%s2711] ss:$2 sm:$0xff] %v2509
      %2753 = vst [vmem:[%s2713] ss:$2 sm:$0xff] %v2516
      %2754 = vst [vmem:[%s2715] ss:$2 sm:$0xff] %v2523
      %2755 = vst [vmem:[%s2717] ss:$2 sm:$0xff] %v2530
      %2756 = vst [vmem:[%s2719] ss:$2 sm:$0xff] %v2537
      %v2757 = vld.sshfl [vmem:[#allocation1] sm:$0xff pattern:$0x75316420]
      %v2758 = vld.sshfl [vmem:[#allocation1 + $0x10] sm:$0xff pattern:$0x75316420]
      %v2759 = vld.sshfl [vmem:[#allocation1 + $0x20] sm:$0xff pattern:$0x75316420]
      %v2760 = vld.sshfl [vmem:[#allocation1 + $0x30] sm:$0xff pattern:$0x75316420]
      %2761 = vst [vmem:[#allocation1] ss:$2 sm:$0xff] %v2544
      %2762 = vst [vmem:[%s2707] ss:$2 sm:$0xff] %v2551
      %2763 = vst [vmem:[%s2709] ss:$2 sm:$0xff] %v2558
      %2764 = vst [vmem:[%s2711] ss:$2 sm:$0xff] %v2565
      %2765 = vst [vmem:[%s2713] ss:$2 sm:$0xff] %v2572
      %2766 = vst [vmem:[%s2715] ss:$2 sm:$0xff] %v2579
      %2767 = vst [vmem:[%s2717] ss:$2 sm:$0xff] %v2586
      %2768 = vst [vmem:[%s2719] ss:$2 sm:$0xff] %v2593
      %v2769 = vld.sshfl [vmem:[#allocation1] sm:$0xff pattern:$0x75316420]
      %v2770 = vld.sshfl [vmem:[#allocation1 + $0x10] sm:$0xff pattern:$0x75316420]
      %v2771 = vld.sshfl [vmem:[#allocation1 + $0x20] sm:$0xff pattern:$0x75316420]
      %v2772 = vld.sshfl [vmem:[#allocation1 + $0x30] sm:$0xff pattern:$0x75316420]
      %2773 = vst [vmem:[#allocation1] ss:$2 sm:$0xff] %v2600
      %2774 = vst [vmem:[%s2707] ss:$2 sm:$0xff] %v2607
      %2775 = vst [vmem:[%s2709] ss:$2 sm:$0xff] %v2614
      %2776 = vst [vmem:[%s2711] ss:$2 sm:$0xff] %v2621
      %2777 = vst [vmem:[%s2713] ss:$2 sm:$0xff] %v2628
      %2778 = vst [vmem:[%s2715] ss:$2 sm:$0xff] %v2635
      %2779 = vst [vmem:[%s2717] ss:$2 sm:$0xff] %v2642
      %2780 = vst [vmem:[%s2719] ss:$2 sm:$0xff] %v2649
      %v2781 = vld.sshfl [vmem:[#allocation1] sm:$0xff pattern:$0x75316420]
      %v2782 = vld.sshfl [vmem:[#allocation1 + $0x10] sm:$0xff pattern:$0x75316420]
      %v2783 = vld.sshfl [vmem:[#allocation1 + $0x20] sm:$0xff pattern:$0x75316420]
      %v2784 = vld.sshfl [vmem:[#allocation1 + $0x30] sm:$0xff pattern:$0x75316420]
      %2785 = vst [vmem:[#allocation1] ss:$2 sm:$0xff] %v2656
      %v2786 = vld.sshfl [vmem:[#allocation1] sm:$0xff pattern:$0x75316420]
      %v2812 = vpack.c.bf16 %v2721, %v2721
      %v2813 = vpack.c.bf16 %v2722, %v2722
      %v2814 = vpack.c.bf16 %v2723, %v2723
      %v2815 = vpack.c.bf16 %v2724, %v2724
      %v2816 = vpack.c.bf16 %v2733, %v2733
      %v2817 = vpack.c.bf16 %v2734, %v2734
      %v2818 = vpack.c.bf16 %v2735, %v2735
      %v2819 = vpack.c.bf16 %v2736, %v2736
      %v2820 = vpack.c.bf16 %v2745, %v2745
      %v2821 = vpack.c.bf16 %v2746, %v2746
      %v2822 = vpack.c.bf16 %v2747, %v2747
      %v2823 = vpack.c.bf16 %v2748, %v2748
      %v2824 = vpack.c.bf16 %v2757, %v2757
      %v2825 = vpack.c.bf16 %v2758, %v2758
      %v2826 = vpack.c.bf16 %v2759, %v2759
      %v2827 = vpack.c.bf16 %v2760, %v2760
      %v2828 = vpack.c.bf16 %v2769, %v2769
      %v2829 = vpack.c.bf16 %v2770, %v2770
      %v2830 = vpack.c.bf16 %v2771, %v2771
      %v2831 = vpack.c.bf16 %v2772, %v2772
      %v2832 = vpack.c.bf16 %v2781, %v2781
      %v2833 = vpack.c.bf16 %v2782, %v2782
      %v2834 = vpack.c.bf16 %v2783, %v2783
      %v2835 = vpack.c.bf16 %v2784, %v2784
      %v2836 = vpack.c.bf16 %v2786, %v2786
      %v2862 = vrot.slane %v2812, 3
      %v2863 = vrot.slane %v2813, 3
      %v2864 = vrot.slane %v2814, 3
      %v2865 = vrot.slane %v2815, 3
      %v2866 = vrot.slane %v2816, 3
      %v2867 = vrot.slane %v2817, 3
      %v2868 = vrot.slane %v2818, 3
      %v2869 = vrot.slane %v2819, 3
      %v2870 = vrot.slane %v2820, 3
      %v2871 = vrot.slane %v2821, 3
      %v2872 = vrot.slane %v2822, 3
      %v2873 = vrot.slane %v2823, 3
      %v2874 = vrot.slane %v2824, 3
      %v2875 = vrot.slane %v2825, 3
      %v2876 = vrot.slane %v2826, 3
      %v2877 = vrot.slane %v2827, 3
      %v2878 = vrot.slane %v2828, 3
      %v2879 = vrot.slane %v2829, 3
      %v2880 = vrot.slane %v2830, 3
      %v2881 = vrot.slane %v2831, 3
      %v2882 = vrot.slane %v2832, 3
      %v2883 = vrot.slane %v2833, 3
      %v2884 = vrot.slane %v2834, 3
      %v2885 = vrot.slane %v2835, 3
      %v2886 = vrot.slane %v2836, 3
      %vm2887 = vcmask 1040384
      %v2890 = vsel %vm2887, %v2812, %v2862
      %vm2891 = vcmask 1041409
      %v2892 = vsel %vm2891, %v2812, %v2862
      %v2894 = vrot.slane %v2892, 1
      %vm2895 = vcmask 1042434
      %v2896 = vsel %vm2895, %v2812, %v2862
      %v2898 = vrot.slane %v2896, 2
      %vm2899 = vcmask 1043459
      %v2900 = vsel %vm2899, %v2812, %v2862
      %v2902 = vrot.slane %v2900, 3
      %v2905 = vsel %vm2887, %v2813, %v2863
      %v2906 = vsel %vm2891, %v2813, %v2863
      %v2908 = vrot.slane %v2906, 1
      %v2909 = vsel %vm2895, %v2813, %v2863
      %v2911 = vrot.slane %v2909, 2
      %v2912 = vsel %vm2899, %v2813, %v2863
      %v2914 = vrot.slane %v2912, 3
      %v2917 = vsel %vm2887, %v2814, %v2864
      %v2918 = vsel %vm2891, %v2814, %v2864
      %v2920 = vrot.slane %v2918, 1
      %v2921 = vsel %vm2895, %v2814, %v2864
      %v2923 = vrot.slane %v2921, 2
      %v2924 = vsel %vm2899, %v2814, %v2864
      %v2926 = vrot.slane %v2924, 3
      %v2929 = vsel %vm2887, %v2815, %v2865
      %v2930 = vsel %vm2891, %v2815, %v2865
      %v2932 = vrot.slane %v2930, 1
      %v2933 = vsel %vm2895, %v2815, %v2865
      %v2935 = vrot.slane %v2933, 2
      %v2936 = vsel %vm2899, %v2815, %v2865
      %v2938 = vrot.slane %v2936, 3
      %v2941 = vsel %vm2887, %v2816, %v2866
      %v2942 = vsel %vm2891, %v2816, %v2866
      %v2944 = vrot.slane %v2942, 1
      %v2945 = vsel %vm2895, %v2816, %v2866
      %v2947 = vrot.slane %v2945, 2
      %v2948 = vsel %vm2899, %v2816, %v2866
      %v2950 = vrot.slane %v2948, 3
      %v2953 = vsel %vm2887, %v2817, %v2867
      %v2954 = vsel %vm2891, %v2817, %v2867
      %v2956 = vrot.slane %v2954, 1
      %v2957 = vsel %vm2895, %v2817, %v2867
      %v2959 = vrot.slane %v2957, 2
      %v2960 = vsel %vm2899, %v2817, %v2867
      %v2962 = vrot.slane %v2960, 3
      %v2965 = vsel %vm2887, %v2818, %v2868
      %v2966 = vsel %vm2891, %v2818, %v2868
      %v2968 = vrot.slane %v2966, 1
      %v2969 = vsel %vm2895, %v2818, %v2868
      %v2971 = vrot.slane %v2969, 2
      %v2972 = vsel %vm2899, %v2818, %v2868
      %v2974 = vrot.slane %v2972, 3
      %v2977 = vsel %vm2887, %v2819, %v2869
      %v2978 = vsel %vm2891, %v2819, %v2869
      %v2980 = vrot.slane %v2978, 1
      %v2981 = vsel %vm2895, %v2819, %v2869
      %v2983 = vrot.slane %v2981, 2
      %v2984 = vsel %vm2899, %v2819, %v2869
      %v2986 = vrot.slane %v2984, 3
      %v2989 = vsel %vm2887, %v2820, %v2870
      %v2990 = vsel %vm2891, %v2820, %v2870
      %v2992 = vrot.slane %v2990, 1
      %v2993 = vsel %vm2895, %v2820, %v2870
      %v2995 = vrot.slane %v2993, 2
      %v2996 = vsel %vm2899, %v2820, %v2870
      %v2998 = vrot.slane %v2996, 3
      %v3001 = vsel %vm2887, %v2821, %v2871
      %v3002 = vsel %vm2891, %v2821, %v2871
      %v3004 = vrot.slane %v3002, 1
      %v3005 = vsel %vm2895, %v2821, %v2871
      %v3007 = vrot.slane %v3005, 2
      %v3008 = vsel %vm2899, %v2821, %v2871
      %v3010 = vrot.slane %v3008, 3
      %v3013 = vsel %vm2887, %v2822, %v2872
      %v3014 = vsel %vm2891, %v2822, %v2872
      %v3016 = vrot.slane %v3014, 1
      %v3017 = vsel %vm2895, %v2822, %v2872
      %v3019 = vrot.slane %v3017, 2
      %v3020 = vsel %vm2899, %v2822, %v2872
      %v3022 = vrot.slane %v3020, 3
      %v3025 = vsel %vm2887, %v2823, %v2873
      %v3026 = vsel %vm2891, %v2823, %v2873
      %v3028 = vrot.slane %v3026, 1
      %v3029 = vsel %vm2895, %v2823, %v2873
      %v3031 = vrot.slane %v3029, 2
      %v3032 = vsel %vm2899, %v2823, %v2873
      %v3034 = vrot.slane %v3032, 3
      %v3037 = vsel %vm2887, %v2824, %v2874
      %v3038 = vsel %vm2891, %v2824, %v2874
      %v3040 = vrot.slane %v3038, 1
      %v3041 = vsel %vm2895, %v2824, %v2874
      %v3043 = vrot.slane %v3041, 2
      %v3044 = vsel %vm2899, %v2824, %v2874
      %v3046 = vrot.slane %v3044, 3
      %v3049 = vsel %vm2887, %v2825, %v2875
      %v3050 = vsel %vm2891, %v2825, %v2875
      %v3052 = vrot.slane %v3050, 1
      %v3053 = vsel %vm2895, %v2825, %v2875
      %v3055 = vrot.slane %v3053, 2
      %v3056 = vsel %vm2899, %v2825, %v2875
      %v3058 = vrot.slane %v3056, 3
      %v3061 = vsel %vm2887, %v2826, %v2876
      %v3062 = vsel %vm2891, %v2826, %v2876
      %v3064 = vrot.slane %v3062, 1
      %v3065 = vsel %vm2895, %v2826, %v2876
      %v3067 = vrot.slane %v3065, 2
      %v3068 = vsel %vm2899, %v2826, %v2876
      %v3070 = vrot.slane %v3068, 3
      %v3073 = vsel %vm2887, %v2827, %v2877
      %v3074 = vsel %vm2891, %v2827, %v2877
      %v3076 = vrot.slane %v3074, 1
      %v3077 = vsel %vm2895, %v2827, %v2877
      %v3079 = vrot.slane %v3077, 2
      %v3080 = vsel %vm2899, %v2827, %v2877
      %v3082 = vrot.slane %v3080, 3
      %v3085 = vsel %vm2887, %v2828, %v2878
      %v3086 = vsel %vm2891, %v2828, %v2878
      %v3088 = vrot.slane %v3086, 1
      %v3089 = vsel %vm2895, %v2828, %v2878
      %v3091 = vrot.slane %v3089, 2
      %v3092 = vsel %vm2899, %v2828, %v2878
      %v3094 = vrot.slane %v3092, 3
      %v3097 = vsel %vm2887, %v2829, %v2879
      %v3098 = vsel %vm2891, %v2829, %v2879
      %v3100 = vrot.slane %v3098, 1
      %v3101 = vsel %vm2895, %v2829, %v2879
      %v3103 = vrot.slane %v3101, 2
      %v3104 = vsel %vm2899, %v2829, %v2879
      %v3106 = vrot.slane %v3104, 3
      %v3109 = vsel %vm2887, %v2830, %v2880
      %v3110 = vsel %vm2891, %v2830, %v2880
      %v3112 = vrot.slane %v3110, 1
      %v3113 = vsel %vm2895, %v2830, %v2880
      %v3115 = vrot.slane %v3113, 2
      %v3116 = vsel %vm2899, %v2830, %v2880
      %v3118 = vrot.slane %v3116, 3
      %v3121 = vsel %vm2887, %v2831, %v2881
      %v3122 = vsel %vm2891, %v2831, %v2881
      %v3124 = vrot.slane %v3122, 1
      %v3125 = vsel %vm2895, %v2831, %v2881
      %v3127 = vrot.slane %v3125, 2
      %v3128 = vsel %vm2899, %v2831, %v2881
      %v3130 = vrot.slane %v3128, 3
      %v3133 = vsel %vm2887, %v2832, %v2882
      %v3134 = vsel %vm2891, %v2832, %v2882
      %v3136 = vrot.slane %v3134, 1
      %v3137 = vsel %vm2895, %v2832, %v2882
      %v3139 = vrot.slane %v3137, 2
      %v3140 = vsel %vm2899, %v2832, %v2882
      %v3142 = vrot.slane %v3140, 3
      %v3145 = vsel %vm2887, %v2833, %v2883
      %v3146 = vsel %vm2891, %v2833, %v2883
      %v3148 = vrot.slane %v3146, 1
      %v3149 = vsel %vm2895, %v2833, %v2883
      %v3151 = vrot.slane %v3149, 2
      %v3152 = vsel %vm2899, %v2833, %v2883
      %v3154 = vrot.slane %v3152, 3
      %v3157 = vsel %vm2887, %v2834, %v2884
      %v3158 = vsel %vm2891, %v2834, %v2884
      %v3160 = vrot.slane %v3158, 1
      %v3161 = vsel %vm2895, %v2834, %v2884
      %v3163 = vrot.slane %v3161, 2
      %v3164 = vsel %vm2899, %v2834, %v2884
      %v3166 = vrot.slane %v3164, 3
      %v3169 = vsel %vm2887, %v2835, %v2885
      %v3170 = vsel %vm2891, %v2835, %v2885
      %v3172 = vrot.slane %v3170, 1
      %v3173 = vsel %vm2895, %v2835, %v2885
      %v3175 = vrot.slane %v3173, 2
      %v3176 = vsel %vm2899, %v2835, %v2885
      %v3178 = vrot.slane %v3176, 3
      %v3181 = vsel %vm2887, %v2836, %v2886
      %v3182 = vsel %vm2891, %v2836, %v2886
      %v3184 = vrot.slane %v3182, 1
      %3185 = vst [vmem:[#allocation1] ss:$9 sm:$0xff] %v2890
      %s3187 = scalar_lea.vmem [#allocation1], 1
      %3188 = vst [vmem:[%s3187] ss:$9 sm:$0xff] %v2894
      %s3190 = scalar_lea.vmem [#allocation1], 2
      %3191 = vst [vmem:[%s3190] ss:$9 sm:$0xff] %v2898
      %s3193 = scalar_lea.vmem [#allocation1], 3
      %3194 = vst [vmem:[%s3193] ss:$9 sm:$0xff] %v2902
      %s3195 = scalar_lea.vmem [#allocation1], 4
      %3196 = vst [vmem:[%s3195] ss:$9 sm:$0xff] %v2905
      %v3197 = vld [vmem:[#allocation1] sm:$0xff]
      %3199 = vst [vmem:[#allocation1] ss:$9 sm:$0xff] %v2914
      %3200 = vst [vmem:[%s3187] ss:$9 sm:$0xff] %v2917
      %3202 = vst [vmem:[%s3190] ss:$9 sm:$0xff] %v2920
      %3204 = vst [vmem:[%s3193] ss:$9 sm:$0xff] %v2923
      %3206 = vst [vmem:[%s3195] ss:$9 sm:$0xff] %v2926
      %v3207 = vld [vmem:[#allocation1] sm:$0xff]
      %3209 = vst [vmem:[#allocation1] ss:$9 sm:$0xff] %v2935
      %3211 = vst [vmem:[%s3187] ss:$9 sm:$0xff] %v2938
      %3212 = vst [vmem:[%s3190] ss:$9 sm:$0xff] %v2941
      %3214 = vst [vmem:[%s3193] ss:$9 sm:$0xff] %v2944
      %3216 = vst [vmem:[%s3195] ss:$9 sm:$0xff] %v2947
      %v3217 = vld [vmem:[#allocation1] sm:$0xff]
      %3219 = vst [vmem:[#allocation1] ss:$9 sm:$0xff] %v2956
      %3221 = vst [vmem:[%s3187] ss:$9 sm:$0xff] %v2959
      %3223 = vst [vmem:[%s3190] ss:$9 sm:$0xff] %v2962
      %3224 = vst [vmem:[%s3193] ss:$9 sm:$0xff] %v2965
      %3226 = vst [vmem:[%s3195] ss:$9 sm:$0xff] %v2968
      %v3227 = vld [vmem:[#allocation1] sm:$0xff]
      %3228 = vst [vmem:[#allocation1] ss:$9 sm:$0xff] %v2977
      %3230 = vst [vmem:[%s3187] ss:$9 sm:$0xff] %v2980
      %3232 = vst [vmem:[%s3190] ss:$9 sm:$0xff] %v2983
      %3234 = vst [vmem:[%s3193] ss:$9 sm:$0xff] %v2986
      %3235 = vst [vmem:[%s3195] ss:$9 sm:$0xff] %v2989
      %v3236 = vld [vmem:[#allocation1] sm:$0xff]
      %3238 = vst [vmem:[#allocation1] ss:$9 sm:$0xff] %v2998
      %3239 = vst [vmem:[%s3187] ss:$9 sm:$0xff] %v3001
      %3241 = vst [vmem:[%s3190] ss:$9 sm:$0xff] %v3004
      %3243 = vst [vmem:[%s3193] ss:$9 sm:$0xff] %v3007
      %3245 = vst [vmem:[%s3195] ss:$9 sm:$0xff] %v3010
      %v3246 = vld [vmem:[#allocation1] sm:$0xff]
      %3248 = vst [vmem:[#allocation1] ss:$9 sm:$0xff] %v3019
      %3250 = vst [vmem:[%s3187] ss:$9 sm:$0xff] %v3022
      %3251 = vst [vmem:[%s3190] ss:$9 sm:$0xff] %v3025
      %3253 = vst [vmem:[%s3193] ss:$9 sm:$0xff] %v3028
      %3255 = vst [vmem:[%s3195] ss:$9 sm:$0xff] %v3031
      %v3256 = vld [vmem:[#allocation1] sm:$0xff]
      %3258 = vst [vmem:[#allocation1] ss:$9 sm:$0xff] %v3040
      %3260 = vst [vmem:[%s3187] ss:$9 sm:$0xff] %v3043
      %3262 = vst [vmem:[%s3190] ss:$9 sm:$0xff] %v3046
      %3263 = vst [vmem:[%s3193] ss:$9 sm:$0xff] %v3049
      %3265 = vst [vmem:[%s3195] ss:$9 sm:$0xff] %v3052
      %v3266 = vld [vmem:[#allocation1] sm:$0xff]
      %3267 = vst [vmem:[#allocation1] ss:$9 sm:$0xff] %v3061
      %3269 = vst [vmem:[%s3187] ss:$9 sm:$0xff] %v3064
      %3271 = vst [vmem:[%s3190] ss:$9 sm:$0xff] %v3067
      %3273 = vst [vmem:[%s3193] ss:$9 sm:$0xff] %v3070
      %3274 = vst [vmem:[%s3195] ss:$9 sm:$0xff] %v3073
      %v3275 = vld [vmem:[#allocation1] sm:$0xff]
      %3277 = vst [vmem:[#allocation1] ss:$9 sm:$0xff] %v3082
      %3278 = vst [vmem:[%s3187] ss:$9 sm:$0xff] %v3085
      %3280 = vst [vmem:[%s3190] ss:$9 sm:$0xff] %v3088
      %3282 = vst [vmem:[%s3193] ss:$9 sm:$0xff] %v3091
      %3284 = vst [vmem:[%s3195] ss:$9 sm:$0xff] %v3094
      %v3285 = vld [vmem:[#allocation1] sm:$0xff]
      %3286 = vst [vmem:[#allocation1] ss:$9 sm:$0xff] %v2890
      %s3287 = scalar_lea.vmem [#allocation1], 1
      %3288 = vst [vmem:[%s3287] ss:$9 sm:$0xff] %v2894
      %s3289 = scalar_lea.vmem [#allocation1], 2
      %3290 = vst [vmem:[%s3289] ss:$9 sm:$0xff] %v2898
      %s3291 = scalar_lea.vmem [#allocation1], 3
      %3292 = vst [vmem:[%s3291] ss:$9 sm:$0xff] %v2902
      %s3293 = scalar_lea.vmem [#allocation1], 4
      %3294 = vst [vmem:[%s3293] ss:$9 sm:$0xff] %v2905
      %s3296 = scalar_lea.vmem [#allocation1], 5
      %3297 = vst [vmem:[%s3296] ss:$9 sm:$0xff] %v2908
      %v3298 = vld [vmem:[#allocation1] sm:$0xff]
      %3299 = vst [vmem:[#allocation1] ss:$9 sm:$0xff] %v2914
      %3300 = vst [vmem:[%s3287] ss:$9 sm:$0xff] %v2917
      %3301 = vst [vmem:[%s3289] ss:$9 sm:$0xff] %v2920
      %3302 = vst [vmem:[%s3291] ss:$9 sm:$0xff] %v2923
      %3303 = vst [vmem:[%s3293] ss:$9 sm:$0xff] %v2926
      %3304 = vst [vmem:[%s3296] ss:$9 sm:$0xff] %v2929
      %v3305 = vld [vmem:[#allocation1] sm:$0xff]
      %3306 = vst [vmem:[#allocation1] ss:$9 sm:$0xff] %v2935
      %3307 = vst [vmem:[%s3287] ss:$9 sm:$0xff] %v2938
      %3308 = vst [vmem:[%s3289] ss:$9 sm:$0xff] %v2941
      %3309 = vst [vmem:[%s3291] ss:$9 sm:$0xff] %v2944
      %3310 = vst [vmem:[%s3293] ss:$9 sm:$0xff] %v2947
      %3312 = vst [vmem:[%s3296] ss:$9 sm:$0xff] %v2950
      %v3313 = vld [vmem:[#allocation1] sm:$0xff]
      %3314 = vst [vmem:[#allocation1] ss:$9 sm:$0xff] %v2956
      %3315 = vst [vmem:[%s3287] ss:$9 sm:$0xff] %v2959
      %3316 = vst [vmem:[%s3289] ss:$9 sm:$0xff] %v2962
      %3317 = vst [vmem:[%s3291] ss:$9 sm:$0xff] %v2965
      %3318 = vst [vmem:[%s3293] ss:$9 sm:$0xff] %v2968
      %3320 = vst [vmem:[%s3296] ss:$9 sm:$0xff] %v2971
      %v3321 = vld [vmem:[#allocation1] sm:$0xff]
      %3322 = vst [vmem:[#allocation1] ss:$9 sm:$0xff] %v2977
      %3323 = vst [vmem:[%s3287] ss:$9 sm:$0xff] %v2980
      %3324 = vst [vmem:[%s3289] ss:$9 sm:$0xff] %v2983
      %3325 = vst [vmem:[%s3291] ss:$9 sm:$0xff] %v2986
      %3326 = vst [vmem:[%s3293] ss:$9 sm:$0xff] %v2989
      %3328 = vst [vmem:[%s3296] ss:$9 sm:$0xff] %v2992
      %v3329 = vld [vmem:[#allocation1] sm:$0xff]
      %3330 = vst [vmem:[#allocation1] ss:$9 sm:$0xff] %v2998
      %3331 = vst [vmem:[%s3287] ss:$9 sm:$0xff] %v3001
      %3332 = vst [vmem:[%s3289] ss:$9 sm:$0xff] %v3004
      %3333 = vst [vmem:[%s3291] ss:$9 sm:$0xff] %v3007
      %3334 = vst [vmem:[%s3293] ss:$9 sm:$0xff] %v3010
      %3335 = vst [vmem:[%s3296] ss:$9 sm:$0xff] %v3013
      %v3336 = vld [vmem:[#allocation1] sm:$0xff]
      %3337 = vst [vmem:[#allocation1] ss:$9 sm:$0xff] %v3019
      %3338 = vst [vmem:[%s3287] ss:$9 sm:$0xff] %v3022
      %3339 = vst [vmem:[%s3289] ss:$9 sm:$0xff] %v3025
      %3340 = vst [vmem:[%s3291] ss:$9 sm:$0xff] %v3028
      %3341 = vst [vmem:[%s3293] ss:$9 sm:$0xff] %v3031
      %3343 = vst [vmem:[%s3296] ss:$9 sm:$0xff] %v3034
      %v3344 = vld [vmem:[#allocation1] sm:$0xff]
      %3345 = vst [vmem:[#allocation1] ss:$9 sm:$0xff] %v3040
      %3346 = vst [vmem:[%s3287] ss:$9 sm:$0xff] %v3043
      %3347 = vst [vmem:[%s3289] ss:$9 sm:$0xff] %v3046
      %3348 = vst [vmem:[%s3291] ss:$9 sm:$0xff] %v3049
      %3349 = vst [vmem:[%s3293] ss:$9 sm:$0xff] %v3052
      %3351 = vst [vmem:[%s3296] ss:$9 sm:$0xff] %v3055
      %v3352 = vld [vmem:[#allocation1] sm:$0xff]
      %3353 = vst [vmem:[#allocation1] ss:$9 sm:$0xff] %v3061
      %3354 = vst [vmem:[%s3287] ss:$9 sm:$0xff] %v3064
      %3355 = vst [vmem:[%s3289] ss:$9 sm:$0xff] %v3067
      %3356 = vst [vmem:[%s3291] ss:$9 sm:$0xff] %v3070
      %3357 = vst [vmem:[%s3293] ss:$9 sm:$0xff] %v3073
      %3359 = vst [vmem:[%s3296] ss:$9 sm:$0xff] %v3076
      %v3360 = vld [vmem:[#allocation1] sm:$0xff]
      %3361 = vst [vmem:[#allocation1] ss:$9 sm:$0xff] %v3082
      %3362 = vst [vmem:[%s3287] ss:$9 sm:$0xff] %v3085
      %3363 = vst [vmem:[%s3289] ss:$9 sm:$0xff] %v3088
      %3364 = vst [vmem:[%s3291] ss:$9 sm:$0xff] %v3091
      %3365 = vst [vmem:[%s3293] ss:$9 sm:$0xff] %v3094
      %3366 = vst [vmem:[%s3296] ss:$9 sm:$0xff] %v3097
      %v3367 = vld [vmem:[#allocation1] sm:$0xff]
      %v3368 = vshrl.u32 %v3298, 16
      %v3370 = vshll.u32 %v3298, 16
      %v3372 = vrot.slane %v3370, 1
      %v3373 = vor.u32 %v3368, %v3372
      %v3374 = vshrl.u32 %v3305, 16
      %v3376 = vshll.u32 %v3305, 16
      %v3378 = vrot.slane %v3376, 1
      %v3379 = vor.u32 %v3374, %v3378
      %v3380 = vshrl.u32 %v3313, 16
      %v3382 = vshll.u32 %v3313, 16
      %v3384 = vrot.slane %v3382, 1
      %v3385 = vor.u32 %v3380, %v3384
      %v3386 = vshrl.u32 %v3321, 16
      %v3388 = vshll.u32 %v3321, 16
      %v3390 = vrot.slane %v3388, 1
      %v3391 = vor.u32 %v3386, %v3390
      %v3392 = vshrl.u32 %v3329, 16
      %v3394 = vshll.u32 %v3329, 16
      %v3396 = vrot.slane %v3394, 1
      %v3397 = vor.u32 %v3392, %v3396
      %v3398 = vshrl.u32 %v3336, 16
      %v3400 = vshll.u32 %v3336, 16
      %v3402 = vrot.slane %v3400, 1
      %v3403 = vor.u32 %v3398, %v3402
      %v3404 = vshrl.u32 %v3344, 16
      %v3406 = vshll.u32 %v3344, 16
      %v3408 = vrot.slane %v3406, 1
      %v3409 = vor.u32 %v3404, %v3408
      %v3410 = vshrl.u32 %v3352, 16
      %v3412 = vshll.u32 %v3352, 16
      %v3414 = vrot.slane %v3412, 1
      %v3415 = vor.u32 %v3410, %v3414
      %v3416 = vshrl.u32 %v3360, 16
      %v3418 = vshll.u32 %v3360, 16
      %v3420 = vrot.slane %v3418, 1
      %v3421 = vor.u32 %v3416, %v3420
      %v3422 = vshrl.u32 %v3367, 16
      %v3424 = vshll.u32 %v3367, 16
      %v3426 = vrot.slane %v3424, 1
      %v3427 = vor.u32 %v3422, %v3426
      %3428 = vst [vmem:[#allocation1] ss:$9 sm:$0xff] %v2894
      %s3429 = scalar_lea.vmem [#allocation1], 1
      %3430 = vst [vmem:[%s3429] ss:$9 sm:$0xff] %v2898
      %s3431 = scalar_lea.vmem [#allocation1], 2
      %3432 = vst [vmem:[%s3431] ss:$9 sm:$0xff] %v2902
      %s3433 = scalar_lea.vmem [#allocation1], 3
      %3434 = vst [vmem:[%s3433] ss:$9 sm:$0xff] %v2905
      %s3435 = scalar_lea.vmem [#allocation1], 4
      %3436 = vst [vmem:[%s3435] ss:$9 sm:$0xff] %v2908
      %v3437 = vld [vmem:[#allocation1] sm:$0xff]
      %3439 = vst [vmem:[#allocation1] ss:$9 sm:$0xff] %v2917
      %3440 = vst [vmem:[%s3429] ss:$9 sm:$0xff] %v2920
      %3441 = vst [vmem:[%s3431] ss:$9 sm:$0xff] %v2923
      %3442 = vst [vmem:[%s3433] ss:$9 sm:$0xff] %v2926
      %3443 = vst [vmem:[%s3435] ss:$9 sm:$0xff] %v2929
      %v3444 = vld [vmem:[#allocation1] sm:$0xff]
      %3446 = vst [vmem:[#allocation1] ss:$9 sm:$0xff] %v2938
      %3447 = vst [vmem:[%s3429] ss:$9 sm:$0xff] %v2941
      %3448 = vst [vmem:[%s3431] ss:$9 sm:$0xff] %v2944
      %3449 = vst [vmem:[%s3433] ss:$9 sm:$0xff] %v2947
      %3450 = vst [vmem:[%s3435] ss:$9 sm:$0xff] %v2950
      %v3451 = vld [vmem:[#allocation1] sm:$0xff]
      %3453 = vst [vmem:[#allocation1] ss:$9 sm:$0xff] %v2959
      %3454 = vst [vmem:[%s3429] ss:$9 sm:$0xff] %v2962
      %3455 = vst [vmem:[%s3431] ss:$9 sm:$0xff] %v2965
      %3456 = vst [vmem:[%s3433] ss:$9 sm:$0xff] %v2968
      %3457 = vst [vmem:[%s3435] ss:$9 sm:$0xff] %v2971
      %v3458 = vld [vmem:[#allocation1] sm:$0xff]
      %3460 = vst [vmem:[#allocation1] ss:$9 sm:$0xff] %v2980
      %3461 = vst [vmem:[%s3429] ss:$9 sm:$0xff] %v2983
      %3462 = vst [vmem:[%s3431] ss:$9 sm:$0xff] %v2986
      %3463 = vst [vmem:[%s3433] ss:$9 sm:$0xff] %v2989
      %3464 = vst [vmem:[%s3435] ss:$9 sm:$0xff] %v2992
      %v3465 = vld [vmem:[#allocation1] sm:$0xff]
      %3467 = vst [vmem:[#allocation1] ss:$9 sm:$0xff] %v3001
      %3468 = vst [vmem:[%s3429] ss:$9 sm:$0xff] %v3004
      %3469 = vst [vmem:[%s3431] ss:$9 sm:$0xff] %v3007
      %3470 = vst [vmem:[%s3433] ss:$9 sm:$0xff] %v3010
      %3471 = vst [vmem:[%s3435] ss:$9 sm:$0xff] %v3013
      %v3472 = vld [vmem:[#allocation1] sm:$0xff]
      %3474 = vst [vmem:[#allocation1] ss:$9 sm:$0xff] %v3022
      %3475 = vst [vmem:[%s3429] ss:$9 sm:$0xff] %v3025
      %3476 = vst [vmem:[%s3431] ss:$9 sm:$0xff] %v3028
      %3477 = vst [vmem:[%s3433] ss:$9 sm:$0xff] %v3031
      %3478 = vst [vmem:[%s3435] ss:$9 sm:$0xff] %v3034
      %v3479 = vld [vmem:[#allocation1] sm:$0xff]
      %3481 = vst [vmem:[#allocation1] ss:$9 sm:$0xff] %v3043
      %3482 = vst [vmem:[%s3429] ss:$9 sm:$0xff] %v3046
      %3483 = vst [vmem:[%s3431] ss:$9 sm:$0xff] %v3049
      %3484 = vst [vmem:[%s3433] ss:$9 sm:$0xff] %v3052
      %3485 = vst [vmem:[%s3435] ss:$9 sm:$0xff] %v3055
      %v3486 = vld [vmem:[#allocation1] sm:$0xff]
      %3488 = vst [vmem:[#allocation1] ss:$9 sm:$0xff] %v3064
      %3489 = vst [vmem:[%s3429] ss:$9 sm:$0xff] %v3067
      %3490 = vst [vmem:[%s3431] ss:$9 sm:$0xff] %v3070
      %3491 = vst [vmem:[%s3433] ss:$9 sm:$0xff] %v3073
      %3492 = vst [vmem:[%s3435] ss:$9 sm:$0xff] %v3076
      %v3493 = vld [vmem:[#allocation1] sm:$0xff]
      %3495 = vst [vmem:[#allocation1] ss:$9 sm:$0xff] %v3085
      %3496 = vst [vmem:[%s3429] ss:$9 sm:$0xff] %v3088
      %3497 = vst [vmem:[%s3431] ss:$9 sm:$0xff] %v3091
      %3498 = vst [vmem:[%s3433] ss:$9 sm:$0xff] %v3094
      %3499 = vst [vmem:[%s3435] ss:$9 sm:$0xff] %v3097
      %v3500 = vld [vmem:[#allocation1] sm:$0xff]
      %3502 = vst [vmem:[#allocation1] ss:$9 sm:$0xff] %v2894
      %s3503 = scalar_lea.vmem [#allocation1], 1
      %3504 = vst [vmem:[%s3503] ss:$9 sm:$0xff] %v2898
      %s3505 = scalar_lea.vmem [#allocation1], 2
      %3506 = vst [vmem:[%s3505] ss:$9 sm:$0xff] %v2902
      %s3507 = scalar_lea.vmem [#allocation1], 3
      %3508 = vst [vmem:[%s3507] ss:$9 sm:$0xff] %v2905
      %s3509 = scalar_lea.vmem [#allocation1], 4
      %3510 = vst [vmem:[%s3509] ss:$9 sm:$0xff] %v2908
      %s3512 = scalar_lea.vmem [#allocation1], 5
      %3513 = vst [vmem:[%s3512] ss:$9 sm:$0xff] %v2911
      %v3514 = vld [vmem:[#allocation1] sm:$0xff]
      %3515 = vst [vmem:[#allocation1] ss:$9 sm:$0xff] %v2917
      %3516 = vst [vmem:[%s3503] ss:$9 sm:$0xff] %v2920
      %3517 = vst [vmem:[%s3505] ss:$9 sm:$0xff] %v2923
      %3518 = vst [vmem:[%s3507] ss:$9 sm:$0xff] %v2926
      %3519 = vst [vmem:[%s3509] ss:$9 sm:$0xff] %v2929
      %3521 = vst [vmem:[%s3512] ss:$9 sm:$0xff] %v2932
      %v3522 = vld [vmem:[#allocation1] sm:$0xff]
      %3523 = vst [vmem:[#allocation1] ss:$9 sm:$0xff] %v2938
      %3524 = vst [vmem:[%s3503] ss:$9 sm:$0xff] %v2941
      %3525 = vst [vmem:[%s3505] ss:$9 sm:$0xff] %v2944
      %3526 = vst [vmem:[%s3507] ss:$9 sm:$0xff] %v2947
      %3527 = vst [vmem:[%s3509] ss:$9 sm:$0xff] %v2950
      %3528 = vst [vmem:[%s3512] ss:$9 sm:$0xff] %v2953
      %v3529 = vld [vmem:[#allocation1] sm:$0xff]
      %3530 = vst [vmem:[#allocation1] ss:$9 sm:$0xff] %v2959
      %3531 = vst [vmem:[%s3503] ss:$9 sm:$0xff] %v2962
      %3532 = vst [vmem:[%s3505] ss:$9 sm:$0xff] %v2965
      %3533 = vst [vmem:[%s3507] ss:$9 sm:$0xff] %v2968
      %3534 = vst [vmem:[%s3509] ss:$9 sm:$0xff] %v2971
      %3536 = vst [vmem:[%s3512] ss:$9 sm:$0xff] %v2974
      %v3537 = vld [vmem:[#allocation1] sm:$0xff]
      %3538 = vst [vmem:[#allocation1] ss:$9 sm:$0xff] %v2980
      %3539 = vst [vmem:[%s3503] ss:$9 sm:$0xff] %v2983
      %3540 = vst [vmem:[%s3505] ss:$9 sm:$0xff] %v2986
      %3541 = vst [vmem:[%s3507] ss:$9 sm:$0xff] %v2989
      %3542 = vst [vmem:[%s3509] ss:$9 sm:$0xff] %v2992
      %3544 = vst [vmem:[%s3512] ss:$9 sm:$0xff] %v2995
      %v3545 = vld [vmem:[#allocation1] sm:$0xff]
      %3546 = vst [vmem:[#allocation1] ss:$9 sm:$0xff] %v3001
      %3547 = vst [vmem:[%s3503] ss:$9 sm:$0xff] %v3004
      %3548 = vst [vmem:[%s3505] ss:$9 sm:$0xff] %v3007
      %3549 = vst [vmem:[%s3507] ss:$9 sm:$0xff] %v3010
      %3550 = vst [vmem:[%s3509] ss:$9 sm:$0xff] %v3013
      %3552 = vst [vmem:[%s3512] ss:$9 sm:$0xff] %v3016
      %v3553 = vld [vmem:[#allocation1] sm:$0xff]
      %3554 = vst [vmem:[#allocation1] ss:$9 sm:$0xff] %v3022
      %3555 = vst [vmem:[%s3503] ss:$9 sm:$0xff] %v3025
      %3556 = vst [vmem:[%s3505] ss:$9 sm:$0xff] %v3028
      %3557 = vst [vmem:[%s3507] ss:$9 sm:$0xff] %v3031
      %3558 = vst [vmem:[%s3509] ss:$9 sm:$0xff] %v3034
      %3559 = vst [vmem:[%s3512] ss:$9 sm:$0xff] %v3037
      %v3560 = vld [vmem:[#allocation1] sm:$0xff]
      %3561 = vst [vmem:[#allocation1] ss:$9 sm:$0xff] %v3043
      %3562 = vst [vmem:[%s3503] ss:$9 sm:$0xff] %v3046
      %3563 = vst [vmem:[%s3505] ss:$9 sm:$0xff] %v3049
      %3564 = vst [vmem:[%s3507] ss:$9 sm:$0xff] %v3052
      %3565 = vst [vmem:[%s3509] ss:$9 sm:$0xff] %v3055
      %3567 = vst [vmem:[%s3512] ss:$9 sm:$0xff] %v3058
      %v3568 = vld [vmem:[#allocation1] sm:$0xff]
      %3569 = vst [vmem:[#allocation1] ss:$9 sm:$0xff] %v3064
      %3570 = vst [vmem:[%s3503] ss:$9 sm:$0xff] %v3067
      %3571 = vst [vmem:[%s3505] ss:$9 sm:$0xff] %v3070
      %3572 = vst [vmem:[%s3507] ss:$9 sm:$0xff] %v3073
      %3573 = vst [vmem:[%s3509] ss:$9 sm:$0xff] %v3076
      %3575 = vst [vmem:[%s3512] ss:$9 sm:$0xff] %v3079
      %v3576 = vld [vmem:[#allocation1] sm:$0xff]
      %3577 = vst [vmem:[#allocation1] ss:$9 sm:$0xff] %v3085
      %3578 = vst [vmem:[%s3503] ss:$9 sm:$0xff] %v3088
      %3579 = vst [vmem:[%s3505] ss:$9 sm:$0xff] %v3091
      %3580 = vst [vmem:[%s3507] ss:$9 sm:$0xff] %v3094
      %3581 = vst [vmem:[%s3509] ss:$9 sm:$0xff] %v3097
      %3583 = vst [vmem:[%s3512] ss:$9 sm:$0xff] %v3100
      %v3584 = vld [vmem:[#allocation1] sm:$0xff]
      %v3585 = vshrl.u32 %v3514, 16
      %v3587 = vshll.u32 %v3514, 16
      %v3589 = vrot.slane %v3587, 1
      %v3590 = vor.u32 %v3585, %v3589
      %v3591 = vshrl.u32 %v3522, 16
      %v3593 = vshll.u32 %v3522, 16
      %v3595 = vrot.slane %v3593, 1
      %v3596 = vor.u32 %v3591, %v3595
      %v3597 = vshrl.u32 %v3529, 16
      %v3599 = vshll.u32 %v3529, 16
      %v3601 = vrot.slane %v3599, 1
      %v3602 = vor.u32 %v3597, %v3601
      %v3603 = vshrl.u32 %v3537, 16
      %v3605 = vshll.u32 %v3537, 16
      %v3607 = vrot.slane %v3605, 1
      %v3608 = vor.u32 %v3603, %v3607
      %v3609 = vshrl.u32 %v3545, 16
      %v3611 = vshll.u32 %v3545, 16
      %v3613 = vrot.slane %v3611, 1
      %v3614 = vor.u32 %v3609, %v3613
      %v3615 = vshrl.u32 %v3553, 16
      %v3617 = vshll.u32 %v3553, 16
      %v3619 = vrot.slane %v3617, 1
      %v3620 = vor.u32 %v3615, %v3619
      %v3621 = vshrl.u32 %v3560, 16
      %v3623 = vshll.u32 %v3560, 16
      %v3625 = vrot.slane %v3623, 1
      %v3626 = vor.u32 %v3621, %v3625
      %v3627 = vshrl.u32 %v3568, 16
      %v3629 = vshll.u32 %v3568, 16
      %v3631 = vrot.slane %v3629, 1
      %v3632 = vor.u32 %v3627, %v3631
      %v3633 = vshrl.u32 %v3576, 16
      %v3635 = vshll.u32 %v3576, 16
      %v3637 = vrot.slane %v3635, 1
      %v3638 = vor.u32 %v3633, %v3637
      %v3639 = vshrl.u32 %v3584, 16
      %v3641 = vshll.u32 %v3584, 16
      %v3643 = vrot.slane %v3641, 1
      %v3644 = vor.u32 %v3639, %v3643
      %3645 = vst [vmem:[#allocation1] ss:$9 sm:$0xff] %v2898
      %s3646 = scalar_lea.vmem [#allocation1], 1
      %3647 = vst [vmem:[%s3646] ss:$9 sm:$0xff] %v2902
      %s3648 = scalar_lea.vmem [#allocation1], 2
      %3649 = vst [vmem:[%s3648] ss:$9 sm:$0xff] %v2905
      %s3650 = scalar_lea.vmem [#allocation1], 3
      %3651 = vst [vmem:[%s3650] ss:$9 sm:$0xff] %v2908
      %s3652 = scalar_lea.vmem [#allocation1], 4
      %3653 = vst [vmem:[%s3652] ss:$9 sm:$0xff] %v2911
      %v3654 = vld [vmem:[#allocation1] sm:$0xff]
      %3656 = vst [vmem:[#allocation1] ss:$9 sm:$0xff] %v2920
      %3657 = vst [vmem:[%s3646] ss:$9 sm:$0xff] %v2923
      %3658 = vst [vmem:[%s3648] ss:$9 sm:$0xff] %v2926
      %3659 = vst [vmem:[%s3650] ss:$9 sm:$0xff] %v2929
      %3660 = vst [vmem:[%s3652] ss:$9 sm:$0xff] %v2932
      %v3661 = vld [vmem:[#allocation1] sm:$0xff]
      %3663 = vst [vmem:[#allocation1] ss:$9 sm:$0xff] %v2941
      %3664 = vst [vmem:[%s3646] ss:$9 sm:$0xff] %v2944
      %3665 = vst [vmem:[%s3648] ss:$9 sm:$0xff] %v2947
      %3666 = vst [vmem:[%s3650] ss:$9 sm:$0xff] %v2950
      %3667 = vst [vmem:[%s3652] ss:$9 sm:$0xff] %v2953
      %v3668 = vld [vmem:[#allocation1] sm:$0xff]
      %3670 = vst [vmem:[#allocation1] ss:$9 sm:$0xff] %v2962
      %3671 = vst [vmem:[%s3646] ss:$9 sm:$0xff] %v2965
      %3672 = vst [vmem:[%s3648] ss:$9 sm:$0xff] %v2968
      %3673 = vst [vmem:[%s3650] ss:$9 sm:$0xff] %v2971
      %3674 = vst [vmem:[%s3652] ss:$9 sm:$0xff] %v2974
      %v3675 = vld [vmem:[#allocation1] sm:$0xff]
      %3677 = vst [vmem:[#allocation1] ss:$9 sm:$0xff] %v2983
      %3678 = vst [vmem:[%s3646] ss:$9 sm:$0xff] %v2986
      %3679 = vst [vmem:[%s3648] ss:$9 sm:$0xff] %v2989
      %3680 = vst [vmem:[%s3650] ss:$9 sm:$0xff] %v2992
      %3681 = vst [vmem:[%s3652] ss:$9 sm:$0xff] %v2995
      %v3682 = vld [vmem:[#allocation1] sm:$0xff]
      %3684 = vst [vmem:[#allocation1] ss:$9 sm:$0xff] %v3004
      %3685 = vst [vmem:[%s3646] ss:$9 sm:$0xff] %v3007
      %3686 = vst [vmem:[%s3648] ss:$9 sm:$0xff] %v3010
      %3687 = vst [vmem:[%s3650] ss:$9 sm:$0xff] %v3013
      %3688 = vst [vmem:[%s3652] ss:$9 sm:$0xff] %v3016
      %v3689 = vld [vmem:[#allocation1] sm:$0xff]
      %3691 = vst [vmem:[#allocation1] ss:$9 sm:$0xff] %v3025
      %3692 = vst [vmem:[%s3646] ss:$9 sm:$0xff] %v3028
      %3693 = vst [vmem:[%s3648] ss:$9 sm:$0xff] %v3031
      %3694 = vst [vmem:[%s3650] ss:$9 sm:$0xff] %v3034
      %3695 = vst [vmem:[%s3652] ss:$9 sm:$0xff] %v3037
      %v3696 = vld [vmem:[#allocation1] sm:$0xff]
      %3698 = vst [vmem:[#allocation1] ss:$9 sm:$0xff] %v3046
      %3699 = vst [vmem:[%s3646] ss:$9 sm:$0xff] %v3049
      %3700 = vst [vmem:[%s3648] ss:$9 sm:$0xff] %v3052
      %3701 = vst [vmem:[%s3650] ss:$9 sm:$0xff] %v3055
      %3702 = vst [vmem:[%s3652] ss:$9 sm:$0xff] %v3058
      %v3703 = vld [vmem:[#allocation1] sm:$0xff]
      %3705 = vst [vmem:[#allocation1] ss:$9 sm:$0xff] %v3067
      %3706 = vst [vmem:[%s3646] ss:$9 sm:$0xff] %v3070
      %3707 = vst [vmem:[%s3648] ss:$9 sm:$0xff] %v3073
      %3708 = vst [vmem:[%s3650] ss:$9 sm:$0xff] %v3076
      %3709 = vst [vmem:[%s3652] ss:$9 sm:$0xff] %v3079
      %v3710 = vld [vmem:[#allocation1] sm:$0xff]
      %3712 = vst [vmem:[#allocation1] ss:$9 sm:$0xff] %v3088
      %3713 = vst [vmem:[%s3646] ss:$9 sm:$0xff] %v3091
      %3714 = vst [vmem:[%s3648] ss:$9 sm:$0xff] %v3094
      %3715 = vst [vmem:[%s3650] ss:$9 sm:$0xff] %v3097
      %3716 = vst [vmem:[%s3652] ss:$9 sm:$0xff] %v3100
      %v3717 = vld [vmem:[#allocation1] sm:$0xff]
      %3719 = vst [vmem:[#allocation1] ss:$9 sm:$0xff] %v2914
      %s3720 = scalar_lea.vmem [#allocation1], 1
      %3721 = vst [vmem:[%s3720] ss:$9 sm:$0xff] %v2917
      %s3722 = scalar_lea.vmem [#allocation1], 2
      %3723 = vst [vmem:[%s3722] ss:$9 sm:$0xff] %v2920
      %s3724 = scalar_lea.vmem [#allocation1], 3
      %3725 = vst [vmem:[%s3724] ss:$9 sm:$0xff] %v2923
      %s3726 = scalar_lea.vmem [#allocation1], 4
      %3727 = vst [vmem:[%s3726] ss:$9 sm:$0xff] %v2926
      %v3728 = vld [vmem:[#allocation1] sm:$0xff]
      %3730 = vst [vmem:[#allocation1] ss:$9 sm:$0xff] %v2935
      %3731 = vst [vmem:[%s3720] ss:$9 sm:$0xff] %v2938
      %3732 = vst [vmem:[%s3722] ss:$9 sm:$0xff] %v2941
      %3733 = vst [vmem:[%s3724] ss:$9 sm:$0xff] %v2944
      %3734 = vst [vmem:[%s3726] ss:$9 sm:$0xff] %v2947
      %v3735 = vld [vmem:[#allocation1] sm:$0xff]
      %3737 = vst [vmem:[#allocation1] ss:$9 sm:$0xff] %v2956
      %3738 = vst [vmem:[%s3720] ss:$9 sm:$0xff] %v2959
      %3739 = vst [vmem:[%s3722] ss:$9 sm:$0xff] %v2962
      %3740 = vst [vmem:[%s3724] ss:$9 sm:$0xff] %v2965
      %3741 = vst [vmem:[%s3726] ss:$9 sm:$0xff] %v2968
      %v3742 = vld [vmem:[#allocation1] sm:$0xff]
      %3744 = vst [vmem:[#allocation1] ss:$9 sm:$0xff] %v2977
      %3745 = vst [vmem:[%s3720] ss:$9 sm:$0xff] %v2980
      %3746 = vst [vmem:[%s3722] ss:$9 sm:$0xff] %v2983
      %3747 = vst [vmem:[%s3724] ss:$9 sm:$0xff] %v2986
      %3748 = vst [vmem:[%s3726] ss:$9 sm:$0xff] %v2989
      %v3749 = vld [vmem:[#allocation1] sm:$0xff]
      %3751 = vst [vmem:[#allocation1] ss:$9 sm:$0xff] %v2998
      %3752 = vst [vmem:[%s3720] ss:$9 sm:$0xff] %v3001
      %3753 = vst [vmem:[%s3722] ss:$9 sm:$0xff] %v3004
      %3754 = vst [vmem:[%s3724] ss:$9 sm:$0xff] %v3007
      %3755 = vst [vmem:[%s3726] ss:$9 sm:$0xff] %v3010
      %v3756 = vld [vmem:[#allocation1] sm:$0xff]
      %3758 = vst [vmem:[#allocation1] ss:$9 sm:$0xff] %v3019
      %3759 = vst [vmem:[%s3720] ss:$9 sm:$0xff] %v3022
      %3760 = vst [vmem:[%s3722] ss:$9 sm:$0xff] %v3025
      %3761 = vst [vmem:[%s3724] ss:$9 sm:$0xff] %v3028
      %3762 = vst [vmem:[%s3726] ss:$9 sm:$0xff] %v3031
      %v3763 = vld [vmem:[#allocation1] sm:$0xff]
      %3765 = vst [vmem:[#allocation1] ss:$9 sm:$0xff] %v3040
      %3766 = vst [vmem:[%s3720] ss:$9 sm:$0xff] %v3043
      %3767 = vst [vmem:[%s3722] ss:$9 sm:$0xff] %v3046
      %3768 = vst [vmem:[%s3724] ss:$9 sm:$0xff] %v3049
      %3769 = vst [vmem:[%s3726] ss:$9 sm:$0xff] %v3052
      %v3770 = vld [vmem:[#allocation1] sm:$0xff]
      %3772 = vst [vmem:[#allocation1] ss:$9 sm:$0xff] %v3061
      %3773 = vst [vmem:[%s3720] ss:$9 sm:$0xff] %v3064
      %3774 = vst [vmem:[%s3722] ss:$9 sm:$0xff] %v3067
      %3775 = vst [vmem:[%s3724] ss:$9 sm:$0xff] %v3070
      %3776 = vst [vmem:[%s3726] ss:$9 sm:$0xff] %v3073
      %v3777 = vld [vmem:[#allocation1] sm:$0xff]
      %3779 = vst [vmem:[#allocation1] ss:$9 sm:$0xff] %v3082
      %3780 = vst [vmem:[%s3720] ss:$9 sm:$0xff] %v3085
      %3781 = vst [vmem:[%s3722] ss:$9 sm:$0xff] %v3088
      %3782 = vst [vmem:[%s3724] ss:$9 sm:$0xff] %v3091
      %3783 = vst [vmem:[%s3726] ss:$9 sm:$0xff] %v3094
      %v3784 = vld [vmem:[#allocation1] sm:$0xff]
      %3787 = vst [vmem:[#allocation1] ss:$9 sm:$0xff] %v3103
      %3789 = vst [vmem:[%s3720] ss:$9 sm:$0xff] %v3106
      %3790 = vst [vmem:[%s3722] ss:$9 sm:$0xff] %v3109
      %3792 = vst [vmem:[%s3724] ss:$9 sm:$0xff] %v3112
      %3794 = vst [vmem:[%s3726] ss:$9 sm:$0xff] %v3115
      %v3795 = vld [vmem:[#allocation1] sm:$0xff]
      %3797 = vst [vmem:[#allocation1] ss:$9 sm:$0xff] %v2914
      %s3798 = scalar_lea.vmem [#allocation1], 1
      %3799 = vst [vmem:[%s3798] ss:$9 sm:$0xff] %v2917
      %s3800 = scalar_lea.vmem [#allocation1], 2
      %3801 = vst [vmem:[%s3800] ss:$9 sm:$0xff] %v2920
      %s3802 = scalar_lea.vmem [#allocation1], 3
      %3803 = vst [vmem:[%s3802] ss:$9 sm:$0xff] %v2923
      %s3804 = scalar_lea.vmem [#allocation1], 4
      %3805 = vst [vmem:[%s3804] ss:$9 sm:$0xff] %v2926
      %s3806 = scalar_lea.vmem [#allocation1], 5
      %3807 = vst [vmem:[%s3806] ss:$9 sm:$0xff] %v2929
      %v3808 = vld [vmem:[#allocation1] sm:$0xff]
      %3809 = vst [vmem:[#allocation1] ss:$9 sm:$0xff] %v2935
      %3810 = vst [vmem:[%s3798] ss:$9 sm:$0xff] %v2938
      %3811 = vst [vmem:[%s3800] ss:$9 sm:$0xff] %v2941
      %3812 = vst [vmem:[%s3802] ss:$9 sm:$0xff] %v2944
      %3813 = vst [vmem:[%s3804] ss:$9 sm:$0xff] %v2947
      %3814 = vst [vmem:[%s3806] ss:$9 sm:$0xff] %v2950
      %v3815 = vld [vmem:[#allocation1] sm:$0xff]
      %3816 = vst [vmem:[#allocation1] ss:$9 sm:$0xff] %v2956
      %3817 = vst [vmem:[%s3798] ss:$9 sm:$0xff] %v2959
      %3818 = vst [vmem:[%s3800] ss:$9 sm:$0xff] %v2962
      %3819 = vst [vmem:[%s3802] ss:$9 sm:$0xff] %v2965
      %3820 = vst [vmem:[%s3804] ss:$9 sm:$0xff] %v2968
      %3821 = vst [vmem:[%s3806] ss:$9 sm:$0xff] %v2971
      %v3822 = vld [vmem:[#allocation1] sm:$0xff]
      %3823 = vst [vmem:[#allocation1] ss:$9 sm:$0xff] %v2977
      %3824 = vst [vmem:[%s3798] ss:$9 sm:$0xff] %v2980
      %3825 = vst [vmem:[%s3800] ss:$9 sm:$0xff] %v2983
      %3826 = vst [vmem:[%s3802] ss:$9 sm:$0xff] %v2986
      %3827 = vst [vmem:[%s3804] ss:$9 sm:$0xff] %v2989
      %3828 = vst [vmem:[%s3806] ss:$9 sm:$0xff] %v2992
      %v3829 = vld [vmem:[#allocation1] sm:$0xff]
      %3830 = vst [vmem:[#allocation1] ss:$9 sm:$0xff] %v2998
      %3831 = vst [vmem:[%s3798] ss:$9 sm:$0xff] %v3001
      %3832 = vst [vmem:[%s3800] ss:$9 sm:$0xff] %v3004
      %3833 = vst [vmem:[%s3802] ss:$9 sm:$0xff] %v3007
      %3834 = vst [vmem:[%s3804] ss:$9 sm:$0xff] %v3010
      %3835 = vst [vmem:[%s3806] ss:$9 sm:$0xff] %v3013
      %v3836 = vld [vmem:[#allocation1] sm:$0xff]
      %3837 = vst [vmem:[#allocation1] ss:$9 sm:$0xff] %v3019
      %3838 = vst [vmem:[%s3798] ss:$9 sm:$0xff] %v3022
      %3839 = vst [vmem:[%s3800] ss:$9 sm:$0xff] %v3025
      %3840 = vst [vmem:[%s3802] ss:$9 sm:$0xff] %v3028
      %3841 = vst [vmem:[%s3804] ss:$9 sm:$0xff] %v3031
      %3842 = vst [vmem:[%s3806] ss:$9 sm:$0xff] %v3034
      %v3843 = vld [vmem:[#allocation1] sm:$0xff]
      %3844 = vst [vmem:[#allocation1] ss:$9 sm:$0xff] %v3040
      %3845 = vst [vmem:[%s3798] ss:$9 sm:$0xff] %v3043
      %3846 = vst [vmem:[%s3800] ss:$9 sm:$0xff] %v3046
      %3847 = vst [vmem:[%s3802] ss:$9 sm:$0xff] %v3049
      %3848 = vst [vmem:[%s3804] ss:$9 sm:$0xff] %v3052
      %3849 = vst [vmem:[%s3806] ss:$9 sm:$0xff] %v3055
      %v3850 = vld [vmem:[#allocation1] sm:$0xff]
      %3851 = vst [vmem:[#allocation1] ss:$9 sm:$0xff] %v3061
      %3852 = vst [vmem:[%s3798] ss:$9 sm:$0xff] %v3064
      %3853 = vst [vmem:[%s3800] ss:$9 sm:$0xff] %v3067
      %3854 = vst [vmem:[%s3802] ss:$9 sm:$0xff] %v3070
      %3855 = vst [vmem:[%s3804] ss:$9 sm:$0xff] %v3073
      %3856 = vst [vmem:[%s3806] ss:$9 sm:$0xff] %v3076
      %v3857 = vld [vmem:[#allocation1] sm:$0xff]
      %3858 = vst [vmem:[#allocation1] ss:$9 sm:$0xff] %v3082
      %3859 = vst [vmem:[%s3798] ss:$9 sm:$0xff] %v3085
      %3860 = vst [vmem:[%s3800] ss:$9 sm:$0xff] %v3088
      %3861 = vst [vmem:[%s3802] ss:$9 sm:$0xff] %v3091
      %3862 = vst [vmem:[%s3804] ss:$9 sm:$0xff] %v3094
      %3863 = vst [vmem:[%s3806] ss:$9 sm:$0xff] %v3097
      %v3864 = vld [vmem:[#allocation1] sm:$0xff]
      %3865 = vst [vmem:[#allocation1] ss:$9 sm:$0xff] %v3103
      %3866 = vst [vmem:[%s3798] ss:$9 sm:$0xff] %v3106
      %3867 = vst [vmem:[%s3800] ss:$9 sm:$0xff] %v3109
      %3868 = vst [vmem:[%s3802] ss:$9 sm:$0xff] %v3112
      %3869 = vst [vmem:[%s3804] ss:$9 sm:$0xff] %v3115
      %3871 = vst [vmem:[%s3806] ss:$9 sm:$0xff] %v3118
      %v3872 = vld [vmem:[#allocation1] sm:$0xff]
      %v3873 = vshrl.u32 %v3808, 16
      %v3875 = vshll.u32 %v3808, 16
      %v3877 = vrot.slane %v3875, 1
      %v3878 = vor.u32 %v3873, %v3877
      %v3879 = vshrl.u32 %v3815, 16
      %v3881 = vshll.u32 %v3815, 16
      %v3883 = vrot.slane %v3881, 1
      %v3884 = vor.u32 %v3879, %v3883
      %v3885 = vshrl.u32 %v3822, 16
      %v3887 = vshll.u32 %v3822, 16
      %v3889 = vrot.slane %v3887, 1
      %v3890 = vor.u32 %v3885, %v3889
      %v3891 = vshrl.u32 %v3829, 16
      %v3893 = vshll.u32 %v3829, 16
      %v3895 = vrot.slane %v3893, 1
      %v3896 = vor.u32 %v3891, %v3895
      %v3897 = vshrl.u32 %v3836, 16
      %v3899 = vshll.u32 %v3836, 16
      %v3901 = vrot.slane %v3899, 1
      %v3902 = vor.u32 %v3897, %v3901
      %v3903 = vshrl.u32 %v3843, 16
      %v3905 = vshll.u32 %v3843, 16
      %v3907 = vrot.slane %v3905, 1
      %v3908 = vor.u32 %v3903, %v3907
      %v3909 = vshrl.u32 %v3850, 16
      %v3911 = vshll.u32 %v3850, 16
      %v3913 = vrot.slane %v3911, 1
      %v3914 = vor.u32 %v3909, %v3913
      %v3915 = vshrl.u32 %v3857, 16
      %v3917 = vshll.u32 %v3857, 16
      %v3919 = vrot.slane %v3917, 1
      %v3920 = vor.u32 %v3915, %v3919
      %v3921 = vshrl.u32 %v3864, 16
      %v3923 = vshll.u32 %v3864, 16
      %v3925 = vrot.slane %v3923, 1
      %v3926 = vor.u32 %v3921, %v3925
      %v3927 = vshrl.u32 %v3872, 16
      %v3929 = vshll.u32 %v3872, 16
      %v3931 = vrot.slane %v3929, 1
      %v3932 = vor.u32 %v3927, %v3931
      %3933 = vst [vmem:[#allocation1] ss:$9 sm:$0xff] %v2917
      %s3934 = scalar_lea.vmem [#allocation1], 1
      %3935 = vst [vmem:[%s3934] ss:$9 sm:$0xff] %v2920
      %s3936 = scalar_lea.vmem [#allocation1], 2
      %3937 = vst [vmem:[%s3936] ss:$9 sm:$0xff] %v2923
      %s3938 = scalar_lea.vmem [#allocation1], 3
      %3939 = vst [vmem:[%s3938] ss:$9 sm:$0xff] %v2926
      %s3940 = scalar_lea.vmem [#allocation1], 4
      %3941 = vst [vmem:[%s3940] ss:$9 sm:$0xff] %v2929
      %v3942 = vld [vmem:[#allocation1] sm:$0xff]
      %3944 = vst [vmem:[#allocation1] ss:$9 sm:$0xff] %v2938
      %3945 = vst [vmem:[%s3934] ss:$9 sm:$0xff] %v2941
      %3946 = vst [vmem:[%s3936] ss:$9 sm:$0xff] %v2944
      %3947 = vst [vmem:[%s3938] ss:$9 sm:$0xff] %v2947
      %3948 = vst [vmem:[%s3940] ss:$9 sm:$0xff] %v2950
      %v3949 = vld [vmem:[#allocation1] sm:$0xff]
      %3951 = vst [vmem:[#allocation1] ss:$9 sm:$0xff] %v2959
      %3952 = vst [vmem:[%s3934] ss:$9 sm:$0xff] %v2962
      %3953 = vst [vmem:[%s3936] ss:$9 sm:$0xff] %v2965
      %3954 = vst [vmem:[%s3938] ss:$9 sm:$0xff] %v2968
      %3955 = vst [vmem:[%s3940] ss:$9 sm:$0xff] %v2971
      %v3956 = vld [vmem:[#allocation1] sm:$0xff]
      %3958 = vst [vmem:[#allocation1] ss:$9 sm:$0xff] %v2980
      %3959 = vst [vmem:[%s3934] ss:$9 sm:$0xff] %v2983
      %3960 = vst [vmem:[%s3936] ss:$9 sm:$0xff] %v2986
      %3961 = vst [vmem:[%s3938] ss:$9 sm:$0xff] %v2989
      %3962 = vst [vmem:[%s3940] ss:$9 sm:$0xff] %v2992
      %v3963 = vld [vmem:[#allocation1] sm:$0xff]
      %3965 = vst [vmem:[#allocation1] ss:$9 sm:$0xff] %v3001
      %3966 = vst [vmem:[%s3934] ss:$9 sm:$0xff] %v3004
      %3967 = vst [vmem:[%s3936] ss:$9 sm:$0xff] %v3007
      %3968 = vst [vmem:[%s3938] ss:$9 sm:$0xff] %v3010
      %3969 = vst [vmem:[%s3940] ss:$9 sm:$0xff] %v3013
      %v3970 = vld [vmem:[#allocation1] sm:$0xff]
      %3972 = vst [vmem:[#allocation1] ss:$9 sm:$0xff] %v3022
      %3973 = vst [vmem:[%s3934] ss:$9 sm:$0xff] %v3025
      %3974 = vst [vmem:[%s3936] ss:$9 sm:$0xff] %v3028
      %3975 = vst [vmem:[%s3938] ss:$9 sm:$0xff] %v3031
      %3976 = vst [vmem:[%s3940] ss:$9 sm:$0xff] %v3034
      %v3977 = vld [vmem:[#allocation1] sm:$0xff]
      %3979 = vst [vmem:[#allocation1] ss:$9 sm:$0xff] %v3043
      %3980 = vst [vmem:[%s3934] ss:$9 sm:$0xff] %v3046
      %3981 = vst [vmem:[%s3936] ss:$9 sm:$0xff] %v3049
      %3982 = vst [vmem:[%s3938] ss:$9 sm:$0xff] %v3052
      %3983 = vst [vmem:[%s3940] ss:$9 sm:$0xff] %v3055
      %v3984 = vld [vmem:[#allocation1] sm:$0xff]
      %3986 = vst [vmem:[#allocation1] ss:$9 sm:$0xff] %v3064
      %3987 = vst [vmem:[%s3934] ss:$9 sm:$0xff] %v3067
      %3988 = vst [vmem:[%s3936] ss:$9 sm:$0xff] %v3070
      %3989 = vst [vmem:[%s3938] ss:$9 sm:$0xff] %v3073
      %3990 = vst [vmem:[%s3940] ss:$9 sm:$0xff] %v3076
      %v3991 = vld [vmem:[#allocation1] sm:$0xff]
      %3993 = vst [vmem:[#allocation1] ss:$9 sm:$0xff] %v3085
      %3994 = vst [vmem:[%s3934] ss:$9 sm:$0xff] %v3088
      %3995 = vst [vmem:[%s3936] ss:$9 sm:$0xff] %v3091
      %3996 = vst [vmem:[%s3938] ss:$9 sm:$0xff] %v3094
      %3997 = vst [vmem:[%s3940] ss:$9 sm:$0xff] %v3097
      %v3998 = vld [vmem:[#allocation1] sm:$0xff]
      %4000 = vst [vmem:[#allocation1] ss:$9 sm:$0xff] %v3106
      %4001 = vst [vmem:[%s3934] ss:$9 sm:$0xff] %v3109
      %4002 = vst [vmem:[%s3936] ss:$9 sm:$0xff] %v3112
      %4003 = vst [vmem:[%s3938] ss:$9 sm:$0xff] %v3115
      %4004 = vst [vmem:[%s3940] ss:$9 sm:$0xff] %v3118
      %v4005 = vld [vmem:[#allocation1] sm:$0xff]
      %4007 = vst [vmem:[#allocation1] ss:$9 sm:$0xff] %v2917
      %s4008 = scalar_lea.vmem [#allocation1], 1
      %4009 = vst [vmem:[%s4008] ss:$9 sm:$0xff] %v2920
      %s4010 = scalar_lea.vmem [#allocation1], 2
      %4011 = vst [vmem:[%s4010] ss:$9 sm:$0xff] %v2923
      %s4012 = scalar_lea.vmem [#allocation1], 3
      %4013 = vst [vmem:[%s4012] ss:$9 sm:$0xff] %v2926
      %s4014 = scalar_lea.vmem [#allocation1], 4
      %4015 = vst [vmem:[%s4014] ss:$9 sm:$0xff] %v2929
      %s4016 = scalar_lea.vmem [#allocation1], 5
      %4017 = vst [vmem:[%s4016] ss:$9 sm:$0xff] %v2932
      %v4018 = vld [vmem:[#allocation1] sm:$0xff]
      %4019 = vst [vmem:[#allocation1] ss:$9 sm:$0xff] %v2938
      %4020 = vst [vmem:[%s4008] ss:$9 sm:$0xff] %v2941
      %4021 = vst [vmem:[%s4010] ss:$9 sm:$0xff] %v2944
      %4022 = vst [vmem:[%s4012] ss:$9 sm:$0xff] %v2947
      %4023 = vst [vmem:[%s4014] ss:$9 sm:$0xff] %v2950
      %4024 = vst [vmem:[%s4016] ss:$9 sm:$0xff] %v2953
      %v4025 = vld [vmem:[#allocation1] sm:$0xff]
      %4026 = vst [vmem:[#allocation1] ss:$9 sm:$0xff] %v2959
      %4027 = vst [vmem:[%s4008] ss:$9 sm:$0xff] %v2962
      %4028 = vst [vmem:[%s4010] ss:$9 sm:$0xff] %v2965
      %4029 = vst [vmem:[%s4012] ss:$9 sm:$0xff] %v2968
      %4030 = vst [vmem:[%s4014] ss:$9 sm:$0xff] %v2971
      %4031 = vst [vmem:[%s4016] ss:$9 sm:$0xff] %v2974
      %v4032 = vld [vmem:[#allocation1] sm:$0xff]
      %4033 = vst [vmem:[#allocation1] ss:$9 sm:$0xff] %v2980
      %4034 = vst [vmem:[%s4008] ss:$9 sm:$0xff] %v2983
      %4035 = vst [vmem:[%s4010] ss:$9 sm:$0xff] %v2986
      %4036 = vst [vmem:[%s4012] ss:$9 sm:$0xff] %v2989
      %4037 = vst [vmem:[%s4014] ss:$9 sm:$0xff] %v2992
      %4038 = vst [vmem:[%s4016] ss:$9 sm:$0xff] %v2995
      %v4039 = vld [vmem:[#allocation1] sm:$0xff]
      %4040 = vst [vmem:[#allocation1] ss:$9 sm:$0xff] %v3001
      %4041 = vst [vmem:[%s4008] ss:$9 sm:$0xff] %v3004
      %4042 = vst [vmem:[%s4010] ss:$9 sm:$0xff] %v3007
      %4043 = vst [vmem:[%s4012] ss:$9 sm:$0xff] %v3010
      %4044 = vst [vmem:[%s4014] ss:$9 sm:$0xff] %v3013
      %4045 = vst [vmem:[%s4016] ss:$9 sm:$0xff] %v3016
      %v4046 = vld [vmem:[#allocation1] sm:$0xff]
      %4047 = vst [vmem:[#allocation1] ss:$9 sm:$0xff] %v3022
      %4048 = vst [vmem:[%s4008] ss:$9 sm:$0xff] %v3025
      %4049 = vst [vmem:[%s4010] ss:$9 sm:$0xff] %v3028
      %4050 = vst [vmem:[%s4012] ss:$9 sm:$0xff] %v3031
      %4051 = vst [vmem:[%s4014] ss:$9 sm:$0xff] %v3034
      %4052 = vst [vmem:[%s4016] ss:$9 sm:$0xff] %v3037
      %v4053 = vld [vmem:[#allocation1] sm:$0xff]
      %4054 = vst [vmem:[#allocation1] ss:$9 sm:$0xff] %v3043
      %4055 = vst [vmem:[%s4008] ss:$9 sm:$0xff] %v3046
      %4056 = vst [vmem:[%s4010] ss:$9 sm:$0xff] %v3049
      %4057 = vst [vmem:[%s4012] ss:$9 sm:$0xff] %v3052
      %4058 = vst [vmem:[%s4014] ss:$9 sm:$0xff] %v3055
      %4059 = vst [vmem:[%s4016] ss:$9 sm:$0xff] %v3058
      %v4060 = vld [vmem:[#allocation1] sm:$0xff]
      %4061 = vst [vmem:[#allocation1] ss:$9 sm:$0xff] %v3064
      %4062 = vst [vmem:[%s4008] ss:$9 sm:$0xff] %v3067
      %4063 = vst [vmem:[%s4010] ss:$9 sm:$0xff] %v3070
      %4064 = vst [vmem:[%s4012] ss:$9 sm:$0xff] %v3073
      %4065 = vst [vmem:[%s4014] ss:$9 sm:$0xff] %v3076
      %4066 = vst [vmem:[%s4016] ss:$9 sm:$0xff] %v3079
      %v4067 = vld [vmem:[#allocation1] sm:$0xff]
      %4068 = vst [vmem:[#allocation1] ss:$9 sm:$0xff] %v3085
      %4069 = vst [vmem:[%s4008] ss:$9 sm:$0xff] %v3088
      %4070 = vst [vmem:[%s4010] ss:$9 sm:$0xff] %v3091
      %4071 = vst [vmem:[%s4012] ss:$9 sm:$0xff] %v3094
      %4072 = vst [vmem:[%s4014] ss:$9 sm:$0xff] %v3097
      %4073 = vst [vmem:[%s4016] ss:$9 sm:$0xff] %v3100
      %v4074 = vld [vmem:[#allocation1] sm:$0xff]
      %4075 = vst [vmem:[#allocation1] ss:$9 sm:$0xff] %v3106
      %4076 = vst [vmem:[%s4008] ss:$9 sm:$0xff] %v3109
      %4077 = vst [vmem:[%s4010] ss:$9 sm:$0xff] %v3112
      %4078 = vst [vmem:[%s4012] ss:$9 sm:$0xff] %v3115
      %4079 = vst [vmem:[%s4014] ss:$9 sm:$0xff] %v3118
      %4080 = vst [vmem:[%s4016] ss:$9 sm:$0xff] %v3121
      %v4081 = vld [vmem:[#allocation1] sm:$0xff]
      %v4082 = vshrl.u32 %v4018, 16
      %v4084 = vshll.u32 %v4018, 16
      %v4086 = vrot.slane %v4084, 1
      %v4087 = vor.u32 %v4082, %v4086
      %v4088 = vshrl.u32 %v4025, 16
      %v4090 = vshll.u32 %v4025, 16
      %v4092 = vrot.slane %v4090, 1
      %v4093 = vor.u32 %v4088, %v4092
      %v4094 = vshrl.u32 %v4032, 16
      %v4096 = vshll.u32 %v4032, 16
      %v4098 = vrot.slane %v4096, 1
      %v4099 = vor.u32 %v4094, %v4098
      %v4100 = vshrl.u32 %v4039, 16
      %v4102 = vshll.u32 %v4039, 16
      %v4104 = vrot.slane %v4102, 1
      %v4105 = vor.u32 %v4100, %v4104
      %v4106 = vshrl.u32 %v4046, 16
      %v4108 = vshll.u32 %v4046, 16
      %v4110 = vrot.slane %v4108, 1
      %v4111 = vor.u32 %v4106, %v4110
      %v4112 = vshrl.u32 %v4053, 16
      %v4114 = vshll.u32 %v4053, 16
      %v4116 = vrot.slane %v4114, 1
      %v4117 = vor.u32 %v4112, %v4116
      %v4118 = vshrl.u32 %v4060, 16
      %v4120 = vshll.u32 %v4060, 16
      %v4122 = vrot.slane %v4120, 1
      %v4123 = vor.u32 %v4118, %v4122
      %v4124 = vshrl.u32 %v4067, 16
      %v4126 = vshll.u32 %v4067, 16
      %v4128 = vrot.slane %v4126, 1
      %v4129 = vor.u32 %v4124, %v4128
      %v4130 = vshrl.u32 %v4074, 16
      %v4132 = vshll.u32 %v4074, 16
      %v4134 = vrot.slane %v4132, 1
      %v4135 = vor.u32 %v4130, %v4134
      %v4136 = vshrl.u32 %v4081, 16
      %v4138 = vshll.u32 %v4081, 16
      %v4140 = vrot.slane %v4138, 1
      %v4141 = vor.u32 %v4136, %v4140
      %4142 = vst [vmem:[#allocation1] ss:$9 sm:$0xff] %v2920
      %s4143 = scalar_lea.vmem [#allocation1], 1
      %4144 = vst [vmem:[%s4143] ss:$9 sm:$0xff] %v2923
      %s4145 = scalar_lea.vmem [#allocation1], 2
      %4146 = vst [vmem:[%s4145] ss:$9 sm:$0xff] %v2926
      %s4147 = scalar_lea.vmem [#allocation1], 3
      %4148 = vst [vmem:[%s4147] ss:$9 sm:$0xff] %v2929
      %s4149 = scalar_lea.vmem [#allocation1], 4
      %4150 = vst [vmem:[%s4149] ss:$9 sm:$0xff] %v2932
      %v4151 = vld [vmem:[#allocation1] sm:$0xff]
      %4153 = vst [vmem:[#allocation1] ss:$9 sm:$0xff] %v2941
      %4154 = vst [vmem:[%s4143] ss:$9 sm:$0xff] %v2944
      %4155 = vst [vmem:[%s4145] ss:$9 sm:$0xff] %v2947
      %4156 = vst [vmem:[%s4147] ss:$9 sm:$0xff] %v2950
      %4157 = vst [vmem:[%s4149] ss:$9 sm:$0xff] %v2953
      %v4158 = vld [vmem:[#allocation1] sm:$0xff]
      %4160 = vst [vmem:[#allocation1] ss:$9 sm:$0xff] %v2962
      %4161 = vst [vmem:[%s4143] ss:$9 sm:$0xff] %v2965
      %4162 = vst [vmem:[%s4145] ss:$9 sm:$0xff] %v2968
      %4163 = vst [vmem:[%s4147] ss:$9 sm:$0xff] %v2971
      %4164 = vst [vmem:[%s4149] ss:$9 sm:$0xff] %v2974
      %v4165 = vld [vmem:[#allocation1] sm:$0xff]
      %4167 = vst [vmem:[#allocation1] ss:$9 sm:$0xff] %v2983
      %4168 = vst [vmem:[%s4143] ss:$9 sm:$0xff] %v2986
      %4169 = vst [vmem:[%s4145] ss:$9 sm:$0xff] %v2989
      %4170 = vst [vmem:[%s4147] ss:$9 sm:$0xff] %v2992
      %4171 = vst [vmem:[%s4149] ss:$9 sm:$0xff] %v2995
      %v4172 = vld [vmem:[#allocation1] sm:$0xff]
      %4174 = vst [vmem:[#allocation1] ss:$9 sm:$0xff] %v3004
      %4175 = vst [vmem:[%s4143] ss:$9 sm:$0xff] %v3007
      %4176 = vst [vmem:[%s4145] ss:$9 sm:$0xff] %v3010
      %4177 = vst [vmem:[%s4147] ss:$9 sm:$0xff] %v3013
      %4178 = vst [vmem:[%s4149] ss:$9 sm:$0xff] %v3016
      %v4179 = vld [vmem:[#allocation1] sm:$0xff]
      %4181 = vst [vmem:[#allocation1] ss:$9 sm:$0xff] %v3025
      %4182 = vst [vmem:[%s4143] ss:$9 sm:$0xff] %v3028
      %4183 = vst [vmem:[%s4145] ss:$9 sm:$0xff] %v3031
      %4184 = vst [vmem:[%s4147] ss:$9 sm:$0xff] %v3034
      %4185 = vst [vmem:[%s4149] ss:$9 sm:$0xff] %v3037
      %v4186 = vld [vmem:[#allocation1] sm:$0xff]
      %4188 = vst [vmem:[#allocation1] ss:$9 sm:$0xff] %v3046
      %4189 = vst [vmem:[%s4143] ss:$9 sm:$0xff] %v3049
      %4190 = vst [vmem:[%s4145] ss:$9 sm:$0xff] %v3052
      %4191 = vst [vmem:[%s4147] ss:$9 sm:$0xff] %v3055
      %4192 = vst [vmem:[%s4149] ss:$9 sm:$0xff] %v3058
      %v4193 = vld [vmem:[#allocation1] sm:$0xff]
      %4195 = vst [vmem:[#allocation1] ss:$9 sm:$0xff] %v3067
      %4196 = vst [vmem:[%s4143] ss:$9 sm:$0xff] %v3070
      %4197 = vst [vmem:[%s4145] ss:$9 sm:$0xff] %v3073
      %4198 = vst [vmem:[%s4147] ss:$9 sm:$0xff] %v3076
      %4199 = vst [vmem:[%s4149] ss:$9 sm:$0xff] %v3079
      %v4200 = vld [vmem:[#allocation1] sm:$0xff]
      %4202 = vst [vmem:[#allocation1] ss:$9 sm:$0xff] %v3088
      %4203 = vst [vmem:[%s4143] ss:$9 sm:$0xff] %v3091
      %4204 = vst [vmem:[%s4145] ss:$9 sm:$0xff] %v3094
      %4205 = vst [vmem:[%s4147] ss:$9 sm:$0xff] %v3097
      %4206 = vst [vmem:[%s4149] ss:$9 sm:$0xff] %v3100
      %v4207 = vld [vmem:[#allocation1] sm:$0xff]
      %4209 = vst [vmem:[#allocation1] ss:$9 sm:$0xff] %v3109
      %4210 = vst [vmem:[%s4143] ss:$9 sm:$0xff] %v3112
      %4211 = vst [vmem:[%s4145] ss:$9 sm:$0xff] %v3115
      %4212 = vst [vmem:[%s4147] ss:$9 sm:$0xff] %v3118
      %4213 = vst [vmem:[%s4149] ss:$9 sm:$0xff] %v3121
      %v4214 = vld [vmem:[#allocation1] sm:$0xff]
      %4216 = vst [vmem:[#allocation1] ss:$9 sm:$0xff] %v2935
      %s4217 = scalar_lea.vmem [#allocation1], 1
      %4218 = vst [vmem:[%s4217] ss:$9 sm:$0xff] %v2938
      %s4219 = scalar_lea.vmem [#allocation1], 2
      %4220 = vst [vmem:[%s4219] ss:$9 sm:$0xff] %v2941
      %s4221 = scalar_lea.vmem [#allocation1], 3
      %4222 = vst [vmem:[%s4221] ss:$9 sm:$0xff] %v2944
      %s4223 = scalar_lea.vmem [#allocation1], 4
      %4224 = vst [vmem:[%s4223] ss:$9 sm:$0xff] %v2947
      %v4225 = vld [vmem:[#allocation1] sm:$0xff]
      %4227 = vst [vmem:[#allocation1] ss:$9 sm:$0xff] %v2956
      %4228 = vst [vmem:[%s4217] ss:$9 sm:$0xff] %v2959
      %4229 = vst [vmem:[%s4219] ss:$9 sm:$0xff] %v2962
      %4230 = vst [vmem:[%s4221] ss:$9 sm:$0xff] %v2965
      %4231 = vst [vmem:[%s4223] ss:$9 sm:$0xff] %v2968
      %v4232 = vld [vmem:[#allocation1] sm:$0xff]
      %4234 = vst [vmem:[#allocation1] ss:$9 sm:$0xff] %v2977
      %4235 = vst [vmem:[%s4217] ss:$9 sm:$0xff] %v2980
      %4236 = vst [vmem:[%s4219] ss:$9 sm:$0xff] %v2983
      %4237 = vst [vmem:[%s4221] ss:$9 sm:$0xff] %v2986
      %4238 = vst [vmem:[%s4223] ss:$9 sm:$0xff] %v2989
      %v4239 = vld [vmem:[#allocation1] sm:$0xff]
      %4241 = vst [vmem:[#allocation1] ss:$9 sm:$0xff] %v2998
      %4242 = vst [vmem:[%s4217] ss:$9 sm:$0xff] %v3001
      %4243 = vst [vmem:[%s4219] ss:$9 sm:$0xff] %v3004
      %4244 = vst [vmem:[%s4221] ss:$9 sm:$0xff] %v3007
      %4245 = vst [vmem:[%s4223] ss:$9 sm:$0xff] %v3010
      %v4246 = vld [vmem:[#allocation1] sm:$0xff]
      %4248 = vst [vmem:[#allocation1] ss:$9 sm:$0xff] %v3019
      %4249 = vst [vmem:[%s4217] ss:$9 sm:$0xff] %v3022
      %4250 = vst [vmem:[%s4219] ss:$9 sm:$0xff] %v3025
      %4251 = vst [vmem:[%s4221] ss:$9 sm:$0xff] %v3028
      %4252 = vst [vmem:[%s4223] ss:$9 sm:$0xff] %v3031
      %v4253 = vld [vmem:[#allocation1] sm:$0xff]
      %4255 = vst [vmem:[#allocation1] ss:$9 sm:$0xff] %v3040
      %4256 = vst [vmem:[%s4217] ss:$9 sm:$0xff] %v3043
      %4257 = vst [vmem:[%s4219] ss:$9 sm:$0xff] %v3046
      %4258 = vst [vmem:[%s4221] ss:$9 sm:$0xff] %v3049
      %4259 = vst [vmem:[%s4223] ss:$9 sm:$0xff] %v3052
      %v4260 = vld [vmem:[#allocation1] sm:$0xff]
      %4262 = vst [vmem:[#allocation1] ss:$9 sm:$0xff] %v3061
      %4263 = vst [vmem:[%s4217] ss:$9 sm:$0xff] %v3064
      %4264 = vst [vmem:[%s4219] ss:$9 sm:$0xff] %v3067
      %4265 = vst [vmem:[%s4221] ss:$9 sm:$0xff] %v3070
      %4266 = vst [vmem:[%s4223] ss:$9 sm:$0xff] %v3073
      %v4267 = vld [vmem:[#allocation1] sm:$0xff]
      %4269 = vst [vmem:[#allocation1] ss:$9 sm:$0xff] %v3082
      %4270 = vst [vmem:[%s4217] ss:$9 sm:$0xff] %v3085
      %4271 = vst [vmem:[%s4219] ss:$9 sm:$0xff] %v3088
      %4272 = vst [vmem:[%s4221] ss:$9 sm:$0xff] %v3091
      %4273 = vst [vmem:[%s4223] ss:$9 sm:$0xff] %v3094
      %v4274 = vld [vmem:[#allocation1] sm:$0xff]
      %4276 = vst [vmem:[#allocation1] ss:$9 sm:$0xff] %v3103
      %4277 = vst [vmem:[%s4217] ss:$9 sm:$0xff] %v3106
      %4278 = vst [vmem:[%s4219] ss:$9 sm:$0xff] %v3109
      %4279 = vst [vmem:[%s4221] ss:$9 sm:$0xff] %v3112
      %4280 = vst [vmem:[%s4223] ss:$9 sm:$0xff] %v3115
      %v4281 = vld [vmem:[#allocation1] sm:$0xff]
      %4284 = vst [vmem:[#allocation1] ss:$9 sm:$0xff] %v3124
      %4286 = vst [vmem:[%s4217] ss:$9 sm:$0xff] %v3127
      %4288 = vst [vmem:[%s4219] ss:$9 sm:$0xff] %v3130
      %4289 = vst [vmem:[%s4221] ss:$9 sm:$0xff] %v3133
      %4291 = vst [vmem:[%s4223] ss:$9 sm:$0xff] %v3136
      %v4292 = vld [vmem:[#allocation1] sm:$0xff]
      %4294 = vst [vmem:[#allocation1] ss:$9 sm:$0xff] %v2935
      %s4295 = scalar_lea.vmem [#allocation1], 1
      %4296 = vst [vmem:[%s4295] ss:$9 sm:$0xff] %v2938
      %s4297 = scalar_lea.vmem [#allocation1], 2
      %4298 = vst [vmem:[%s4297] ss:$9 sm:$0xff] %v2941
      %s4299 = scalar_lea.vmem [#allocation1], 3
      %4300 = vst [vmem:[%s4299] ss:$9 sm:$0xff] %v2944
      %s4301 = scalar_lea.vmem [#allocation1], 4
      %4302 = vst [vmem:[%s4301] ss:$9 sm:$0xff] %v2947
      %s4303 = scalar_lea.vmem [#allocation1], 5
      %4304 = vst [vmem:[%s4303] ss:$9 sm:$0xff] %v2950
      %v4305 = vld [vmem:[#allocation1] sm:$0xff]
      %4306 = vst [vmem:[#allocation1] ss:$9 sm:$0xff] %v2956
      %4307 = vst [vmem:[%s4295] ss:$9 sm:$0xff] %v2959
      %4308 = vst [vmem:[%s4297] ss:$9 sm:$0xff] %v2962
      %4309 = vst [vmem:[%s4299] ss:$9 sm:$0xff] %v2965
      %4310 = vst [vmem:[%s4301] ss:$9 sm:$0xff] %v2968
      %4311 = vst [vmem:[%s4303] ss:$9 sm:$0xff] %v2971
      %v4312 = vld [vmem:[#allocation1] sm:$0xff]
      %4313 = vst [vmem:[#allocation1] ss:$9 sm:$0xff] %v2977
      %4314 = vst [vmem:[%s4295] ss:$9 sm:$0xff] %v2980
      %4315 = vst [vmem:[%s4297] ss:$9 sm:$0xff] %v2983
      %4316 = vst [vmem:[%s4299] ss:$9 sm:$0xff] %v2986
      %4317 = vst [vmem:[%s4301] ss:$9 sm:$0xff] %v2989
      %4318 = vst [vmem:[%s4303] ss:$9 sm:$0xff] %v2992
      %v4319 = vld [vmem:[#allocation1] sm:$0xff]
      %4320 = vst [vmem:[#allocation1] ss:$9 sm:$0xff] %v2998
      %4321 = vst [vmem:[%s4295] ss:$9 sm:$0xff] %v3001
      %4322 = vst [vmem:[%s4297] ss:$9 sm:$0xff] %v3004
      %4323 = vst [vmem:[%s4299] ss:$9 sm:$0xff] %v3007
      %4324 = vst [vmem:[%s4301] ss:$9 sm:$0xff] %v3010
      %4325 = vst [vmem:[%s4303] ss:$9 sm:$0xff] %v3013
      %v4326 = vld [vmem:[#allocation1] sm:$0xff]
      %4327 = vst [vmem:[#allocation1] ss:$9 sm:$0xff] %v3019
      %4328 = vst [vmem:[%s4295] ss:$9 sm:$0xff] %v3022
      %4329 = vst [vmem:[%s4297] ss:$9 sm:$0xff] %v3025
      %4330 = vst [vmem:[%s4299] ss:$9 sm:$0xff] %v3028
      %4331 = vst [vmem:[%s4301] ss:$9 sm:$0xff] %v3031
      %4332 = vst [vmem:[%s4303] ss:$9 sm:$0xff] %v3034
      %v4333 = vld [vmem:[#allocation1] sm:$0xff]
      %4334 = vst [vmem:[#allocation1] ss:$9 sm:$0xff] %v3040
      %4335 = vst [vmem:[%s4295] ss:$9 sm:$0xff] %v3043
      %4336 = vst [vmem:[%s4297] ss:$9 sm:$0xff] %v3046
      %4337 = vst [vmem:[%s4299] ss:$9 sm:$0xff] %v3049
      %4338 = vst [vmem:[%s4301] ss:$9 sm:$0xff] %v3052
      %4339 = vst [vmem:[%s4303] ss:$9 sm:$0xff] %v3055
      %v4340 = vld [vmem:[#allocation1] sm:$0xff]
      %4341 = vst [vmem:[#allocation1] ss:$9 sm:$0xff] %v3061
      %4342 = vst [vmem:[%s4295] ss:$9 sm:$0xff] %v3064
      %4343 = vst [vmem:[%s4297] ss:$9 sm:$0xff] %v3067
      %4344 = vst [vmem:[%s4299] ss:$9 sm:$0xff] %v3070
      %4345 = vst [vmem:[%s4301] ss:$9 sm:$0xff] %v3073
      %4346 = vst [vmem:[%s4303] ss:$9 sm:$0xff] %v3076
      %v4347 = vld [vmem:[#allocation1] sm:$0xff]
      %4348 = vst [vmem:[#allocation1] ss:$9 sm:$0xff] %v3082
      %4349 = vst [vmem:[%s4295] ss:$9 sm:$0xff] %v3085
      %4350 = vst [vmem:[%s4297] ss:$9 sm:$0xff] %v3088
      %4351 = vst [vmem:[%s4299] ss:$9 sm:$0xff] %v3091
      %4352 = vst [vmem:[%s4301] ss:$9 sm:$0xff] %v3094
      %4353 = vst [vmem:[%s4303] ss:$9 sm:$0xff] %v3097
      %v4354 = vld [vmem:[#allocation1] sm:$0xff]
      %4355 = vst [vmem:[#allocation1] ss:$9 sm:$0xff] %v3103
      %4356 = vst [vmem:[%s4295] ss:$9 sm:$0xff] %v3106
      %4357 = vst [vmem:[%s4297] ss:$9 sm:$0xff] %v3109
      %4358 = vst [vmem:[%s4299] ss:$9 sm:$0xff] %v3112
      %4359 = vst [vmem:[%s4301] ss:$9 sm:$0xff] %v3115
      %4360 = vst [vmem:[%s4303] ss:$9 sm:$0xff] %v3118
      %v4361 = vld [vmem:[#allocation1] sm:$0xff]
      %4362 = vst [vmem:[#allocation1] ss:$9 sm:$0xff] %v3124
      %4363 = vst [vmem:[%s4295] ss:$9 sm:$0xff] %v3127
      %4364 = vst [vmem:[%s4297] ss:$9 sm:$0xff] %v3130
      %4365 = vst [vmem:[%s4299] ss:$9 sm:$0xff] %v3133
      %4366 = vst [vmem:[%s4301] ss:$9 sm:$0xff] %v3136
      %4368 = vst [vmem:[%s4303] ss:$9 sm:$0xff] %v3139
      %v4369 = vld [vmem:[#allocation1] sm:$0xff]
      %v4370 = vshrl.u32 %v4305, 16
      %v4372 = vshll.u32 %v4305, 16
      %v4374 = vrot.slane %v4372, 1
      %v4375 = vor.u32 %v4370, %v4374
      %v4376 = vshrl.u32 %v4312, 16
      %v4378 = vshll.u32 %v4312, 16
      %v4380 = vrot.slane %v4378, 1
      %v4381 = vor.u32 %v4376, %v4380
      %v4382 = vshrl.u32 %v4319, 16
      %v4384 = vshll.u32 %v4319, 16
      %v4386 = vrot.slane %v4384, 1
      %v4387 = vor.u32 %v4382, %v4386
      %v4388 = vshrl.u32 %v4326, 16
      %v4390 = vshll.u32 %v4326, 16
      %v4392 = vrot.slane %v4390, 1
      %v4393 = vor.u32 %v4388, %v4392
      %v4394 = vshrl.u32 %v4333, 16
      %v4396 = vshll.u32 %v4333, 16
      %v4398 = vrot.slane %v4396, 1
      %v4399 = vor.u32 %v4394, %v4398
      %v4400 = vshrl.u32 %v4340, 16
      %v4402 = vshll.u32 %v4340, 16
      %v4404 = vrot.slane %v4402, 1
      %v4405 = vor.u32 %v4400, %v4404
      %v4406 = vshrl.u32 %v4347, 16
      %v4408 = vshll.u32 %v4347, 16
      %v4410 = vrot.slane %v4408, 1
      %v4411 = vor.u32 %v4406, %v4410
      %v4412 = vshrl.u32 %v4354, 16
      %v4414 = vshll.u32 %v4354, 16
      %v4416 = vrot.slane %v4414, 1
      %v4417 = vor.u32 %v4412, %v4416
      %v4418 = vshrl.u32 %v4361, 16
      %v4420 = vshll.u32 %v4361, 16
      %v4422 = vrot.slane %v4420, 1
      %v4423 = vor.u32 %v4418, %v4422
      %v4424 = vshrl.u32 %v4369, 16
      %v4426 = vshll.u32 %v4369, 16
      %v4428 = vrot.slane %v4426, 1
      %v4429 = vor.u32 %v4424, %v4428
      %4430 = vst [vmem:[#allocation1] ss:$9 sm:$0xff] %v2938
      %s4431 = scalar_lea.vmem [#allocation1], 1
      %4432 = vst [vmem:[%s4431] ss:$9 sm:$0xff] %v2941
      %s4433 = scalar_lea.vmem [#allocation1], 2
      %4434 = vst [vmem:[%s4433] ss:$9 sm:$0xff] %v2944
      %s4435 = scalar_lea.vmem [#allocation1], 3
      %4436 = vst [vmem:[%s4435] ss:$9 sm:$0xff] %v2947
      %s4437 = scalar_lea.vmem [#allocation1], 4
      %4438 = vst [vmem:[%s4437] ss:$9 sm:$0xff] %v2950
      %v4439 = vld [vmem:[#allocation1] sm:$0xff]
      %4441 = vst [vmem:[#allocation1] ss:$9 sm:$0xff] %v2959
      %4442 = vst [vmem:[%s4431] ss:$9 sm:$0xff] %v2962
      %4443 = vst [vmem:[%s4433] ss:$9 sm:$0xff] %v2965
      %4444 = vst [vmem:[%s4435] ss:$9 sm:$0xff] %v2968
      %4445 = vst [vmem:[%s4437] ss:$9 sm:$0xff] %v2971
      %v4446 = vld [vmem:[#allocation1] sm:$0xff]
      %4448 = vst [vmem:[#allocation1] ss:$9 sm:$0xff] %v2980
      %4449 = vst [vmem:[%s4431] ss:$9 sm:$0xff] %v2983
      %4450 = vst [vmem:[%s4433] ss:$9 sm:$0xff] %v2986
      %4451 = vst [vmem:[%s4435] ss:$9 sm:$0xff] %v2989
      %4452 = vst [vmem:[%s4437] ss:$9 sm:$0xff] %v2992
      %v4453 = vld [vmem:[#allocation1] sm:$0xff]
      %4455 = vst [vmem:[#allocation1] ss:$9 sm:$0xff] %v3001
      %4456 = vst [vmem:[%s4431] ss:$9 sm:$0xff] %v3004
      %4457 = vst [vmem:[%s4433] ss:$9 sm:$0xff] %v3007
      %4458 = vst [vmem:[%s4435] ss:$9 sm:$0xff] %v3010
      %4459 = vst [vmem:[%s4437] ss:$9 sm:$0xff] %v3013
      %v4460 = vld [vmem:[#allocation1] sm:$0xff]
      %4462 = vst [vmem:[#allocation1] ss:$9 sm:$0xff] %v3022
      %4463 = vst [vmem:[%s4431] ss:$9 sm:$0xff] %v3025
      %4464 = vst [vmem:[%s4433] ss:$9 sm:$0xff] %v3028
      %4465 = vst [vmem:[%s4435] ss:$9 sm:$0xff] %v3031
      %4466 = vst [vmem:[%s4437] ss:$9 sm:$0xff] %v3034
      %v4467 = vld [vmem:[#allocation1] sm:$0xff]
      %4469 = vst [vmem:[#allocation1] ss:$9 sm:$0xff] %v3043
      %4470 = vst [vmem:[%s4431] ss:$9 sm:$0xff] %v3046
      %4471 = vst [vmem:[%s4433] ss:$9 sm:$0xff] %v3049
      %4472 = vst [vmem:[%s4435] ss:$9 sm:$0xff] %v3052
      %4473 = vst [vmem:[%s4437] ss:$9 sm:$0xff] %v3055
      %v4474 = vld [vmem:[#allocation1] sm:$0xff]
      %4476 = vst [vmem:[#allocation1] ss:$9 sm:$0xff] %v3064
      %4477 = vst [vmem:[%s4431] ss:$9 sm:$0xff] %v3067
      %4478 = vst [vmem:[%s4433] ss:$9 sm:$0xff] %v3070
      %4479 = vst [vmem:[%s4435] ss:$9 sm:$0xff] %v3073
      %4480 = vst [vmem:[%s4437] ss:$9 sm:$0xff] %v3076
      %v4481 = vld [vmem:[#allocation1] sm:$0xff]
      %4483 = vst [vmem:[#allocation1] ss:$9 sm:$0xff] %v3085
      %4484 = vst [vmem:[%s4431] ss:$9 sm:$0xff] %v3088
      %4485 = vst [vmem:[%s4433] ss:$9 sm:$0xff] %v3091
      %4486 = vst [vmem:[%s4435] ss:$9 sm:$0xff] %v3094
      %4487 = vst [vmem:[%s4437] ss:$9 sm:$0xff] %v3097
      %v4488 = vld [vmem:[#allocation1] sm:$0xff]
      %4490 = vst [vmem:[#allocation1] ss:$9 sm:$0xff] %v3106
      %4491 = vst [vmem:[%s4431] ss:$9 sm:$0xff] %v3109
      %4492 = vst [vmem:[%s4433] ss:$9 sm:$0xff] %v3112
      %4493 = vst [vmem:[%s4435] ss:$9 sm:$0xff] %v3115
      %4494 = vst [vmem:[%s4437] ss:$9 sm:$0xff] %v3118
      %v4495 = vld [vmem:[#allocation1] sm:$0xff]
      %4497 = vst [vmem:[#allocation1] ss:$9 sm:$0xff] %v3127
      %4498 = vst [vmem:[%s4431] ss:$9 sm:$0xff] %v3130
      %4499 = vst [vmem:[%s4433] ss:$9 sm:$0xff] %v3133
      %4500 = vst [vmem:[%s4435] ss:$9 sm:$0xff] %v3136
      %4501 = vst [vmem:[%s4437] ss:$9 sm:$0xff] %v3139
      %v4502 = vld [vmem:[#allocation1] sm:$0xff]
      %4504 = vst [vmem:[#allocation1] ss:$9 sm:$0xff] %v2938
      %s4505 = scalar_lea.vmem [#allocation1], 1
      %4506 = vst [vmem:[%s4505] ss:$9 sm:$0xff] %v2941
      %s4507 = scalar_lea.vmem [#allocation1], 2
      %4508 = vst [vmem:[%s4507] ss:$9 sm:$0xff] %v2944
      %s4509 = scalar_lea.vmem [#allocation1], 3
      %4510 = vst [vmem:[%s4509] ss:$9 sm:$0xff] %v2947
      %s4511 = scalar_lea.vmem [#allocation1], 4
      %4512 = vst [vmem:[%s4511] ss:$9 sm:$0xff] %v2950
      %s4513 = scalar_lea.vmem [#allocation1], 5
      %4514 = vst [vmem:[%s4513] ss:$9 sm:$0xff] %v2953
      %v4515 = vld [vmem:[#allocation1] sm:$0xff]
      %4516 = vst [vmem:[#allocation1] ss:$9 sm:$0xff] %v2959
      %4517 = vst [vmem:[%s4505] ss:$9 sm:$0xff] %v2962
      %4518 = vst [vmem:[%s4507] ss:$9 sm:$0xff] %v2965
      %4519 = vst [vmem:[%s4509] ss:$9 sm:$0xff] %v2968
      %4520 = vst [vmem:[%s4511] ss:$9 sm:$0xff] %v2971
      %4521 = vst [vmem:[%s4513] ss:$9 sm:$0xff] %v2974
      %v4522 = vld [vmem:[#allocation1] sm:$0xff]
      %4523 = vst [vmem:[#allocation1] ss:$9 sm:$0xff] %v2980
      %4524 = vst [vmem:[%s4505] ss:$9 sm:$0xff] %v2983
      %4525 = vst [vmem:[%s4507] ss:$9 sm:$0xff] %v2986
      %4526 = vst [vmem:[%s4509] ss:$9 sm:$0xff] %v2989
      %4527 = vst [vmem:[%s4511] ss:$9 sm:$0xff] %v2992
      %4528 = vst [vmem:[%s4513] ss:$9 sm:$0xff] %v2995
      %v4529 = vld [vmem:[#allocation1] sm:$0xff]
      %4530 = vst [vmem:[#allocation1] ss:$9 sm:$0xff] %v3001
      %4531 = vst [vmem:[%s4505] ss:$9 sm:$0xff] %v3004
      %4532 = vst [vmem:[%s4507] ss:$9 sm:$0xff] %v3007
      %4533 = vst [vmem:[%s4509] ss:$9 sm:$0xff] %v3010
      %4534 = vst [vmem:[%s4511] ss:$9 sm:$0xff] %v3013
      %4535 = vst [vmem:[%s4513] ss:$9 sm:$0xff] %v3016
      %v4536 = vld [vmem:[#allocation1] sm:$0xff]
      %4537 = vst [vmem:[#allocation1] ss:$9 sm:$0xff] %v3022
      %4538 = vst [vmem:[%s4505] ss:$9 sm:$0xff] %v3025
      %4539 = vst [vmem:[%s4507] ss:$9 sm:$0xff] %v3028
      %4540 = vst [vmem:[%s4509] ss:$9 sm:$0xff] %v3031
      %4541 = vst [vmem:[%s4511] ss:$9 sm:$0xff] %v3034
      %4542 = vst [vmem:[%s4513] ss:$9 sm:$0xff] %v3037
      %v4543 = vld [vmem:[#allocation1] sm:$0xff]
      %4544 = vst [vmem:[#allocation1] ss:$9 sm:$0xff] %v3043
      %4545 = vst [vmem:[%s4505] ss:$9 sm:$0xff] %v3046
      %4546 = vst [vmem:[%s4507] ss:$9 sm:$0xff] %v3049
      %4547 = vst [vmem:[%s4509] ss:$9 sm:$0xff] %v3052
      %4548 = vst [vmem:[%s4511] ss:$9 sm:$0xff] %v3055
      %4549 = vst [vmem:[%s4513] ss:$9 sm:$0xff] %v3058
      %v4550 = vld [vmem:[#allocation1] sm:$0xff]
      %4551 = vst [vmem:[#allocation1] ss:$9 sm:$0xff] %v3064
      %4552 = vst [vmem:[%s4505] ss:$9 sm:$0xff] %v3067
      %4553 = vst [vmem:[%s4507] ss:$9 sm:$0xff] %v3070
      %4554 = vst [vmem:[%s4509] ss:$9 sm:$0xff] %v3073
      %4555 = vst [vmem:[%s4511] ss:$9 sm:$0xff] %v3076
      %4556 = vst [vmem:[%s4513] ss:$9 sm:$0xff] %v3079
      %v4557 = vld [vmem:[#allocation1] sm:$0xff]
      %4558 = vst [vmem:[#allocation1] ss:$9 sm:$0xff] %v3085
      %4559 = vst [vmem:[%s4505] ss:$9 sm:$0xff] %v3088
      %4560 = vst [vmem:[%s4507] ss:$9 sm:$0xff] %v3091
      %4561 = vst [vmem:[%s4509] ss:$9 sm:$0xff] %v3094
      %4562 = vst [vmem:[%s4511] ss:$9 sm:$0xff] %v3097
      %4563 = vst [vmem:[%s4513] ss:$9 sm:$0xff] %v3100
      %v4564 = vld [vmem:[#allocation1] sm:$0xff]
      %4565 = vst [vmem:[#allocation1] ss:$9 sm:$0xff] %v3106
      %4566 = vst [vmem:[%s4505] ss:$9 sm:$0xff] %v3109
      %4567 = vst [vmem:[%s4507] ss:$9 sm:$0xff] %v3112
      %4568 = vst [vmem:[%s4509] ss:$9 sm:$0xff] %v3115
      %4569 = vst [vmem:[%s4511] ss:$9 sm:$0xff] %v3118
      %4570 = vst [vmem:[%s4513] ss:$9 sm:$0xff] %v3121
      %v4571 = vld [vmem:[#allocation1] sm:$0xff]
      %4572 = vst [vmem:[#allocation1] ss:$9 sm:$0xff] %v3127
      %4573 = vst [vmem:[%s4505] ss:$9 sm:$0xff] %v3130
      %4574 = vst [vmem:[%s4507] ss:$9 sm:$0xff] %v3133
      %4575 = vst [vmem:[%s4509] ss:$9 sm:$0xff] %v3136
      %4576 = vst [vmem:[%s4511] ss:$9 sm:$0xff] %v3139
      %4578 = vst [vmem:[%s4513] ss:$9 sm:$0xff] %v3142
      %v4579 = vld [vmem:[#allocation1] sm:$0xff]
      %v4580 = vshrl.u32 %v4515, 16
      %v4582 = vshll.u32 %v4515, 16
      %v4584 = vrot.slane %v4582, 1
      %v4585 = vor.u32 %v4580, %v4584
      %v4586 = vshrl.u32 %v4522, 16
      %v4588 = vshll.u32 %v4522, 16
      %v4590 = vrot.slane %v4588, 1
      %v4591 = vor.u32 %v4586, %v4590
      %v4592 = vshrl.u32 %v4529, 16
      %v4594 = vshll.u32 %v4529, 16
      %v4596 = vrot.slane %v4594, 1
      %v4597 = vor.u32 %v4592, %v4596
      %v4598 = vshrl.u32 %v4536, 16
      %v4600 = vshll.u32 %v4536, 16
      %v4602 = vrot.slane %v4600, 1
      %v4603 = vor.u32 %v4598, %v4602
      %v4604 = vshrl.u32 %v4543, 16
      %v4606 = vshll.u32 %v4543, 16
      %v4608 = vrot.slane %v4606, 1
      %v4609 = vor.u32 %v4604, %v4608
      %v4610 = vshrl.u32 %v4550, 16
      %v4612 = vshll.u32 %v4550, 16
      %v4614 = vrot.slane %v4612, 1
      %v4615 = vor.u32 %v4610, %v4614
      %v4616 = vshrl.u32 %v4557, 16
      %v4618 = vshll.u32 %v4557, 16
      %v4620 = vrot.slane %v4618, 1
      %v4621 = vor.u32 %v4616, %v4620
      %v4622 = vshrl.u32 %v4564, 16
      %v4624 = vshll.u32 %v4564, 16
      %v4626 = vrot.slane %v4624, 1
      %v4627 = vor.u32 %v4622, %v4626
      %v4628 = vshrl.u32 %v4571, 16
      %v4630 = vshll.u32 %v4571, 16
      %v4632 = vrot.slane %v4630, 1
      %v4633 = vor.u32 %v4628, %v4632
      %v4634 = vshrl.u32 %v4579, 16
      %v4636 = vshll.u32 %v4579, 16
      %v4638 = vrot.slane %v4636, 1
      %v4639 = vor.u32 %v4634, %v4638
      %4640 = vst [vmem:[#allocation1] ss:$9 sm:$0xff] %v2941
      %s4641 = scalar_lea.vmem [#allocation1], 1
      %4642 = vst [vmem:[%s4641] ss:$9 sm:$0xff] %v2944
      %s4643 = scalar_lea.vmem [#allocation1], 2
      %4644 = vst [vmem:[%s4643] ss:$9 sm:$0xff] %v2947
      %s4645 = scalar_lea.vmem [#allocation1], 3
      %4646 = vst [vmem:[%s4645] ss:$9 sm:$0xff] %v2950
      %s4647 = scalar_lea.vmem [#allocation1], 4
      %4648 = vst [vmem:[%s4647] ss:$9 sm:$0xff] %v2953
      %v4649 = vld [vmem:[#allocation1] sm:$0xff]
      %4651 = vst [vmem:[#allocation1] ss:$9 sm:$0xff] %v2962
      %4652 = vst [vmem:[%s4641] ss:$9 sm:$0xff] %v2965
      %4653 = vst [vmem:[%s4643] ss:$9 sm:$0xff] %v2968
      %4654 = vst [vmem:[%s4645] ss:$9 sm:$0xff] %v2971
      %4655 = vst [vmem:[%s4647] ss:$9 sm:$0xff] %v2974
      %v4656 = vld [vmem:[#allocation1] sm:$0xff]
      %4658 = vst [vmem:[#allocation1] ss:$9 sm:$0xff] %v2983
      %4659 = vst [vmem:[%s4641] ss:$9 sm:$0xff] %v2986
      %4660 = vst [vmem:[%s4643] ss:$9 sm:$0xff] %v2989
      %4661 = vst [vmem:[%s4645] ss:$9 sm:$0xff] %v2992
      %4662 = vst [vmem:[%s4647] ss:$9 sm:$0xff] %v2995
      %v4663 = vld [vmem:[#allocation1] sm:$0xff]
      %4665 = vst [vmem:[#allocation1] ss:$9 sm:$0xff] %v3004
      %4666 = vst [vmem:[%s4641] ss:$9 sm:$0xff] %v3007
      %4667 = vst [vmem:[%s4643] ss:$9 sm:$0xff] %v3010
      %4668 = vst [vmem:[%s4645] ss:$9 sm:$0xff] %v3013
      %4669 = vst [vmem:[%s4647] ss:$9 sm:$0xff] %v3016
      %v4670 = vld [vmem:[#allocation1] sm:$0xff]
      %4672 = vst [vmem:[#allocation1] ss:$9 sm:$0xff] %v3025
      %4673 = vst [vmem:[%s4641] ss:$9 sm:$0xff] %v3028
      %4674 = vst [vmem:[%s4643] ss:$9 sm:$0xff] %v3031
      %4675 = vst [vmem:[%s4645] ss:$9 sm:$0xff] %v3034
      %4676 = vst [vmem:[%s4647] ss:$9 sm:$0xff] %v3037
      %v4677 = vld [vmem:[#allocation1] sm:$0xff]
      %4679 = vst [vmem:[#allocation1] ss:$9 sm:$0xff] %v3046
      %4680 = vst [vmem:[%s4641] ss:$9 sm:$0xff] %v3049
      %4681 = vst [vmem:[%s4643] ss:$9 sm:$0xff] %v3052
      %4682 = vst [vmem:[%s4645] ss:$9 sm:$0xff] %v3055
      %4683 = vst [vmem:[%s4647] ss:$9 sm:$0xff] %v3058
      %v4684 = vld [vmem:[#allocation1] sm:$0xff]
      %4686 = vst [vmem:[#allocation1] ss:$9 sm:$0xff] %v3067
      %4687 = vst [vmem:[%s4641] ss:$9 sm:$0xff] %v3070
      %4688 = vst [vmem:[%s4643] ss:$9 sm:$0xff] %v3073
      %4689 = vst [vmem:[%s4645] ss:$9 sm:$0xff] %v3076
      %4690 = vst [vmem:[%s4647] ss:$9 sm:$0xff] %v3079
      %v4691 = vld [vmem:[#allocation1] sm:$0xff]
      %4693 = vst [vmem:[#allocation1] ss:$9 sm:$0xff] %v3088
      %4694 = vst [vmem:[%s4641] ss:$9 sm:$0xff] %v3091
      %4695 = vst [vmem:[%s4643] ss:$9 sm:$0xff] %v3094
      %4696 = vst [vmem:[%s4645] ss:$9 sm:$0xff] %v3097
      %4697 = vst [vmem:[%s4647] ss:$9 sm:$0xff] %v3100
      %v4698 = vld [vmem:[#allocation1] sm:$0xff]
      %4700 = vst [vmem:[#allocation1] ss:$9 sm:$0xff] %v3109
      %4701 = vst [vmem:[%s4641] ss:$9 sm:$0xff] %v3112
      %4702 = vst [vmem:[%s4643] ss:$9 sm:$0xff] %v3115
      %4703 = vst [vmem:[%s4645] ss:$9 sm:$0xff] %v3118
      %4704 = vst [vmem:[%s4647] ss:$9 sm:$0xff] %v3121
      %v4705 = vld [vmem:[#allocation1] sm:$0xff]
      %4707 = vst [vmem:[#allocation1] ss:$9 sm:$0xff] %v3130
      %4708 = vst [vmem:[%s4641] ss:$9 sm:$0xff] %v3133
      %4709 = vst [vmem:[%s4643] ss:$9 sm:$0xff] %v3136
      %4710 = vst [vmem:[%s4645] ss:$9 sm:$0xff] %v3139
      %4711 = vst [vmem:[%s4647] ss:$9 sm:$0xff] %v3142
      %v4712 = vld [vmem:[#allocation1] sm:$0xff]
      %4714 = vst [vmem:[#allocation1] ss:$9 sm:$0xff] %v2956
      %s4715 = scalar_lea.vmem [#allocation1], 1
      %4716 = vst [vmem:[%s4715] ss:$9 sm:$0xff] %v2959
      %s4717 = scalar_lea.vmem [#allocation1], 2
      %4718 = vst [vmem:[%s4717] ss:$9 sm:$0xff] %v2962
      %s4719 = scalar_lea.vmem [#allocation1], 3
      %4720 = vst [vmem:[%s4719] ss:$9 sm:$0xff] %v2965
      %s4721 = scalar_lea.vmem [#allocation1], 4
      %4722 = vst [vmem:[%s4721] ss:$9 sm:$0xff] %v2968
      %v4723 = vld [vmem:[#allocation1] sm:$0xff]
      %4725 = vst [vmem:[#allocation1] ss:$9 sm:$0xff] %v2977
      %4726 = vst [vmem:[%s4715] ss:$9 sm:$0xff] %v2980
      %4727 = vst [vmem:[%s4717] ss:$9 sm:$0xff] %v2983
      %4728 = vst [vmem:[%s4719] ss:$9 sm:$0xff] %v2986
      %4729 = vst [vmem:[%s4721] ss:$9 sm:$0xff] %v2989
      %v4730 = vld [vmem:[#allocation1] sm:$0xff]
      %4732 = vst [vmem:[#allocation1] ss:$9 sm:$0xff] %v2998
      %4733 = vst [vmem:[%s4715] ss:$9 sm:$0xff] %v3001
      %4734 = vst [vmem:[%s4717] ss:$9 sm:$0xff] %v3004
      %4735 = vst [vmem:[%s4719] ss:$9 sm:$0xff] %v3007
      %4736 = vst [vmem:[%s4721] ss:$9 sm:$0xff] %v3010
      %v4737 = vld [vmem:[#allocation1] sm:$0xff]
      %4739 = vst [vmem:[#allocation1] ss:$9 sm:$0xff] %v3019
      %4740 = vst [vmem:[%s4715] ss:$9 sm:$0xff] %v3022
      %4741 = vst [vmem:[%s4717] ss:$9 sm:$0xff] %v3025
      %4742 = vst [vmem:[%s4719] ss:$9 sm:$0xff] %v3028
      %4743 = vst [vmem:[%s4721] ss:$9 sm:$0xff] %v3031
      %v4744 = vld [vmem:[#allocation1] sm:$0xff]
      %4746 = vst [vmem:[#allocation1] ss:$9 sm:$0xff] %v3040
      %4747 = vst [vmem:[%s4715] ss:$9 sm:$0xff] %v3043
      %4748 = vst [vmem:[%s4717] ss:$9 sm:$0xff] %v3046
      %4749 = vst [vmem:[%s4719] ss:$9 sm:$0xff] %v3049
      %4750 = vst [vmem:[%s4721] ss:$9 sm:$0xff] %v3052
      %v4751 = vld [vmem:[#allocation1] sm:$0xff]
      %4753 = vst [vmem:[#allocation1] ss:$9 sm:$0xff] %v3061
      %4754 = vst [vmem:[%s4715] ss:$9 sm:$0xff] %v3064
      %4755 = vst [vmem:[%s4717] ss:$9 sm:$0xff] %v3067
      %4756 = vst [vmem:[%s4719] ss:$9 sm:$0xff] %v3070
      %4757 = vst [vmem:[%s4721] ss:$9 sm:$0xff] %v3073
      %v4758 = vld [vmem:[#allocation1] sm:$0xff]
      %4760 = vst [vmem:[#allocation1] ss:$9 sm:$0xff] %v3082
      %4761 = vst [vmem:[%s4715] ss:$9 sm:$0xff] %v3085
      %4762 = vst [vmem:[%s4717] ss:$9 sm:$0xff] %v3088
      %4763 = vst [vmem:[%s4719] ss:$9 sm:$0xff] %v3091
      %4764 = vst [vmem:[%s4721] ss:$9 sm:$0xff] %v3094
      %v4765 = vld [vmem:[#allocation1] sm:$0xff]
      %4767 = vst [vmem:[#allocation1] ss:$9 sm:$0xff] %v3103
      %4768 = vst [vmem:[%s4715] ss:$9 sm:$0xff] %v3106
      %4769 = vst [vmem:[%s4717] ss:$9 sm:$0xff] %v3109
      %4770 = vst [vmem:[%s4719] ss:$9 sm:$0xff] %v3112
      %4771 = vst [vmem:[%s4721] ss:$9 sm:$0xff] %v3115
      %v4772 = vld [vmem:[#allocation1] sm:$0xff]
      %4774 = vst [vmem:[#allocation1] ss:$9 sm:$0xff] %v3124
      %4775 = vst [vmem:[%s4715] ss:$9 sm:$0xff] %v3127
      %4776 = vst [vmem:[%s4717] ss:$9 sm:$0xff] %v3130
      %4777 = vst [vmem:[%s4719] ss:$9 sm:$0xff] %v3133
      %4778 = vst [vmem:[%s4721] ss:$9 sm:$0xff] %v3136
      %v4779 = vld [vmem:[#allocation1] sm:$0xff]
      %4781 = vst [vmem:[#allocation1] ss:$9 sm:$0xff] %v3145
      %4783 = vst [vmem:[%s4715] ss:$9 sm:$0xff] %v3148
      %4785 = vst [vmem:[%s4717] ss:$9 sm:$0xff] %v3151
      %4787 = vst [vmem:[%s4719] ss:$9 sm:$0xff] %v3154
      %4788 = vst [vmem:[%s4721] ss:$9 sm:$0xff] %v3157
      %v4789 = vld [vmem:[#allocation1] sm:$0xff]
      %4791 = vst [vmem:[#allocation1] ss:$9 sm:$0xff] %v2956
      %s4792 = scalar_lea.vmem [#allocation1], 1
      %4793 = vst [vmem:[%s4792] ss:$9 sm:$0xff] %v2959
      %s4794 = scalar_lea.vmem [#allocation1], 2
      %4795 = vst [vmem:[%s4794] ss:$9 sm:$0xff] %v2962
      %s4796 = scalar_lea.vmem [#allocation1], 3
      %4797 = vst [vmem:[%s4796] ss:$9 sm:$0xff] %v2965
      %s4798 = scalar_lea.vmem [#allocation1], 4
      %4799 = vst [vmem:[%s4798] ss:$9 sm:$0xff] %v2968
      %s4800 = scalar_lea.vmem [#allocation1], 5
      %4801 = vst [vmem:[%s4800] ss:$9 sm:$0xff] %v2971
      %v4802 = vld [vmem:[#allocation1] sm:$0xff]
      %4803 = vst [vmem:[#allocation1] ss:$9 sm:$0xff] %v2977
      %4804 = vst [vmem:[%s4792] ss:$9 sm:$0xff] %v2980
      %4805 = vst [vmem:[%s4794] ss:$9 sm:$0xff] %v2983
      %4806 = vst [vmem:[%s4796] ss:$9 sm:$0xff] %v2986
      %4807 = vst [vmem:[%s4798] ss:$9 sm:$0xff] %v2989
      %4808 = vst [vmem:[%s4800] ss:$9 sm:$0xff] %v2992
      %v4809 = vld [vmem:[#allocation1] sm:$0xff]
      %4810 = vst [vmem:[#allocation1] ss:$9 sm:$0xff] %v2998
      %4811 = vst [vmem:[%s4792] ss:$9 sm:$0xff] %v3001
      %4812 = vst [vmem:[%s4794] ss:$9 sm:$0xff] %v3004
      %4813 = vst [vmem:[%s4796] ss:$9 sm:$0xff] %v3007
      %4814 = vst [vmem:[%s4798] ss:$9 sm:$0xff] %v3010
      %4815 = vst [vmem:[%s4800] ss:$9 sm:$0xff] %v3013
      %v4816 = vld [vmem:[#allocation1] sm:$0xff]
      %4817 = vst [vmem:[#allocation1] ss:$9 sm:$0xff] %v3019
      %4818 = vst [vmem:[%s4792] ss:$9 sm:$0xff] %v3022
      %4819 = vst [vmem:[%s4794] ss:$9 sm:$0xff] %v3025
      %4820 = vst [vmem:[%s4796] ss:$9 sm:$0xff] %v3028
      %4821 = vst [vmem:[%s4798] ss:$9 sm:$0xff] %v3031
      %4822 = vst [vmem:[%s4800] ss:$9 sm:$0xff] %v3034
      %v4823 = vld [vmem:[#allocation1] sm:$0xff]
      %4824 = vst [vmem:[#allocation1] ss:$9 sm:$0xff] %v3040
      %4825 = vst [vmem:[%s4792] ss:$9 sm:$0xff] %v3043
      %4826 = vst [vmem:[%s4794] ss:$9 sm:$0xff] %v3046
      %4827 = vst [vmem:[%s4796] ss:$9 sm:$0xff] %v3049
      %4828 = vst [vmem:[%s4798] ss:$9 sm:$0xff] %v3052
      %4829 = vst [vmem:[%s4800] ss:$9 sm:$0xff] %v3055
      %v4830 = vld [vmem:[#allocation1] sm:$0xff]
      %4831 = vst [vmem:[#allocation1] ss:$9 sm:$0xff] %v3061
      %4832 = vst [vmem:[%s4792] ss:$9 sm:$0xff] %v3064
      %4833 = vst [vmem:[%s4794] ss:$9 sm:$0xff] %v3067
      %4834 = vst [vmem:[%s4796] ss:$9 sm:$0xff] %v3070
      %4835 = vst [vmem:[%s4798] ss:$9 sm:$0xff] %v3073
      %4836 = vst [vmem:[%s4800] ss:$9 sm:$0xff] %v3076
      %v4837 = vld [vmem:[#allocation1] sm:$0xff]
      %4838 = vst [vmem:[#allocation1] ss:$9 sm:$0xff] %v3082
      %4839 = vst [vmem:[%s4792] ss:$9 sm:$0xff] %v3085
      %4840 = vst [vmem:[%s4794] ss:$9 sm:$0xff] %v3088
      %4841 = vst [vmem:[%s4796] ss:$9 sm:$0xff] %v3091
      %4842 = vst [vmem:[%s4798] ss:$9 sm:$0xff] %v3094
      %4843 = vst [vmem:[%s4800] ss:$9 sm:$0xff] %v3097
      %v4844 = vld [vmem:[#allocation1] sm:$0xff]
      %4845 = vst [vmem:[#allocation1] ss:$9 sm:$0xff] %v3103
      %4846 = vst [vmem:[%s4792] ss:$9 sm:$0xff] %v3106
      %4847 = vst [vmem:[%s4794] ss:$9 sm:$0xff] %v3109
      %4848 = vst [vmem:[%s4796] ss:$9 sm:$0xff] %v3112
      %4849 = vst [vmem:[%s4798] ss:$9 sm:$0xff] %v3115
      %4850 = vst [vmem:[%s4800] ss:$9 sm:$0xff] %v3118
      %v4851 = vld [vmem:[#allocation1] sm:$0xff]
      %4852 = vst [vmem:[#allocation1] ss:$9 sm:$0xff] %v3124
      %4853 = vst [vmem:[%s4792] ss:$9 sm:$0xff] %v3127
      %4854 = vst [vmem:[%s4794] ss:$9 sm:$0xff] %v3130
      %4855 = vst [vmem:[%s4796] ss:$9 sm:$0xff] %v3133
      %4856 = vst [vmem:[%s4798] ss:$9 sm:$0xff] %v3136
      %4857 = vst [vmem:[%s4800] ss:$9 sm:$0xff] %v3139
      %v4858 = vld [vmem:[#allocation1] sm:$0xff]
      %4859 = vst [vmem:[#allocation1] ss:$9 sm:$0xff] %v3145
      %4860 = vst [vmem:[%s4792] ss:$9 sm:$0xff] %v3148
      %4861 = vst [vmem:[%s4794] ss:$9 sm:$0xff] %v3151
      %4862 = vst [vmem:[%s4796] ss:$9 sm:$0xff] %v3154
      %4863 = vst [vmem:[%s4798] ss:$9 sm:$0xff] %v3157
      %4865 = vst [vmem:[%s4800] ss:$9 sm:$0xff] %v3160
      %v4866 = vld [vmem:[#allocation1] sm:$0xff]
      %4867 = vst [vmem:[#allocation1] ss:$9 sm:$0xff] %v2959
      %s4868 = scalar_lea.vmem [#allocation1], 1
      %4869 = vst [vmem:[%s4868] ss:$9 sm:$0xff] %v2962
      %s4870 = scalar_lea.vmem [#allocation1], 2
      %4871 = vst [vmem:[%s4870] ss:$9 sm:$0xff] %v2965
      %s4872 = scalar_lea.vmem [#allocation1], 3
      %4873 = vst [vmem:[%s4872] ss:$9 sm:$0xff] %v2968
      %s4874 = scalar_lea.vmem [#allocation1], 4
      %4875 = vst [vmem:[%s4874] ss:$9 sm:$0xff] %v2971
      %v4876 = vld [vmem:[#allocation1] sm:$0xff]
      %4877 = vst [vmem:[#allocation1] ss:$9 sm:$0xff] %v2980
      %4878 = vst [vmem:[%s4868] ss:$9 sm:$0xff] %v2983
      %4879 = vst [vmem:[%s4870] ss:$9 sm:$0xff] %v2986
      %4880 = vst [vmem:[%s4872] ss:$9 sm:$0xff] %v2989
      %4881 = vst [vmem:[%s4874] ss:$9 sm:$0xff] %v2992
      %v4882 = vld [vmem:[#allocation1] sm:$0xff]
      %4883 = vst [vmem:[#allocation1] ss:$9 sm:$0xff] %v3001
      %4884 = vst [vmem:[%s4868] ss:$9 sm:$0xff] %v3004
      %4885 = vst [vmem:[%s4870] ss:$9 sm:$0xff] %v3007
      %4886 = vst [vmem:[%s4872] ss:$9 sm:$0xff] %v3010
      %4887 = vst [vmem:[%s4874] ss:$9 sm:$0xff] %v3013
      %v4888 = vld [vmem:[#allocation1] sm:$0xff]
      %4889 = vst [vmem:[#allocation1] ss:$9 sm:$0xff] %v3022
      %4890 = vst [vmem:[%s4868] ss:$9 sm:$0xff] %v3025
      %4891 = vst [vmem:[%s4870] ss:$9 sm:$0xff] %v3028
      %4892 = vst [vmem:[%s4872] ss:$9 sm:$0xff] %v3031
      %4893 = vst [vmem:[%s4874] ss:$9 sm:$0xff] %v3034
      %v4894 = vld [vmem:[#allocation1] sm:$0xff]
      %4895 = vst [vmem:[#allocation1] ss:$9 sm:$0xff] %v3043
      %4896 = vst [vmem:[%s4868] ss:$9 sm:$0xff] %v3046
      %4897 = vst [vmem:[%s4870] ss:$9 sm:$0xff] %v3049
      %4898 = vst [vmem:[%s4872] ss:$9 sm:$0xff] %v3052
      %4899 = vst [vmem:[%s4874] ss:$9 sm:$0xff] %v3055
      %v4900 = vld [vmem:[#allocation1] sm:$0xff]
      %4901 = vst [vmem:[#allocation1] ss:$9 sm:$0xff] %v3064
      %4902 = vst [vmem:[%s4868] ss:$9 sm:$0xff] %v3067
      %4903 = vst [vmem:[%s4870] ss:$9 sm:$0xff] %v3070
      %4904 = vst [vmem:[%s4872] ss:$9 sm:$0xff] %v3073
      %4905 = vst [vmem:[%s4874] ss:$9 sm:$0xff] %v3076
      %v4906 = vld [vmem:[#allocation1] sm:$0xff]
      %4907 = vst [vmem:[#allocation1] ss:$9 sm:$0xff] %v3085
      %4908 = vst [vmem:[%s4868] ss:$9 sm:$0xff] %v3088
      %4909 = vst [vmem:[%s4870] ss:$9 sm:$0xff] %v3091
      %4910 = vst [vmem:[%s4872] ss:$9 sm:$0xff] %v3094
      %4911 = vst [vmem:[%s4874] ss:$9 sm:$0xff] %v3097
      %v4912 = vld [vmem:[#allocation1] sm:$0xff]
      %4913 = vst [vmem:[#allocation1] ss:$9 sm:$0xff] %v3106
      %4914 = vst [vmem:[%s4868] ss:$9 sm:$0xff] %v3109
      %4915 = vst [vmem:[%s4870] ss:$9 sm:$0xff] %v3112
      %4916 = vst [vmem:[%s4872] ss:$9 sm:$0xff] %v3115
      %4917 = vst [vmem:[%s4874] ss:$9 sm:$0xff] %v3118
      %v4918 = vld [vmem:[#allocation1] sm:$0xff]
      %4919 = vst [vmem:[#allocation1] ss:$9 sm:$0xff] %v3127
      %4920 = vst [vmem:[%s4868] ss:$9 sm:$0xff] %v3130
      %4921 = vst [vmem:[%s4870] ss:$9 sm:$0xff] %v3133
      %4922 = vst [vmem:[%s4872] ss:$9 sm:$0xff] %v3136
      %4923 = vst [vmem:[%s4874] ss:$9 sm:$0xff] %v3139
      %v4924 = vld [vmem:[#allocation1] sm:$0xff]
      %4925 = vst [vmem:[#allocation1] ss:$9 sm:$0xff] %v3148
      %4926 = vst [vmem:[%s4868] ss:$9 sm:$0xff] %v3151
      %4927 = vst [vmem:[%s4870] ss:$9 sm:$0xff] %v3154
      %4928 = vst [vmem:[%s4872] ss:$9 sm:$0xff] %v3157
      %4929 = vst [vmem:[%s4874] ss:$9 sm:$0xff] %v3160
      %v4930 = vld [vmem:[#allocation1] sm:$0xff]
      %v4931 = vshrl.u32 %v4876, 16
      %v4933 = vrot.slane %v4931, 7
      %v4934 = vshll.u32 %v4876, 16
      %v4936 = vor.u32 %v4933, %v4934
      %v4937 = vshrl.u32 %v4882, 16
      %v4939 = vrot.slane %v4937, 7
      %v4940 = vshll.u32 %v4882, 16
      %v4942 = vor.u32 %v4939, %v4940
      %v4943 = vshrl.u32 %v4888, 16
      %v4945 = vrot.slane %v4943, 7
      %v4946 = vshll.u32 %v4888, 16
      %v4948 = vor.u32 %v4945, %v4946
      %v4949 = vshrl.u32 %v4894, 16
      %v4951 = vrot.slane %v4949, 7
      %v4952 = vshll.u32 %v4894, 16
      %v4954 = vor.u32 %v4951, %v4952
      %v4955 = vshrl.u32 %v4900, 16
      %v4957 = vrot.slane %v4955, 7
      %v4958 = vshll.u32 %v4900, 16
      %v4960 = vor.u32 %v4957, %v4958
      %v4961 = vshrl.u32 %v4906, 16
      %v4963 = vrot.slane %v4961, 7
      %v4964 = vshll.u32 %v4906, 16
      %v4966 = vor.u32 %v4963, %v4964
      %v4967 = vshrl.u32 %v4912, 16
      %v4969 = vrot.slane %v4967, 7
      %v4970 = vshll.u32 %v4912, 16
      %v4972 = vor.u32 %v4969, %v4970
      %v4973 = vshrl.u32 %v4918, 16
      %v4975 = vrot.slane %v4973, 7
      %v4976 = vshll.u32 %v4918, 16
      %v4978 = vor.u32 %v4975, %v4976
      %v4979 = vshrl.u32 %v4924, 16
      %v4981 = vrot.slane %v4979, 7
      %v4982 = vshll.u32 %v4924, 16
      %v4984 = vor.u32 %v4981, %v4982
      %v4985 = vshrl.u32 %v4930, 16
      %v4987 = vrot.slane %v4985, 7
      %v4988 = vshll.u32 %v4930, 16
      %v4990 = vor.u32 %v4987, %v4988
      %4991 = vst [vmem:[#allocation1] ss:$9 sm:$0xff] %v2959
      %s4992 = scalar_lea.vmem [#allocation1], 1
      %4993 = vst [vmem:[%s4992] ss:$9 sm:$0xff] %v2962
      %s4994 = scalar_lea.vmem [#allocation1], 2
      %4995 = vst [vmem:[%s4994] ss:$9 sm:$0xff] %v2965
      %s4996 = scalar_lea.vmem [#allocation1], 3
      %4997 = vst [vmem:[%s4996] ss:$9 sm:$0xff] %v2968
      %s4998 = scalar_lea.vmem [#allocation1], 4
      %4999 = vst [vmem:[%s4998] ss:$9 sm:$0xff] %v2971
      %s5000 = scalar_lea.vmem [#allocation1], 5
      %5001 = vst [vmem:[%s5000] ss:$9 sm:$0xff] %v2974
      %v5002 = vld [vmem:[#allocation1] sm:$0xff]
      %5003 = vst [vmem:[#allocation1] ss:$9 sm:$0xff] %v2980
      %5004 = vst [vmem:[%s4992] ss:$9 sm:$0xff] %v2983
      %5005 = vst [vmem:[%s4994] ss:$9 sm:$0xff] %v2986
      %5006 = vst [vmem:[%s4996] ss:$9 sm:$0xff] %v2989
      %5007 = vst [vmem:[%s4998] ss:$9 sm:$0xff] %v2992
      %5008 = vst [vmem:[%s5000] ss:$9 sm:$0xff] %v2995
      %v5009 = vld [vmem:[#allocation1] sm:$0xff]
      %5010 = vst [vmem:[#allocation1] ss:$9 sm:$0xff] %v3001
      %5011 = vst [vmem:[%s4992] ss:$9 sm:$0xff] %v3004
      %5012 = vst [vmem:[%s4994] ss:$9 sm:$0xff] %v3007
      %5013 = vst [vmem:[%s4996] ss:$9 sm:$0xff] %v3010
      %5014 = vst [vmem:[%s4998] ss:$9 sm:$0xff] %v3013
      %5015 = vst [vmem:[%s5000] ss:$9 sm:$0xff] %v3016
      %v5016 = vld [vmem:[#allocation1] sm:$0xff]
      %5017 = vst [vmem:[#allocation1] ss:$9 sm:$0xff] %v3022
      %5018 = vst [vmem:[%s4992] ss:$9 sm:$0xff] %v3025
      %5019 = vst [vmem:[%s4994] ss:$9 sm:$0xff] %v3028
      %5020 = vst [vmem:[%s4996] ss:$9 sm:$0xff] %v3031
      %5021 = vst [vmem:[%s4998] ss:$9 sm:$0xff] %v3034
      %5022 = vst [vmem:[%s5000] ss:$9 sm:$0xff] %v3037
      %v5023 = vld [vmem:[#allocation1] sm:$0xff]
      %5024 = vst [vmem:[#allocation1] ss:$9 sm:$0xff] %v3043
      %5025 = vst [vmem:[%s4992] ss:$9 sm:$0xff] %v3046
      %5026 = vst [vmem:[%s4994] ss:$9 sm:$0xff] %v3049
      %5027 = vst [vmem:[%s4996] ss:$9 sm:$0xff] %v3052
      %5028 = vst [vmem:[%s4998] ss:$9 sm:$0xff] %v3055
      %5029 = vst [vmem:[%s5000] ss:$9 sm:$0xff] %v3058
      %v5030 = vld [vmem:[#allocation1] sm:$0xff]
      %5031 = vst [vmem:[#allocation1] ss:$9 sm:$0xff] %v3064
      %5032 = vst [vmem:[%s4992] ss:$9 sm:$0xff] %v3067
      %5033 = vst [vmem:[%s4994] ss:$9 sm:$0xff] %v3070
      %5034 = vst [vmem:[%s4996] ss:$9 sm:$0xff] %v3073
      %5035 = vst [vmem:[%s4998] ss:$9 sm:$0xff] %v3076
      %5036 = vst [vmem:[%s5000] ss:$9 sm:$0xff] %v3079
      %v5037 = vld [vmem:[#allocation1] sm:$0xff]
      %5038 = vst [vmem:[#allocation1] ss:$9 sm:$0xff] %v3085
      %5039 = vst [vmem:[%s4992] ss:$9 sm:$0xff] %v3088
      %5040 = vst [vmem:[%s4994] ss:$9 sm:$0xff] %v3091
      %5041 = vst [vmem:[%s4996] ss:$9 sm:$0xff] %v3094
      %5042 = vst [vmem:[%s4998] ss:$9 sm:$0xff] %v3097
      %5043 = vst [vmem:[%s5000] ss:$9 sm:$0xff] %v3100
      %v5044 = vld [vmem:[#allocation1] sm:$0xff]
      %5045 = vst [vmem:[#allocation1] ss:$9 sm:$0xff] %v3106
      %5046 = vst [vmem:[%s4992] ss:$9 sm:$0xff] %v3109
      %5047 = vst [vmem:[%s4994] ss:$9 sm:$0xff] %v3112
      %5048 = vst [vmem:[%s4996] ss:$9 sm:$0xff] %v3115
      %5049 = vst [vmem:[%s4998] ss:$9 sm:$0xff] %v3118
      %5050 = vst [vmem:[%s5000] ss:$9 sm:$0xff] %v3121
      %v5051 = vld [vmem:[#allocation1] sm:$0xff]
      %5052 = vst [vmem:[#allocation1] ss:$9 sm:$0xff] %v3127
      %5053 = vst [vmem:[%s4992] ss:$9 sm:$0xff] %v3130
      %5054 = vst [vmem:[%s4994] ss:$9 sm:$0xff] %v3133
      %5055 = vst [vmem:[%s4996] ss:$9 sm:$0xff] %v3136
      %5056 = vst [vmem:[%s4998] ss:$9 sm:$0xff] %v3139
      %5057 = vst [vmem:[%s5000] ss:$9 sm:$0xff] %v3142
      %v5058 = vld [vmem:[#allocation1] sm:$0xff]
      %5059 = vst [vmem:[#allocation1] ss:$9 sm:$0xff] %v3148
      %5060 = vst [vmem:[%s4992] ss:$9 sm:$0xff] %v3151
      %5061 = vst [vmem:[%s4994] ss:$9 sm:$0xff] %v3154
      %5062 = vst [vmem:[%s4996] ss:$9 sm:$0xff] %v3157
      %5063 = vst [vmem:[%s4998] ss:$9 sm:$0xff] %v3160
      %5065 = vst [vmem:[%s5000] ss:$9 sm:$0xff] %v3163
      %v5066 = vld [vmem:[#allocation1] sm:$0xff]
      %5067 = vst [vmem:[#allocation1] ss:$9 sm:$0xff] %v2962
      %s5068 = scalar_lea.vmem [#allocation1], 1
      %5069 = vst [vmem:[%s5068] ss:$9 sm:$0xff] %v2965
      %s5070 = scalar_lea.vmem [#allocation1], 2
      %5071 = vst [vmem:[%s5070] ss:$9 sm:$0xff] %v2968
      %s5072 = scalar_lea.vmem [#allocation1], 3
      %5073 = vst [vmem:[%s5072] ss:$9 sm:$0xff] %v2971
      %s5074 = scalar_lea.vmem [#allocation1], 4
      %5075 = vst [vmem:[%s5074] ss:$9 sm:$0xff] %v2974
      %v5076 = vld [vmem:[#allocation1] sm:$0xff]
      %5077 = vst [vmem:[#allocation1] ss:$9 sm:$0xff] %v2983
      %5078 = vst [vmem:[%s5068] ss:$9 sm:$0xff] %v2986
      %5079 = vst [vmem:[%s5070] ss:$9 sm:$0xff] %v2989
      %5080 = vst [vmem:[%s5072] ss:$9 sm:$0xff] %v2992
      %5081 = vst [vmem:[%s5074] ss:$9 sm:$0xff] %v2995
      %v5082 = vld [vmem:[#allocation1] sm:$0xff]
      %5083 = vst [vmem:[#allocation1] ss:$9 sm:$0xff] %v3004
      %5084 = vst [vmem:[%s5068] ss:$9 sm:$0xff] %v3007
      %5085 = vst [vmem:[%s5070] ss:$9 sm:$0xff] %v3010
      %5086 = vst [vmem:[%s5072] ss:$9 sm:$0xff] %v3013
      %5087 = vst [vmem:[%s5074] ss:$9 sm:$0xff] %v3016
      %v5088 = vld [vmem:[#allocation1] sm:$0xff]
      %5089 = vst [vmem:[#allocation1] ss:$9 sm:$0xff] %v3025
      %5090 = vst [vmem:[%s5068] ss:$9 sm:$0xff] %v3028
      %5091 = vst [vmem:[%s5070] ss:$9 sm:$0xff] %v3031
      %5092 = vst [vmem:[%s5072] ss:$9 sm:$0xff] %v3034
      %5093 = vst [vmem:[%s5074] ss:$9 sm:$0xff] %v3037
      %v5094 = vld [vmem:[#allocation1] sm:$0xff]
      %5095 = vst [vmem:[#allocation1] ss:$9 sm:$0xff] %v3046
      %5096 = vst [vmem:[%s5068] ss:$9 sm:$0xff] %v3049
      %5097 = vst [vmem:[%s5070] ss:$9 sm:$0xff] %v3052
      %5098 = vst [vmem:[%s5072] ss:$9 sm:$0xff] %v3055
      %5099 = vst [vmem:[%s5074] ss:$9 sm:$0xff] %v3058
      %v5100 = vld [vmem:[#allocation1] sm:$0xff]
      %5101 = vst [vmem:[#allocation1] ss:$9 sm:$0xff] %v3067
      %5102 = vst [vmem:[%s5068] ss:$9 sm:$0xff] %v3070
      %5103 = vst [vmem:[%s5070] ss:$9 sm:$0xff] %v3073
      %5104 = vst [vmem:[%s5072] ss:$9 sm:$0xff] %v3076
      %5105 = vst [vmem:[%s5074] ss:$9 sm:$0xff] %v3079
      %v5106 = vld [vmem:[#allocation1] sm:$0xff]
      %5107 = vst [vmem:[#allocation1] ss:$9 sm:$0xff] %v3088
      %5108 = vst [vmem:[%s5068] ss:$9 sm:$0xff] %v3091
      %5109 = vst [vmem:[%s5070] ss:$9 sm:$0xff] %v3094
      %5110 = vst [vmem:[%s5072] ss:$9 sm:$0xff] %v3097
      %5111 = vst [vmem:[%s5074] ss:$9 sm:$0xff] %v3100
      %v5112 = vld [vmem:[#allocation1] sm:$0xff]
      %5113 = vst [vmem:[#allocation1] ss:$9 sm:$0xff] %v3109
      %5114 = vst [vmem:[%s5068] ss:$9 sm:$0xff] %v3112
      %5115 = vst [vmem:[%s5070] ss:$9 sm:$0xff] %v3115
      %5116 = vst [vmem:[%s5072] ss:$9 sm:$0xff] %v3118
      %5117 = vst [vmem:[%s5074] ss:$9 sm:$0xff] %v3121
      %v5118 = vld [vmem:[#allocation1] sm:$0xff]
      %5119 = vst [vmem:[#allocation1] ss:$9 sm:$0xff] %v3130
      %5120 = vst [vmem:[%s5068] ss:$9 sm:$0xff] %v3133
      %5121 = vst [vmem:[%s5070] ss:$9 sm:$0xff] %v3136
      %5122 = vst [vmem:[%s5072] ss:$9 sm:$0xff] %v3139
      %5123 = vst [vmem:[%s5074] ss:$9 sm:$0xff] %v3142
      %v5124 = vld [vmem:[#allocation1] sm:$0xff]
      %5125 = vst [vmem:[#allocation1] ss:$9 sm:$0xff] %v3151
      %5126 = vst [vmem:[%s5068] ss:$9 sm:$0xff] %v3154
      %5127 = vst [vmem:[%s5070] ss:$9 sm:$0xff] %v3157
      %5128 = vst [vmem:[%s5072] ss:$9 sm:$0xff] %v3160
      %5129 = vst [vmem:[%s5074] ss:$9 sm:$0xff] %v3163
      %v5130 = vld [vmem:[#allocation1] sm:$0xff]
      %v5131 = vshrl.u32 %v5076, 16
      %v5133 = vrot.slane %v5131, 7
      %v5134 = vshll.u32 %v5076, 16
      %v5136 = vor.u32 %v5133, %v5134
      %v5137 = vshrl.u32 %v5082, 16
      %v5139 = vrot.slane %v5137, 7
      %v5140 = vshll.u32 %v5082, 16
      %v5142 = vor.u32 %v5139, %v5140
      %v5143 = vshrl.u32 %v5088, 16
      %v5145 = vrot.slane %v5143, 7
      %v5146 = vshll.u32 %v5088, 16
      %v5148 = vor.u32 %v5145, %v5146
      %v5149 = vshrl.u32 %v5094, 16
      %v5151 = vrot.slane %v5149, 7
      %v5152 = vshll.u32 %v5094, 16
      %v5154 = vor.u32 %v5151, %v5152
      %v5155 = vshrl.u32 %v5100, 16
      %v5157 = vrot.slane %v5155, 7
      %v5158 = vshll.u32 %v5100, 16
      %v5160 = vor.u32 %v5157, %v5158
      %v5161 = vshrl.u32 %v5106, 16
      %v5163 = vrot.slane %v5161, 7
      %v5164 = vshll.u32 %v5106, 16
      %v5166 = vor.u32 %v5163, %v5164
      %v5167 = vshrl.u32 %v5112, 16
      %v5169 = vrot.slane %v5167, 7
      %v5170 = vshll.u32 %v5112, 16
      %v5172 = vor.u32 %v5169, %v5170
      %v5173 = vshrl.u32 %v5118, 16
      %v5175 = vrot.slane %v5173, 7
      %v5176 = vshll.u32 %v5118, 16
      %v5178 = vor.u32 %v5175, %v5176
      %v5179 = vshrl.u32 %v5124, 16
      %v5181 = vrot.slane %v5179, 7
      %v5182 = vshll.u32 %v5124, 16
      %v5184 = vor.u32 %v5181, %v5182
      %v5185 = vshrl.u32 %v5130, 16
      %v5187 = vrot.slane %v5185, 7
      %v5188 = vshll.u32 %v5130, 16
      %v5190 = vor.u32 %v5187, %v5188
      %5191 = vst [vmem:[#allocation1] ss:$9 sm:$0xff] %v2977
      %s5192 = scalar_lea.vmem [#allocation1], 1
      %5193 = vst [vmem:[%s5192] ss:$9 sm:$0xff] %v2980
      %s5194 = scalar_lea.vmem [#allocation1], 2
      %5195 = vst [vmem:[%s5194] ss:$9 sm:$0xff] %v2983
      %s5196 = scalar_lea.vmem [#allocation1], 3
      %5197 = vst [vmem:[%s5196] ss:$9 sm:$0xff] %v2986
      %s5198 = scalar_lea.vmem [#allocation1], 4
      %5199 = vst [vmem:[%s5198] ss:$9 sm:$0xff] %v2989
      %v5200 = vld [vmem:[#allocation1] sm:$0xff]
      %5201 = vst [vmem:[#allocation1] ss:$9 sm:$0xff] %v2998
      %5202 = vst [vmem:[%s5192] ss:$9 sm:$0xff] %v3001
      %5203 = vst [vmem:[%s5194] ss:$9 sm:$0xff] %v3004
      %5204 = vst [vmem:[%s5196] ss:$9 sm:$0xff] %v3007
      %5205 = vst [vmem:[%s5198] ss:$9 sm:$0xff] %v3010
      %v5206 = vld [vmem:[#allocation1] sm:$0xff]
      %5207 = vst [vmem:[#allocation1] ss:$9 sm:$0xff] %v3019
      %5208 = vst [vmem:[%s5192] ss:$9 sm:$0xff] %v3022
      %5209 = vst [vmem:[%s5194] ss:$9 sm:$0xff] %v3025
      %5210 = vst [vmem:[%s5196] ss:$9 sm:$0xff] %v3028
      %5211 = vst [vmem:[%s5198] ss:$9 sm:$0xff] %v3031
      %v5212 = vld [vmem:[#allocation1] sm:$0xff]
      %5213 = vst [vmem:[#allocation1] ss:$9 sm:$0xff] %v3040
      %5214 = vst [vmem:[%s5192] ss:$9 sm:$0xff] %v3043
      %5215 = vst [vmem:[%s5194] ss:$9 sm:$0xff] %v3046
      %5216 = vst [vmem:[%s5196] ss:$9 sm:$0xff] %v3049
      %5217 = vst [vmem:[%s5198] ss:$9 sm:$0xff] %v3052
      %v5218 = vld [vmem:[#allocation1] sm:$0xff]
      %5219 = vst [vmem:[#allocation1] ss:$9 sm:$0xff] %v3061
      %5220 = vst [vmem:[%s5192] ss:$9 sm:$0xff] %v3064
      %5221 = vst [vmem:[%s5194] ss:$9 sm:$0xff] %v3067
      %5222 = vst [vmem:[%s5196] ss:$9 sm:$0xff] %v3070
      %5223 = vst [vmem:[%s5198] ss:$9 sm:$0xff] %v3073
      %v5224 = vld [vmem:[#allocation1] sm:$0xff]
      %5225 = vst [vmem:[#allocation1] ss:$9 sm:$0xff] %v3082
      %5226 = vst [vmem:[%s5192] ss:$9 sm:$0xff] %v3085
      %5227 = vst [vmem:[%s5194] ss:$9 sm:$0xff] %v3088
      %5228 = vst [vmem:[%s5196] ss:$9 sm:$0xff] %v3091
      %5229 = vst [vmem:[%s5198] ss:$9 sm:$0xff] %v3094
      %v5230 = vld [vmem:[#allocation1] sm:$0xff]
      %5231 = vst [vmem:[#allocation1] ss:$9 sm:$0xff] %v3103
      %5232 = vst [vmem:[%s5192] ss:$9 sm:$0xff] %v3106
      %5233 = vst [vmem:[%s5194] ss:$9 sm:$0xff] %v3109
      %5234 = vst [vmem:[%s5196] ss:$9 sm:$0xff] %v3112
      %5235 = vst [vmem:[%s5198] ss:$9 sm:$0xff] %v3115
      %v5236 = vld [vmem:[#allocation1] sm:$0xff]
      %5237 = vst [vmem:[#allocation1] ss:$9 sm:$0xff] %v3124
      %5238 = vst [vmem:[%s5192] ss:$9 sm:$0xff] %v3127
      %5239 = vst [vmem:[%s5194] ss:$9 sm:$0xff] %v3130
      %5240 = vst [vmem:[%s5196] ss:$9 sm:$0xff] %v3133
      %5241 = vst [vmem:[%s5198] ss:$9 sm:$0xff] %v3136
      %v5242 = vld [vmem:[#allocation1] sm:$0xff]
      %5243 = vst [vmem:[#allocation1] ss:$9 sm:$0xff] %v3145
      %5244 = vst [vmem:[%s5192] ss:$9 sm:$0xff] %v3148
      %5245 = vst [vmem:[%s5194] ss:$9 sm:$0xff] %v3151
      %5246 = vst [vmem:[%s5196] ss:$9 sm:$0xff] %v3154
      %5247 = vst [vmem:[%s5198] ss:$9 sm:$0xff] %v3157
      %v5248 = vld [vmem:[#allocation1] sm:$0xff]
      %5250 = vst [vmem:[#allocation1] ss:$9 sm:$0xff] %v3166
      %5251 = vst [vmem:[%s5192] ss:$9 sm:$0xff] %v3169
      %5253 = vst [vmem:[%s5194] ss:$9 sm:$0xff] %v3172
      %5255 = vst [vmem:[%s5196] ss:$9 sm:$0xff] %v3175
      %5257 = vst [vmem:[%s5198] ss:$9 sm:$0xff] %v3178
      %v5258 = vld [vmem:[#allocation1] sm:$0xff]
      %v5259 = vshrl.u32 %v5200, 16
      %v5261 = vrot.slane %v5259, 7
      %v5262 = vshll.u32 %v5200, 16
      %v5264 = vor.u32 %v5261, %v5262
      %v5265 = vshrl.u32 %v5206, 16
      %v5267 = vrot.slane %v5265, 7
      %v5268 = vshll.u32 %v5206, 16
      %v5270 = vor.u32 %v5267, %v5268
      %v5271 = vshrl.u32 %v5212, 16
      %v5273 = vrot.slane %v5271, 7
      %v5274 = vshll.u32 %v5212, 16
      %v5276 = vor.u32 %v5273, %v5274
      %v5277 = vshrl.u32 %v5218, 16
      %v5279 = vrot.slane %v5277, 7
      %v5280 = vshll.u32 %v5218, 16
      %v5282 = vor.u32 %v5279, %v5280
      %v5283 = vshrl.u32 %v5224, 16
      %v5285 = vrot.slane %v5283, 7
      %v5286 = vshll.u32 %v5224, 16
      %v5288 = vor.u32 %v5285, %v5286
      %v5289 = vshrl.u32 %v5230, 16
      %v5291 = vrot.slane %v5289, 7
      %v5292 = vshll.u32 %v5230, 16
      %v5294 = vor.u32 %v5291, %v5292
      %v5295 = vshrl.u32 %v5236, 16
      %v5297 = vrot.slane %v5295, 7
      %v5298 = vshll.u32 %v5236, 16
      %v5300 = vor.u32 %v5297, %v5298
      %v5301 = vshrl.u32 %v5242, 16
      %v5303 = vrot.slane %v5301, 7
      %v5304 = vshll.u32 %v5242, 16
      %v5306 = vor.u32 %v5303, %v5304
      %v5307 = vshrl.u32 %v5248, 16
      %v5309 = vrot.slane %v5307, 7
      %v5310 = vshll.u32 %v5248, 16
      %v5312 = vor.u32 %v5309, %v5310
      %v5313 = vshrl.u32 %v5258, 16
      %v5315 = vrot.slane %v5313, 7
      %v5316 = vshll.u32 %v5258, 16
      %v5318 = vor.u32 %v5315, %v5316
      %5319 = vst [vmem:[#allocation1] ss:$9 sm:$0xff] %v2977
      %s5320 = scalar_lea.vmem [#allocation1], 1
      %5321 = vst [vmem:[%s5320] ss:$9 sm:$0xff] %v2980
      %s5322 = scalar_lea.vmem [#allocation1], 2
      %5323 = vst [vmem:[%s5322] ss:$9 sm:$0xff] %v2983
      %s5324 = scalar_lea.vmem [#allocation1], 3
      %5325 = vst [vmem:[%s5324] ss:$9 sm:$0xff] %v2986
      %s5326 = scalar_lea.vmem [#allocation1], 4
      %5327 = vst [vmem:[%s5326] ss:$9 sm:$0xff] %v2989
      %s5328 = scalar_lea.vmem [#allocation1], 5
      %5329 = vst [vmem:[%s5328] ss:$9 sm:$0xff] %v2992
      %v5330 = vld [vmem:[#allocation1] sm:$0xff]
      %5331 = vst [vmem:[#allocation1] ss:$9 sm:$0xff] %v2998
      %5332 = vst [vmem:[%s5320] ss:$9 sm:$0xff] %v3001
      %5333 = vst [vmem:[%s5322] ss:$9 sm:$0xff] %v3004
      %5334 = vst [vmem:[%s5324] ss:$9 sm:$0xff] %v3007
      %5335 = vst [vmem:[%s5326] ss:$9 sm:$0xff] %v3010
      %5336 = vst [vmem:[%s5328] ss:$9 sm:$0xff] %v3013
      %v5337 = vld [vmem:[#allocation1] sm:$0xff]
      %5338 = vst [vmem:[#allocation1] ss:$9 sm:$0xff] %v3019
      %5339 = vst [vmem:[%s5320] ss:$9 sm:$0xff] %v3022
      %5340 = vst [vmem:[%s5322] ss:$9 sm:$0xff] %v3025
      %5341 = vst [vmem:[%s5324] ss:$9 sm:$0xff] %v3028
      %5342 = vst [vmem:[%s5326] ss:$9 sm:$0xff] %v3031
      %5343 = vst [vmem:[%s5328] ss:$9 sm:$0xff] %v3034
      %v5344 = vld [vmem:[#allocation1] sm:$0xff]
      %5345 = vst [vmem:[#allocation1] ss:$9 sm:$0xff] %v3040
      %5346 = vst [vmem:[%s5320] ss:$9 sm:$0xff] %v3043
      %5347 = vst [vmem:[%s5322] ss:$9 sm:$0xff] %v3046
      %5348 = vst [vmem:[%s5324] ss:$9 sm:$0xff] %v3049
      %5349 = vst [vmem:[%s5326] ss:$9 sm:$0xff] %v3052
      %5350 = vst [vmem:[%s5328] ss:$9 sm:$0xff] %v3055
      %v5351 = vld [vmem:[#allocation1] sm:$0xff]
      %5352 = vst [vmem:[#allocation1] ss:$9 sm:$0xff] %v3061
      %5353 = vst [vmem:[%s5320] ss:$9 sm:$0xff] %v3064
      %5354 = vst [vmem:[%s5322] ss:$9 sm:$0xff] %v3067
      %5355 = vst [vmem:[%s5324] ss:$9 sm:$0xff] %v3070
      %5356 = vst [vmem:[%s5326] ss:$9 sm:$0xff] %v3073
      %5357 = vst [vmem:[%s5328] ss:$9 sm:$0xff] %v3076
      %v5358 = vld [vmem:[#allocation1] sm:$0xff]
      %5359 = vst [vmem:[#allocation1] ss:$9 sm:$0xff] %v3082
      %5360 = vst [vmem:[%s5320] ss:$9 sm:$0xff] %v3085
      %5361 = vst [vmem:[%s5322] ss:$9 sm:$0xff] %v3088
      %5362 = vst [vmem:[%s5324] ss:$9 sm:$0xff] %v3091
      %5363 = vst [vmem:[%s5326] ss:$9 sm:$0xff] %v3094
      %5364 = vst [vmem:[%s5328] ss:$9 sm:$0xff] %v3097
      %v5365 = vld [vmem:[#allocation1] sm:$0xff]
      %5366 = vst [vmem:[#allocation1] ss:$9 sm:$0xff] %v3103
      %5367 = vst [vmem:[%s5320] ss:$9 sm:$0xff] %v3106
      %5368 = vst [vmem:[%s5322] ss:$9 sm:$0xff] %v3109
      %5369 = vst [vmem:[%s5324] ss:$9 sm:$0xff] %v3112
      %5370 = vst [vmem:[%s5326] ss:$9 sm:$0xff] %v3115
      %5371 = vst [vmem:[%s5328] ss:$9 sm:$0xff] %v3118
      %v5372 = vld [vmem:[#allocation1] sm:$0xff]
      %5373 = vst [vmem:[#allocation1] ss:$9 sm:$0xff] %v3124
      %5374 = vst [vmem:[%s5320] ss:$9 sm:$0xff] %v3127
      %5375 = vst [vmem:[%s5322] ss:$9 sm:$0xff] %v3130
      %5376 = vst [vmem:[%s5324] ss:$9 sm:$0xff] %v3133
      %5377 = vst [vmem:[%s5326] ss:$9 sm:$0xff] %v3136
      %5378 = vst [vmem:[%s5328] ss:$9 sm:$0xff] %v3139
      %v5379 = vld [vmem:[#allocation1] sm:$0xff]
      %5380 = vst [vmem:[#allocation1] ss:$9 sm:$0xff] %v3145
      %5381 = vst [vmem:[%s5320] ss:$9 sm:$0xff] %v3148
      %5382 = vst [vmem:[%s5322] ss:$9 sm:$0xff] %v3151
      %5383 = vst [vmem:[%s5324] ss:$9 sm:$0xff] %v3154
      %5384 = vst [vmem:[%s5326] ss:$9 sm:$0xff] %v3157
      %5385 = vst [vmem:[%s5328] ss:$9 sm:$0xff] %v3160
      %v5386 = vld [vmem:[#allocation1] sm:$0xff]
      %5387 = vst [vmem:[#allocation1] ss:$9 sm:$0xff] %v3166
      %5388 = vst [vmem:[%s5320] ss:$9 sm:$0xff] %v3169
      %5389 = vst [vmem:[%s5322] ss:$9 sm:$0xff] %v3172
      %5390 = vst [vmem:[%s5324] ss:$9 sm:$0xff] %v3175
      %5391 = vst [vmem:[%s5326] ss:$9 sm:$0xff] %v3178
      %5392 = vst [vmem:[%s5328] ss:$9 sm:$0xff] %v3181
      %v5393 = vld [vmem:[#allocation1] sm:$0xff]
      %5394 = vst [vmem:[#allocation1] ss:$9 sm:$0xff] %v2980
      %s5395 = scalar_lea.vmem [#allocation1], 1
      %5396 = vst [vmem:[%s5395] ss:$9 sm:$0xff] %v2983
      %s5397 = scalar_lea.vmem [#allocation1], 2
      %5398 = vst [vmem:[%s5397] ss:$9 sm:$0xff] %v2986
      %s5399 = scalar_lea.vmem [#allocation1], 3
      %5400 = vst [vmem:[%s5399] ss:$9 sm:$0xff] %v2989
      %s5401 = scalar_lea.vmem [#allocation1], 4
      %5402 = vst [vmem:[%s5401] ss:$9 sm:$0xff] %v2992
      %v5403 = vld [vmem:[#allocation1] sm:$0xff]
      %5404 = vst [vmem:[#allocation1] ss:$9 sm:$0xff] %v3001
      %5405 = vst [vmem:[%s5395] ss:$9 sm:$0xff] %v3004
      %5406 = vst [vmem:[%s5397] ss:$9 sm:$0xff] %v3007
      %5407 = vst [vmem:[%s5399] ss:$9 sm:$0xff] %v3010
      %5408 = vst [vmem:[%s5401] ss:$9 sm:$0xff] %v3013
      %v5409 = vld [vmem:[#allocation1] sm:$0xff]
      %5410 = vst [vmem:[#allocation1] ss:$9 sm:$0xff] %v3022
      %5411 = vst [vmem:[%s5395] ss:$9 sm:$0xff] %v3025
      %5412 = vst [vmem:[%s5397] ss:$9 sm:$0xff] %v3028
      %5413 = vst [vmem:[%s5399] ss:$9 sm:$0xff] %v3031
      %5414 = vst [vmem:[%s5401] ss:$9 sm:$0xff] %v3034
      %v5415 = vld [vmem:[#allocation1] sm:$0xff]
      %5416 = vst [vmem:[#allocation1] ss:$9 sm:$0xff] %v3043
      %5417 = vst [vmem:[%s5395] ss:$9 sm:$0xff] %v3046
      %5418 = vst [vmem:[%s5397] ss:$9 sm:$0xff] %v3049
      %5419 = vst [vmem:[%s5399] ss:$9 sm:$0xff] %v3052
      %5420 = vst [vmem:[%s5401] ss:$9 sm:$0xff] %v3055
      %v5421 = vld [vmem:[#allocation1] sm:$0xff]
      %5422 = vst [vmem:[#allocation1] ss:$9 sm:$0xff] %v3064
      %5423 = vst [vmem:[%s5395] ss:$9 sm:$0xff] %v3067
      %5424 = vst [vmem:[%s5397] ss:$9 sm:$0xff] %v3070
      %5425 = vst [vmem:[%s5399] ss:$9 sm:$0xff] %v3073
      %5426 = vst [vmem:[%s5401] ss:$9 sm:$0xff] %v3076
      %v5427 = vld [vmem:[#allocation1] sm:$0xff]
      %5428 = vst [vmem:[#allocation1] ss:$9 sm:$0xff] %v3085
      %5429 = vst [vmem:[%s5395] ss:$9 sm:$0xff] %v3088
      %5430 = vst [vmem:[%s5397] ss:$9 sm:$0xff] %v3091
      %5431 = vst [vmem:[%s5399] ss:$9 sm:$0xff] %v3094
      %5432 = vst [vmem:[%s5401] ss:$9 sm:$0xff] %v3097
      %v5433 = vld [vmem:[#allocation1] sm:$0xff]
      %5434 = vst [vmem:[#allocation1] ss:$9 sm:$0xff] %v3106
      %5435 = vst [vmem:[%s5395] ss:$9 sm:$0xff] %v3109
      %5436 = vst [vmem:[%s5397] ss:$9 sm:$0xff] %v3112
      %5437 = vst [vmem:[%s5399] ss:$9 sm:$0xff] %v3115
      %5438 = vst [vmem:[%s5401] ss:$9 sm:$0xff] %v3118
      %v5439 = vld [vmem:[#allocation1] sm:$0xff]
      %5440 = vst [vmem:[#allocation1] ss:$9 sm:$0xff] %v3127
      %5441 = vst [vmem:[%s5395] ss:$9 sm:$0xff] %v3130
      %5442 = vst [vmem:[%s5397] ss:$9 sm:$0xff] %v3133
      %5443 = vst [vmem:[%s5399] ss:$9 sm:$0xff] %v3136
      %5444 = vst [vmem:[%s5401] ss:$9 sm:$0xff] %v3139
      %v5445 = vld [vmem:[#allocation1] sm:$0xff]
      %5446 = vst [vmem:[#allocation1] ss:$9 sm:$0xff] %v3148
      %5447 = vst [vmem:[%s5395] ss:$9 sm:$0xff] %v3151
      %5448 = vst [vmem:[%s5397] ss:$9 sm:$0xff] %v3154
      %5449 = vst [vmem:[%s5399] ss:$9 sm:$0xff] %v3157
      %5450 = vst [vmem:[%s5401] ss:$9 sm:$0xff] %v3160
      %v5451 = vld [vmem:[#allocation1] sm:$0xff]
      %5452 = vst [vmem:[#allocation1] ss:$9 sm:$0xff] %v3169
      %5453 = vst [vmem:[%s5395] ss:$9 sm:$0xff] %v3172
      %5454 = vst [vmem:[%s5397] ss:$9 sm:$0xff] %v3175
      %5455 = vst [vmem:[%s5399] ss:$9 sm:$0xff] %v3178
      %5456 = vst [vmem:[%s5401] ss:$9 sm:$0xff] %v3181
      %v5457 = vld [vmem:[#allocation1] sm:$0xff]
      %v5458 = vshrl.u32 %v5403, 16
      %v5460 = vrot.slane %v5458, 7
      %v5461 = vshll.u32 %v5403, 16
      %v5463 = vor.u32 %v5460, %v5461
      %v5464 = vshrl.u32 %v5409, 16
      %v5466 = vrot.slane %v5464, 7
      %v5467 = vshll.u32 %v5409, 16
      %v5469 = vor.u32 %v5466, %v5467
      %v5470 = vshrl.u32 %v5415, 16
      %v5472 = vrot.slane %v5470, 7
      %v5473 = vshll.u32 %v5415, 16
      %v5475 = vor.u32 %v5472, %v5473
      %v5476 = vshrl.u32 %v5421, 16
      %v5478 = vrot.slane %v5476, 7
      %v5479 = vshll.u32 %v5421, 16
      %v5481 = vor.u32 %v5478, %v5479
      %v5482 = vshrl.u32 %v5427, 16
      %v5484 = vrot.slane %v5482, 7
      %v5485 = vshll.u32 %v5427, 16
      %v5487 = vor.u32 %v5484, %v5485
      %v5488 = vshrl.u32 %v5433, 16
      %v5490 = vrot.slane %v5488, 7
      %v5491 = vshll.u32 %v5433, 16
      %v5493 = vor.u32 %v5490, %v5491
      %v5494 = vshrl.u32 %v5439, 16
      %v5496 = vrot.slane %v5494, 7
      %v5497 = vshll.u32 %v5439, 16
      %v5499 = vor.u32 %v5496, %v5497
      %v5500 = vshrl.u32 %v5445, 16
      %v5502 = vrot.slane %v5500, 7
      %v5503 = vshll.u32 %v5445, 16
      %v5505 = vor.u32 %v5502, %v5503
      %v5506 = vshrl.u32 %v5451, 16
      %v5508 = vrot.slane %v5506, 7
      %v5509 = vshll.u32 %v5451, 16
      %v5511 = vor.u32 %v5508, %v5509
      %v5512 = vshrl.u32 %v5457, 16
      %v5514 = vrot.slane %v5512, 7
      %v5515 = vshll.u32 %v5457, 16
      %v5517 = vor.u32 %v5514, %v5515
      %5518 = vst [vmem:[#allocation1] ss:$9 sm:$0xff] %v2980
      %s5519 = scalar_lea.vmem [#allocation1], 1
      %5520 = vst [vmem:[%s5519] ss:$9 sm:$0xff] %v2983
      %s5521 = scalar_lea.vmem [#allocation1], 2
      %5522 = vst [vmem:[%s5521] ss:$9 sm:$0xff] %v2986
      %s5523 = scalar_lea.vmem [#allocation1], 3
      %5524 = vst [vmem:[%s5523] ss:$9 sm:$0xff] %v2989
      %s5525 = scalar_lea.vmem [#allocation1], 4
      %5526 = vst [vmem:[%s5525] ss:$9 sm:$0xff] %v2992
      %s5527 = scalar_lea.vmem [#allocation1], 5
      %5528 = vst [vmem:[%s5527] ss:$9 sm:$0xff] %v2995
      %v5529 = vld [vmem:[#allocation1] sm:$0xff]
      %5530 = vst [vmem:[#allocation1] ss:$9 sm:$0xff] %v3001
      %5531 = vst [vmem:[%s5519] ss:$9 sm:$0xff] %v3004
      %5532 = vst [vmem:[%s5521] ss:$9 sm:$0xff] %v3007
      %5533 = vst [vmem:[%s5523] ss:$9 sm:$0xff] %v3010
      %5534 = vst [vmem:[%s5525] ss:$9 sm:$0xff] %v3013
      %5535 = vst [vmem:[%s5527] ss:$9 sm:$0xff] %v3016
      %v5536 = vld [vmem:[#allocation1] sm:$0xff]
      %5537 = vst [vmem:[#allocation1] ss:$9 sm:$0xff] %v3022
      %5538 = vst [vmem:[%s5519] ss:$9 sm:$0xff] %v3025
      %5539 = vst [vmem:[%s5521] ss:$9 sm:$0xff] %v3028
      %5540 = vst [vmem:[%s5523] ss:$9 sm:$0xff] %v3031
      %5541 = vst [vmem:[%s5525] ss:$9 sm:$0xff] %v3034
      %5542 = vst [vmem:[%s5527] ss:$9 sm:$0xff] %v3037
      %v5543 = vld [vmem:[#allocation1] sm:$0xff]
      %5544 = vst [vmem:[#allocation1] ss:$9 sm:$0xff] %v3043
      %5545 = vst [vmem:[%s5519] ss:$9 sm:$0xff] %v3046
      %5546 = vst [vmem:[%s5521] ss:$9 sm:$0xff] %v3049
      %5547 = vst [vmem:[%s5523] ss:$9 sm:$0xff] %v3052
      %5548 = vst [vmem:[%s5525] ss:$9 sm:$0xff] %v3055
      %5549 = vst [vmem:[%s5527] ss:$9 sm:$0xff] %v3058
      %v5550 = vld [vmem:[#allocation1] sm:$0xff]
      %5551 = vst [vmem:[#allocation1] ss:$9 sm:$0xff] %v3064
      %5552 = vst [vmem:[%s5519] ss:$9 sm:$0xff] %v3067
      %5553 = vst [vmem:[%s5521] ss:$9 sm:$0xff] %v3070
      %5554 = vst [vmem:[%s5523] ss:$9 sm:$0xff] %v3073
      %5555 = vst [vmem:[%s5525] ss:$9 sm:$0xff] %v3076
      %5556 = vst [vmem:[%s5527] ss:$9 sm:$0xff] %v3079
      %v5557 = vld [vmem:[#allocation1] sm:$0xff]
      %5558 = vst [vmem:[#allocation1] ss:$9 sm:$0xff] %v3085
      %5559 = vst [vmem:[%s5519] ss:$9 sm:$0xff] %v3088
      %5560 = vst [vmem:[%s5521] ss:$9 sm:$0xff] %v3091
      %5561 = vst [vmem:[%s5523] ss:$9 sm:$0xff] %v3094
      %5562 = vst [vmem:[%s5525] ss:$9 sm:$0xff] %v3097
      %5563 = vst [vmem:[%s5527] ss:$9 sm:$0xff] %v3100
      %v5564 = vld [vmem:[#allocation1] sm:$0xff]
      %5565 = vst [vmem:[#allocation1] ss:$9 sm:$0xff] %v3106
      %5566 = vst [vmem:[%s5519] ss:$9 sm:$0xff] %v3109
      %5567 = vst [vmem:[%s5521] ss:$9 sm:$0xff] %v3112
      %5568 = vst [vmem:[%s5523] ss:$9 sm:$0xff] %v3115
      %5569 = vst [vmem:[%s5525] ss:$9 sm:$0xff] %v3118
      %5570 = vst [vmem:[%s5527] ss:$9 sm:$0xff] %v3121
      %v5571 = vld [vmem:[#allocation1] sm:$0xff]
      %5572 = vst [vmem:[#allocation1] ss:$9 sm:$0xff] %v3127
      %5573 = vst [vmem:[%s5519] ss:$9 sm:$0xff] %v3130
      %5574 = vst [vmem:[%s5521] ss:$9 sm:$0xff] %v3133
      %5575 = vst [vmem:[%s5523] ss:$9 sm:$0xff] %v3136
      %5576 = vst [vmem:[%s5525] ss:$9 sm:$0xff] %v3139
      %5577 = vst [vmem:[%s5527] ss:$9 sm:$0xff] %v3142
      %v5578 = vld [vmem:[#allocation1] sm:$0xff]
      %5579 = vst [vmem:[#allocation1] ss:$9 sm:$0xff] %v3148
      %5580 = vst [vmem:[%s5519] ss:$9 sm:$0xff] %v3151
      %5581 = vst [vmem:[%s5521] ss:$9 sm:$0xff] %v3154
      %5582 = vst [vmem:[%s5523] ss:$9 sm:$0xff] %v3157
      %5583 = vst [vmem:[%s5525] ss:$9 sm:$0xff] %v3160
      %5584 = vst [vmem:[%s5527] ss:$9 sm:$0xff] %v3163
      %v5585 = vld [vmem:[#allocation1] sm:$0xff]
      %5586 = vst [vmem:[#allocation1] ss:$9 sm:$0xff] %v3169
      %5587 = vst [vmem:[%s5519] ss:$9 sm:$0xff] %v3172
      %5588 = vst [vmem:[%s5521] ss:$9 sm:$0xff] %v3175
      %5589 = vst [vmem:[%s5523] ss:$9 sm:$0xff] %v3178
      %5590 = vst [vmem:[%s5525] ss:$9 sm:$0xff] %v3181
      %5592 = vst [vmem:[%s5527] ss:$9 sm:$0xff] %v3184
      %v5593 = vld [vmem:[#allocation1] sm:$0xff]
      %5594 = vst [vmem:[#allocation1] ss:$9 sm:$0xff] %v2983
      %s5595 = scalar_lea.vmem [#allocation1], 1
      %5596 = vst [vmem:[%s5595] ss:$9 sm:$0xff] %v2986
      %s5597 = scalar_lea.vmem [#allocation1], 2
      %5598 = vst [vmem:[%s5597] ss:$9 sm:$0xff] %v2989
      %s5599 = scalar_lea.vmem [#allocation1], 3
      %5600 = vst [vmem:[%s5599] ss:$9 sm:$0xff] %v2992
      %s5601 = scalar_lea.vmem [#allocation1], 4
      %5602 = vst [vmem:[%s5601] ss:$9 sm:$0xff] %v2995
      %v5603 = vld [vmem:[#allocation1] sm:$0xff]
      %5604 = vst [vmem:[#allocation1] ss:$9 sm:$0xff] %v3004
      %5605 = vst [vmem:[%s5595] ss:$9 sm:$0xff] %v3007
      %5606 = vst [vmem:[%s5597] ss:$9 sm:$0xff] %v3010
      %5607 = vst [vmem:[%s5599] ss:$9 sm:$0xff] %v3013
      %5608 = vst [vmem:[%s5601] ss:$9 sm:$0xff] %v3016
      %v5609 = vld [vmem:[#allocation1] sm:$0xff]
      %5610 = vst [vmem:[#allocation1] ss:$9 sm:$0xff] %v3025
      %5611 = vst [vmem:[%s5595] ss:$9 sm:$0xff] %v3028
      %5612 = vst [vmem:[%s5597] ss:$9 sm:$0xff] %v3031
      %5613 = vst [vmem:[%s5599] ss:$9 sm:$0xff] %v3034
      %5614 = vst [vmem:[%s5601] ss:$9 sm:$0xff] %v3037
      %v5615 = vld [vmem:[#allocation1] sm:$0xff]
      %5616 = vst [vmem:[#allocation1] ss:$9 sm:$0xff] %v3046
      %5617 = vst [vmem:[%s5595] ss:$9 sm:$0xff] %v3049
      %5618 = vst [vmem:[%s5597] ss:$9 sm:$0xff] %v3052
      %5619 = vst [vmem:[%s5599] ss:$9 sm:$0xff] %v3055
      %5620 = vst [vmem:[%s5601] ss:$9 sm:$0xff] %v3058
      %v5621 = vld [vmem:[#allocation1] sm:$0xff]
      %5622 = vst [vmem:[#allocation1] ss:$9 sm:$0xff] %v3067
      %5623 = vst [vmem:[%s5595] ss:$9 sm:$0xff] %v3070
      %5624 = vst [vmem:[%s5597] ss:$9 sm:$0xff] %v3073
      %5625 = vst [vmem:[%s5599] ss:$9 sm:$0xff] %v3076
      %5626 = vst [vmem:[%s5601] ss:$9 sm:$0xff] %v3079
      %v5627 = vld [vmem:[#allocation1] sm:$0xff]
      %5628 = vst [vmem:[#allocation1] ss:$9 sm:$0xff] %v3088
      %5629 = vst [vmem:[%s5595] ss:$9 sm:$0xff] %v3091
      %5630 = vst [vmem:[%s5597] ss:$9 sm:$0xff] %v3094
      %5631 = vst [vmem:[%s5599] ss:$9 sm:$0xff] %v3097
      %5632 = vst [vmem:[%s5601] ss:$9 sm:$0xff] %v3100
      %v5633 = vld [vmem:[#allocation1] sm:$0xff]
      %5634 = vst [vmem:[#allocation1] ss:$9 sm:$0xff] %v3109
      %5635 = vst [vmem:[%s5595] ss:$9 sm:$0xff] %v3112
      %5636 = vst [vmem:[%s5597] ss:$9 sm:$0xff] %v3115
      %5637 = vst [vmem:[%s5599] ss:$9 sm:$0xff] %v3118
      %5638 = vst [vmem:[%s5601] ss:$9 sm:$0xff] %v3121
      %v5639 = vld [vmem:[#allocation1] sm:$0xff]
      %5640 = vst [vmem:[#allocation1] ss:$9 sm:$0xff] %v3130
      %5641 = vst [vmem:[%s5595] ss:$9 sm:$0xff] %v3133
      %5642 = vst [vmem:[%s5597] ss:$9 sm:$0xff] %v3136
      %5643 = vst [vmem:[%s5599] ss:$9 sm:$0xff] %v3139
      %5644 = vst [vmem:[%s5601] ss:$9 sm:$0xff] %v3142
      %v5645 = vld [vmem:[#allocation1] sm:$0xff]
      %5646 = vst [vmem:[#allocation1] ss:$9 sm:$0xff] %v3151
      %5647 = vst [vmem:[%s5595] ss:$9 sm:$0xff] %v3154
      %5648 = vst [vmem:[%s5597] ss:$9 sm:$0xff] %v3157
      %5649 = vst [vmem:[%s5599] ss:$9 sm:$0xff] %v3160
      %5650 = vst [vmem:[%s5601] ss:$9 sm:$0xff] %v3163
      %v5651 = vld [vmem:[#allocation1] sm:$0xff]
      %5652 = vst [vmem:[#allocation1] ss:$9 sm:$0xff] %v3172
      %5653 = vst [vmem:[%s5595] ss:$9 sm:$0xff] %v3175
      %5654 = vst [vmem:[%s5597] ss:$9 sm:$0xff] %v3178
      %5655 = vst [vmem:[%s5599] ss:$9 sm:$0xff] %v3181
      %5656 = vst [vmem:[%s5601] ss:$9 sm:$0xff] %v3184
      %v5657 = vld [vmem:[#allocation1] sm:$0xff]
      %v5658 = vshrl.u32 %v5603, 16
      %v5660 = vrot.slane %v5658, 7
      %v5661 = vshll.u32 %v5603, 16
      %v5663 = vor.u32 %v5660, %v5661
      %v5664 = vshrl.u32 %v5609, 16
      %v5666 = vrot.slane %v5664, 7
      %v5667 = vshll.u32 %v5609, 16
      %v5669 = vor.u32 %v5666, %v5667
      %v5670 = vshrl.u32 %v5615, 16
      %v5672 = vrot.slane %v5670, 7
      %v5673 = vshll.u32 %v5615, 16
      %v5675 = vor.u32 %v5672, %v5673
      %v5676 = vshrl.u32 %v5621, 16
      %v5678 = vrot.slane %v5676, 7
      %v5679 = vshll.u32 %v5621, 16
      %v5681 = vor.u32 %v5678, %v5679
      %v5682 = vshrl.u32 %v5627, 16
      %v5684 = vrot.slane %v5682, 7
      %v5685 = vshll.u32 %v5627, 16
      %v5687 = vor.u32 %v5684, %v5685
      %v5688 = vshrl.u32 %v5633, 16
      %v5690 = vrot.slane %v5688, 7
      %v5691 = vshll.u32 %v5633, 16
      %v5693 = vor.u32 %v5690, %v5691
      %v5694 = vshrl.u32 %v5639, 16
      %v5696 = vrot.slane %v5694, 7
      %v5697 = vshll.u32 %v5639, 16
      %v5699 = vor.u32 %v5696, %v5697
      %v5700 = vshrl.u32 %v5645, 16
      %v5702 = vrot.slane %v5700, 7
      %v5703 = vshll.u32 %v5645, 16
      %v5705 = vor.u32 %v5702, %v5703
      %v5706 = vshrl.u32 %v5651, 16
      %v5708 = vrot.slane %v5706, 7
      %v5709 = vshll.u32 %v5651, 16
      %v5711 = vor.u32 %v5708, %v5709
      %v5712 = vshrl.u32 %v5657, 16
      %v5714 = vrot.slane %v5712, 7
      %v5715 = vshll.u32 %v5657, 16
      %v5717 = vor.u32 %v5714, %v5715
      %v5718 = vshrl.u32 %v4802, 16
      %v5720 = vshll.u32 %v4802, 16
      %v5722 = vrot.slane %v5720, 1
      %v5723 = vor.u32 %v5718, %v5722
      %v5725 = vshrl.u32 %v4936, 16
      %v5727 = vshll.u32 %v4936, 16
      %v5729 = vrot.slane %v5727, 1
      %v5730 = vor.u32 %v5725, %v5729
      %v5731 = vshrl.u32 %v5002, 16
      %v5733 = vshll.u32 %v5002, 16
      %v5735 = vrot.slane %v5733, 1
      %v5736 = vor.u32 %v5731, %v5735
      %v5738 = vshrl.u32 %v5136, 16
      %v5740 = vshll.u32 %v5136, 16
      %v5742 = vrot.slane %v5740, 1
      %v5743 = vor.u32 %v5738, %v5742
      %v5745 = vshrl.u32 %v5264, 16
      %v5747 = vshll.u32 %v5264, 16
      %v5749 = vrot.slane %v5747, 1
      %v5750 = vor.u32 %v5745, %v5749
      %v5751 = vshrl.u32 %v5330, 16
      %v5753 = vshll.u32 %v5330, 16
      %v5755 = vrot.slane %v5753, 1
      %v5756 = vor.u32 %v5751, %v5755
      %v5758 = vshrl.u32 %v5463, 16
      %v5760 = vshll.u32 %v5463, 16
      %v5762 = vrot.slane %v5760, 1
      %v5763 = vor.u32 %v5758, %v5762
      %v5764 = vshrl.u32 %v5529, 16
      %v5766 = vshll.u32 %v5529, 16
      %v5768 = vrot.slane %v5766, 1
      %v5769 = vor.u32 %v5764, %v5768
      %v5771 = vshrl.u32 %v5663, 16
      %v5773 = vshll.u32 %v5663, 16
      %v5775 = vrot.slane %v5773, 1
      %v5776 = vor.u32 %v5771, %v5775
      %v5777 = vshrl.u32 %v4809, 16
      %v5779 = vshll.u32 %v4809, 16
      %v5781 = vrot.slane %v5779, 1
      %v5782 = vor.u32 %v5777, %v5781
      %v5784 = vshrl.u32 %v4942, 16
      %v5786 = vshll.u32 %v4942, 16
      %v5788 = vrot.slane %v5786, 1
      %v5789 = vor.u32 %v5784, %v5788
      %v5790 = vshrl.u32 %v5009, 16
      %v5792 = vshll.u32 %v5009, 16
      %v5794 = vrot.slane %v5792, 1
      %v5795 = vor.u32 %v5790, %v5794
      %v5797 = vshrl.u32 %v5142, 16
      %v5799 = vshll.u32 %v5142, 16
      %v5801 = vrot.slane %v5799, 1
      %v5802 = vor.u32 %v5797, %v5801
      %v5804 = vshrl.u32 %v5270, 16
      %v5806 = vshll.u32 %v5270, 16
      %v5808 = vrot.slane %v5806, 1
      %v5809 = vor.u32 %v5804, %v5808
      %v5810 = vshrl.u32 %v5337, 16
      %v5812 = vshll.u32 %v5337, 16
      %v5814 = vrot.slane %v5812, 1
      %v5815 = vor.u32 %v5810, %v5814
      %v5817 = vshrl.u32 %v5469, 16
      %v5819 = vshll.u32 %v5469, 16
      %v5821 = vrot.slane %v5819, 1
      %v5822 = vor.u32 %v5817, %v5821
      %v5823 = vshrl.u32 %v5536, 16
      %v5825 = vshll.u32 %v5536, 16
      %v5827 = vrot.slane %v5825, 1
      %v5828 = vor.u32 %v5823, %v5827
      %v5830 = vshrl.u32 %v5669, 16
      %v5832 = vshll.u32 %v5669, 16
      %v5834 = vrot.slane %v5832, 1
      %v5835 = vor.u32 %v5830, %v5834
      %v5836 = vshrl.u32 %v4816, 16
      %v5838 = vshll.u32 %v4816, 16
      %v5840 = vrot.slane %v5838, 1
      %v5841 = vor.u32 %v5836, %v5840
      %v5843 = vshrl.u32 %v4948, 16
      %v5845 = vshll.u32 %v4948, 16
      %v5847 = vrot.slane %v5845, 1
      %v5848 = vor.u32 %v5843, %v5847
      %v5849 = vshrl.u32 %v5016, 16
      %v5851 = vshll.u32 %v5016, 16
      %v5853 = vrot.slane %v5851, 1
      %v5854 = vor.u32 %v5849, %v5853
      %v5856 = vshrl.u32 %v5148, 16
      %v5858 = vshll.u32 %v5148, 16
      %v5860 = vrot.slane %v5858, 1
      %v5861 = vor.u32 %v5856, %v5860
      %v5863 = vshrl.u32 %v5276, 16
      %v5865 = vshll.u32 %v5276, 16
      %v5867 = vrot.slane %v5865, 1
      %v5868 = vor.u32 %v5863, %v5867
      %v5869 = vshrl.u32 %v5344, 16
      %v5871 = vshll.u32 %v5344, 16
      %v5873 = vrot.slane %v5871, 1
      %v5874 = vor.u32 %v5869, %v5873
      %v5876 = vshrl.u32 %v5475, 16
      %v5878 = vshll.u32 %v5475, 16
      %v5880 = vrot.slane %v5878, 1
      %v5881 = vor.u32 %v5876, %v5880
      %v5882 = vshrl.u32 %v5543, 16
      %v5884 = vshll.u32 %v5543, 16
      %v5886 = vrot.slane %v5884, 1
      %v5887 = vor.u32 %v5882, %v5886
      %v5889 = vshrl.u32 %v5675, 16
      %v5891 = vshll.u32 %v5675, 16
      %v5893 = vrot.slane %v5891, 1
      %v5894 = vor.u32 %v5889, %v5893
      %v5895 = vshrl.u32 %v4823, 16
      %v5897 = vshll.u32 %v4823, 16
      %v5899 = vrot.slane %v5897, 1
      %v5900 = vor.u32 %v5895, %v5899
      %v5902 = vshrl.u32 %v4954, 16
      %v5904 = vshll.u32 %v4954, 16
      %v5906 = vrot.slane %v5904, 1
      %v5907 = vor.u32 %v5902, %v5906
      %v5908 = vshrl.u32 %v5023, 16
      %v5910 = vshll.u32 %v5023, 16
      %v5912 = vrot.slane %v5910, 1
      %v5913 = vor.u32 %v5908, %v5912
      %v5915 = vshrl.u32 %v5154, 16
      %v5917 = vshll.u32 %v5154, 16
      %v5919 = vrot.slane %v5917, 1
      %v5920 = vor.u32 %v5915, %v5919
      %v5922 = vshrl.u32 %v5282, 16
      %v5924 = vshll.u32 %v5282, 16
      %v5926 = vrot.slane %v5924, 1
      %v5927 = vor.u32 %v5922, %v5926
      %v5928 = vshrl.u32 %v5351, 16
      %v5930 = vshll.u32 %v5351, 16
      %v5932 = vrot.slane %v5930, 1
      %v5933 = vor.u32 %v5928, %v5932
      %v5935 = vshrl.u32 %v5481, 16
      %v5937 = vshll.u32 %v5481, 16
      %v5939 = vrot.slane %v5937, 1
      %v5940 = vor.u32 %v5935, %v5939
      %v5941 = vshrl.u32 %v5550, 16
      %v5943 = vshll.u32 %v5550, 16
      %v5945 = vrot.slane %v5943, 1
      %v5946 = vor.u32 %v5941, %v5945
      %v5948 = vshrl.u32 %v5681, 16
      %v5950 = vshll.u32 %v5681, 16
      %v5952 = vrot.slane %v5950, 1
      %v5953 = vor.u32 %v5948, %v5952
      %v5954 = vshrl.u32 %v4830, 16
      %v5956 = vshll.u32 %v4830, 16
      %v5958 = vrot.slane %v5956, 1
      %v5959 = vor.u32 %v5954, %v5958
      %v5961 = vshrl.u32 %v4960, 16
      %v5963 = vshll.u32 %v4960, 16
      %v5965 = vrot.slane %v5963, 1
      %v5966 = vor.u32 %v5961, %v5965
      %v5967 = vshrl.u32 %v5030, 16
      %v5969 = vshll.u32 %v5030, 16
      %v5971 = vrot.slane %v5969, 1
      %v5972 = vor.u32 %v5967, %v5971
      %v5974 = vshrl.u32 %v5160, 16
      %v5976 = vshll.u32 %v5160, 16
      %v5978 = vrot.slane %v5976, 1
      %v5979 = vor.u32 %v5974, %v5978
      %v5981 = vshrl.u32 %v5288, 16
      %v5983 = vshll.u32 %v5288, 16
      %v5985 = vrot.slane %v5983, 1
      %v5986 = vor.u32 %v5981, %v5985
      %v5987 = vshrl.u32 %v5358, 16
      %v5989 = vshll.u32 %v5358, 16
      %v5991 = vrot.slane %v5989, 1
      %v5992 = vor.u32 %v5987, %v5991
      %v5994 = vshrl.u32 %v5487, 16
      %v5996 = vshll.u32 %v5487, 16
      %v5998 = vrot.slane %v5996, 1
      %v5999 = vor.u32 %v5994, %v5998
      %v6000 = vshrl.u32 %v5557, 16
      %v6002 = vshll.u32 %v5557, 16
      %v6004 = vrot.slane %v6002, 1
      %v6005 = vor.u32 %v6000, %v6004
      %v6007 = vshrl.u32 %v5687, 16
      %v6009 = vshll.u32 %v5687, 16
      %v6011 = vrot.slane %v6009, 1
      %v6012 = vor.u32 %v6007, %v6011
      %v6013 = vshrl.u32 %v4837, 16
      %v6015 = vshll.u32 %v4837, 16
      %v6017 = vrot.slane %v6015, 1
      %v6018 = vor.u32 %v6013, %v6017
      %v6020 = vshrl.u32 %v4966, 16
      %v6022 = vshll.u32 %v4966, 16
      %v6024 = vrot.slane %v6022, 1
      %v6025 = vor.u32 %v6020, %v6024
      %v6026 = vshrl.u32 %v5037, 16
      %v6028 = vshll.u32 %v5037, 16
      %v6030 = vrot.slane %v6028, 1
      %v6031 = vor.u32 %v6026, %v6030
      %v6033 = vshrl.u32 %v5166, 16
      %v6035 = vshll.u32 %v5166, 16
      %v6037 = vrot.slane %v6035, 1
      %v6038 = vor.u32 %v6033, %v6037
      %v6040 = vshrl.u32 %v5294, 16
      %v6042 = vshll.u32 %v5294, 16
      %v6044 = vrot.slane %v6042, 1
      %v6045 = vor.u32 %v6040, %v6044
      %v6046 = vshrl.u32 %v5365, 16
      %v6048 = vshll.u32 %v5365, 16
      %v6050 = vrot.slane %v6048, 1
      %v6051 = vor.u32 %v6046, %v6050
      %v6053 = vshrl.u32 %v5493, 16
      %v6055 = vshll.u32 %v5493, 16
      %v6057 = vrot.slane %v6055, 1
      %v6058 = vor.u32 %v6053, %v6057
      %v6059 = vshrl.u32 %v5564, 16
      %v6061 = vshll.u32 %v5564, 16
      %v6063 = vrot.slane %v6061, 1
      %v6064 = vor.u32 %v6059, %v6063
      %v6066 = vshrl.u32 %v5693, 16
      %v6068 = vshll.u32 %v5693, 16
      %v6070 = vrot.slane %v6068, 1
      %v6071 = vor.u32 %v6066, %v6070
      %v6072 = vshrl.u32 %v4844, 16
      %v6074 = vshll.u32 %v4844, 16
      %v6076 = vrot.slane %v6074, 1
      %v6077 = vor.u32 %v6072, %v6076
      %v6079 = vshrl.u32 %v4972, 16
      %v6081 = vshll.u32 %v4972, 16
      %v6083 = vrot.slane %v6081, 1
      %v6084 = vor.u32 %v6079, %v6083
      %v6085 = vshrl.u32 %v5044, 16
      %v6087 = vshll.u32 %v5044, 16
      %v6089 = vrot.slane %v6087, 1
      %v6090 = vor.u32 %v6085, %v6089
      %v6092 = vshrl.u32 %v5172, 16
      %v6094 = vshll.u32 %v5172, 16
      %v6096 = vrot.slane %v6094, 1
      %v6097 = vor.u32 %v6092, %v6096
      %v6099 = vshrl.u32 %v5300, 16
      %v6101 = vshll.u32 %v5300, 16
      %v6103 = vrot.slane %v6101, 1
      %v6104 = vor.u32 %v6099, %v6103
      %v6105 = vshrl.u32 %v5372, 16
      %v6107 = vshll.u32 %v5372, 16
      %v6109 = vrot.slane %v6107, 1
      %v6110 = vor.u32 %v6105, %v6109
      %v6112 = vshrl.u32 %v5499, 16
      %v6114 = vshll.u32 %v5499, 16
      %v6116 = vrot.slane %v6114, 1
      %v6117 = vor.u32 %v6112, %v6116
      %v6118 = vshrl.u32 %v5571, 16
      %v6120 = vshll.u32 %v5571, 16
      %v6122 = vrot.slane %v6120, 1
      %v6123 = vor.u32 %v6118, %v6122
      %v6125 = vshrl.u32 %v5699, 16
      %v6127 = vshll.u32 %v5699, 16
      %v6129 = vrot.slane %v6127, 1
      %v6130 = vor.u32 %v6125, %v6129
      %v6131 = vshrl.u32 %v4851, 16
      %v6133 = vshll.u32 %v4851, 16
      %v6135 = vrot.slane %v6133, 1
      %v6136 = vor.u32 %v6131, %v6135
      %v6138 = vshrl.u32 %v4978, 16
      %v6140 = vshll.u32 %v4978, 16
      %v6142 = vrot.slane %v6140, 1
      %v6143 = vor.u32 %v6138, %v6142
      %v6144 = vshrl.u32 %v5051, 16
      %v6146 = vshll.u32 %v5051, 16
      %v6148 = vrot.slane %v6146, 1
      %v6149 = vor.u32 %v6144, %v6148
      %v6151 = vshrl.u32 %v5178, 16
      %v6153 = vshll.u32 %v5178, 16
      %v6155 = vrot.slane %v6153, 1
      %v6156 = vor.u32 %v6151, %v6155
      %v6158 = vshrl.u32 %v5306, 16
      %v6160 = vshll.u32 %v5306, 16
      %v6162 = vrot.slane %v6160, 1
      %v6163 = vor.u32 %v6158, %v6162
      %v6164 = vshrl.u32 %v5379, 16
      %v6166 = vshll.u32 %v5379, 16
      %v6168 = vrot.slane %v6166, 1
      %v6169 = vor.u32 %v6164, %v6168
      %v6171 = vshrl.u32 %v5505, 16
      %v6173 = vshll.u32 %v5505, 16
      %v6175 = vrot.slane %v6173, 1
      %v6176 = vor.u32 %v6171, %v6175
      %v6177 = vshrl.u32 %v5578, 16
      %v6179 = vshll.u32 %v5578, 16
      %v6181 = vrot.slane %v6179, 1
      %v6182 = vor.u32 %v6177, %v6181
      %v6184 = vshrl.u32 %v5705, 16
      %v6186 = vshll.u32 %v5705, 16
      %v6188 = vrot.slane %v6186, 1
      %v6189 = vor.u32 %v6184, %v6188
      %v6190 = vshrl.u32 %v4858, 16
      %v6192 = vshll.u32 %v4858, 16
      %v6194 = vrot.slane %v6192, 1
      %v6195 = vor.u32 %v6190, %v6194
      %v6197 = vshrl.u32 %v4984, 16
      %v6199 = vshll.u32 %v4984, 16
      %v6201 = vrot.slane %v6199, 1
      %v6202 = vor.u32 %v6197, %v6201
      %v6203 = vshrl.u32 %v5058, 16
      %v6205 = vshll.u32 %v5058, 16
      %v6207 = vrot.slane %v6205, 1
      %v6208 = vor.u32 %v6203, %v6207
      %v6210 = vshrl.u32 %v5184, 16
      %v6212 = vshll.u32 %v5184, 16
      %v6214 = vrot.slane %v6212, 1
      %v6215 = vor.u32 %v6210, %v6214
      %v6217 = vshrl.u32 %v5312, 16
      %v6219 = vshll.u32 %v5312, 16
      %v6221 = vrot.slane %v6219, 1
      %v6222 = vor.u32 %v6217, %v6221
      %v6223 = vshrl.u32 %v5386, 16
      %v6225 = vshll.u32 %v5386, 16
      %v6227 = vrot.slane %v6225, 1
      %v6228 = vor.u32 %v6223, %v6227
      %v6230 = vshrl.u32 %v5511, 16
      %v6232 = vshll.u32 %v5511, 16
      %v6234 = vrot.slane %v6232, 1
      %v6235 = vor.u32 %v6230, %v6234
      %v6236 = vshrl.u32 %v5585, 16
      %v6238 = vshll.u32 %v5585, 16
      %v6240 = vrot.slane %v6238, 1
      %v6241 = vor.u32 %v6236, %v6240
      %v6243 = vshrl.u32 %v5711, 16
      %v6245 = vshll.u32 %v5711, 16
      %v6247 = vrot.slane %v6245, 1
      %v6248 = vor.u32 %v6243, %v6247
      %v6249 = vshrl.u32 %v4866, 16
      %v6251 = vshll.u32 %v4866, 16
      %v6253 = vrot.slane %v6251, 1
      %v6254 = vor.u32 %v6249, %v6253
      %v6256 = vshrl.u32 %v4990, 16
      %v6258 = vshll.u32 %v4990, 16
      %v6260 = vrot.slane %v6258, 1
      %v6261 = vor.u32 %v6256, %v6260
      %v6262 = vshrl.u32 %v5066, 16
      %v6264 = vshll.u32 %v5066, 16
      %v6266 = vrot.slane %v6264, 1
      %v6267 = vor.u32 %v6262, %v6266
      %v6269 = vshrl.u32 %v5190, 16
      %v6271 = vshll.u32 %v5190, 16
      %v6273 = vrot.slane %v6271, 1
      %v6274 = vor.u32 %v6269, %v6273
      %v6276 = vshrl.u32 %v5318, 16
      %v6278 = vshll.u32 %v5318, 16
      %v6280 = vrot.slane %v6278, 1
      %v6281 = vor.u32 %v6276, %v6280
      %v6282 = vshrl.u32 %v5393, 16
      %v6284 = vshll.u32 %v5393, 16
      %v6286 = vrot.slane %v6284, 1
      %v6287 = vor.u32 %v6282, %v6286
      %v6289 = vshrl.u32 %v5517, 16
      %v6291 = vshll.u32 %v5517, 16
      %v6293 = vrot.slane %v6291, 1
      %v6294 = vor.u32 %v6289, %v6293
      %v6295 = vshrl.u32 %v5593, 16
      %v6297 = vshll.u32 %v5593, 16
      %v6299 = vrot.slane %v6297, 1
      %v6300 = vor.u32 %v6295, %v6299
      %v6302 = vshrl.u32 %v5717, 16
      %v6304 = vshll.u32 %v5717, 16
      %v6306 = vrot.slane %v6304, 1
      %v6307 = vor.u32 %v6302, %v6306
      %v6308 = vrot.slane %v3373, 7
      %v6309 = vrot.slane %v3437, 6
      %v6310 = vrot.slane %v3590, 5
      %v6311 = vrot.slane %v3654, 4
      %v6312 = vrot.slane %v3728, 3
      %v6313 = vrot.slane %v3878, 2
      %v6314 = vrot.slane %v3942, 1
      %v6315 = vrot.slane %v4151, 7
      %v6316 = vrot.slane %v4225, 6
      %v6317 = vrot.slane %v4375, 5
      %v6318 = vrot.slane %v4439, 4
      %v6319 = vrot.slane %v4585, 3
      %v6320 = vrot.slane %v4649, 2
      %v6321 = vrot.slane %v4723, 1
      %v6322 = vrot.slane %v5730, 7
      %v6323 = vrot.slane %v5736, 6
      %v6324 = vrot.slane %v5743, 5
      %v6325 = vrot.slane %v5750, 4
      %v6326 = vrot.slane %v5756, 3
      %v6327 = vrot.slane %v5763, 2
      %v6328 = vrot.slane %v5769, 1
      %v6329 = vrot.slane %v3379, 7
      %v6330 = vrot.slane %v3444, 6
      %v6331 = vrot.slane %v3596, 5
      %v6332 = vrot.slane %v3661, 4
      %v6333 = vrot.slane %v3735, 3
      %v6334 = vrot.slane %v3884, 2
      %v6335 = vrot.slane %v3949, 1
      %v6336 = vrot.slane %v4158, 7
      %v6337 = vrot.slane %v4232, 6
      %v6338 = vrot.slane %v4381, 5
      %v6339 = vrot.slane %v4446, 4
      %v6340 = vrot.slane %v4591, 3
      %v6341 = vrot.slane %v4656, 2
      %v6342 = vrot.slane %v4730, 1
      %v6343 = vrot.slane %v5789, 7
      %v6344 = vrot.slane %v5795, 6
      %v6345 = vrot.slane %v5802, 5
      %v6346 = vrot.slane %v5809, 4
      %v6347 = vrot.slane %v5815, 3
      %v6348 = vrot.slane %v5822, 2
      %v6349 = vrot.slane %v5828, 1
      %v6350 = vrot.slane %v3385, 7
      %v6351 = vrot.slane %v3451, 6
      %v6352 = vrot.slane %v3602, 5
      %v6353 = vrot.slane %v3668, 4
      %v6354 = vrot.slane %v3742, 3
      %v6355 = vrot.slane %v3890, 2
      %v6356 = vrot.slane %v3956, 1
      %v6357 = vrot.slane %v4165, 7
      %v6358 = vrot.slane %v4239, 6
      %v6359 = vrot.slane %v4387, 5
      %v6360 = vrot.slane %v4453, 4
      %v6361 = vrot.slane %v4597, 3
      %v6362 = vrot.slane %v4663, 2
      %v6363 = vrot.slane %v4737, 1
      %v6364 = vrot.slane %v5848, 7
      %v6365 = vrot.slane %v5854, 6
      %v6366 = vrot.slane %v5861, 5
      %v6367 = vrot.slane %v5868, 4
      %v6368 = vrot.slane %v5874, 3
      %v6369 = vrot.slane %v5881, 2
      %v6370 = vrot.slane %v5887, 1
      %v6371 = vrot.slane %v3391, 7
      %v6372 = vrot.slane %v3458, 6
      %v6373 = vrot.slane %v3608, 5
      %v6374 = vrot.slane %v3675, 4
      %v6375 = vrot.slane %v3749, 3
      %v6376 = vrot.slane %v3896, 2
      %v6377 = vrot.slane %v3963, 1
      %v6378 = vrot.slane %v4172, 7
      %v6379 = vrot.slane %v4246, 6
      %v6380 = vrot.slane %v4393, 5
      %v6381 = vrot.slane %v4460, 4
      %v6382 = vrot.slane %v4603, 3
      %v6383 = vrot.slane %v4670, 2
      %v6384 = vrot.slane %v4744, 1
      %v6385 = vrot.slane %v5907, 7
      %v6386 = vrot.slane %v5913, 6
      %v6387 = vrot.slane %v5920, 5
      %v6388 = vrot.slane %v5927, 4
      %v6389 = vrot.slane %v5933, 3
      %v6390 = vrot.slane %v5940, 2
      %v6391 = vrot.slane %v5946, 1
      %v6392 = vrot.slane %v3397, 7
      %v6393 = vrot.slane %v3465, 6
      %v6394 = vrot.slane %v3614, 5
      %v6395 = vrot.slane %v3682, 4
      %v6396 = vrot.slane %v3756, 3
      %v6397 = vrot.slane %v3902, 2
      %v6398 = vrot.slane %v3970, 1
      %v6399 = vrot.slane %v4179, 7
      %v6400 = vrot.slane %v4253, 6
      %v6401 = vrot.slane %v4399, 5
      %v6402 = vrot.slane %v4467, 4
      %v6403 = vrot.slane %v4609, 3
      %v6404 = vrot.slane %v4677, 2
      %v6405 = vrot.slane %v4751, 1
      %v6406 = vrot.slane %v5966, 7
      %v6407 = vrot.slane %v5972, 6
      %v6408 = vrot.slane %v5979, 5
      %v6409 = vrot.slane %v5986, 4
      %v6410 = vrot.slane %v5992, 3
      %v6411 = vrot.slane %v5999, 2
      %v6412 = vrot.slane %v6005, 1
      %v6413 = vrot.slane %v3403, 7
      %v6414 = vrot.slane %v3472, 6
      %v6415 = vrot.slane %v3620, 5
      %v6416 = vrot.slane %v3689, 4
      %v6417 = vrot.slane %v3763, 3
      %v6418 = vrot.slane %v3908, 2
      %v6419 = vrot.slane %v3977, 1
      %v6420 = vrot.slane %v4186, 7
      %v6421 = vrot.slane %v4260, 6
      %v6422 = vrot.slane %v4405, 5
      %v6423 = vrot.slane %v4474, 4
      %v6424 = vrot.slane %v4615, 3
      %v6425 = vrot.slane %v4684, 2
      %v6426 = vrot.slane %v4758, 1
      %v6427 = vrot.slane %v6025, 7
      %v6428 = vrot.slane %v6031, 6
      %v6429 = vrot.slane %v6038, 5
      %v6430 = vrot.slane %v6045, 4
      %v6431 = vrot.slane %v6051, 3
      %v6432 = vrot.slane %v6058, 2
      %v6433 = vrot.slane %v6064, 1
      %v6434 = vrot.slane %v3409, 7
      %v6435 = vrot.slane %v3479, 6
      %v6436 = vrot.slane %v3626, 5
      %v6437 = vrot.slane %v3696, 4
      %v6438 = vrot.slane %v3770, 3
      %v6439 = vrot.slane %v3914, 2
      %v6440 = vrot.slane %v3984, 1
      %v6441 = vrot.slane %v4193, 7
      %v6442 = vrot.slane %v4267, 6
      %v6443 = vrot.slane %v4411, 5
      %v6444 = vrot.slane %v4481, 4
      %v6445 = vrot.slane %v4621, 3
      %v6446 = vrot.slane %v4691, 2
      %v6447 = vrot.slane %v4765, 1
      %v6448 = vrot.slane %v6084, 7
      %v6449 = vrot.slane %v6090, 6
      %v6450 = vrot.slane %v6097, 5
      %v6451 = vrot.slane %v6104, 4
      %v6452 = vrot.slane %v6110, 3
      %v6453 = vrot.slane %v6117, 2
      %v6454 = vrot.slane %v6123, 1
      %v6455 = vrot.slane %v3415, 7
      %v6456 = vrot.slane %v3486, 6
      %v6457 = vrot.slane %v3632, 5
      %v6458 = vrot.slane %v3703, 4
      %v6459 = vrot.slane %v3777, 3
      %v6460 = vrot.slane %v3920, 2
      %v6461 = vrot.slane %v3991, 1
      %v6462 = vrot.slane %v4200, 7
      %v6463 = vrot.slane %v4274, 6
      %v6464 = vrot.slane %v4417, 5
      %v6465 = vrot.slane %v4488, 4
      %v6466 = vrot.slane %v4627, 3
      %v6467 = vrot.slane %v4698, 2
      %v6468 = vrot.slane %v4772, 1
      %v6469 = vrot.slane %v6143, 7
      %v6470 = vrot.slane %v6149, 6
      %v6471 = vrot.slane %v6156, 5
      %v6472 = vrot.slane %v6163, 4
      %v6473 = vrot.slane %v6169, 3
      %v6474 = vrot.slane %v6176, 2
      %v6475 = vrot.slane %v6182, 1
      %v6476 = vrot.slane %v3421, 7
      %v6477 = vrot.slane %v3493, 6
      %v6478 = vrot.slane %v3638, 5
      %v6479 = vrot.slane %v3710, 4
      %v6480 = vrot.slane %v3784, 3
      %v6481 = vrot.slane %v3926, 2
      %v6482 = vrot.slane %v3998, 1
      %v6483 = vrot.slane %v4207, 7
      %v6484 = vrot.slane %v4281, 6
      %v6485 = vrot.slane %v4423, 5
      %v6486 = vrot.slane %v4495, 4
      %v6487 = vrot.slane %v4633, 3
      %v6488 = vrot.slane %v4705, 2
      %v6489 = vrot.slane %v4779, 1
      %v6490 = vrot.slane %v6202, 7
      %v6491 = vrot.slane %v6208, 6
      %v6492 = vrot.slane %v6215, 5
      %v6493 = vrot.slane %v6222, 4
      %v6494 = vrot.slane %v6228, 3
      %v6495 = vrot.slane %v6235, 2
      %v6496 = vrot.slane %v6241, 1
      %v6497 = vrot.slane %v3427, 7
      %v6498 = vrot.slane %v3500, 6
      %v6499 = vrot.slane %v3644, 5
      %v6500 = vrot.slane %v3717, 4
      %v6501 = vrot.slane %v3795, 3
      %v6502 = vrot.slane %v3932, 2
      %v6503 = vrot.slane %v4005, 1
      %v6504 = vrot.slane %v4214, 7
      %v6505 = vrot.slane %v4292, 6
      %v6506 = vrot.slane %v4429, 5
      %v6507 = vrot.slane %v4502, 4
      %v6508 = vrot.slane %v4639, 3
      %v6509 = vrot.slane %v4712, 2
      %v6510 = vrot.slane %v4789, 1
      %v6511 = vrot.slane %v6261, 7
      %v6512 = vrot.slane %v6267, 6
      %v6513 = vrot.slane %v6274, 5
      %v6514 = vrot.slane %v6281, 4
      %v6515 = vrot.slane %v6287, 3
      %v6516 = vrot.slane %v6294, 2
      %v6517 = vrot.slane %v6300, 1
      %v6519 = vsel %vm2887, %v3197, %v6308
      %v6522 = vsel %vm2895, %v6309, %v6310
      %v6523 = vsel %vm1331, %v6519, %v6522
      %vm6524 = vcmask 1044484
      %v6527 = vsel %vm6524, %v6311, %v6312
      %vm6528 = vcmask 1046534
      %v6531 = vsel %vm6528, %v6313, %v6314
      %vm6532 = vcmask 1045508
      %v6533 = vsel %vm6532, %v6527, %v6531
      %v6534 = vsel %vm2313, %v6523, %v6533
      %v6537 = vsel %vm2887, %v4087, %v6315
      %v6540 = vsel %vm2895, %v6316, %v6317
      %v6541 = vsel %vm1331, %v6537, %v6540
      %v6544 = vsel %vm6524, %v6318, %v6319
      %v6547 = vsel %vm6528, %v6320, %v6321
      %v6548 = vsel %vm6532, %v6544, %v6547
      %v6549 = vsel %vm2313, %v6541, %v6548
      %v6552 = vsel %vm2887, %v5723, %v6322
      %v6555 = vsel %vm2895, %v6323, %v6324
      %v6556 = vsel %vm1331, %v6552, %v6555
      %v6559 = vsel %vm6524, %v6325, %v6326
      %v6562 = vsel %vm6528, %v6327, %v6328
      %v6563 = vsel %vm6532, %v6559, %v6562
      %v6564 = vsel %vm2313, %v6556, %v6563
      %v6565 = vsel %vm2891, %v3197, %v6308
      %v6566 = vsel %vm2899, %v6309, %v6310
      %vm6567 = vcmask 1042433
      %v6568 = vsel %vm6567, %v6565, %v6566
      %vm6569 = vcmask 1045509
      %v6570 = vsel %vm6569, %v6311, %v6312
      %vm6571 = vcmask 1046528
      %v6572 = vsel %vm6571, %v6314, %v6313
      %vm6573 = vcmask 1046533
      %v6574 = vsel %vm6573, %v6570, %v6572
      %vm6575 = vcmask 1044481
      %v6576 = vsel %vm6575, %v6568, %v6574
      %v6578 = vrot.slane %v6576, 1
      %v6579 = vsel %vm2891, %v4087, %v6315
      %v6580 = vsel %vm2899, %v6316, %v6317
      %v6581 = vsel %vm6567, %v6579, %v6580
      %v6582 = vsel %vm6569, %v6318, %v6319
      %v6583 = vsel %vm6571, %v6321, %v6320
      %v6584 = vsel %vm6573, %v6582, %v6583
      %v6585 = vsel %vm6575, %v6581, %v6584
      %v6587 = vrot.slane %v6585, 1
      %v6588 = vsel %vm2891, %v5723, %v6322
      %v6589 = vsel %vm2899, %v6323, %v6324
      %v6590 = vsel %vm6567, %v6588, %v6589
      %v6591 = vsel %vm6569, %v6325, %v6326
      %v6592 = vsel %vm6571, %v6328, %v6327
      %v6593 = vsel %vm6573, %v6591, %v6592
      %v6594 = vsel %vm6575, %v6590, %v6593
      %v6596 = vrot.slane %v6594, 1
      %v6597 = vrot.slane %v5776, 1
      %v6598 = vsel %vm2895, %v3197, %v6308
      %v6599 = vsel %vm6524, %v6309, %v6310
      %v6600 = vsel %vm1335, %v6598, %v6599
      %v6601 = vsel %vm6528, %v6311, %v6312
      %v6602 = vsel %vm2887, %v6313, %v6314
      %vm6603 = vcmask 1045504
      %v6604 = vsel %vm6603, %v6602, %v6601
      %vm6605 = vcmask 1045506
      %v6606 = vsel %vm6605, %v6600, %v6604
      %v6608 = vrot.slane %v6606, 2
      %v6609 = vsel %vm2895, %v4087, %v6315
      %v6610 = vsel %vm6524, %v6316, %v6317
      %v6611 = vsel %vm1335, %v6609, %v6610
      %v6612 = vsel %vm6528, %v6318, %v6319
      %v6613 = vsel %vm2887, %v6320, %v6321
      %v6614 = vsel %vm6603, %v6613, %v6612
      %v6615 = vsel %vm6605, %v6611, %v6614
      %v6617 = vrot.slane %v6615, 2
      %v6618 = vsel %vm2895, %v5723, %v6322
      %v6619 = vsel %vm6524, %v6323, %v6324
      %v6620 = vsel %vm1335, %v6618, %v6619
      %v6621 = vsel %vm6528, %v6325, %v6326
      %v6622 = vsel %vm2887, %v6327, %v6328
      %v6623 = vsel %vm6603, %v6622, %v6621
      %v6624 = vsel %vm6605, %v6620, %v6623
      %v6626 = vrot.slane %v6624, 2
      %v6627 = vrot.slane %v5776, 2
      %v6628 = vsel %vm2899, %v3197, %v6308
      %v6629 = vsel %vm6569, %v6309, %v6310
      %vm6630 = vcmask 1044483
      %v6631 = vsel %vm6630, %v6628, %v6629
      %v6632 = vsel %vm6571, %v6312, %v6311
      %v6633 = vsel %vm2891, %v6313, %v6314
      %vm6634 = vcmask 1046529
      %v6635 = vsel %vm6634, %v6633, %v6632
      %vm6636 = vcmask 1046531
      %v6637 = vsel %vm6636, %v6631, %v6635
      %v6639 = vrot.slane %v6637, 3
      %v6640 = vsel %vm2899, %v4087, %v6315
      %v6641 = vsel %vm6569, %v6316, %v6317
      %v6642 = vsel %vm6630, %v6640, %v6641
      %v6643 = vsel %vm6571, %v6319, %v6318
      %v6644 = vsel %vm2891, %v6320, %v6321
      %v6645 = vsel %vm6634, %v6644, %v6643
      %v6646 = vsel %vm6636, %v6642, %v6645
      %v6648 = vrot.slane %v6646, 3
      %v6649 = vsel %vm2899, %v5723, %v6322
      %v6650 = vsel %vm6569, %v6323, %v6324
      %v6651 = vsel %vm6630, %v6649, %v6650
      %v6652 = vsel %vm6571, %v6326, %v6325
      %v6653 = vsel %vm2891, %v6327, %v6328
      %v6654 = vsel %vm6634, %v6653, %v6652
      %v6655 = vsel %vm6636, %v6651, %v6654
      %v6657 = vrot.slane %v6655, 3
      %v6658 = vrot.slane %v5776, 3
      %v6659 = vsel %vm6524, %v3197, %v6308
      %v6660 = vsel %vm6528, %v6309, %v6310
      %v6661 = vsel %vm6532, %v6659, %v6660
      %v6662 = vsel %vm2887, %v6311, %v6312
      %v6663 = vsel %vm2895, %v6313, %v6314
      %v6664 = vsel %vm1331, %v6662, %v6663
      %v6665 = vsel %vm2313, %v6664, %v6661
      %v6667 = vrot.slane %v6665, 4
      %v6668 = vsel %vm6524, %v4087, %v6315
      %v6669 = vsel %vm6528, %v6316, %v6317
      %v6670 = vsel %vm6532, %v6668, %v6669
      %v6671 = vsel %vm2887, %v6318, %v6319
      %v6672 = vsel %vm2895, %v6320, %v6321
      %v6673 = vsel %vm1331, %v6671, %v6672
      %v6674 = vsel %vm2313, %v6673, %v6670
      %v6676 = vrot.slane %v6674, 4
      %v6677 = vsel %vm6524, %v5723, %v6322
      %v6678 = vsel %vm6528, %v6323, %v6324
      %v6679 = vsel %vm6532, %v6677, %v6678
      %v6680 = vsel %vm2887, %v6325, %v6326
      %v6681 = vsel %vm2895, %v6327, %v6328
      %v6682 = vsel %vm1331, %v6680, %v6681
      %v6683 = vsel %vm2313, %v6682, %v6679
      %v6685 = vrot.slane %v6683, 4
      %v6686 = vrot.slane %v5776, 4
      %v6688 = vsel %vm2887, %v3207, %v6329
      %v6691 = vsel %vm2895, %v6330, %v6331
      %v6692 = vsel %vm1331, %v6688, %v6691
      %v6695 = vsel %vm6524, %v6332, %v6333
      %v6698 = vsel %vm6528, %v6334, %v6335
      %v6699 = vsel %vm6532, %v6695, %v6698
      %v6700 = vsel %vm2313, %v6692, %v6699
      %v6703 = vsel %vm2887, %v4093, %v6336
      %v6706 = vsel %vm2895, %v6337, %v6338
      %v6707 = vsel %vm1331, %v6703, %v6706
      %v6710 = vsel %vm6524, %v6339, %v6340
      %v6713 = vsel %vm6528, %v6341, %v6342
      %v6714 = vsel %vm6532, %v6710, %v6713
      %v6715 = vsel %vm2313, %v6707, %v6714
      %v6718 = vsel %vm2887, %v5782, %v6343
      %v6721 = vsel %vm2895, %v6344, %v6345
      %v6722 = vsel %vm1331, %v6718, %v6721
      %v6725 = vsel %vm6524, %v6346, %v6347
      %v6728 = vsel %vm6528, %v6348, %v6349
      %v6729 = vsel %vm6532, %v6725, %v6728
      %v6730 = vsel %vm2313, %v6722, %v6729
      %v6731 = vsel %vm2891, %v3207, %v6329
      %v6732 = vsel %vm2899, %v6330, %v6331
      %v6733 = vsel %vm6567, %v6731, %v6732
      %v6734 = vsel %vm6569, %v6332, %v6333
      %v6735 = vsel %vm6571, %v6335, %v6334
      %v6736 = vsel %vm6573, %v6734, %v6735
      %v6737 = vsel %vm6575, %v6733, %v6736
      %v6739 = vrot.slane %v6737, 1
      %v6740 = vsel %vm2891, %v4093, %v6336
      %v6741 = vsel %vm2899, %v6337, %v6338
      %v6742 = vsel %vm6567, %v6740, %v6741
      %v6743 = vsel %vm6569, %v6339, %v6340
      %v6744 = vsel %vm6571, %v6342, %v6341
      %v6745 = vsel %vm6573, %v6743, %v6744
      %v6746 = vsel %vm6575, %v6742, %v6745
      %v6748 = vrot.slane %v6746, 1
      %v6749 = vsel %vm2891, %v5782, %v6343
      %v6750 = vsel %vm2899, %v6344, %v6345
      %v6751 = vsel %vm6567, %v6749, %v6750
      %v6752 = vsel %vm6569, %v6346, %v6347
      %v6753 = vsel %vm6571, %v6349, %v6348
      %v6754 = vsel %vm6573, %v6752, %v6753
      %v6755 = vsel %vm6575, %v6751, %v6754
      %v6757 = vrot.slane %v6755, 1
      %v6758 = vrot.slane %v5835, 1
      %v6759 = vsel %vm2895, %v3207, %v6329
      %v6760 = vsel %vm6524, %v6330, %v6331
      %v6761 = vsel %vm1335, %v6759, %v6760
      %v6762 = vsel %vm6528, %v6332, %v6333
      %v6763 = vsel %vm2887, %v6334, %v6335
      %v6764 = vsel %vm6603, %v6763, %v6762
      %v6765 = vsel %vm6605, %v6761, %v6764
      %v6767 = vrot.slane %v6765, 2
      %v6768 = vsel %vm2895, %v4093, %v6336
      %v6769 = vsel %vm6524, %v6337, %v6338
      %v6770 = vsel %vm1335, %v6768, %v6769
      %v6771 = vsel %vm6528, %v6339, %v6340
      %v6772 = vsel %vm2887, %v6341, %v6342
      %v6773 = vsel %vm6603, %v6772, %v6771
      %v6774 = vsel %vm6605, %v6770, %v6773
      %v6776 = vrot.slane %v6774, 2
      %v6777 = vsel %vm2895, %v5782, %v6343
      %v6778 = vsel %vm6524, %v6344, %v6345
      %v6779 = vsel %vm1335, %v6777, %v6778
      %v6780 = vsel %vm6528, %v6346, %v6347
      %v6781 = vsel %vm2887, %v6348, %v6349
      %v6782 = vsel %vm6603, %v6781, %v6780
      %v6783 = vsel %vm6605, %v6779, %v6782
      %v6785 = vrot.slane %v6783, 2
      %v6786 = vrot.slane %v5835, 2
      %v6787 = vsel %vm2899, %v3207, %v6329
      %v6788 = vsel %vm6569, %v6330, %v6331
      %v6789 = vsel %vm6630, %v6787, %v6788
      %v6790 = vsel %vm6571, %v6333, %v6332
      %v6791 = vsel %vm2891, %v6334, %v6335
      %v6792 = vsel %vm6634, %v6791, %v6790
      %v6793 = vsel %vm6636, %v6789, %v6792
      %v6795 = vrot.slane %v6793, 3
      %v6796 = vsel %vm2899, %v4093, %v6336
      %v6797 = vsel %vm6569, %v6337, %v6338
      %v6798 = vsel %vm6630, %v6796, %v6797
      %v6799 = vsel %vm6571, %v6340, %v6339
      %v6800 = vsel %vm2891, %v6341, %v6342
      %v6801 = vsel %vm6634, %v6800, %v6799
      %v6802 = vsel %vm6636, %v6798, %v6801
      %v6804 = vrot.slane %v6802, 3
      %v6805 = vsel %vm2899, %v5782, %v6343
      %v6806 = vsel %vm6569, %v6344, %v6345
      %v6807 = vsel %vm6630, %v6805, %v6806
      %v6808 = vsel %vm6571, %v6347, %v6346
      %v6809 = vsel %vm2891, %v6348, %v6349
      %v6810 = vsel %vm6634, %v6809, %v6808
      %v6811 = vsel %vm6636, %v6807, %v6810
      %v6813 = vrot.slane %v6811, 3
      %v6814 = vrot.slane %v5835, 3
      %v6815 = vsel %vm6524, %v3207, %v6329
      %v6816 = vsel %vm6528, %v6330, %v6331
      %v6817 = vsel %vm6532, %v6815, %v6816
      %v6818 = vsel %vm2887, %v6332, %v6333
      %v6819 = vsel %vm2895, %v6334, %v6335
      %v6820 = vsel %vm1331, %v6818, %v6819
      %v6821 = vsel %vm2313, %v6820, %v6817
      %v6823 = vrot.slane %v6821, 4
      %v6824 = vsel %vm6524, %v4093, %v6336
      %v6825 = vsel %vm6528, %v6337, %v6338
      %v6826 = vsel %vm6532, %v6824, %v6825
      %v6827 = vsel %vm2887, %v6339, %v6340
      %v6828 = vsel %vm2895, %v6341, %v6342
      %v6829 = vsel %vm1331, %v6827, %v6828
      %v6830 = vsel %vm2313, %v6829, %v6826
      %v6832 = vrot.slane %v6830, 4
      %v6833 = vsel %vm6524, %v5782, %v6343
      %v6834 = vsel %vm6528, %v6344, %v6345
      %v6835 = vsel %vm6532, %v6833, %v6834
      %v6836 = vsel %vm2887, %v6346, %v6347
      %v6837 = vsel %vm2895, %v6348, %v6349
      %v6838 = vsel %vm1331, %v6836, %v6837
      %v6839 = vsel %vm2313, %v6838, %v6835
      %v6841 = vrot.slane %v6839, 4
      %v6842 = vrot.slane %v5835, 4
      %v6844 = vsel %vm2887, %v3217, %v6350
      %v6847 = vsel %vm2895, %v6351, %v6352
      %v6848 = vsel %vm1331, %v6844, %v6847
      %v6851 = vsel %vm6524, %v6353, %v6354
      %v6854 = vsel %vm6528, %v6355, %v6356
      %v6855 = vsel %vm6532, %v6851, %v6854
      %v6856 = vsel %vm2313, %v6848, %v6855
      %v6859 = vsel %vm2887, %v4099, %v6357
      %v6862 = vsel %vm2895, %v6358, %v6359
      %v6863 = vsel %vm1331, %v6859, %v6862
      %v6866 = vsel %vm6524, %v6360, %v6361
      %v6869 = vsel %vm6528, %v6362, %v6363
      %v6870 = vsel %vm6532, %v6866, %v6869
      %v6871 = vsel %vm2313, %v6863, %v6870
      %v6874 = vsel %vm2887, %v5841, %v6364
      %v6877 = vsel %vm2895, %v6365, %v6366
      %v6878 = vsel %vm1331, %v6874, %v6877
      %v6881 = vsel %vm6524, %v6367, %v6368
      %v6884 = vsel %vm6528, %v6369, %v6370
      %v6885 = vsel %vm6532, %v6881, %v6884
      %v6886 = vsel %vm2313, %v6878, %v6885
      %v6887 = vsel %vm2891, %v3217, %v6350
      %v6888 = vsel %vm2899, %v6351, %v6352
      %v6889 = vsel %vm6567, %v6887, %v6888
      %v6890 = vsel %vm6569, %v6353, %v6354
      %v6891 = vsel %vm6571, %v6356, %v6355
      %v6892 = vsel %vm6573, %v6890, %v6891
      %v6893 = vsel %vm6575, %v6889, %v6892
      %v6895 = vrot.slane %v6893, 1
      %v6896 = vsel %vm2891, %v4099, %v6357
      %v6897 = vsel %vm2899, %v6358, %v6359
      %v6898 = vsel %vm6567, %v6896, %v6897
      %v6899 = vsel %vm6569, %v6360, %v6361
      %v6900 = vsel %vm6571, %v6363, %v6362
      %v6901 = vsel %vm6573, %v6899, %v6900
      %v6902 = vsel %vm6575, %v6898, %v6901
      %v6904 = vrot.slane %v6902, 1
      %v6905 = vsel %vm2891, %v5841, %v6364
      %v6906 = vsel %vm2899, %v6365, %v6366
      %v6907 = vsel %vm6567, %v6905, %v6906
      %v6908 = vsel %vm6569, %v6367, %v6368
      %v6909 = vsel %vm6571, %v6370, %v6369
      %v6910 = vsel %vm6573, %v6908, %v6909
      %v6911 = vsel %vm6575, %v6907, %v6910
      %v6913 = vrot.slane %v6911, 1
      %v6914 = vrot.slane %v5894, 1
      %v6915 = vsel %vm2895, %v3217, %v6350
      %v6916 = vsel %vm6524, %v6351, %v6352
      %v6917 = vsel %vm1335, %v6915, %v6916
      %v6918 = vsel %vm6528, %v6353, %v6354
      %v6919 = vsel %vm2887, %v6355, %v6356
      %v6920 = vsel %vm6603, %v6919, %v6918
      %v6921 = vsel %vm6605, %v6917, %v6920
      %v6923 = vrot.slane %v6921, 2
      %v6924 = vsel %vm2895, %v4099, %v6357
      %v6925 = vsel %vm6524, %v6358, %v6359
      %v6926 = vsel %vm1335, %v6924, %v6925
      %v6927 = vsel %vm6528, %v6360, %v6361
      %v6928 = vsel %vm2887, %v6362, %v6363
      %v6929 = vsel %vm6603, %v6928, %v6927
      %v6930 = vsel %vm6605, %v6926, %v6929
      %v6932 = vrot.slane %v6930, 2
      %v6933 = vsel %vm2895, %v5841, %v6364
      %v6934 = vsel %vm6524, %v6365, %v6366
      %v6935 = vsel %vm1335, %v6933, %v6934
      %v6936 = vsel %vm6528, %v6367, %v6368
      %v6937 = vsel %vm2887, %v6369, %v6370
      %v6938 = vsel %vm6603, %v6937, %v6936
      %v6939 = vsel %vm6605, %v6935, %v6938
      %v6941 = vrot.slane %v6939, 2
      %v6942 = vrot.slane %v5894, 2
      %v6943 = vsel %vm2899, %v3217, %v6350
      %v6944 = vsel %vm6569, %v6351, %v6352
      %v6945 = vsel %vm6630, %v6943, %v6944
      %v6946 = vsel %vm6571, %v6354, %v6353
      %v6947 = vsel %vm2891, %v6355, %v6356
      %v6948 = vsel %vm6634, %v6947, %v6946
      %v6949 = vsel %vm6636, %v6945, %v6948
      %v6951 = vrot.slane %v6949, 3
      %v6952 = vsel %vm2899, %v4099, %v6357
      %v6953 = vsel %vm6569, %v6358, %v6359
      %v6954 = vsel %vm6630, %v6952, %v6953
      %v6955 = vsel %vm6571, %v6361, %v6360
      %v6956 = vsel %vm2891, %v6362, %v6363
      %v6957 = vsel %vm6634, %v6956, %v6955
      %v6958 = vsel %vm6636, %v6954, %v6957
      %v6960 = vrot.slane %v6958, 3
      %v6961 = vsel %vm2899, %v5841, %v6364
      %v6962 = vsel %vm6569, %v6365, %v6366
      %v6963 = vsel %vm6630, %v6961, %v6962
      %v6964 = vsel %vm6571, %v6368, %v6367
      %v6965 = vsel %vm2891, %v6369, %v6370
      %v6966 = vsel %vm6634, %v6965, %v6964
      %v6967 = vsel %vm6636, %v6963, %v6966
      %v6969 = vrot.slane %v6967, 3
      %v6970 = vrot.slane %v5894, 3
      %v6971 = vsel %vm6524, %v3217, %v6350
      %v6972 = vsel %vm6528, %v6351, %v6352
      %v6973 = vsel %vm6532, %v6971, %v6972
      %v6974 = vsel %vm2887, %v6353, %v6354
      %v6975 = vsel %vm2895, %v6355, %v6356
      %v6976 = vsel %vm1331, %v6974, %v6975
      %v6977 = vsel %vm2313, %v6976, %v6973
      %v6979 = vrot.slane %v6977, 4
      %v6980 = vsel %vm6524, %v4099, %v6357
      %v6981 = vsel %vm6528, %v6358, %v6359
      %v6982 = vsel %vm6532, %v6980, %v6981
      %v6983 = vsel %vm2887, %v6360, %v6361
      %v6984 = vsel %vm2895, %v6362, %v6363
      %v6985 = vsel %vm1331, %v6983, %v6984
      %v6986 = vsel %vm2313, %v6985, %v6982
      %v6988 = vrot.slane %v6986, 4
      %v6989 = vsel %vm6524, %v5841, %v6364
      %v6990 = vsel %vm6528, %v6365, %v6366
      %v6991 = vsel %vm6532, %v6989, %v6990
      %v6992 = vsel %vm2887, %v6367, %v6368
      %v6993 = vsel %vm2895, %v6369, %v6370
      %v6994 = vsel %vm1331, %v6992, %v6993
      %v6995 = vsel %vm2313, %v6994, %v6991
      %v6997 = vrot.slane %v6995, 4
      %v6998 = vrot.slane %v5894, 4
      %v7000 = vsel %vm2887, %v3227, %v6371
      %v7003 = vsel %vm2895, %v6372, %v6373
      %v7004 = vsel %vm1331, %v7000, %v7003
      %v7007 = vsel %vm6524, %v6374, %v6375
      %v7010 = vsel %vm6528, %v6376, %v6377
      %v7011 = vsel %vm6532, %v7007, %v7010
      %v7012 = vsel %vm2313, %v7004, %v7011
      %v7015 = vsel %vm2887, %v4105, %v6378
      %v7018 = vsel %vm2895, %v6379, %v6380
      %v7019 = vsel %vm1331, %v7015, %v7018
      %v7022 = vsel %vm6524, %v6381, %v6382
      %v7025 = vsel %vm6528, %v6383, %v6384
      %v7026 = vsel %vm6532, %v7022, %v7025
      %v7027 = vsel %vm2313, %v7019, %v7026
      %v7030 = vsel %vm2887, %v5900, %v6385
      %v7033 = vsel %vm2895, %v6386, %v6387
      %v7034 = vsel %vm1331, %v7030, %v7033
      %v7037 = vsel %vm6524, %v6388, %v6389
      %v7040 = vsel %vm6528, %v6390, %v6391
      %v7041 = vsel %vm6532, %v7037, %v7040
      %v7042 = vsel %vm2313, %v7034, %v7041
      %v7043 = vsel %vm2891, %v3227, %v6371
      %v7044 = vsel %vm2899, %v6372, %v6373
      %v7045 = vsel %vm6567, %v7043, %v7044
      %v7046 = vsel %vm6569, %v6374, %v6375
      %v7047 = vsel %vm6571, %v6377, %v6376
      %v7048 = vsel %vm6573, %v7046, %v7047
      %v7049 = vsel %vm6575, %v7045, %v7048
      %v7051 = vrot.slane %v7049, 1
      %v7052 = vsel %vm2891, %v4105, %v6378
      %v7053 = vsel %vm2899, %v6379, %v6380
      %v7054 = vsel %vm6567, %v7052, %v7053
      %v7055 = vsel %vm6569, %v6381, %v6382
      %v7056 = vsel %vm6571, %v6384, %v6383
      %v7057 = vsel %vm6573, %v7055, %v7056
      %v7058 = vsel %vm6575, %v7054, %v7057
      %v7060 = vrot.slane %v7058, 1
      %v7061 = vsel %vm2891, %v5900, %v6385
      %v7062 = vsel %vm2899, %v6386, %v6387
      %v7063 = vsel %vm6567, %v7061, %v7062
      %v7064 = vsel %vm6569, %v6388, %v6389
      %v7065 = vsel %vm6571, %v6391, %v6390
      %v7066 = vsel %vm6573, %v7064, %v7065
      %v7067 = vsel %vm6575, %v7063, %v7066
      %v7069 = vrot.slane %v7067, 1
      %v7070 = vrot.slane %v5953, 1
      %v7071 = vsel %vm2895, %v3227, %v6371
      %v7072 = vsel %vm6524, %v6372, %v6373
      %v7073 = vsel %vm1335, %v7071, %v7072
      %v7074 = vsel %vm6528, %v6374, %v6375
      %v7075 = vsel %vm2887, %v6376, %v6377
      %v7076 = vsel %vm6603, %v7075, %v7074
      %v7077 = vsel %vm6605, %v7073, %v7076
      %v7079 = vrot.slane %v7077, 2
      %v7080 = vsel %vm2895, %v4105, %v6378
      %v7081 = vsel %vm6524, %v6379, %v6380
      %v7082 = vsel %vm1335, %v7080, %v7081
      %v7083 = vsel %vm6528, %v6381, %v6382
      %v7084 = vsel %vm2887, %v6383, %v6384
      %v7085 = vsel %vm6603, %v7084, %v7083
      %v7086 = vsel %vm6605, %v7082, %v7085
      %v7088 = vrot.slane %v7086, 2
      %v7089 = vsel %vm2895, %v5900, %v6385
      %v7090 = vsel %vm6524, %v6386, %v6387
      %v7091 = vsel %vm1335, %v7089, %v7090
      %v7092 = vsel %vm6528, %v6388, %v6389
      %v7093 = vsel %vm2887, %v6390, %v6391
      %v7094 = vsel %vm6603, %v7093, %v7092
      %v7095 = vsel %vm6605, %v7091, %v7094
      %v7097 = vrot.slane %v7095, 2
      %v7098 = vrot.slane %v5953, 2
      %v7099 = vsel %vm2899, %v3227, %v6371
      %v7100 = vsel %vm6569, %v6372, %v6373
      %v7101 = vsel %vm6630, %v7099, %v7100
      %v7102 = vsel %vm6571, %v6375, %v6374
      %v7103 = vsel %vm2891, %v6376, %v6377
      %v7104 = vsel %vm6634, %v7103, %v7102
      %v7105 = vsel %vm6636, %v7101, %v7104
      %v7107 = vrot.slane %v7105, 3
      %v7108 = vsel %vm2899, %v4105, %v6378
      %v7109 = vsel %vm6569, %v6379, %v6380
      %v7110 = vsel %vm6630, %v7108, %v7109
      %v7111 = vsel %vm6571, %v6382, %v6381
      %v7112 = vsel %vm2891, %v6383, %v6384
      %v7113 = vsel %vm6634, %v7112, %v7111
      %v7114 = vsel %vm6636, %v7110, %v7113
      %v7116 = vrot.slane %v7114, 3
      %v7117 = vsel %vm2899, %v5900, %v6385
      %v7118 = vsel %vm6569, %v6386, %v6387
      %v7119 = vsel %vm6630, %v7117, %v7118
      %v7120 = vsel %vm6571, %v6389, %v6388
      %v7121 = vsel %vm2891, %v6390, %v6391
      %v7122 = vsel %vm6634, %v7121, %v7120
      %v7123 = vsel %vm6636, %v7119, %v7122
      %v7125 = vrot.slane %v7123, 3
      %v7126 = vrot.slane %v5953, 3
      %v7127 = vsel %vm6524, %v3227, %v6371
      %v7128 = vsel %vm6528, %v6372, %v6373
      %v7129 = vsel %vm6532, %v7127, %v7128
      %v7130 = vsel %vm2887, %v6374, %v6375
      %v7131 = vsel %vm2895, %v6376, %v6377
      %v7132 = vsel %vm1331, %v7130, %v7131
      %v7133 = vsel %vm2313, %v7132, %v7129
      %v7135 = vrot.slane %v7133, 4
      %v7136 = vsel %vm6524, %v4105, %v6378
      %v7137 = vsel %vm6528, %v6379, %v6380
      %v7138 = vsel %vm6532, %v7136, %v7137
      %v7139 = vsel %vm2887, %v6381, %v6382
      %v7140 = vsel %vm2895, %v6383, %v6384
      %v7141 = vsel %vm1331, %v7139, %v7140
      %v7142 = vsel %vm2313, %v7141, %v7138
      %v7144 = vrot.slane %v7142, 4
      %v7145 = vsel %vm6524, %v5900, %v6385
      %v7146 = vsel %vm6528, %v6386, %v6387
      %v7147 = vsel %vm6532, %v7145, %v7146
      %v7148 = vsel %vm2887, %v6388, %v6389
      %v7149 = vsel %vm2895, %v6390, %v6391
      %v7150 = vsel %vm1331, %v7148, %v7149
      %v7151 = vsel %vm2313, %v7150, %v7147
      %v7153 = vrot.slane %v7151, 4
      %v7154 = vrot.slane %v5953, 4
      %v7156 = vsel %vm2887, %v3236, %v6392
      %v7159 = vsel %vm2895, %v6393, %v6394
      %v7160 = vsel %vm1331, %v7156, %v7159
      %v7163 = vsel %vm6524, %v6395, %v6396
      %v7166 = vsel %vm6528, %v6397, %v6398
      %v7167 = vsel %vm6532, %v7163, %v7166
      %v7168 = vsel %vm2313, %v7160, %v7167
      %v7171 = vsel %vm2887, %v4111, %v6399
      %v7174 = vsel %vm2895, %v6400, %v6401
      %v7175 = vsel %vm1331, %v7171, %v7174
      %v7178 = vsel %vm6524, %v6402, %v6403
      %v7181 = vsel %vm6528, %v6404, %v6405
      %v7182 = vsel %vm6532, %v7178, %v7181
      %v7183 = vsel %vm2313, %v7175, %v7182
      %v7186 = vsel %vm2887, %v5959, %v6406
      %v7189 = vsel %vm2895, %v6407, %v6408
      %v7190 = vsel %vm1331, %v7186, %v7189
      %v7193 = vsel %vm6524, %v6409, %v6410
      %v7196 = vsel %vm6528, %v6411, %v6412
      %v7197 = vsel %vm6532, %v7193, %v7196
      %v7198 = vsel %vm2313, %v7190, %v7197
      %v7199 = vsel %vm2891, %v3236, %v6392
      %v7200 = vsel %vm2899, %v6393, %v6394
      %v7201 = vsel %vm6567, %v7199, %v7200
      %v7202 = vsel %vm6569, %v6395, %v6396
      %v7203 = vsel %vm6571, %v6398, %v6397
      %v7204 = vsel %vm6573, %v7202, %v7203
      %v7205 = vsel %vm6575, %v7201, %v7204
      %v7207 = vrot.slane %v7205, 1
      %v7208 = vsel %vm2891, %v4111, %v6399
      %v7209 = vsel %vm2899, %v6400, %v6401
      %v7210 = vsel %vm6567, %v7208, %v7209
      %v7211 = vsel %vm6569, %v6402, %v6403
      %v7212 = vsel %vm6571, %v6405, %v6404
      %v7213 = vsel %vm6573, %v7211, %v7212
      %v7214 = vsel %vm6575, %v7210, %v7213
      %v7216 = vrot.slane %v7214, 1
      %v7217 = vsel %vm2891, %v5959, %v6406
      %v7218 = vsel %vm2899, %v6407, %v6408
      %v7219 = vsel %vm6567, %v7217, %v7218
      %v7220 = vsel %vm6569, %v6409, %v6410
      %v7221 = vsel %vm6571, %v6412, %v6411
      %v7222 = vsel %vm6573, %v7220, %v7221
      %v7223 = vsel %vm6575, %v7219, %v7222
      %v7225 = vrot.slane %v7223, 1
      %v7226 = vrot.slane %v6012, 1
      %v7227 = vsel %vm2895, %v3236, %v6392
      %v7228 = vsel %vm6524, %v6393, %v6394
      %v7229 = vsel %vm1335, %v7227, %v7228
      %v7230 = vsel %vm6528, %v6395, %v6396
      %v7231 = vsel %vm2887, %v6397, %v6398
      %v7232 = vsel %vm6603, %v7231, %v7230
      %v7233 = vsel %vm6605, %v7229, %v7232
      %v7235 = vrot.slane %v7233, 2
      %v7236 = vsel %vm2895, %v4111, %v6399
      %v7237 = vsel %vm6524, %v6400, %v6401
      %v7238 = vsel %vm1335, %v7236, %v7237
      %v7239 = vsel %vm6528, %v6402, %v6403
      %v7240 = vsel %vm2887, %v6404, %v6405
      %v7241 = vsel %vm6603, %v7240, %v7239
      %v7242 = vsel %vm6605, %v7238, %v7241
      %v7244 = vrot.slane %v7242, 2
      %v7245 = vsel %vm2895, %v5959, %v6406
      %v7246 = vsel %vm6524, %v6407, %v6408
      %v7247 = vsel %vm1335, %v7245, %v7246
      %v7248 = vsel %vm6528, %v6409, %v6410
      %v7249 = vsel %vm2887, %v6411, %v6412
      %v7250 = vsel %vm6603, %v7249, %v7248
      %v7251 = vsel %vm6605, %v7247, %v7250
      %v7253 = vrot.slane %v7251, 2
      %v7254 = vrot.slane %v6012, 2
      %v7255 = vsel %vm2899, %v3236, %v6392
      %v7256 = vsel %vm6569, %v6393, %v6394
      %v7257 = vsel %vm6630, %v7255, %v7256
      %v7258 = vsel %vm6571, %v6396, %v6395
      %v7259 = vsel %vm2891, %v6397, %v6398
      %v7260 = vsel %vm6634, %v7259, %v7258
      %v7261 = vsel %vm6636, %v7257, %v7260
      %v7263 = vrot.slane %v7261, 3
      %v7264 = vsel %vm2899, %v4111, %v6399
      %v7265 = vsel %vm6569, %v6400, %v6401
      %v7266 = vsel %vm6630, %v7264, %v7265
      %v7267 = vsel %vm6571, %v6403, %v6402
      %v7268 = vsel %vm2891, %v6404, %v6405
      %v7269 = vsel %vm6634, %v7268, %v7267
      %v7270 = vsel %vm6636, %v7266, %v7269
      %v7272 = vrot.slane %v7270, 3
      %v7273 = vsel %vm2899, %v5959, %v6406
      %v7274 = vsel %vm6569, %v6407, %v6408
      %v7275 = vsel %vm6630, %v7273, %v7274
      %v7276 = vsel %vm6571, %v6410, %v6409
      %v7277 = vsel %vm2891, %v6411, %v6412
      %v7278 = vsel %vm6634, %v7277, %v7276
      %v7279 = vsel %vm6636, %v7275, %v7278
      %v7281 = vrot.slane %v7279, 3
      %v7282 = vrot.slane %v6012, 3
      %v7283 = vsel %vm6524, %v3236, %v6392
      %v7284 = vsel %vm6528, %v6393, %v6394
      %v7285 = vsel %vm6532, %v7283, %v7284
      %v7286 = vsel %vm2887, %v6395, %v6396
      %v7287 = vsel %vm2895, %v6397, %v6398
      %v7288 = vsel %vm1331, %v7286, %v7287
      %v7289 = vsel %vm2313, %v7288, %v7285
      %v7291 = vrot.slane %v7289, 4
      %v7292 = vsel %vm6524, %v4111, %v6399
      %v7293 = vsel %vm6528, %v6400, %v6401
      %v7294 = vsel %vm6532, %v7292, %v7293
      %v7295 = vsel %vm2887, %v6402, %v6403
      %v7296 = vsel %vm2895, %v6404, %v6405
      %v7297 = vsel %vm1331, %v7295, %v7296
      %v7298 = vsel %vm2313, %v7297, %v7294
      %v7300 = vrot.slane %v7298, 4
      %v7301 = vsel %vm6524, %v5959, %v6406
      %v7302 = vsel %vm6528, %v6407, %v6408
      %v7303 = vsel %vm6532, %v7301, %v7302
      %v7304 = vsel %vm2887, %v6409, %v6410
      %v7305 = vsel %vm2895, %v6411, %v6412
      %v7306 = vsel %vm1331, %v7304, %v7305
      %v7307 = vsel %vm2313, %v7306, %v7303
      %v7309 = vrot.slane %v7307, 4
      %v7310 = vrot.slane %v6012, 4
      %v7312 = vsel %vm2887, %v3246, %v6413
      %v7315 = vsel %vm2895, %v6414, %v6415
      %v7316 = vsel %vm1331, %v7312, %v7315
      %v7319 = vsel %vm6524, %v6416, %v6417
      %v7322 = vsel %vm6528, %v6418, %v6419
      %v7323 = vsel %vm6532, %v7319, %v7322
      %v7324 = vsel %vm2313, %v7316, %v7323
      %v7327 = vsel %vm2887, %v4117, %v6420
      %v7330 = vsel %vm2895, %v6421, %v6422
      %v7331 = vsel %vm1331, %v7327, %v7330
      %v7334 = vsel %vm6524, %v6423, %v6424
      %v7337 = vsel %vm6528, %v6425, %v6426
      %v7338 = vsel %vm6532, %v7334, %v7337
      %v7339 = vsel %vm2313, %v7331, %v7338
      %v7342 = vsel %vm2887, %v6018, %v6427
      %v7345 = vsel %vm2895, %v6428, %v6429
      %v7346 = vsel %vm1331, %v7342, %v7345
      %v7349 = vsel %vm6524, %v6430, %v6431
      %v7352 = vsel %vm6528, %v6432, %v6433
      %v7353 = vsel %vm6532, %v7349, %v7352
      %v7354 = vsel %vm2313, %v7346, %v7353
      %v7355 = vsel %vm2891, %v3246, %v6413
      %v7356 = vsel %vm2899, %v6414, %v6415
      %v7357 = vsel %vm6567, %v7355, %v7356
      %v7358 = vsel %vm6569, %v6416, %v6417
      %v7359 = vsel %vm6571, %v6419, %v6418
      %v7360 = vsel %vm6573, %v7358, %v7359
      %v7361 = vsel %vm6575, %v7357, %v7360
      %v7363 = vrot.slane %v7361, 1
      %v7364 = vsel %vm2891, %v4117, %v6420
      %v7365 = vsel %vm2899, %v6421, %v6422
      %v7366 = vsel %vm6567, %v7364, %v7365
      %v7367 = vsel %vm6569, %v6423, %v6424
      %v7368 = vsel %vm6571, %v6426, %v6425
      %v7369 = vsel %vm6573, %v7367, %v7368
      %v7370 = vsel %vm6575, %v7366, %v7369
      %v7372 = vrot.slane %v7370, 1
      %v7373 = vsel %vm2891, %v6018, %v6427
      %v7374 = vsel %vm2899, %v6428, %v6429
      %v7375 = vsel %vm6567, %v7373, %v7374
      %v7376 = vsel %vm6569, %v6430, %v6431
      %v7377 = vsel %vm6571, %v6433, %v6432
      %v7378 = vsel %vm6573, %v7376, %v7377
      %v7379 = vsel %vm6575, %v7375, %v7378
      %v7381 = vrot.slane %v7379, 1
      %v7382 = vrot.slane %v6071, 1
      %v7383 = vsel %vm2895, %v3246, %v6413
      %v7384 = vsel %vm6524, %v6414, %v6415
      %v7385 = vsel %vm1335, %v7383, %v7384
      %v7386 = vsel %vm6528, %v6416, %v6417
      %v7387 = vsel %vm2887, %v6418, %v6419
      %v7388 = vsel %vm6603, %v7387, %v7386
      %v7389 = vsel %vm6605, %v7385, %v7388
      %v7391 = vrot.slane %v7389, 2
      %v7392 = vsel %vm2895, %v4117, %v6420
      %v7393 = vsel %vm6524, %v6421, %v6422
      %v7394 = vsel %vm1335, %v7392, %v7393
      %v7395 = vsel %vm6528, %v6423, %v6424
      %v7396 = vsel %vm2887, %v6425, %v6426
      %v7397 = vsel %vm6603, %v7396, %v7395
      %v7398 = vsel %vm6605, %v7394, %v7397
      %v7400 = vrot.slane %v7398, 2
      %v7401 = vsel %vm2895, %v6018, %v6427
      %v7402 = vsel %vm6524, %v6428, %v6429
      %v7403 = vsel %vm1335, %v7401, %v7402
      %v7404 = vsel %vm6528, %v6430, %v6431
      %v7405 = vsel %vm2887, %v6432, %v6433
      %v7406 = vsel %vm6603, %v7405, %v7404
      %v7407 = vsel %vm6605, %v7403, %v7406
      %v7409 = vrot.slane %v7407, 2
      %v7410 = vrot.slane %v6071, 2
      %v7411 = vsel %vm2899, %v3246, %v6413
      %v7412 = vsel %vm6569, %v6414, %v6415
      %v7413 = vsel %vm6630, %v7411, %v7412
      %v7414 = vsel %vm6571, %v6417, %v6416
      %v7415 = vsel %vm2891, %v6418, %v6419
      %v7416 = vsel %vm6634, %v7415, %v7414
      %v7417 = vsel %vm6636, %v7413, %v7416
      %v7419 = vrot.slane %v7417, 3
      %v7420 = vsel %vm2899, %v4117, %v6420
      %v7421 = vsel %vm6569, %v6421, %v6422
      %v7422 = vsel %vm6630, %v7420, %v7421
      %v7423 = vsel %vm6571, %v6424, %v6423
      %v7424 = vsel %vm2891, %v6425, %v6426
      %v7425 = vsel %vm6634, %v7424, %v7423
      %v7426 = vsel %vm6636, %v7422, %v7425
      %v7428 = vrot.slane %v7426, 3
      %v7429 = vsel %vm2899, %v6018, %v6427
      %v7430 = vsel %vm6569, %v6428, %v6429
      %v7431 = vsel %vm6630, %v7429, %v7430
      %v7432 = vsel %vm6571, %v6431, %v6430
      %v7433 = vsel %vm2891, %v6432, %v6433
      %v7434 = vsel %vm6634, %v7433, %v7432
      %v7435 = vsel %vm6636, %v7431, %v7434
      %v7437 = vrot.slane %v7435, 3
      %v7438 = vrot.slane %v6071, 3
      %v7439 = vsel %vm6524, %v3246, %v6413
      %v7440 = vsel %vm6528, %v6414, %v6415
      %v7441 = vsel %vm6532, %v7439, %v7440
      %v7442 = vsel %vm2887, %v6416, %v6417
      %v7443 = vsel %vm2895, %v6418, %v6419
      %v7444 = vsel %vm1331, %v7442, %v7443
      %v7445 = vsel %vm2313, %v7444, %v7441
      %v7447 = vrot.slane %v7445, 4
      %v7448 = vsel %vm6524, %v4117, %v6420
      %v7449 = vsel %vm6528, %v6421, %v6422
      %v7450 = vsel %vm6532, %v7448, %v7449
      %v7451 = vsel %vm2887, %v6423, %v6424
      %v7452 = vsel %vm2895, %v6425, %v6426
      %v7453 = vsel %vm1331, %v7451, %v7452
      %v7454 = vsel %vm2313, %v7453, %v7450
      %v7456 = vrot.slane %v7454, 4
      %v7457 = vsel %vm6524, %v6018, %v6427
      %v7458 = vsel %vm6528, %v6428, %v6429
      %v7459 = vsel %vm6532, %v7457, %v7458
      %v7460 = vsel %vm2887, %v6430, %v6431
      %v7461 = vsel %vm2895, %v6432, %v6433
      %v7462 = vsel %vm1331, %v7460, %v7461
      %v7463 = vsel %vm2313, %v7462, %v7459
      %v7465 = vrot.slane %v7463, 4
      %v7466 = vrot.slane %v6071, 4
      %v7468 = vsel %vm2887, %v3256, %v6434
      %v7471 = vsel %vm2895, %v6435, %v6436
      %v7472 = vsel %vm1331, %v7468, %v7471
      %v7475 = vsel %vm6524, %v6437, %v6438
      %v7478 = vsel %vm6528, %v6439, %v6440
      %v7479 = vsel %vm6532, %v7475, %v7478
      %v7480 = vsel %vm2313, %v7472, %v7479
      %v7483 = vsel %vm2887, %v4123, %v6441
      %v7486 = vsel %vm2895, %v6442, %v6443
      %v7487 = vsel %vm1331, %v7483, %v7486
      %v7490 = vsel %vm6524, %v6444, %v6445
      %v7493 = vsel %vm6528, %v6446, %v6447
      %v7494 = vsel %vm6532, %v7490, %v7493
      %v7495 = vsel %vm2313, %v7487, %v7494
      %v7498 = vsel %vm2887, %v6077, %v6448
      %v7501 = vsel %vm2895, %v6449, %v6450
      %v7502 = vsel %vm1331, %v7498, %v7501
      %v7505 = vsel %vm6524, %v6451, %v6452
      %v7508 = vsel %vm6528, %v6453, %v6454
      %v7509 = vsel %vm6532, %v7505, %v7508
      %v7510 = vsel %vm2313, %v7502, %v7509
      %v7511 = vsel %vm2891, %v3256, %v6434
      %v7512 = vsel %vm2899, %v6435, %v6436
      %v7513 = vsel %vm6567, %v7511, %v7512
      %v7514 = vsel %vm6569, %v6437, %v6438
      %v7515 = vsel %vm6571, %v6440, %v6439
      %v7516 = vsel %vm6573, %v7514, %v7515
      %v7517 = vsel %vm6575, %v7513, %v7516
      %v7519 = vrot.slane %v7517, 1
      %v7520 = vsel %vm2891, %v4123, %v6441
      %v7521 = vsel %vm2899, %v6442, %v6443
      %v7522 = vsel %vm6567, %v7520, %v7521
      %v7523 = vsel %vm6569, %v6444, %v6445
      %v7524 = vsel %vm6571, %v6447, %v6446
      %v7525 = vsel %vm6573, %v7523, %v7524
      %v7526 = vsel %vm6575, %v7522, %v7525
      %v7528 = vrot.slane %v7526, 1
      %v7529 = vsel %vm2891, %v6077, %v6448
      %v7530 = vsel %vm2899, %v6449, %v6450
      %v7531 = vsel %vm6567, %v7529, %v7530
      %v7532 = vsel %vm6569, %v6451, %v6452
      %v7533 = vsel %vm6571, %v6454, %v6453
      %v7534 = vsel %vm6573, %v7532, %v7533
      %v7535 = vsel %vm6575, %v7531, %v7534
      %v7537 = vrot.slane %v7535, 1
      %v7538 = vrot.slane %v6130, 1
      %v7539 = vsel %vm2895, %v3256, %v6434
      %v7540 = vsel %vm6524, %v6435, %v6436
      %v7541 = vsel %vm1335, %v7539, %v7540
      %v7542 = vsel %vm6528, %v6437, %v6438
      %v7543 = vsel %vm2887, %v6439, %v6440
      %v7544 = vsel %vm6603, %v7543, %v7542
      %v7545 = vsel %vm6605, %v7541, %v7544
      %v7547 = vrot.slane %v7545, 2
      %v7548 = vsel %vm2895, %v4123, %v6441
      %v7549 = vsel %vm6524, %v6442, %v6443
      %v7550 = vsel %vm1335, %v7548, %v7549
      %v7551 = vsel %vm6528, %v6444, %v6445
      %v7552 = vsel %vm2887, %v6446, %v6447
      %v7553 = vsel %vm6603, %v7552, %v7551
      %v7554 = vsel %vm6605, %v7550, %v7553
      %v7556 = vrot.slane %v7554, 2
      %v7557 = vsel %vm2895, %v6077, %v6448
      %v7558 = vsel %vm6524, %v6449, %v6450
      %v7559 = vsel %vm1335, %v7557, %v7558
      %v7560 = vsel %vm6528, %v6451, %v6452
      %v7561 = vsel %vm2887, %v6453, %v6454
      %v7562 = vsel %vm6603, %v7561, %v7560
      %v7563 = vsel %vm6605, %v7559, %v7562
      %v7565 = vrot.slane %v7563, 2
      %v7566 = vrot.slane %v6130, 2
      %v7567 = vsel %vm2899, %v3256, %v6434
      %v7568 = vsel %vm6569, %v6435, %v6436
      %v7569 = vsel %vm6630, %v7567, %v7568
      %v7570 = vsel %vm6571, %v6438, %v6437
      %v7571 = vsel %vm2891, %v6439, %v6440
      %v7572 = vsel %vm6634, %v7571, %v7570
      %v7573 = vsel %vm6636, %v7569, %v7572
      %v7575 = vrot.slane %v7573, 3
      %v7576 = vsel %vm2899, %v4123, %v6441
      %v7577 = vsel %vm6569, %v6442, %v6443
      %v7578 = vsel %vm6630, %v7576, %v7577
      %v7579 = vsel %vm6571, %v6445, %v6444
      %v7580 = vsel %vm2891, %v6446, %v6447
      %v7581 = vsel %vm6634, %v7580, %v7579
      %v7582 = vsel %vm6636, %v7578, %v7581
      %v7584 = vrot.slane %v7582, 3
      %v7585 = vsel %vm2899, %v6077, %v6448
      %v7586 = vsel %vm6569, %v6449, %v6450
      %v7587 = vsel %vm6630, %v7585, %v7586
      %v7588 = vsel %vm6571, %v6452, %v6451
      %v7589 = vsel %vm2891, %v6453, %v6454
      %v7590 = vsel %vm6634, %v7589, %v7588
      %v7591 = vsel %vm6636, %v7587, %v7590
      %v7593 = vrot.slane %v7591, 3
      %v7594 = vrot.slane %v6130, 3
      %v7595 = vsel %vm6524, %v3256, %v6434
      %v7596 = vsel %vm6528, %v6435, %v6436
      %v7597 = vsel %vm6532, %v7595, %v7596
      %v7598 = vsel %vm2887, %v6437, %v6438
      %v7599 = vsel %vm2895, %v6439, %v6440
      %v7600 = vsel %vm1331, %v7598, %v7599
      %v7601 = vsel %vm2313, %v7600, %v7597
      %v7603 = vrot.slane %v7601, 4
      %v7604 = vsel %vm6524, %v4123, %v6441
      %v7605 = vsel %vm6528, %v6442, %v6443
      %v7606 = vsel %vm6532, %v7604, %v7605
      %v7607 = vsel %vm2887, %v6444, %v6445
      %v7608 = vsel %vm2895, %v6446, %v6447
      %v7609 = vsel %vm1331, %v7607, %v7608
      %v7610 = vsel %vm2313, %v7609, %v7606
      %v7612 = vrot.slane %v7610, 4
      %v7613 = vsel %vm6524, %v6077, %v6448
      %v7614 = vsel %vm6528, %v6449, %v6450
      %v7615 = vsel %vm6532, %v7613, %v7614
      %v7616 = vsel %vm2887, %v6451, %v6452
      %v7617 = vsel %vm2895, %v6453, %v6454
      %v7618 = vsel %vm1331, %v7616, %v7617
      %v7619 = vsel %vm2313, %v7618, %v7615
      %v7621 = vrot.slane %v7619, 4
      %v7622 = vrot.slane %v6130, 4
      %v7624 = vsel %vm2887, %v3266, %v6455
      %v7627 = vsel %vm2895, %v6456, %v6457
      %v7628 = vsel %vm1331, %v7624, %v7627
      %v7631 = vsel %vm6524, %v6458, %v6459
      %v7634 = vsel %vm6528, %v6460, %v6461
      %v7635 = vsel %vm6532, %v7631, %v7634
      %v7636 = vsel %vm2313, %v7628, %v7635
      %v7639 = vsel %vm2887, %v4129, %v6462
      %v7642 = vsel %vm2895, %v6463, %v6464
      %v7643 = vsel %vm1331, %v7639, %v7642
      %v7646 = vsel %vm6524, %v6465, %v6466
      %v7649 = vsel %vm6528, %v6467, %v6468
      %v7650 = vsel %vm6532, %v7646, %v7649
      %v7651 = vsel %vm2313, %v7643, %v7650
      %v7654 = vsel %vm2887, %v6136, %v6469
      %v7657 = vsel %vm2895, %v6470, %v6471
      %v7658 = vsel %vm1331, %v7654, %v7657
      %v7661 = vsel %vm6524, %v6472, %v6473
      %v7664 = vsel %vm6528, %v6474, %v6475
      %v7665 = vsel %vm6532, %v7661, %v7664
      %v7666 = vsel %vm2313, %v7658, %v7665
      %v7667 = vsel %vm2891, %v3266, %v6455
      %v7668 = vsel %vm2899, %v6456, %v6457
      %v7669 = vsel %vm6567, %v7667, %v7668
      %v7670 = vsel %vm6569, %v6458, %v6459
      %v7671 = vsel %vm6571, %v6461, %v6460
      %v7672 = vsel %vm6573, %v7670, %v7671
      %v7673 = vsel %vm6575, %v7669, %v7672
      %v7675 = vrot.slane %v7673, 1
      %v7676 = vsel %vm2891, %v4129, %v6462
      %v7677 = vsel %vm2899, %v6463, %v6464
      %v7678 = vsel %vm6567, %v7676, %v7677
      %v7679 = vsel %vm6569, %v6465, %v6466
      %v7680 = vsel %vm6571, %v6468, %v6467
      %v7681 = vsel %vm6573, %v7679, %v7680
      %v7682 = vsel %vm6575, %v7678, %v7681
      %v7684 = vrot.slane %v7682, 1
      %v7685 = vsel %vm2891, %v6136, %v6469
      %v7686 = vsel %vm2899, %v6470, %v6471
      %v7687 = vsel %vm6567, %v7685, %v7686
      %v7688 = vsel %vm6569, %v6472, %v6473
      %v7689 = vsel %vm6571, %v6475, %v6474
      %v7690 = vsel %vm6573, %v7688, %v7689
      %v7691 = vsel %vm6575, %v7687, %v7690
      %v7693 = vrot.slane %v7691, 1
      %v7694 = vrot.slane %v6189, 1
      %v7695 = vsel %vm2895, %v3266, %v6455
      %v7696 = vsel %vm6524, %v6456, %v6457
      %v7697 = vsel %vm1335, %v7695, %v7696
      %v7698 = vsel %vm6528, %v6458, %v6459
      %v7699 = vsel %vm2887, %v6460, %v6461
      %v7700 = vsel %vm6603, %v7699, %v7698
      %v7701 = vsel %vm6605, %v7697, %v7700
      %v7703 = vrot.slane %v7701, 2
      %v7704 = vsel %vm2895, %v4129, %v6462
      %v7705 = vsel %vm6524, %v6463, %v6464
      %v7706 = vsel %vm1335, %v7704, %v7705
      %v7707 = vsel %vm6528, %v6465, %v6466
      %v7708 = vsel %vm2887, %v6467, %v6468
      %v7709 = vsel %vm6603, %v7708, %v7707
      %v7710 = vsel %vm6605, %v7706, %v7709
      %v7712 = vrot.slane %v7710, 2
      %v7713 = vsel %vm2895, %v6136, %v6469
      %v7714 = vsel %vm6524, %v6470, %v6471
      %v7715 = vsel %vm1335, %v7713, %v7714
      %v7716 = vsel %vm6528, %v6472, %v6473
      %v7717 = vsel %vm2887, %v6474, %v6475
      %v7718 = vsel %vm6603, %v7717, %v7716
      %v7719 = vsel %vm6605, %v7715, %v7718
      %v7721 = vrot.slane %v7719, 2
      %v7722 = vrot.slane %v6189, 2
      %v7723 = vsel %vm2899, %v3266, %v6455
      %v7724 = vsel %vm6569, %v6456, %v6457
      %v7725 = vsel %vm6630, %v7723, %v7724
      %v7726 = vsel %vm6571, %v6459, %v6458
      %v7727 = vsel %vm2891, %v6460, %v6461
      %v7728 = vsel %vm6634, %v7727, %v7726
      %v7729 = vsel %vm6636, %v7725, %v7728
      %v7731 = vrot.slane %v7729, 3
      %v7732 = vsel %vm2899, %v4129, %v6462
      %v7733 = vsel %vm6569, %v6463, %v6464
      %v7734 = vsel %vm6630, %v7732, %v7733
      %v7735 = vsel %vm6571, %v6466, %v6465
      %v7736 = vsel %vm2891, %v6467, %v6468
      %v7737 = vsel %vm6634, %v7736, %v7735
      %v7738 = vsel %vm6636, %v7734, %v7737
      %v7740 = vrot.slane %v7738, 3
      %v7741 = vsel %vm2899, %v6136, %v6469
      %v7742 = vsel %vm6569, %v6470, %v6471
      %v7743 = vsel %vm6630, %v7741, %v7742
      %v7744 = vsel %vm6571, %v6473, %v6472
      %v7745 = vsel %vm2891, %v6474, %v6475
      %v7746 = vsel %vm6634, %v7745, %v7744
      %v7747 = vsel %vm6636, %v7743, %v7746
      %v7749 = vrot.slane %v7747, 3
      %v7750 = vrot.slane %v6189, 3
      %v7751 = vsel %vm6524, %v3266, %v6455
      %v7752 = vsel %vm6528, %v6456, %v6457
      %v7753 = vsel %vm6532, %v7751, %v7752
      %v7754 = vsel %vm2887, %v6458, %v6459
      %v7755 = vsel %vm2895, %v6460, %v6461
      %v7756 = vsel %vm1331, %v7754, %v7755
      %v7757 = vsel %vm2313, %v7756, %v7753
      %v7759 = vrot.slane %v7757, 4
      %v7760 = vsel %vm6524, %v4129, %v6462
      %v7761 = vsel %vm6528, %v6463, %v6464
      %v7762 = vsel %vm6532, %v7760, %v7761
      %v7763 = vsel %vm2887, %v6465, %v6466
      %v7764 = vsel %vm2895, %v6467, %v6468
      %v7765 = vsel %vm1331, %v7763, %v7764
      %v7766 = vsel %vm2313, %v7765, %v7762
      %v7768 = vrot.slane %v7766, 4
      %v7769 = vsel %vm6524, %v6136, %v6469
      %v7770 = vsel %vm6528, %v6470, %v6471
      %v7771 = vsel %vm6532, %v7769, %v7770
      %v7772 = vsel %vm2887, %v6472, %v6473
      %v7773 = vsel %vm2895, %v6474, %v6475
      %v7774 = vsel %vm1331, %v7772, %v7773
      %v7775 = vsel %vm2313, %v7774, %v7771
      %v7777 = vrot.slane %v7775, 4
      %v7778 = vrot.slane %v6189, 4
      %v7780 = vsel %vm2887, %v3275, %v6476
      %v7783 = vsel %vm2895, %v6477, %v6478
      %v7784 = vsel %vm1331, %v7780, %v7783
      %v7787 = vsel %vm6524, %v6479, %v6480
      %v7790 = vsel %vm6528, %v6481, %v6482
      %v7791 = vsel %vm6532, %v7787, %v7790
      %v7792 = vsel %vm2313, %v7784, %v7791
      %v7795 = vsel %vm2887, %v4135, %v6483
      %v7798 = vsel %vm2895, %v6484, %v6485
      %v7799 = vsel %vm1331, %v7795, %v7798
      %v7802 = vsel %vm6524, %v6486, %v6487
      %v7805 = vsel %vm6528, %v6488, %v6489
      %v7806 = vsel %vm6532, %v7802, %v7805
      %v7807 = vsel %vm2313, %v7799, %v7806
      %v7810 = vsel %vm2887, %v6195, %v6490
      %v7813 = vsel %vm2895, %v6491, %v6492
      %v7814 = vsel %vm1331, %v7810, %v7813
      %v7817 = vsel %vm6524, %v6493, %v6494
      %v7820 = vsel %vm6528, %v6495, %v6496
      %v7821 = vsel %vm6532, %v7817, %v7820
      %v7822 = vsel %vm2313, %v7814, %v7821
      %v7823 = vsel %vm2891, %v3275, %v6476
      %v7824 = vsel %vm2899, %v6477, %v6478
      %v7825 = vsel %vm6567, %v7823, %v7824
      %v7826 = vsel %vm6569, %v6479, %v6480
      %v7827 = vsel %vm6571, %v6482, %v6481
      %v7828 = vsel %vm6573, %v7826, %v7827
      %v7829 = vsel %vm6575, %v7825, %v7828
      %v7831 = vrot.slane %v7829, 1
      %v7832 = vsel %vm2891, %v4135, %v6483
      %v7833 = vsel %vm2899, %v6484, %v6485
      %v7834 = vsel %vm6567, %v7832, %v7833
      %v7835 = vsel %vm6569, %v6486, %v6487
      %v7836 = vsel %vm6571, %v6489, %v6488
      %v7837 = vsel %vm6573, %v7835, %v7836
      %v7838 = vsel %vm6575, %v7834, %v7837
      %v7840 = vrot.slane %v7838, 1
      %v7841 = vsel %vm2891, %v6195, %v6490
      %v7842 = vsel %vm2899, %v6491, %v6492
      %v7843 = vsel %vm6567, %v7841, %v7842
      %v7844 = vsel %vm6569, %v6493, %v6494
      %v7845 = vsel %vm6571, %v6496, %v6495
      %v7846 = vsel %vm6573, %v7844, %v7845
      %v7847 = vsel %vm6575, %v7843, %v7846
      %v7849 = vrot.slane %v7847, 1
      %v7850 = vrot.slane %v6248, 1
      %v7851 = vsel %vm2895, %v3275, %v6476
      %v7852 = vsel %vm6524, %v6477, %v6478
      %v7853 = vsel %vm1335, %v7851, %v7852
      %v7854 = vsel %vm6528, %v6479, %v6480
      %v7855 = vsel %vm2887, %v6481, %v6482
      %v7856 = vsel %vm6603, %v7855, %v7854
      %v7857 = vsel %vm6605, %v7853, %v7856
      %v7859 = vrot.slane %v7857, 2
      %v7860 = vsel %vm2895, %v4135, %v6483
      %v7861 = vsel %vm6524, %v6484, %v6485
      %v7862 = vsel %vm1335, %v7860, %v7861
      %v7863 = vsel %vm6528, %v6486, %v6487
      %v7864 = vsel %vm2887, %v6488, %v6489
      %v7865 = vsel %vm6603, %v7864, %v7863
      %v7866 = vsel %vm6605, %v7862, %v7865
      %v7868 = vrot.slane %v7866, 2
      %v7869 = vsel %vm2895, %v6195, %v6490
      %v7870 = vsel %vm6524, %v6491, %v6492
      %v7871 = vsel %vm1335, %v7869, %v7870
      %v7872 = vsel %vm6528, %v6493, %v6494
      %v7873 = vsel %vm2887, %v6495, %v6496
      %v7874 = vsel %vm6603, %v7873, %v7872
      %v7875 = vsel %vm6605, %v7871, %v7874
      %v7877 = vrot.slane %v7875, 2
      %v7878 = vrot.slane %v6248, 2
      %v7879 = vsel %vm2899, %v3275, %v6476
      %v7880 = vsel %vm6569, %v6477, %v6478
      %v7881 = vsel %vm6630, %v7879, %v7880
      %v7882 = vsel %vm6571, %v6480, %v6479
      %v7883 = vsel %vm2891, %v6481, %v6482
      %v7884 = vsel %vm6634, %v7883, %v7882
      %v7885 = vsel %vm6636, %v7881, %v7884
      %v7887 = vrot.slane %v7885, 3
      %v7888 = vsel %vm2899, %v4135, %v6483
      %v7889 = vsel %vm6569, %v6484, %v6485
      %v7890 = vsel %vm6630, %v7888, %v7889
      %v7891 = vsel %vm6571, %v6487, %v6486
      %v7892 = vsel %vm2891, %v6488, %v6489
      %v7893 = vsel %vm6634, %v7892, %v7891
      %v7894 = vsel %vm6636, %v7890, %v7893
      %v7896 = vrot.slane %v7894, 3
      %v7897 = vsel %vm2899, %v6195, %v6490
      %v7898 = vsel %vm6569, %v6491, %v6492
      %v7899 = vsel %vm6630, %v7897, %v7898
      %v7900 = vsel %vm6571, %v6494, %v6493
      %v7901 = vsel %vm2891, %v6495, %v6496
      %v7902 = vsel %vm6634, %v7901, %v7900
      %v7903 = vsel %vm6636, %v7899, %v7902
      %v7905 = vrot.slane %v7903, 3
      %v7906 = vrot.slane %v6248, 3
      %v7907 = vsel %vm6524, %v3275, %v6476
      %v7908 = vsel %vm6528, %v6477, %v6478
      %v7909 = vsel %vm6532, %v7907, %v7908
      %v7910 = vsel %vm2887, %v6479, %v6480
      %v7911 = vsel %vm2895, %v6481, %v6482
      %v7912 = vsel %vm1331, %v7910, %v7911
      %v7913 = vsel %vm2313, %v7912, %v7909
      %v7915 = vrot.slane %v7913, 4
      %v7916 = vsel %vm6524, %v4135, %v6483
      %v7917 = vsel %vm6528, %v6484, %v6485
      %v7918 = vsel %vm6532, %v7916, %v7917
      %v7919 = vsel %vm2887, %v6486, %v6487
      %v7920 = vsel %vm2895, %v6488, %v6489
      %v7921 = vsel %vm1331, %v7919, %v7920
      %v7922 = vsel %vm2313, %v7921, %v7918
      %v7924 = vrot.slane %v7922, 4
      %v7925 = vsel %vm6524, %v6195, %v6490
      %v7926 = vsel %vm6528, %v6491, %v6492
      %v7927 = vsel %vm6532, %v7925, %v7926
      %v7928 = vsel %vm2887, %v6493, %v6494
      %v7929 = vsel %vm2895, %v6495, %v6496
      %v7930 = vsel %vm1331, %v7928, %v7929
      %v7931 = vsel %vm2313, %v7930, %v7927
      %v7933 = vrot.slane %v7931, 4
      %v7934 = vrot.slane %v6248, 4
      %v7936 = vsel %vm2887, %v3285, %v6497
      %v7939 = vsel %vm2895, %v6498, %v6499
      %v7940 = vsel %vm1331, %v7936, %v7939
      %v7943 = vsel %vm6524, %v6500, %v6501
      %v7946 = vsel %vm6528, %v6502, %v6503
      %v7947 = vsel %vm6532, %v7943, %v7946
      %v7948 = vsel %vm2313, %v7940, %v7947
      %v7951 = vsel %vm2887, %v4141, %v6504
      %v7954 = vsel %vm2895, %v6505, %v6506
      %v7955 = vsel %vm1331, %v7951, %v7954
      %v7958 = vsel %vm6524, %v6507, %v6508
      %v7961 = vsel %vm6528, %v6509, %v6510
      %v7962 = vsel %vm6532, %v7958, %v7961
      %v7963 = vsel %vm2313, %v7955, %v7962
      %v7966 = vsel %vm2887, %v6254, %v6511
      %v7969 = vsel %vm2895, %v6512, %v6513
      %v7970 = vsel %vm1331, %v7966, %v7969
      %v7973 = vsel %vm6524, %v6514, %v6515
      %v7976 = vsel %vm6528, %v6516, %v6517
      %v7977 = vsel %vm6532, %v7973, %v7976
      %v7978 = vsel %vm2313, %v7970, %v7977
      %v7979 = vsel %vm2891, %v3285, %v6497
      %v7980 = vsel %vm2899, %v6498, %v6499
      %v7981 = vsel %vm6567, %v7979, %v7980
      %v7982 = vsel %vm6569, %v6500, %v6501
      %v7983 = vsel %vm6571, %v6503, %v6502
      %v7984 = vsel %vm6573, %v7982, %v7983
      %v7985 = vsel %vm6575, %v7981, %v7984
      %v7987 = vrot.slane %v7985, 1
      %v7988 = vsel %vm2891, %v4141, %v6504
      %v7989 = vsel %vm2899, %v6505, %v6506
      %v7990 = vsel %vm6567, %v7988, %v7989
      %v7991 = vsel %vm6569, %v6507, %v6508
      %v7992 = vsel %vm6571, %v6510, %v6509
      %v7993 = vsel %vm6573, %v7991, %v7992
      %v7994 = vsel %vm6575, %v7990, %v7993
      %v7996 = vrot.slane %v7994, 1
      %v7997 = vsel %vm2891, %v6254, %v6511
      %v7998 = vsel %vm2899, %v6512, %v6513
      %v7999 = vsel %vm6567, %v7997, %v7998
      %v8000 = vsel %vm6569, %v6514, %v6515
      %v8001 = vsel %vm6571, %v6517, %v6516
      %v8002 = vsel %vm6573, %v8000, %v8001
      %v8003 = vsel %vm6575, %v7999, %v8002
      %v8005 = vrot.slane %v8003, 1
      %v8006 = vrot.slane %v6307, 1
      %v8007 = vsel %vm2895, %v3285, %v6497
      %v8008 = vsel %vm6524, %v6498, %v6499
      %v8009 = vsel %vm1335, %v8007, %v8008
      %v8010 = vsel %vm6528, %v6500, %v6501
      %v8011 = vsel %vm2887, %v6502, %v6503
      %v8012 = vsel %vm6603, %v8011, %v8010
      %v8013 = vsel %vm6605, %v8009, %v8012
      %v8015 = vrot.slane %v8013, 2
      %v8016 = vsel %vm2895, %v4141, %v6504
      %v8017 = vsel %vm6524, %v6505, %v6506
      %v8018 = vsel %vm1335, %v8016, %v8017
      %v8019 = vsel %vm6528, %v6507, %v6508
      %v8020 = vsel %vm2887, %v6509, %v6510
      %v8021 = vsel %vm6603, %v8020, %v8019
      %v8022 = vsel %vm6605, %v8018, %v8021
      %v8024 = vrot.slane %v8022, 2
      %v8025 = vsel %vm2895, %v6254, %v6511
      %v8026 = vsel %vm6524, %v6512, %v6513
      %v8027 = vsel %vm1335, %v8025, %v8026
      %v8028 = vsel %vm6528, %v6514, %v6515
      %v8029 = vsel %vm2887, %v6516, %v6517
      %v8030 = vsel %vm6603, %v8029, %v8028
      %v8031 = vsel %vm6605, %v8027, %v8030
      %v8033 = vrot.slane %v8031, 2
      %v8034 = vrot.slane %v6307, 2
      %v8035 = vsel %vm2899, %v3285, %v6497
      %v8036 = vsel %vm6569, %v6498, %v6499
      %v8037 = vsel %vm6630, %v8035, %v8036
      %v8038 = vsel %vm6571, %v6501, %v6500
      %v8039 = vsel %vm2891, %v6502, %v6503
      %v8040 = vsel %vm6634, %v8039, %v8038
      %v8041 = vsel %vm6636, %v8037, %v8040
      %v8043 = vrot.slane %v8041, 3
      %v8044 = vsel %vm2899, %v4141, %v6504
      %v8045 = vsel %vm6569, %v6505, %v6506
      %v8046 = vsel %vm6630, %v8044, %v8045
      %v8047 = vsel %vm6571, %v6508, %v6507
      %v8048 = vsel %vm2891, %v6509, %v6510
      %v8049 = vsel %vm6634, %v8048, %v8047
      %v8050 = vsel %vm6636, %v8046, %v8049
      %v8052 = vrot.slane %v8050, 3
      %v8053 = vsel %vm2899, %v6254, %v6511
      %v8054 = vsel %vm6569, %v6512, %v6513
      %v8055 = vsel %vm6630, %v8053, %v8054
      %v8056 = vsel %vm6571, %v6515, %v6514
      %v8057 = vsel %vm2891, %v6516, %v6517
      %v8058 = vsel %vm6634, %v8057, %v8056
      %v8059 = vsel %vm6636, %v8055, %v8058
      %v8061 = vrot.slane %v8059, 3
      %v8062 = vrot.slane %v6307, 3
      %v8063 = vsel %vm6524, %v3285, %v6497
      %v8064 = vsel %vm6528, %v6498, %v6499
      %v8065 = vsel %vm6532, %v8063, %v8064
      %v8066 = vsel %vm2887, %v6500, %v6501
      %v8067 = vsel %vm2895, %v6502, %v6503
      %v8068 = vsel %vm1331, %v8066, %v8067
      %v8069 = vsel %vm2313, %v8068, %v8065
      %v8071 = vrot.slane %v8069, 4
      %v8072 = vsel %vm6524, %v4141, %v6504
      %v8073 = vsel %vm6528, %v6505, %v6506
      %v8074 = vsel %vm6532, %v8072, %v8073
      %v8075 = vsel %vm2887, %v6507, %v6508
      %v8076 = vsel %vm2895, %v6509, %v6510
      %v8077 = vsel %vm1331, %v8075, %v8076
      %v8078 = vsel %vm2313, %v8077, %v8074
      %v8080 = vrot.slane %v8078, 4
      %v8081 = vsel %vm6524, %v6254, %v6511
      %v8082 = vsel %vm6528, %v6512, %v6513
      %v8083 = vsel %vm6532, %v8081, %v8082
      %v8084 = vsel %vm2887, %v6514, %v6515
      %v8085 = vsel %vm2895, %v6516, %v6517
      %v8086 = vsel %vm1331, %v8084, %v8085
      %v8087 = vsel %vm2313, %v8086, %v8083
      %v8089 = vrot.slane %v8087, 4
      %v8090 = vrot.slane %v6307, 4
      %v8091 = vld [vmem:[%s3] sm:$0xf]
      %v8092 = vld [vmem:[%s3 + $0x4] sm:$0xf]
      %v8093 = vld [vmem:[%s3 + $0x8] sm:$0xf]
      %v8094 = vld [vmem:[%s3 + $0xc] sm:$0xf]
      %v8095 = vld [vmem:[%s3 + $0x10] sm:$0xf]
      %v8096 = vld [vmem:[%s3 + $0x14] sm:$0xf]
      %v8097 = vld [vmem:[%s3 + $0x18] sm:$0xf]
      %v8098 = vld [vmem:[%s3 + $0x1c] sm:$0xf]
      %v8099 = vld [vmem:[%s3 + $0x20] sm:$0xf]
      %v8100 = vld [vmem:[%s3 + $0x24] sm:$0xf]
      %v8101 = vld [vmem:[%s3 + $0x28] sm:$0xf]
      %v8102 = vld [vmem:[%s3 + $0x2c] sm:$0xf]
      %v8103 = vld [vmem:[%s3 + $0x30] sm:$0xf]
      %v8104 = vld [vmem:[%s3 + $0x34] sm:$0xf]
      %v8105 = vld [vmem:[%s3 + $0x38] sm:$0xf]
      %v8106 = vld [vmem:[%s3 + $0x3c] sm:$0xf]
      %v8107 = vld [vmem:[%s3 + $0x40] sm:$0xf]
      %v8108 = vld [vmem:[%s3 + $0x44] sm:$0xf]
      %v8109 = vld [vmem:[%s3 + $0x48] sm:$0xf]
      %v8110 = vld [vmem:[%s3 + $0x4c] sm:$0xf]
      %v8111 = vld [vmem:[%s3 + $0x50] sm:$0xf]
      %v8112 = vld [vmem:[%s3 + $0x54] sm:$0xf]
      %v8113 = vld [vmem:[%s3 + $0x58] sm:$0xf]
      %v8114 = vld [vmem:[%s3 + $0x5c] sm:$0xf]
      %v8115 = vld [vmem:[%s3 + $0x60] sm:$0xf]
      %v8116 = vld [vmem:[%s3 + $0x64] sm:$0xf]
      %v8117 = vld [vmem:[%s3 + $0x68] sm:$0xf]
      %v8118 = vld [vmem:[%s3 + $0x6c] sm:$0xf]
      %v8119 = vld [vmem:[%s3 + $0x70] sm:$0xf]
      %v8120 = vld [vmem:[%s3 + $0x74] sm:$0xf]
      %v8121 = vld [vmem:[%s3 + $0x78] sm:$0xf]
      %v8122 = vld [vmem:[%s3 + $0x7c] sm:$0xf]
      %v8123 = vld [vmem:[%s3 + $0x80] sm:$0xf]
      %v8124 = vld [vmem:[%s3 + $0x84] sm:$0xf]
      %v8125 = vld [vmem:[%s3 + $0x88] sm:$0xf]
      %v8126 = vld [vmem:[%s3 + $0x8c] sm:$0xf]
      %v8127 = vld [vmem:[%s3 + $0x90] sm:$0xf]
      %v8128 = vld [vmem:[%s3 + $0x94] sm:$0xf]
      %v8129 = vld [vmem:[%s3 + $0x98] sm:$0xf]
      %v8130 = vld [vmem:[%s3 + $0x9c] sm:$0xf]
      %v8131 = vld [vmem:[%s3 + $0xa0] sm:$0xf]
      %v8132 = vld [vmem:[%s3 + $0xa4] sm:$0xf]
      %v8133 = vld [vmem:[%s3 + $0xa8] sm:$0xf]
      %v8134 = vld [vmem:[%s3 + $0xac] sm:$0xf]
      %v8135 = vld [vmem:[%s3 + $0xb0] sm:$0xf]
      %v8136 = vld [vmem:[%s3 + $0xb4] sm:$0xf]
      %v8137 = vld [vmem:[%s3 + $0xb8] sm:$0xf]
      %v8138 = vld [vmem:[%s3 + $0xbc] sm:$0xf]
      %v8139 = vld [vmem:[%s3 + $0xc0] sm:$0xf]
      %v8140 = vld [vmem:[%s3 + $0xc4] sm:$0xf]
      %v8141 = vld [vmem:[%s3 + $0xc8] sm:$0xf]
      %v8142 = vld [vmem:[%s3 + $0xcc] sm:$0xf]
      %v8143 = vld [vmem:[%s3 + $0xd0] sm:$0xf]
      %v8144 = vld [vmem:[%s3 + $0xd4] sm:$0xf]
      %v8145 = vld [vmem:[%s3 + $0xd8] sm:$0xf]
      %v8146 = vld [vmem:[%s3 + $0xdc] sm:$0xf]
      %v8147 = vld [vmem:[%s3 + $0xe0] sm:$0xf]
      %v8148 = vld [vmem:[%s3 + $0xe4] sm:$0xf]
      %v8149 = vld [vmem:[%s3 + $0xe8] sm:$0xf]
      %v8150 = vld [vmem:[%s3 + $0xec] sm:$0xf]
      %v8151 = vld [vmem:[%s3 + $0xf0] sm:$0xf]
      %v8152 = vld [vmem:[%s3 + $0xf4] sm:$0xf]
      %v8153 = vld [vmem:[%s3 + $0xf8] sm:$0xf]
      %v8154 = vld [vmem:[%s3 + $0xfc] sm:$0xf]
      %v8155 = vld [vmem:[%s3 + $0x100] sm:$0xf]
      %v8156 = vld [vmem:[%s3 + $0x104] sm:$0xf]
      %v8157 = vld [vmem:[%s3 + $0x108] sm:$0xf]
      %v8158 = vld [vmem:[%s3 + $0x10c] sm:$0xf]
      %v8159 = vld [vmem:[%s3 + $0x110] sm:$0xf]
      %v8160 = vld [vmem:[%s3 + $0x114] sm:$0xf]
      %v8161 = vld [vmem:[%s3 + $0x118] sm:$0xf]
      %v8162 = vld [vmem:[%s3 + $0x11c] sm:$0xf]
      %v8163 = vld [vmem:[%s3 + $0x120] sm:$0xf]
      %v8164 = vld [vmem:[%s3 + $0x124] sm:$0xf]
      %v8165 = vld [vmem:[%s3 + $0x128] sm:$0xf]
      %v8166 = vld [vmem:[%s3 + $0x12c] sm:$0xf]
      %v8167 = vld [vmem:[%s3 + $0x130] sm:$0xf]
      %v8168 = vld [vmem:[%s3 + $0x134] sm:$0xf]
      %v8169 = vld [vmem:[%s3 + $0x138] sm:$0xf]
      %v8170 = vld [vmem:[%s3 + $0x13c] sm:$0xf]
      %v8171 = vld [vmem:[%s3 + $0x140] sm:$0xf]
      %v8172 = vld [vmem:[%s3 + $0x144] sm:$0xf]
      %v8173 = vld [vmem:[%s3 + $0x148] sm:$0xf]
      %v8174 = vld [vmem:[%s3 + $0x14c] sm:$0xf]
      %v8175 = vld [vmem:[%s3 + $0x150] sm:$0xf]
      %v8176 = vld [vmem:[%s3 + $0x154] sm:$0xf]
      %v8177 = vld [vmem:[%s3 + $0x158] sm:$0xf]
      %v8178 = vld [vmem:[%s3 + $0x15c] sm:$0xf]
      %v8179 = vld [vmem:[%s3 + $0x160] sm:$0xf]
      %v8180 = vld [vmem:[%s3 + $0x164] sm:$0xf]
      %v8181 = vld [vmem:[%s3 + $0x168] sm:$0xf]
      %v8182 = vld [vmem:[%s3 + $0x16c] sm:$0xf]
      %v8183 = vld [vmem:[%s3 + $0x170] sm:$0xf]
      %v8184 = vld [vmem:[%s3 + $0x174] sm:$0xf]
      %v8185 = vld [vmem:[%s3 + $0x178] sm:$0xf]
      %v8186 = vld [vmem:[%s3 + $0x17c] sm:$0xf]
      %v8187 = vld [vmem:[%s3 + $0x180] sm:$0xf]
      %v8188 = vld [vmem:[%s3 + $0x184] sm:$0xf]
      %v8189 = vld [vmem:[%s3 + $0x188] sm:$0xf]
      %v8190 = vld [vmem:[%s3 + $0x18c] sm:$0xf]
      %v8191 = vld [vmem:[%s3 + $0x190] sm:$0xf]
      %v8192 = vld [vmem:[%s3 + $0x194] sm:$0xf]
      %v8193 = vld [vmem:[%s3 + $0x198] sm:$0xf]
      %v8194 = vld [vmem:[%s3 + $0x19c] sm:$0xf]
      %v8195 = vld [vmem:[%s3 + $0x1a0] sm:$0xf]
      %v8196 = vld [vmem:[%s3 + $0x1a4] sm:$0xf]
      %v8197 = vld [vmem:[%s3 + $0x1a8] sm:$0xf]
      %v8198 = vld [vmem:[%s3 + $0x1ac] sm:$0xf]
      %v8199 = vld [vmem:[%s3 + $0x1b0] sm:$0xf]
      %v8200 = vld [vmem:[%s3 + $0x1b4] sm:$0xf]
      %v8201 = vld [vmem:[%s3 + $0x1b8] sm:$0xf]
      %v8202 = vld [vmem:[%s3 + $0x1bc] sm:$0xf]
      %v8203 = vld [vmem:[%s3 + $0x1c0] sm:$0xf]
      %v8204 = vld [vmem:[%s3 + $0x1c4] sm:$0xf]
      %v8205 = vld [vmem:[%s3 + $0x1c8] sm:$0xf]
      %v8206 = vld [vmem:[%s3 + $0x1cc] sm:$0xf]
      %v8207 = vld [vmem:[%s3 + $0x1d0] sm:$0xf]
      %v8208 = vld [vmem:[%s3 + $0x1d4] sm:$0xf]
      %v8209 = vld [vmem:[%s3 + $0x1d8] sm:$0xf]
      %v8210 = vld [vmem:[%s3 + $0x1dc] sm:$0xf]
      %v8211 = vld [vmem:[%s3 + $0x1e0] sm:$0xf]
      %v8212 = vld [vmem:[%s3 + $0x1e4] sm:$0xf]
      %v8213 = vld [vmem:[%s3 + $0x1e8] sm:$0xf]
      %v8214 = vld [vmem:[%s3 + $0x1ec] sm:$0xf]
      %v8215 = vld [vmem:[%s3 + $0x1f0] sm:$0xf]
      %v8216 = vld [vmem:[%s3 + $0x1f4] sm:$0xf]
      %v8217 = vld [vmem:[%s3 + $0x1f8] sm:$0xf]
      %v8218 = vld [vmem:[%s3 + $0x1fc] sm:$0xf]
      %v8219 = vld [vmem:[%s3 + $0x200] sm:$0xf]
      %v8220 = vld [vmem:[%s3 + $0x204] sm:$0xf]
      %v8221 = vld [vmem:[%s3 + $0x208] sm:$0xf]
      %v8222 = vld [vmem:[%s3 + $0x20c] sm:$0xf]
      %v8223 = vld [vmem:[%s3 + $0x210] sm:$0xf]
      %v8224 = vld [vmem:[%s3 + $0x214] sm:$0xf]
      %v8225 = vld [vmem:[%s3 + $0x218] sm:$0xf]
      %v8226 = vld [vmem:[%s3 + $0x21c] sm:$0xf]
      %v8227 = vld [vmem:[%s3 + $0x220] sm:$0xf]
      %v8228 = vld [vmem:[%s3 + $0x224] sm:$0xf]
      %v8229 = vld [vmem:[%s3 + $0x228] sm:$0xf]
      %v8230 = vld [vmem:[%s3 + $0x22c] sm:$0xf]
      %v8231 = vld [vmem:[%s3 + $0x230] sm:$0xf]
      %v8232 = vld [vmem:[%s3 + $0x234] sm:$0xf]
      %v8233 = vld [vmem:[%s3 + $0x238] sm:$0xf]
      %v8234 = vld [vmem:[%s3 + $0x23c] sm:$0xf]
      %v8235 = vld [vmem:[%s3 + $0x240] sm:$0xf]
      %v8236 = vld [vmem:[%s3 + $0x244] sm:$0xf]
      %v8237 = vld [vmem:[%s3 + $0x248] sm:$0xf]
      %v8238 = vld [vmem:[%s3 + $0x24c] sm:$0xf]
      %v8239 = vld [vmem:[%s3 + $0x250] sm:$0xf]
      %v8240 = vld [vmem:[%s3 + $0x254] sm:$0xf]
      %v8241 = vld [vmem:[%s3 + $0x258] sm:$0xf]
      %v8242 = vld [vmem:[%s3 + $0x25c] sm:$0xf]
      %v8243 = vld [vmem:[%s3 + $0x260] sm:$0xf]
      %v8244 = vld [vmem:[%s3 + $0x264] sm:$0xf]
      %v8245 = vld [vmem:[%s3 + $0x268] sm:$0xf]
      %v8246 = vld [vmem:[%s3 + $0x26c] sm:$0xf]
      %v8247 = vld [vmem:[%s3 + $0x270] sm:$0xf]
      %v8248 = vld [vmem:[%s3 + $0x274] sm:$0xf]
      %v8249 = vld [vmem:[%s3 + $0x278] sm:$0xf]
      %v8250 = vld [vmem:[%s3 + $0x27c] sm:$0xf]
      %v8251 = vld [vmem:[%s3 + $0x280] sm:$0xf]
      %v8252 = vld [vmem:[%s3 + $0x284] sm:$0xf]
      %v8253 = vld [vmem:[%s3 + $0x288] sm:$0xf]
      %v8254 = vld [vmem:[%s3 + $0x28c] sm:$0xf]
      %v8255 = vld [vmem:[%s3 + $0x290] sm:$0xf]
      %v8256 = vld [vmem:[%s3 + $0x294] sm:$0xf]
      %v8257 = vld [vmem:[%s3 + $0x298] sm:$0xf]
      %v8258 = vld [vmem:[%s3 + $0x29c] sm:$0xf]
      %v8259 = vld [vmem:[%s3 + $0x2a0] sm:$0xf]
      %v8260 = vld [vmem:[%s3 + $0x2a4] sm:$0xf]
      %v8261 = vld [vmem:[%s3 + $0x2a8] sm:$0xf]
      %v8262 = vld [vmem:[%s3 + $0x2ac] sm:$0xf]
      %v8263 = vld [vmem:[%s3 + $0x2b0] sm:$0xf]
      %v8264 = vld [vmem:[%s3 + $0x2b4] sm:$0xf]
      %v8265 = vld [vmem:[%s3 + $0x2b8] sm:$0xf]
      %v8266 = vld [vmem:[%s3 + $0x2bc] sm:$0xf]
      %v8267 = vld [vmem:[%s3 + $0x2c0] sm:$0xf]
      %v8268 = vld [vmem:[%s3 + $0x2c4] sm:$0xf]
      %v8269 = vld [vmem:[%s3 + $0x2c8] sm:$0xf]
      %v8270 = vld [vmem:[%s3 + $0x2cc] sm:$0xf]
      %v8271 = vld [vmem:[%s3 + $0x2d0] sm:$0xf]
      %v8272 = vld [vmem:[%s3 + $0x2d4] sm:$0xf]
      %v8273 = vld [vmem:[%s3 + $0x2d8] sm:$0xf]
      %v8274 = vld [vmem:[%s3 + $0x2dc] sm:$0xf]
      %v8275 = vld [vmem:[%s3 + $0x2e0] sm:$0xf]
      %v8276 = vld [vmem:[%s3 + $0x2e4] sm:$0xf]
      %v8277 = vld [vmem:[%s3 + $0x2e8] sm:$0xf]
      %v8278 = vld [vmem:[%s3 + $0x2ec] sm:$0xf]
      %v8279 = vld [vmem:[%s3 + $0x2f0] sm:$0xf]
      %v8280 = vld [vmem:[%s3 + $0x2f4] sm:$0xf]
      %v8281 = vld [vmem:[%s3 + $0x2f8] sm:$0xf]
      %v8282 = vld [vmem:[%s3 + $0x2fc] sm:$0xf]
      %v8283 = vld [vmem:[%s3 + $0x300] sm:$0xf]
      %v8284 = vld [vmem:[%s3 + $0x304] sm:$0xf]
      %v8285 = vld [vmem:[%s3 + $0x308] sm:$0xf]
      %v8286 = vld [vmem:[%s3 + $0x30c] sm:$0xf]
      %v8287 = vld [vmem:[%s3 + $0x310] sm:$0xf]
      %v8288 = vld [vmem:[%s3 + $0x314] sm:$0xf]
      %v8289 = vld [vmem:[%s3 + $0x318] sm:$0xf]
      %v8290 = vld [vmem:[%s3 + $0x31c] sm:$0xf]
      %v8291 = vld [vmem:[%s3 + $0x320] sm:$0xf]
      %v8292 = vld [vmem:[%s3 + $0x324] sm:$0xf]
      %v8293 = vld [vmem:[%s3 + $0x328] sm:$0xf]
      %v8294 = vld [vmem:[%s3 + $0x32c] sm:$0xf]
      %v8295 = vld [vmem:[%s3 + $0x330] sm:$0xf]
      %v8296 = vld [vmem:[%s3 + $0x334] sm:$0xf]
      %v8297 = vld [vmem:[%s3 + $0x338] sm:$0xf]
      %v8298 = vld [vmem:[%s3 + $0x33c] sm:$0xf]
      %v8299 = vld [vmem:[%s3 + $0x340] sm:$0xf]
      %v8300 = vld [vmem:[%s3 + $0x344] sm:$0xf]
      %v8301 = vld [vmem:[%s3 + $0x348] sm:$0xf]
      %v8302 = vld [vmem:[%s3 + $0x34c] sm:$0xf]
      %v8303 = vld [vmem:[%s3 + $0x350] sm:$0xf]
      %v8304 = vld [vmem:[%s3 + $0x354] sm:$0xf]
      %v8305 = vld [vmem:[%s3 + $0x358] sm:$0xf]
      %v8306 = vld [vmem:[%s3 + $0x35c] sm:$0xf]
      %v8307 = vld [vmem:[%s3 + $0x360] sm:$0xf]
      %v8308 = vld [vmem:[%s3 + $0x364] sm:$0xf]
      %v8309 = vld [vmem:[%s3 + $0x368] sm:$0xf]
      %v8310 = vld [vmem:[%s3 + $0x36c] sm:$0xf]
      %v8311 = vld [vmem:[%s3 + $0x370] sm:$0xf]
      %v8312 = vld [vmem:[%s3 + $0x374] sm:$0xf]
      %v8313 = vld [vmem:[%s3 + $0x378] sm:$0xf]
      %v8314 = vld [vmem:[%s3 + $0x37c] sm:$0xf]
      %v8315 = vld [vmem:[%s3 + $0x380] sm:$0xf]
      %v8316 = vld [vmem:[%s3 + $0x384] sm:$0xf]
      %v8317 = vld [vmem:[%s3 + $0x388] sm:$0xf]
      %v8318 = vld [vmem:[%s3 + $0x38c] sm:$0xf]
      %v8319 = vld [vmem:[%s3 + $0x390] sm:$0xf]
      %v8320 = vld [vmem:[%s3 + $0x394] sm:$0xf]
      %v8321 = vld [vmem:[%s3 + $0x398] sm:$0xf]
      %v8322 = vld [vmem:[%s3 + $0x39c] sm:$0xf]
      %v8323 = vld [vmem:[%s3 + $0x3a0] sm:$0xf]
      %v8324 = vld [vmem:[%s3 + $0x3a4] sm:$0xf]
      %v8325 = vld [vmem:[%s3 + $0x3a8] sm:$0xf]
      %v8326 = vld [vmem:[%s3 + $0x3ac] sm:$0xf]
      %v8327 = vld [vmem:[%s3 + $0x3b0] sm:$0xf]
      %v8328 = vld [vmem:[%s3 + $0x3b4] sm:$0xf]
      %v8329 = vld [vmem:[%s3 + $0x3b8] sm:$0xf]
      %v8330 = vld [vmem:[%s3 + $0x3bc] sm:$0xf]
      %v8331 = vld [vmem:[%s3 + $0x3c0] sm:$0xf]
      %v8332 = vld [vmem:[%s3 + $0x3c4] sm:$0xf]
      %v8333 = vld [vmem:[%s3 + $0x3c8] sm:$0xf]
      %v8334 = vld [vmem:[%s3 + $0x3cc] sm:$0xf]
      %v8335 = vld [vmem:[%s3 + $0x3d0] sm:$0xf]
      %v8336 = vld [vmem:[%s3 + $0x3d4] sm:$0xf]
      %v8337 = vld [vmem:[%s3 + $0x3d8] sm:$0xf]
      %v8338 = vld [vmem:[%s3 + $0x3dc] sm:$0xf]
      %v8339 = vld [vmem:[%s3 + $0x3e0] sm:$0xf]
      %v8340 = vld [vmem:[%s3 + $0x3e4] sm:$0xf]
      %v8341 = vld [vmem:[%s3 + $0x3e8] sm:$0xf]
      %v8342 = vld [vmem:[%s3 + $0x3ec] sm:$0xf]
      %v8343 = vld [vmem:[%s3 + $0x3f0] sm:$0xf]
      %v8344 = vld [vmem:[%s3 + $0x3f4] sm:$0xf]
      %v8345 = vld [vmem:[%s3 + $0x3f8] sm:$0xf]
      %v8346 = vld [vmem:[%s3 + $0x3fc] sm:$0xf]
      %v8347 = vld [vmem:[%s3 + $0x400] sm:$0xf]
      %v8348 = vld [vmem:[%s3 + $0x404] sm:$0xf]
      %v8349 = vld [vmem:[%s3 + $0x408] sm:$0xf]
      %v8350 = vld [vmem:[%s3 + $0x40c] sm:$0xf]
      %v8351 = vld [vmem:[%s3 + $0x410] sm:$0xf]
      %v8352 = vld [vmem:[%s3 + $0x414] sm:$0xf]
      %v8353 = vld [vmem:[%s3 + $0x418] sm:$0xf]
      %v8354 = vld [vmem:[%s3 + $0x41c] sm:$0xf]
      %v8355 = vld [vmem:[%s3 + $0x420] sm:$0xf]
      %v8356 = vld [vmem:[%s3 + $0x424] sm:$0xf]
      %v8357 = vld [vmem:[%s3 + $0x428] sm:$0xf]
      %v8358 = vld [vmem:[%s3 + $0x42c] sm:$0xf]
      %v8359 = vld [vmem:[%s3 + $0x430] sm:$0xf]
      %v8360 = vld [vmem:[%s3 + $0x434] sm:$0xf]
      %v8361 = vld [vmem:[%s3 + $0x438] sm:$0xf]
      %v8362 = vld [vmem:[%s3 + $0x43c] sm:$0xf]
      %v8363 = vld [vmem:[%s3 + $0x440] sm:$0xf]
      %v8364 = vld [vmem:[%s3 + $0x444] sm:$0xf]
      %v8365 = vld [vmem:[%s3 + $0x448] sm:$0xf]
      %v8366 = vld [vmem:[%s3 + $0x44c] sm:$0xf]
      %v8367 = vld [vmem:[%s3 + $0x450] sm:$0xf]
      %v8368 = vld [vmem:[%s3 + $0x454] sm:$0xf]
      %v8369 = vld [vmem:[%s3 + $0x458] sm:$0xf]
      %v8370 = vld [vmem:[%s3 + $0x45c] sm:$0xf]
      %v8371 = vld [vmem:[%s3 + $0x460] sm:$0xf]
      %v8372 = vld [vmem:[%s3 + $0x464] sm:$0xf]
      %v8373 = vld [vmem:[%s3 + $0x468] sm:$0xf]
      %v8374 = vld [vmem:[%s3 + $0x46c] sm:$0xf]
      %v8375 = vld [vmem:[%s3 + $0x470] sm:$0xf]
      %v8376 = vld [vmem:[%s3 + $0x474] sm:$0xf]
      %v8377 = vld [vmem:[%s3 + $0x478] sm:$0xf]
      %v8378 = vld [vmem:[%s3 + $0x47c] sm:$0xf]
      %v8379 = vld [vmem:[%s3 + $0x480] sm:$0xf]
      %v8380 = vld [vmem:[%s3 + $0x484] sm:$0xf]
      %v8381 = vld [vmem:[%s3 + $0x488] sm:$0xf]
      %v8382 = vld [vmem:[%s3 + $0x48c] sm:$0xf]
      %v8383 = vld [vmem:[%s3 + $0x490] sm:$0xf]
      %v8384 = vld [vmem:[%s3 + $0x494] sm:$0xf]
      %v8385 = vld [vmem:[%s3 + $0x498] sm:$0xf]
      %v8386 = vld [vmem:[%s3 + $0x49c] sm:$0xf]
      %v8387 = vld [vmem:[%s3 + $0x4a0] sm:$0xf]
      %v8388 = vld [vmem:[%s3 + $0x4a4] sm:$0xf]
      %v8389 = vld [vmem:[%s3 + $0x4a8] sm:$0xf]
      %v8390 = vld [vmem:[%s3 + $0x4ac] sm:$0xf]
      %v8391 = vld [vmem:[%s3 + $0x4b0] sm:$0xf]
      %v8392 = vld [vmem:[%s3 + $0x4b4] sm:$0xf]
      %v8393 = vld [vmem:[%s3 + $0x4b8] sm:$0xf]
      %v8394 = vld [vmem:[%s3 + $0x4bc] sm:$0xf]
      %v8395 = vld [vmem:[%s3 + $0x4c0] sm:$0xf]
      %v8396 = vld [vmem:[%s3 + $0x4c4] sm:$0xf]
      %v8397 = vld [vmem:[%s3 + $0x4c8] sm:$0xf]
      %v8398 = vld [vmem:[%s3 + $0x4cc] sm:$0xf]
      %v8399 = vld [vmem:[%s3 + $0x4d0] sm:$0xf]
      %v8400 = vld [vmem:[%s3 + $0x4d4] sm:$0xf]
      %v8401 = vld [vmem:[%s3 + $0x4d8] sm:$0xf]
      %v8402 = vld [vmem:[%s3 + $0x4dc] sm:$0xf]
      %v8403 = vld [vmem:[%s3 + $0x4e0] sm:$0xf]
      %v8404 = vld [vmem:[%s3 + $0x4e4] sm:$0xf]
      %v8405 = vld [vmem:[%s3 + $0x4e8] sm:$0xf]
      %v8406 = vld [vmem:[%s3 + $0x4ec] sm:$0xf]
      %v8407 = vld [vmem:[%s3 + $0x4f0] sm:$0xf]
      %v8408 = vld [vmem:[%s3 + $0x4f4] sm:$0xf]
      %v8409 = vld [vmem:[%s3 + $0x4f8] sm:$0xf]
      %v8410 = vld [vmem:[%s3 + $0x4fc] sm:$0xf]
      %v8411 = vld [vmem:[%s3 + $0x500] sm:$0xf]
      %v8412 = vld [vmem:[%s3 + $0x504] sm:$0xf]
      %v8413 = vld [vmem:[%s3 + $0x508] sm:$0xf]
      %v8414 = vld [vmem:[%s3 + $0x50c] sm:$0xf]
      %v8415 = vld [vmem:[%s3 + $0x510] sm:$0xf]
      %v8416 = vld [vmem:[%s3 + $0x514] sm:$0xf]
      %v8417 = vld [vmem:[%s3 + $0x518] sm:$0xf]
      %v8418 = vld [vmem:[%s3 + $0x51c] sm:$0xf]
      %v8419 = vld [vmem:[%s3 + $0x520] sm:$0xf]
      %v8420 = vld [vmem:[%s3 + $0x524] sm:$0xf]
      %v8421 = vld [vmem:[%s3 + $0x528] sm:$0xf]
      %v8422 = vld [vmem:[%s3 + $0x52c] sm:$0xf]
      %v8423 = vld [vmem:[%s3 + $0x530] sm:$0xf]
      %v8424 = vld [vmem:[%s3 + $0x534] sm:$0xf]
      %v8425 = vld [vmem:[%s3 + $0x538] sm:$0xf]
      %v8426 = vld [vmem:[%s3 + $0x53c] sm:$0xf]
      %v8427 = vld [vmem:[%s3 + $0x540] sm:$0xf]
      %v8428 = vld [vmem:[%s3 + $0x544] sm:$0xf]
      %v8429 = vld [vmem:[%s3 + $0x548] sm:$0xf]
      %v8430 = vld [vmem:[%s3 + $0x54c] sm:$0xf]
      %v8431 = vld [vmem:[%s3 + $0x550] sm:$0xf]
      %v8432 = vld [vmem:[%s3 + $0x554] sm:$0xf]
      %v8433 = vld [vmem:[%s3 + $0x558] sm:$0xf]
      %v8434 = vld [vmem:[%s3 + $0x55c] sm:$0xf]
      %v8435 = vld [vmem:[%s3 + $0x560] sm:$0xf]
      %v8436 = vld [vmem:[%s3 + $0x564] sm:$0xf]
      %v8437 = vld [vmem:[%s3 + $0x568] sm:$0xf]
      %v8438 = vld [vmem:[%s3 + $0x56c] sm:$0xf]
      %v8439 = vld [vmem:[%s3 + $0x570] sm:$0xf]
      %v8440 = vld [vmem:[%s3 + $0x574] sm:$0xf]
      %v8441 = vld [vmem:[%s3 + $0x578] sm:$0xf]
      %v8442 = vld [vmem:[%s3 + $0x57c] sm:$0xf]
      %v8443 = vld [vmem:[%s3 + $0x580] sm:$0xf]
      %v8444 = vld [vmem:[%s3 + $0x584] sm:$0xf]
      %v8445 = vld [vmem:[%s3 + $0x588] sm:$0xf]
      %v8446 = vld [vmem:[%s3 + $0x58c] sm:$0xf]
      %v8447 = vld [vmem:[%s3 + $0x590] sm:$0xf]
      %v8448 = vld [vmem:[%s3 + $0x594] sm:$0xf]
      %v8449 = vld [vmem:[%s3 + $0x598] sm:$0xf]
      %v8450 = vld [vmem:[%s3 + $0x59c] sm:$0xf]
      %v8451 = vld [vmem:[%s3 + $0x5a0] sm:$0xf]
      %v8452 = vld [vmem:[%s3 + $0x5a4] sm:$0xf]
      %v8453 = vld [vmem:[%s3 + $0x5a8] sm:$0xf]
      %v8454 = vld [vmem:[%s3 + $0x5ac] sm:$0xf]
      %v8455 = vld [vmem:[%s3 + $0x5b0] sm:$0xf]
      %v8456 = vld [vmem:[%s3 + $0x5b4] sm:$0xf]
      %v8457 = vld [vmem:[%s3 + $0x5b8] sm:$0xf]
      %v8458 = vld [vmem:[%s3 + $0x5bc] sm:$0xf]
      %v8459 = vld [vmem:[%s3 + $0x5c0] sm:$0xf]
      %v8460 = vld [vmem:[%s3 + $0x5c4] sm:$0xf]
      %v8461 = vld [vmem:[%s3 + $0x5c8] sm:$0xf]
      %v8462 = vld [vmem:[%s3 + $0x5cc] sm:$0xf]
      %v8463 = vld [vmem:[%s3 + $0x5d0] sm:$0xf]
      %v8464 = vld [vmem:[%s3 + $0x5d4] sm:$0xf]
      %v8465 = vld [vmem:[%s3 + $0x5d8] sm:$0xf]
      %v8466 = vld [vmem:[%s3 + $0x5dc] sm:$0xf]
      %v8467 = vld [vmem:[%s3 + $0x5e0] sm:$0xf]
      %v8468 = vld [vmem:[%s3 + $0x5e4] sm:$0xf]
      %v8469 = vld [vmem:[%s3 + $0x5e8] sm:$0xf]
      %v8470 = vld [vmem:[%s3 + $0x5ec] sm:$0xf]
      %v8471 = vld [vmem:[%s3 + $0x5f0] sm:$0xf]
      %v8472 = vld [vmem:[%s3 + $0x5f4] sm:$0xf]
      %v8473 = vld [vmem:[%s3 + $0x5f8] sm:$0xf]
      %v8474 = vld [vmem:[%s3 + $0x5fc] sm:$0xf]
      %v8475 = vld [vmem:[%s3 + $0x600] sm:$0xf]
      %v8476 = vld [vmem:[%s3 + $0x604] sm:$0xf]
      %v8477 = vld [vmem:[%s3 + $0x608] sm:$0xf]
      %v8478 = vld [vmem:[%s3 + $0x60c] sm:$0xf]
      %v8479 = vld [vmem:[%s3 + $0x610] sm:$0xf]
      %v8480 = vld [vmem:[%s3 + $0x614] sm:$0xf]
      %v8481 = vld [vmem:[%s3 + $0x618] sm:$0xf]
      %v8482 = vld [vmem:[%s3 + $0x61c] sm:$0xf]
      %v8483 = vld [vmem:[%s3 + $0x620] sm:$0xf]
      %v8484 = vld [vmem:[%s3 + $0x624] sm:$0xf]
      %v8485 = vld [vmem:[%s3 + $0x628] sm:$0xf]
      %v8486 = vld [vmem:[%s3 + $0x62c] sm:$0xf]
      %v8487 = vld [vmem:[%s3 + $0x630] sm:$0xf]
      %v8488 = vld [vmem:[%s3 + $0x634] sm:$0xf]
      %v8489 = vld [vmem:[%s3 + $0x638] sm:$0xf]
      %v8490 = vld [vmem:[%s3 + $0x63c] sm:$0xf]
      %v8491 = vld [vmem:[%s4] sm:$0x1]
      %v8493 = vperm.slane %v8491, 0
      %8495 = vst [vmem:[#allocation1] ss:$9 sm:$0xff] %v6534
      %s8497 = scalar_lea.vmem [#allocation1], 1
      %8498 = vst [vmem:[%s8497] ss:$9 sm:$0xff] %v6578
      %s8500 = scalar_lea.vmem [#allocation1], 2
      %8501 = vst [vmem:[%s8500] ss:$9 sm:$0xff] %v6608
      %s8503 = scalar_lea.vmem [#allocation1], 3
      %8504 = vst [vmem:[%s8503] ss:$9 sm:$0xff] %v6639
      %s8506 = scalar_lea.vmem [#allocation1], 4
      %8507 = vst [vmem:[%s8506] ss:$9 sm:$0xff] %v6667
      %s8508 = scalar_lea.vmem [#allocation1], 5
      %8509 = vst [vmem:[%s8508] ss:$9 sm:$0xff] %v6700
      %s8511 = scalar_lea.vmem [#allocation1], 6
      %8512 = vst [vmem:[%s8511] ss:$9 sm:$0xff] %v6739
      %s8514 = scalar_lea.vmem [#allocation1], 7
      %8515 = vst [vmem:[%s8514] ss:$9 sm:$0xff] %v6767
      %v8516 = vld [vmem:[#allocation1] sm:$0xff]
      %v8517 = vld [vmem:[#allocation1 + $0x9] sm:$0xff]
      %v8518 = vld [vmem:[#allocation1 + $0x12] sm:$0xff]
      %v8519 = vld [vmem:[#allocation1 + $0x1b] sm:$0xff]
      %v8520 = vld [vmem:[#allocation1 + $0x24] sm:$0xff]
      %v8521 = vld [vmem:[#allocation1 + $0x2d] sm:$0xff]
      %v8522 = vld [vmem:[#allocation1 + $0x36] sm:$0xff]
      %v8523 = vld [vmem:[#allocation1 + $0x3f] sm:$0xff]
      %8524 = vst [vmem:[#allocation1] ss:$9 sm:$0xff] %v6549
      %8526 = vst [vmem:[%s8497] ss:$9 sm:$0xff] %v6587
      %8528 = vst [vmem:[%s8500] ss:$9 sm:$0xff] %v6617
      %8530 = vst [vmem:[%s8503] ss:$9 sm:$0xff] %v6648
      %8532 = vst [vmem:[%s8506] ss:$9 sm:$0xff] %v6676
      %8533 = vst [vmem:[%s8508] ss:$9 sm:$0xff] %v6715
      %8535 = vst [vmem:[%s8511] ss:$9 sm:$0xff] %v6748
      %8537 = vst [vmem:[%s8514] ss:$9 sm:$0xff] %v6776
      %v8538 = vld [vmem:[#allocation1] sm:$0xff]
      %v8539 = vld [vmem:[#allocation1 + $0x9] sm:$0xff]
      %v8540 = vld [vmem:[#allocation1 + $0x12] sm:$0xff]
      %v8541 = vld [vmem:[#allocation1 + $0x1b] sm:$0xff]
      %v8542 = vld [vmem:[#allocation1 + $0x24] sm:$0xff]
      %v8543 = vld [vmem:[#allocation1 + $0x2d] sm:$0xff]
      %v8544 = vld [vmem:[#allocation1 + $0x36] sm:$0xff]
      %v8545 = vld [vmem:[#allocation1 + $0x3f] sm:$0xff]
      %8546 = vst [vmem:[#allocation1] ss:$9 sm:$0xff] %v6564
      %8548 = vst [vmem:[%s8497] ss:$9 sm:$0xff] %v6596
      %8550 = vst [vmem:[%s8500] ss:$9 sm:$0xff] %v6626
      %8552 = vst [vmem:[%s8503] ss:$9 sm:$0xff] %v6657
      %8554 = vst [vmem:[%s8506] ss:$9 sm:$0xff] %v6685
      %8555 = vst [vmem:[%s8508] ss:$9 sm:$0xff] %v6730
      %8557 = vst [vmem:[%s8511] ss:$9 sm:$0xff] %v6757
      %8559 = vst [vmem:[%s8514] ss:$9 sm:$0xff] %v6785
      %v8560 = vld [vmem:[#allocation1] sm:$0xff]
      %v8561 = vld [vmem:[#allocation1 + $0x9] sm:$0xff]
      %v8562 = vld [vmem:[#allocation1 + $0x12] sm:$0xff]
      %v8563 = vld [vmem:[#allocation1 + $0x1b] sm:$0xff]
      %v8564 = vld [vmem:[#allocation1 + $0x24] sm:$0xff]
      %v8565 = vld [vmem:[#allocation1 + $0x2d] sm:$0xff]
      %v8566 = vld [vmem:[#allocation1 + $0x36] sm:$0xff]
      %v8567 = vld [vmem:[#allocation1 + $0x3f] sm:$0xff]
      %8569 = vst [vmem:[#allocation1] ss:$9 sm:$0xff] %v5776
      %8571 = vst [vmem:[%s8497] ss:$9 sm:$0xff] %v6597
      %8573 = vst [vmem:[%s8500] ss:$9 sm:$0xff] %v6627
      %8575 = vst [vmem:[%s8503] ss:$9 sm:$0xff] %v6658
      %8577 = vst [vmem:[%s8506] ss:$9 sm:$0xff] %v6686
      %8579 = vst [vmem:[%s8508] ss:$9 sm:$0xff] %v5835
      %8581 = vst [vmem:[%s8511] ss:$9 sm:$0xff] %v6758
      %8583 = vst [vmem:[%s8514] ss:$9 sm:$0xff] %v6786
      %v8584 = vld [vmem:[#allocation1] sm:$0xff]
      %8586 = vst [vmem:[#allocation1] ss:$9 sm:$0xff] %v6795
      %8588 = vst [vmem:[%s8497] ss:$9 sm:$0xff] %v6823
      %8589 = vst [vmem:[%s8500] ss:$9 sm:$0xff] %v6856
      %8591 = vst [vmem:[%s8503] ss:$9 sm:$0xff] %v6895
      %8593 = vst [vmem:[%s8506] ss:$9 sm:$0xff] %v6923
      %8595 = vst [vmem:[%s8508] ss:$9 sm:$0xff] %v6951
      %8597 = vst [vmem:[%s8511] ss:$9 sm:$0xff] %v6979
      %8598 = vst [vmem:[%s8514] ss:$9 sm:$0xff] %v7012
      %v8599 = vld [vmem:[#allocation1] sm:$0xff]
      %v8600 = vld [vmem:[#allocation1 + $0x9] sm:$0xff]
      %v8601 = vld [vmem:[#allocation1 + $0x12] sm:$0xff]
      %v8602 = vld [vmem:[#allocation1 + $0x1b] sm:$0xff]
      %v8603 = vld [vmem:[#allocation1 + $0x24] sm:$0xff]
      %v8604 = vld [vmem:[#allocation1 + $0x2d] sm:$0xff]
      %v8605 = vld [vmem:[#allocation1 + $0x36] sm:$0xff]
      %v8606 = vld [vmem:[#allocation1 + $0x3f] sm:$0xff]
      %8608 = vst [vmem:[#allocation1] ss:$9 sm:$0xff] %v6804
      %8610 = vst [vmem:[%s8497] ss:$9 sm:$0xff] %v6832
      %8611 = vst [vmem:[%s8500] ss:$9 sm:$0xff] %v6871
      %8613 = vst [vmem:[%s8503] ss:$9 sm:$0xff] %v6904
      %8615 = vst [vmem:[%s8506] ss:$9 sm:$0xff] %v6932
      %8617 = vst [vmem:[%s8508] ss:$9 sm:$0xff] %v6960
      %8619 = vst [vmem:[%s8511] ss:$9 sm:$0xff] %v6988
      %8620 = vst [vmem:[%s8514] ss:$9 sm:$0xff] %v7027
      %v8621 = vld [vmem:[#allocation1] sm:$0xff]
      %v8622 = vld [vmem:[#allocation1 + $0x9] sm:$0xff]
      %v8623 = vld [vmem:[#allocation1 + $0x12] sm:$0xff]
      %v8624 = vld [vmem:[#allocation1 + $0x1b] sm:$0xff]
      %v8625 = vld [vmem:[#allocation1 + $0x24] sm:$0xff]
      %v8626 = vld [vmem:[#allocation1 + $0x2d] sm:$0xff]
      %v8627 = vld [vmem:[#allocation1 + $0x36] sm:$0xff]
      %v8628 = vld [vmem:[#allocation1 + $0x3f] sm:$0xff]
      %8630 = vst [vmem:[#allocation1] ss:$9 sm:$0xff] %v6813
      %8632 = vst [vmem:[%s8497] ss:$9 sm:$0xff] %v6841
      %8633 = vst [vmem:[%s8500] ss:$9 sm:$0xff] %v6886
      %8635 = vst [vmem:[%s8503] ss:$9 sm:$0xff] %v6913
      %8637 = vst [vmem:[%s8506] ss:$9 sm:$0xff] %v6941
      %8639 = vst [vmem:[%s8508] ss:$9 sm:$0xff] %v6969
      %8641 = vst [vmem:[%s8511] ss:$9 sm:$0xff] %v6997
      %8642 = vst [vmem:[%s8514] ss:$9 sm:$0xff] %v7042
      %v8643 = vld [vmem:[#allocation1] sm:$0xff]
      %v8644 = vld [vmem:[#allocation1 + $0x9] sm:$0xff]
      %v8645 = vld [vmem:[#allocation1 + $0x12] sm:$0xff]
      %v8646 = vld [vmem:[#allocation1 + $0x1b] sm:$0xff]
      %v8647 = vld [vmem:[#allocation1 + $0x24] sm:$0xff]
      %v8648 = vld [vmem:[#allocation1 + $0x2d] sm:$0xff]
      %v8649 = vld [vmem:[#allocation1 + $0x36] sm:$0xff]
      %v8650 = vld [vmem:[#allocation1 + $0x3f] sm:$0xff]
      %8652 = vst [vmem:[#allocation1] ss:$9 sm:$0xff] %v6814
      %8654 = vst [vmem:[%s8497] ss:$9 sm:$0xff] %v6842
      %8656 = vst [vmem:[%s8500] ss:$9 sm:$0xff] %v5894
      %8658 = vst [vmem:[%s8503] ss:$9 sm:$0xff] %v6914
      %8660 = vst [vmem:[%s8506] ss:$9 sm:$0xff] %v6942
      %8662 = vst [vmem:[%s8508] ss:$9 sm:$0xff] %v6970
      %8664 = vst [vmem:[%s8511] ss:$9 sm:$0xff] %v6998
      %8666 = vst [vmem:[%s8514] ss:$9 sm:$0xff] %v5953
      %v8667 = vld [vmem:[#allocation1] sm:$0xff]
      %8669 = vst [vmem:[#allocation1] ss:$9 sm:$0xff] %v7051
      %8671 = vst [vmem:[%s8497] ss:$9 sm:$0xff] %v7079
      %8673 = vst [vmem:[%s8500] ss:$9 sm:$0xff] %v7107
      %8675 = vst [vmem:[%s8503] ss:$9 sm:$0xff] %v7135
      %8676 = vst [vmem:[%s8506] ss:$9 sm:$0xff] %v7168
      %8678 = vst [vmem:[%s8508] ss:$9 sm:$0xff] %v7207
      %8680 = vst [vmem:[%s8511] ss:$9 sm:$0xff] %v7235
      %8682 = vst [vmem:[%s8514] ss:$9 sm:$0xff] %v7263
      %v8683 = vld [vmem:[#allocation1] sm:$0xff]
      %v8684 = vld [vmem:[#allocation1 + $0x9] sm:$0xff]
      %v8685 = vld [vmem:[#allocation1 + $0x12] sm:$0xff]
      %v8686 = vld [vmem:[#allocation1 + $0x1b] sm:$0xff]
      %v8687 = vld [vmem:[#allocation1 + $0x24] sm:$0xff]
      %v8688 = vld [vmem:[#allocation1 + $0x2d] sm:$0xff]
      %v8689 = vld [vmem:[#allocation1 + $0x36] sm:$0xff]
      %v8690 = vld [vmem:[#allocation1 + $0x3f] sm:$0xff]
      %8692 = vst [vmem:[#allocation1] ss:$9 sm:$0xff] %v7060
      %8694 = vst [vmem:[%s8497] ss:$9 sm:$0xff] %v7088
      %8696 = vst [vmem:[%s8500] ss:$9 sm:$0xff] %v7116
      %8698 = vst [vmem:[%s8503] ss:$9 sm:$0xff] %v7144
      %8699 = vst [vmem:[%s8506] ss:$9 sm:$0xff] %v7183
      %8701 = vst [vmem:[%s8508] ss:$9 sm:$0xff] %v7216
      %8703 = vst [vmem:[%s8511] ss:$9 sm:$0xff] %v7244
      %8705 = vst [vmem:[%s8514] ss:$9 sm:$0xff] %v7272
      %v8706 = vld [vmem:[#allocation1] sm:$0xff]
      %v8707 = vld [vmem:[#allocation1 + $0x9] sm:$0xff]
      %v8708 = vld [vmem:[#allocation1 + $0x12] sm:$0xff]
      %v8709 = vld [vmem:[#allocation1 + $0x1b] sm:$0xff]
      %v8710 = vld [vmem:[#allocation1 + $0x24] sm:$0xff]
      %v8711 = vld [vmem:[#allocation1 + $0x2d] sm:$0xff]
      %v8712 = vld [vmem:[#allocation1 + $0x36] sm:$0xff]
      %v8713 = vld [vmem:[#allocation1 + $0x3f] sm:$0xff]
      %8715 = vst [vmem:[#allocation1] ss:$9 sm:$0xff] %v7069
      %8717 = vst [vmem:[%s8497] ss:$9 sm:$0xff] %v7097
      %8719 = vst [vmem:[%s8500] ss:$9 sm:$0xff] %v7125
      %8721 = vst [vmem:[%s8503] ss:$9 sm:$0xff] %v7153
      %8722 = vst [vmem:[%s8506] ss:$9 sm:$0xff] %v7198
      %8724 = vst [vmem:[%s8508] ss:$9 sm:$0xff] %v7225
      %8726 = vst [vmem:[%s8511] ss:$9 sm:$0xff] %v7253
      %8728 = vst [vmem:[%s8514] ss:$9 sm:$0xff] %v7281
      %v8729 = vld [vmem:[#allocation1] sm:$0xff]
      %v8730 = vld [vmem:[#allocation1 + $0x9] sm:$0xff]
      %v8731 = vld [vmem:[#allocation1 + $0x12] sm:$0xff]
      %v8732 = vld [vmem:[#allocation1 + $0x1b] sm:$0xff]
      %v8733 = vld [vmem:[#allocation1 + $0x24] sm:$0xff]
      %v8734 = vld [vmem:[#allocation1 + $0x2d] sm:$0xff]
      %v8735 = vld [vmem:[#allocation1 + $0x36] sm:$0xff]
      %v8736 = vld [vmem:[#allocation1 + $0x3f] sm:$0xff]
      %8738 = vst [vmem:[#allocation1] ss:$9 sm:$0xff] %v7070
      %8740 = vst [vmem:[%s8497] ss:$9 sm:$0xff] %v7098
      %8742 = vst [vmem:[%s8500] ss:$9 sm:$0xff] %v7126
      %8744 = vst [vmem:[%s8503] ss:$9 sm:$0xff] %v7154
      %8746 = vst [vmem:[%s8506] ss:$9 sm:$0xff] %v6012
      %8748 = vst [vmem:[%s8508] ss:$9 sm:$0xff] %v7226
      %8750 = vst [vmem:[%s8511] ss:$9 sm:$0xff] %v7254
      %8752 = vst [vmem:[%s8514] ss:$9 sm:$0xff] %v7282
      %v8753 = vld [vmem:[#allocation1] sm:$0xff]
      %8755 = vst [vmem:[#allocation1] ss:$9 sm:$0xff] %v7291
      %8756 = vst [vmem:[%s8497] ss:$9 sm:$0xff] %v7324
      %8758 = vst [vmem:[%s8500] ss:$9 sm:$0xff] %v7363
      %8760 = vst [vmem:[%s8503] ss:$9 sm:$0xff] %v7391
      %8762 = vst [vmem:[%s8506] ss:$9 sm:$0xff] %v7419
      %8764 = vst [vmem:[%s8508] ss:$9 sm:$0xff] %v7447
      %8765 = vst [vmem:[%s8511] ss:$9 sm:$0xff] %v7480
      %8767 = vst [vmem:[%s8514] ss:$9 sm:$0xff] %v7519
      %v8768 = vld [vmem:[#allocation1] sm:$0xff]
      %v8769 = vld [vmem:[#allocation1 + $0x9] sm:$0xff]
      %v8770 = vld [vmem:[#allocation1 + $0x12] sm:$0xff]
      %v8771 = vld [vmem:[#allocation1 + $0x1b] sm:$0xff]
      %v8772 = vld [vmem:[#allocation1 + $0x24] sm:$0xff]
      %v8773 = vld [vmem:[#allocation1 + $0x2d] sm:$0xff]
      %v8774 = vld [vmem:[#allocation1 + $0x36] sm:$0xff]
      %v8775 = vld [vmem:[#allocation1 + $0x3f] sm:$0xff]
      %8777 = vst [vmem:[#allocation1] ss:$9 sm:$0xff] %v7300
      %8778 = vst [vmem:[%s8497] ss:$9 sm:$0xff] %v7339
      %8780 = vst [vmem:[%s8500] ss:$9 sm:$0xff] %v7372
      %8782 = vst [vmem:[%s8503] ss:$9 sm:$0xff] %v7400
      %8784 = vst [vmem:[%s8506] ss:$9 sm:$0xff] %v7428
      %8786 = vst [vmem:[%s8508] ss:$9 sm:$0xff] %v7456
      %8787 = vst [vmem:[%s8511] ss:$9 sm:$0xff] %v7495
      %8789 = vst [vmem:[%s8514] ss:$9 sm:$0xff] %v7528
      %v8790 = vld [vmem:[#allocation1] sm:$0xff]
      %v8791 = vld [vmem:[#allocation1 + $0x9] sm:$0xff]
      %v8792 = vld [vmem:[#allocation1 + $0x12] sm:$0xff]
      %v8793 = vld [vmem:[#allocation1 + $0x1b] sm:$0xff]
      %v8794 = vld [vmem:[#allocation1 + $0x24] sm:$0xff]
      %v8795 = vld [vmem:[#allocation1 + $0x2d] sm:$0xff]
      %v8796 = vld [vmem:[#allocation1 + $0x36] sm:$0xff]
      %v8797 = vld [vmem:[#allocation1 + $0x3f] sm:$0xff]
      %8799 = vst [vmem:[#allocation1] ss:$9 sm:$0xff] %v7309
      %8800 = vst [vmem:[%s8497] ss:$9 sm:$0xff] %v7354
      %8802 = vst [vmem:[%s8500] ss:$9 sm:$0xff] %v7381
      %8804 = vst [vmem:[%s8503] ss:$9 sm:$0xff] %v7409
      %8806 = vst [vmem:[%s8506] ss:$9 sm:$0xff] %v7437
      %8808 = vst [vmem:[%s8508] ss:$9 sm:$0xff] %v7465
      %8809 = vst [vmem:[%s8511] ss:$9 sm:$0xff] %v7510
      %8811 = vst [vmem:[%s8514] ss:$9 sm:$0xff] %v7537
      %v8812 = vld [vmem:[#allocation1] sm:$0xff]
      %v8813 = vld [vmem:[#allocation1 + $0x9] sm:$0xff]
      %v8814 = vld [vmem:[#allocation1 + $0x12] sm:$0xff]
      %v8815 = vld [vmem:[#allocation1 + $0x1b] sm:$0xff]
      %v8816 = vld [vmem:[#allocation1 + $0x24] sm:$0xff]
      %v8817 = vld [vmem:[#allocation1 + $0x2d] sm:$0xff]
      %v8818 = vld [vmem:[#allocation1 + $0x36] sm:$0xff]
      %v8819 = vld [vmem:[#allocation1 + $0x3f] sm:$0xff]
      %8821 = vst [vmem:[#allocation1] ss:$9 sm:$0xff] %v7310
      %8823 = vst [vmem:[%s8497] ss:$9 sm:$0xff] %v6071
      %8825 = vst [vmem:[%s8500] ss:$9 sm:$0xff] %v7382
      %8827 = vst [vmem:[%s8503] ss:$9 sm:$0xff] %v7410
      %8829 = vst [vmem:[%s8506] ss:$9 sm:$0xff] %v7438
      %8831 = vst [vmem:[%s8508] ss:$9 sm:$0xff] %v7466
      %8833 = vst [vmem:[%s8511] ss:$9 sm:$0xff] %v6130
      %8835 = vst [vmem:[%s8514] ss:$9 sm:$0xff] %v7538
      %v8836 = vld [vmem:[#allocation1] sm:$0xff]
      %8838 = vst [vmem:[#allocation1] ss:$9 sm:$0xff] %v7547
      %8840 = vst [vmem:[%s8497] ss:$9 sm:$0xff] %v7575
      %8842 = vst [vmem:[%s8500] ss:$9 sm:$0xff] %v7603
      %8843 = vst [vmem:[%s8503] ss:$9 sm:$0xff] %v7636
      %8845 = vst [vmem:[%s8506] ss:$9 sm:$0xff] %v7675
      %8847 = vst [vmem:[%s8508] ss:$9 sm:$0xff] %v7703
      %8849 = vst [vmem:[%s8511] ss:$9 sm:$0xff] %v7731
      %8851 = vst [vmem:[%s8514] ss:$9 sm:$0xff] %v7759
      %v8852 = vld [vmem:[#allocation1] sm:$0xff]
      %v8853 = vld [vmem:[#allocation1 + $0x9] sm:$0xff]
      %v8854 = vld [vmem:[#allocation1 + $0x12] sm:$0xff]
      %v8855 = vld [vmem:[#allocation1 + $0x1b] sm:$0xff]
      %v8856 = vld [vmem:[#allocation1 + $0x24] sm:$0xff]
      %v8857 = vld [vmem:[#allocation1 + $0x2d] sm:$0xff]
      %v8858 = vld [vmem:[#allocation1 + $0x36] sm:$0xff]
      %v8859 = vld [vmem:[#allocation1 + $0x3f] sm:$0xff]
      %8861 = vst [vmem:[#allocation1] ss:$9 sm:$0xff] %v7556
      %8863 = vst [vmem:[%s8497] ss:$9 sm:$0xff] %v7584
      %8865 = vst [vmem:[%s8500] ss:$9 sm:$0xff] %v7612
      %8866 = vst [vmem:[%s8503] ss:$9 sm:$0xff] %v7651
      %8868 = vst [vmem:[%s8506] ss:$9 sm:$0xff] %v7684
      %8870 = vst [vmem:[%s8508] ss:$9 sm:$0xff] %v7712
      %8872 = vst [vmem:[%s8511] ss:$9 sm:$0xff] %v7740
      %8874 = vst [vmem:[%s8514] ss:$9 sm:$0xff] %v7768
      %v8875 = vld [vmem:[#allocation1] sm:$0xff]
      %v8876 = vld [vmem:[#allocation1 + $0x9] sm:$0xff]
      %v8877 = vld [vmem:[#allocation1 + $0x12] sm:$0xff]
      %v8878 = vld [vmem:[#allocation1 + $0x1b] sm:$0xff]
      %v8879 = vld [vmem:[#allocation1 + $0x24] sm:$0xff]
      %v8880 = vld [vmem:[#allocation1 + $0x2d] sm:$0xff]
      %v8881 = vld [vmem:[#allocation1 + $0x36] sm:$0xff]
      %v8882 = vld [vmem:[#allocation1 + $0x3f] sm:$0xff]
      %8884 = vst [vmem:[#allocation1] ss:$9 sm:$0xff] %v7565
      %8886 = vst [vmem:[%s8497] ss:$9 sm:$0xff] %v7593
      %8888 = vst [vmem:[%s8500] ss:$9 sm:$0xff] %v7621
      %8889 = vst [vmem:[%s8503] ss:$9 sm:$0xff] %v7666
      %8891 = vst [vmem:[%s8506] ss:$9 sm:$0xff] %v7693
      %8893 = vst [vmem:[%s8508] ss:$9 sm:$0xff] %v7721
      %8895 = vst [vmem:[%s8511] ss:$9 sm:$0xff] %v7749
      %8897 = vst [vmem:[%s8514] ss:$9 sm:$0xff] %v7777
      %v8898 = vld [vmem:[#allocation1] sm:$0xff]
      %v8899 = vld [vmem:[#allocation1 + $0x9] sm:$0xff]
      %v8900 = vld [vmem:[#allocation1 + $0x12] sm:$0xff]
      %v8901 = vld [vmem:[#allocation1 + $0x1b] sm:$0xff]
      %v8902 = vld [vmem:[#allocation1 + $0x24] sm:$0xff]
      %v8903 = vld [vmem:[#allocation1 + $0x2d] sm:$0xff]
      %v8904 = vld [vmem:[#allocation1 + $0x36] sm:$0xff]
      %v8905 = vld [vmem:[#allocation1 + $0x3f] sm:$0xff]
      %8907 = vst [vmem:[#allocation1] ss:$9 sm:$0xff] %v7566
      %8909 = vst [vmem:[%s8497] ss:$9 sm:$0xff] %v7594
      %8911 = vst [vmem:[%s8500] ss:$9 sm:$0xff] %v7622
      %8913 = vst [vmem:[%s8503] ss:$9 sm:$0xff] %v6189
      %8915 = vst [vmem:[%s8506] ss:$9 sm:$0xff] %v7694
      %8917 = vst [vmem:[%s8508] ss:$9 sm:$0xff] %v7722
      %8919 = vst [vmem:[%s8511] ss:$9 sm:$0xff] %v7750
      %8921 = vst [vmem:[%s8514] ss:$9 sm:$0xff] %v7778
      %v8922 = vld [vmem:[#allocation1] sm:$0xff]
      %8923 = vst [vmem:[#allocation1] ss:$9 sm:$0xff] %v7792
      %8925 = vst [vmem:[%s8497] ss:$9 sm:$0xff] %v7831
      %8927 = vst [vmem:[%s8500] ss:$9 sm:$0xff] %v7859
      %8929 = vst [vmem:[%s8503] ss:$9 sm:$0xff] %v7887
      %8931 = vst [vmem:[%s8506] ss:$9 sm:$0xff] %v7915
      %8932 = vst [vmem:[%s8508] ss:$9 sm:$0xff] %v7948
      %8934 = vst [vmem:[%s8511] ss:$9 sm:$0xff] %v7987
      %8936 = vst [vmem:[%s8514] ss:$9 sm:$0xff] %v8015
      %v8937 = vld [vmem:[#allocation1] sm:$0xff]
      %v8938 = vld [vmem:[#allocation1 + $0x9] sm:$0xff]
      %v8939 = vld [vmem:[#allocation1 + $0x12] sm:$0xff]
      %v8940 = vld [vmem:[#allocation1 + $0x1b] sm:$0xff]
      %v8941 = vld [vmem:[#allocation1 + $0x24] sm:$0xff]
      %v8942 = vld [vmem:[#allocation1 + $0x2d] sm:$0xff]
      %v8943 = vld [vmem:[#allocation1 + $0x36] sm:$0xff]
      %v8944 = vld [vmem:[#allocation1 + $0x3f] sm:$0xff]
      %8945 = vst [vmem:[#allocation1] ss:$9 sm:$0xff] %v7807
      %8947 = vst [vmem:[%s8497] ss:$9 sm:$0xff] %v7840
      %8949 = vst [vmem:[%s8500] ss:$9 sm:$0xff] %v7868
      %8951 = vst [vmem:[%s8503] ss:$9 sm:$0xff] %v7896
      %8953 = vst [vmem:[%s8506] ss:$9 sm:$0xff] %v7924
      %8954 = vst [vmem:[%s8508] ss:$9 sm:$0xff] %v7963
      %8956 = vst [vmem:[%s8511] ss:$9 sm:$0xff] %v7996
      %8958 = vst [vmem:[%s8514] ss:$9 sm:$0xff] %v8024
      %v8959 = vld [vmem:[#allocation1] sm:$0xff]
      %v8960 = vld [vmem:[#allocation1 + $0x9] sm:$0xff]
      %v8961 = vld [vmem:[#allocation1 + $0x12] sm:$0xff]
      %v8962 = vld [vmem:[#allocation1 + $0x1b] sm:$0xff]
      %v8963 = vld [vmem:[#allocation1 + $0x24] sm:$0xff]
      %v8964 = vld [vmem:[#allocation1 + $0x2d] sm:$0xff]
      %v8965 = vld [vmem:[#allocation1 + $0x36] sm:$0xff]
      %v8966 = vld [vmem:[#allocation1 + $0x3f] sm:$0xff]
      %8967 = vst [vmem:[#allocation1] ss:$9 sm:$0xff] %v7822
      %8969 = vst [vmem:[%s8497] ss:$9 sm:$0xff] %v7849
      %8971 = vst [vmem:[%s8500] ss:$9 sm:$0xff] %v7877
      %8973 = vst [vmem:[%s8503] ss:$9 sm:$0xff] %v7905
      %8975 = vst [vmem:[%s8506] ss:$9 sm:$0xff] %v7933
      %8976 = vst [vmem:[%s8508] ss:$9 sm:$0xff] %v7978
      %8978 = vst [vmem:[%s8511] ss:$9 sm:$0xff] %v8005
      %8980 = vst [vmem:[%s8514] ss:$9 sm:$0xff] %v8033
      %v8981 = vld [vmem:[#allocation1] sm:$0xff]
      %v8982 = vld [vmem:[#allocation1 + $0x9] sm:$0xff]
      %v8983 = vld [vmem:[#allocation1 + $0x12] sm:$0xff]
      %v8984 = vld [vmem:[#allocation1 + $0x1b] sm:$0xff]
      %v8985 = vld [vmem:[#allocation1 + $0x24] sm:$0xff]
      %v8986 = vld [vmem:[#allocation1 + $0x2d] sm:$0xff]
      %v8987 = vld [vmem:[#allocation1 + $0x36] sm:$0xff]
      %v8988 = vld [vmem:[#allocation1 + $0x3f] sm:$0xff]
      %8990 = vst [vmem:[#allocation1] ss:$9 sm:$0xff] %v6248
      %8992 = vst [vmem:[%s8497] ss:$9 sm:$0xff] %v7850
      %8994 = vst [vmem:[%s8500] ss:$9 sm:$0xff] %v7878
      %8996 = vst [vmem:[%s8503] ss:$9 sm:$0xff] %v7906
      %8998 = vst [vmem:[%s8506] ss:$9 sm:$0xff] %v7934
      %9000 = vst [vmem:[%s8508] ss:$9 sm:$0xff] %v6307
      %9002 = vst [vmem:[%s8511] ss:$9 sm:$0xff] %v8006
      %9004 = vst [vmem:[%s8514] ss:$9 sm:$0xff] %v8034
      %v9005 = vld [vmem:[#allocation1] sm:$0xff]
      %9007 = vst [vmem:[#allocation1] ss:$9 sm:$0xff] %v8043
      %9009 = vst [vmem:[%s8497] ss:$9 sm:$0xff] %v8071
      %v9010 = vld [vmem:[#allocation1] sm:$0xff]
      %v9011 = vld [vmem:[#allocation1 + $0x9] sm:$0xff]
      %v9012 = vld [vmem:[#allocation1 + $0x12] sm:$0xff]
      %v9013 = vld [vmem:[#allocation1 + $0x1b] sm:$0xff]
      %v9014 = vld [vmem:[#allocation1 + $0x24] sm:$0xff]
      %v9015 = vld [vmem:[#allocation1 + $0x2d] sm:$0xff]
      %v9016 = vld [vmem:[#allocation1 + $0x36] sm:$0xff]
      %v9017 = vld [vmem:[#allocation1 + $0x3f] sm:$0xff]
      %9019 = vst [vmem:[#allocation1] ss:$9 sm:$0xff] %v8052
      %9021 = vst [vmem:[%s8497] ss:$9 sm:$0xff] %v8080
      %v9022 = vld [vmem:[#allocation1] sm:$0xff]
      %v9023 = vld [vmem:[#allocation1 + $0x9] sm:$0xff]
      %v9024 = vld [vmem:[#allocation1 + $0x12] sm:$0xff]
      %v9025 = vld [vmem:[#allocation1 + $0x1b] sm:$0xff]
      %v9026 = vld [vmem:[#allocation1 + $0x24] sm:$0xff]
      %v9027 = vld [vmem:[#allocation1 + $0x2d] sm:$0xff]
      %v9028 = vld [vmem:[#allocation1 + $0x36] sm:$0xff]
      %v9029 = vld [vmem:[#allocation1 + $0x3f] sm:$0xff]
      %9031 = vst [vmem:[#allocation1] ss:$9 sm:$0xff] %v8061
      %9033 = vst [vmem:[%s8497] ss:$9 sm:$0xff] %v8089
      %v9034 = vld [vmem:[#allocation1] sm:$0xff]
      %v9035 = vld [vmem:[#allocation1 + $0x9] sm:$0xff]
      %v9036 = vld [vmem:[#allocation1 + $0x12] sm:$0xff]
      %v9037 = vld [vmem:[#allocation1 + $0x1b] sm:$0xff]
      %v9038 = vld [vmem:[#allocation1 + $0x24] sm:$0xff]
      %v9039 = vld [vmem:[#allocation1 + $0x2d] sm:$0xff]
      %v9040 = vld [vmem:[#allocation1 + $0x36] sm:$0xff]
      %v9041 = vld [vmem:[#allocation1 + $0x3f] sm:$0xff]
      %9043 = vst [vmem:[#allocation1] ss:$9 sm:$0xff] %v8062
      %9045 = vst [vmem:[%s8497] ss:$9 sm:$0xff] %v8090
      %v9046 = vld [vmem:[#allocation1] sm:$0xff]
      %v9622 = vunpack.c.l.b16 %v8091
      %v9623 = vunpack.c.l.b16 %v8092
      %v9624 = vunpack.c.l.b16 %v8093
      %v9625 = vunpack.c.l.b16 %v8094
      %v9626 = vunpack.c.l.b16 %v8095
      %v9627 = vunpack.c.l.b16 %v8096
      %v9628 = vunpack.c.l.b16 %v8097
      %v9629 = vunpack.c.l.b16 %v8098
      %v9630 = vunpack.c.l.b16 %v8099
      %v9631 = vunpack.c.l.b16 %v8100
      %v9632 = vunpack.c.l.b16 %v8101
      %v9633 = vunpack.c.l.b16 %v8102
      %v9634 = vunpack.c.l.b16 %v8103
      %v9635 = vunpack.c.l.b16 %v8104
      %v9636 = vunpack.c.l.b16 %v8105
      %v9637 = vunpack.c.l.b16 %v8106
      %v9638 = vunpack.c.l.b16 %v8107
      %v9639 = vunpack.c.l.b16 %v8108
      %v9640 = vunpack.c.l.b16 %v8109
      %v9641 = vunpack.c.l.b16 %v8110
      %v9642 = vunpack.c.l.b16 %v8111
      %v9643 = vunpack.c.l.b16 %v8112
      %v9644 = vunpack.c.l.b16 %v8113
      %v9645 = vunpack.c.l.b16 %v8114
      %v9646 = vunpack.c.l.b16 %v8115
      %v9647 = vunpack.c.l.b16 %v8116
      %v9648 = vunpack.c.l.b16 %v8117
      %v9649 = vunpack.c.l.b16 %v8118
      %v9650 = vunpack.c.l.b16 %v8119
      %v9651 = vunpack.c.l.b16 %v8120
      %v9652 = vunpack.c.l.b16 %v8121
      %v9653 = vunpack.c.l.b16 %v8122
      %v9654 = vunpack.c.l.b16 %v8123
      %v9655 = vunpack.c.l.b16 %v8124
      %v9656 = vunpack.c.l.b16 %v8125
      %v9657 = vunpack.c.l.b16 %v8126
      %v9658 = vunpack.c.l.b16 %v8127
      %v9659 = vunpack.c.l.b16 %v8128
      %v9660 = vunpack.c.l.b16 %v8129
      %v9661 = vunpack.c.l.b16 %v8130
      %v9662 = vunpack.c.l.b16 %v8131
      %v9663 = vunpack.c.l.b16 %v8132
      %v9664 = vunpack.c.l.b16 %v8133
      %v9665 = vunpack.c.l.b16 %v8134
      %v9666 = vunpack.c.l.b16 %v8135
      %v9667 = vunpack.c.l.b16 %v8136
      %v9668 = vunpack.c.l.b16 %v8137
      %v9669 = vunpack.c.l.b16 %v8138
      %v9670 = vunpack.c.l.b16 %v8139
      %v9671 = vunpack.c.l.b16 %v8140
      %v9672 = vunpack.c.l.b16 %v8141
      %v9673 = vunpack.c.l.b16 %v8142
      %v9674 = vunpack.c.l.b16 %v8143
      %v9675 = vunpack.c.l.b16 %v8144
      %v9676 = vunpack.c.l.b16 %v8145
      %v9677 = vunpack.c.l.b16 %v8146
      %v9678 = vunpack.c.l.b16 %v8147
      %v9679 = vunpack.c.l.b16 %v8148
      %v9680 = vunpack.c.l.b16 %v8149
      %v9681 = vunpack.c.l.b16 %v8150
      %v9682 = vunpack.c.l.b16 %v8151
      %v9683 = vunpack.c.l.b16 %v8152
      %v9684 = vunpack.c.l.b16 %v8153
      %v9685 = vunpack.c.l.b16 %v8154
      %v9686 = vunpack.c.l.b16 %v8155
      %v9687 = vunpack.c.l.b16 %v8156
      %v9688 = vunpack.c.l.b16 %v8157
      %v9689 = vunpack.c.l.b16 %v8158
      %v9690 = vunpack.c.l.b16 %v8159
      %v9691 = vunpack.c.l.b16 %v8160
      %v9692 = vunpack.c.l.b16 %v8161
      %v9693 = vunpack.c.l.b16 %v8162
      %v9694 = vunpack.c.l.b16 %v8163
      %v9695 = vunpack.c.l.b16 %v8164
      %v9696 = vunpack.c.l.b16 %v8165
      %v9697 = vunpack.c.l.b16 %v8166
      %v9698 = vunpack.c.l.b16 %v8167
      %v9699 = vunpack.c.l.b16 %v8168
      %v9700 = vunpack.c.l.b16 %v8169
      %v9701 = vunpack.c.l.b16 %v8170
      %v9702 = vunpack.c.l.b16 %v8171
      %v9703 = vunpack.c.l.b16 %v8172
      %v9704 = vunpack.c.l.b16 %v8173
      %v9705 = vunpack.c.l.b16 %v8174
      %v9706 = vunpack.c.l.b16 %v8175
      %v9707 = vunpack.c.l.b16 %v8176
      %v9708 = vunpack.c.l.b16 %v8177
      %v9709 = vunpack.c.l.b16 %v8178
      %v9710 = vunpack.c.l.b16 %v8179
      %v9711 = vunpack.c.l.b16 %v8180
      %v9712 = vunpack.c.l.b16 %v8181
      %v9713 = vunpack.c.l.b16 %v8182
      %v9714 = vunpack.c.l.b16 %v8183
      %v9715 = vunpack.c.l.b16 %v8184
      %v9716 = vunpack.c.l.b16 %v8185
      %v9717 = vunpack.c.l.b16 %v8186
      %v9718 = vunpack.c.l.b16 %v8187
      %v9719 = vunpack.c.l.b16 %v8188
      %v9720 = vunpack.c.l.b16 %v8189
      %v9721 = vunpack.c.l.b16 %v8190
      %v9722 = vunpack.c.l.b16 %v8191
      %v9723 = vunpack.c.l.b16 %v8192
      %v9724 = vunpack.c.l.b16 %v8193
      %v9725 = vunpack.c.l.b16 %v8194
      %v9726 = vunpack.c.l.b16 %v8195
      %v9727 = vunpack.c.l.b16 %v8196
      %v9728 = vunpack.c.l.b16 %v8197
      %v9729 = vunpack.c.l.b16 %v8198
      %v9730 = vunpack.c.l.b16 %v8199
      %v9731 = vunpack.c.l.b16 %v8200
      %v9732 = vunpack.c.l.b16 %v8201
      %v9733 = vunpack.c.l.b16 %v8202
      %v9734 = vunpack.c.l.b16 %v8203
      %v9735 = vunpack.c.l.b16 %v8204
      %v9736 = vunpack.c.l.b16 %v8205
      %v9737 = vunpack.c.l.b16 %v8206
      %v9738 = vunpack.c.l.b16 %v8207
      %v9739 = vunpack.c.l.b16 %v8208
      %v9740 = vunpack.c.l.b16 %v8209
      %v9741 = vunpack.c.l.b16 %v8210
      %v9742 = vunpack.c.l.b16 %v8211
      %v9743 = vunpack.c.l.b16 %v8212
      %v9744 = vunpack.c.l.b16 %v8213
      %v9745 = vunpack.c.l.b16 %v8214
      %v9746 = vunpack.c.l.b16 %v8215
      %v9747 = vunpack.c.l.b16 %v8216
      %v9748 = vunpack.c.l.b16 %v8217
      %v9749 = vunpack.c.l.b16 %v8218
      %v9750 = vunpack.c.l.b16 %v8219
      %v9751 = vunpack.c.l.b16 %v8220
      %v9752 = vunpack.c.l.b16 %v8221
      %v9753 = vunpack.c.l.b16 %v8222
      %v9754 = vunpack.c.l.b16 %v8223
      %v9755 = vunpack.c.l.b16 %v8224
      %v9756 = vunpack.c.l.b16 %v8225
      %v9757 = vunpack.c.l.b16 %v8226
      %v9758 = vunpack.c.l.b16 %v8227
      %v9759 = vunpack.c.l.b16 %v8228
      %v9760 = vunpack.c.l.b16 %v8229
      %v9761 = vunpack.c.l.b16 %v8230
      %v9762 = vunpack.c.l.b16 %v8231
      %v9763 = vunpack.c.l.b16 %v8232
      %v9764 = vunpack.c.l.b16 %v8233
      %v9765 = vunpack.c.l.b16 %v8234
      %v9766 = vunpack.c.l.b16 %v8235
      %v9767 = vunpack.c.l.b16 %v8236
      %v9768 = vunpack.c.l.b16 %v8237
      %v9769 = vunpack.c.l.b16 %v8238
      %v9770 = vunpack.c.l.b16 %v8239
      %v9771 = vunpack.c.l.b16 %v8240
      %v9772 = vunpack.c.l.b16 %v8241
      %v9773 = vunpack.c.l.b16 %v8242
      %v9774 = vunpack.c.l.b16 %v8243
      %v9775 = vunpack.c.l.b16 %v8244
      %v9776 = vunpack.c.l.b16 %v8245
      %v9777 = vunpack.c.l.b16 %v8246
      %v9778 = vunpack.c.l.b16 %v8247
      %v9779 = vunpack.c.l.b16 %v8248
      %v9780 = vunpack.c.l.b16 %v8249
      %v9781 = vunpack.c.l.b16 %v8250
      %v9782 = vunpack.c.l.b16 %v8251
      %v9783 = vunpack.c.l.b16 %v8252
      %v9784 = vunpack.c.l.b16 %v8253
      %v9785 = vunpack.c.l.b16 %v8254
      %v9786 = vunpack.c.l.b16 %v8255
      %v9787 = vunpack.c.l.b16 %v8256
      %v9788 = vunpack.c.l.b16 %v8257
      %v9789 = vunpack.c.l.b16 %v8258
      %v9790 = vunpack.c.l.b16 %v8259
      %v9791 = vunpack.c.l.b16 %v8260
      %v9792 = vunpack.c.l.b16 %v8261
      %v9793 = vunpack.c.l.b16 %v8262
      %v9794 = vunpack.c.l.b16 %v8263
      %v9795 = vunpack.c.l.b16 %v8264
      %v9796 = vunpack.c.l.b16 %v8265
      %v9797 = vunpack.c.l.b16 %v8266
      %v9798 = vunpack.c.l.b16 %v8267
      %v9799 = vunpack.c.l.b16 %v8268
      %v9800 = vunpack.c.l.b16 %v8269
      %v9801 = vunpack.c.l.b16 %v8270
      %v9802 = vunpack.c.l.b16 %v8271
      %v9803 = vunpack.c.l.b16 %v8272
      %v9804 = vunpack.c.l.b16 %v8273
      %v9805 = vunpack.c.l.b16 %v8274
      %v9806 = vunpack.c.l.b16 %v8275
      %v9807 = vunpack.c.l.b16 %v8276
      %v9808 = vunpack.c.l.b16 %v8277
      %v9809 = vunpack.c.l.b16 %v8278
      %v9810 = vunpack.c.l.b16 %v8279
      %v9811 = vunpack.c.l.b16 %v8280
      %v9812 = vunpack.c.l.b16 %v8281
      %v9813 = vunpack.c.l.b16 %v8282
      %v9814 = vunpack.c.l.b16 %v8283
      %v9815 = vunpack.c.l.b16 %v8284
      %v9816 = vunpack.c.l.b16 %v8285
      %v9817 = vunpack.c.l.b16 %v8286
      %v9818 = vunpack.c.l.b16 %v8287
      %v9819 = vunpack.c.l.b16 %v8288
      %v9820 = vunpack.c.l.b16 %v8289
      %v9821 = vunpack.c.l.b16 %v8290
      %v9822 = vunpack.c.l.b16 %v8291
      %v9823 = vunpack.c.l.b16 %v8292
      %v9824 = vunpack.c.l.b16 %v8293
      %v9825 = vunpack.c.l.b16 %v8294
      %v9826 = vunpack.c.l.b16 %v8295
      %v9827 = vunpack.c.l.b16 %v8296
      %v9828 = vunpack.c.l.b16 %v8297
      %v9829 = vunpack.c.l.b16 %v8298
      %v9830 = vunpack.c.l.b16 %v8299
      %v9831 = vunpack.c.l.b16 %v8300
      %v9832 = vunpack.c.l.b16 %v8301
      %v9833 = vunpack.c.l.b16 %v8302
      %v9834 = vunpack.c.l.b16 %v8303
      %v9835 = vunpack.c.l.b16 %v8304
      %v9836 = vunpack.c.l.b16 %v8305
      %v9837 = vunpack.c.l.b16 %v8306
      %v9838 = vunpack.c.l.b16 %v8307
      %v9839 = vunpack.c.l.b16 %v8308
      %v9840 = vunpack.c.l.b16 %v8309
      %v9841 = vunpack.c.l.b16 %v8310
      %v9842 = vunpack.c.l.b16 %v8311
      %v9843 = vunpack.c.l.b16 %v8312
      %v9844 = vunpack.c.l.b16 %v8313
      %v9845 = vunpack.c.l.b16 %v8314
      %v9846 = vunpack.c.l.b16 %v8315
      %v9847 = vunpack.c.l.b16 %v8316
      %v9848 = vunpack.c.l.b16 %v8317
      %v9849 = vunpack.c.l.b16 %v8318
      %v9850 = vunpack.c.l.b16 %v8319
      %v9851 = vunpack.c.l.b16 %v8320
      %v9852 = vunpack.c.l.b16 %v8321
      %v9853 = vunpack.c.l.b16 %v8322
      %v9854 = vunpack.c.l.b16 %v8323
      %v9855 = vunpack.c.l.b16 %v8324
      %v9856 = vunpack.c.l.b16 %v8325
      %v9857 = vunpack.c.l.b16 %v8326
      %v9858 = vunpack.c.l.b16 %v8327
      %v9859 = vunpack.c.l.b16 %v8328
      %v9860 = vunpack.c.l.b16 %v8329
      %v9861 = vunpack.c.l.b16 %v8330
      %v9862 = vunpack.c.l.b16 %v8331
      %v9863 = vunpack.c.l.b16 %v8332
      %v9864 = vunpack.c.l.b16 %v8333
      %v9865 = vunpack.c.l.b16 %v8334
      %v9866 = vunpack.c.l.b16 %v8335
      %v9867 = vunpack.c.l.b16 %v8336
      %v9868 = vunpack.c.l.b16 %v8337
      %v9869 = vunpack.c.l.b16 %v8338
      %v9870 = vunpack.c.l.b16 %v8339
      %v9871 = vunpack.c.l.b16 %v8340
      %v9872 = vunpack.c.l.b16 %v8341
      %v9873 = vunpack.c.l.b16 %v8342
      %v9874 = vunpack.c.l.b16 %v8343
      %v9875 = vunpack.c.l.b16 %v8344
      %v9876 = vunpack.c.l.b16 %v8345
      %v9877 = vunpack.c.l.b16 %v8346
      %v9878 = vunpack.c.l.b16 %v8347
      %v9879 = vunpack.c.l.b16 %v8348
      %v9880 = vunpack.c.l.b16 %v8349
      %v9881 = vunpack.c.l.b16 %v8350
      %v9882 = vunpack.c.l.b16 %v8351
      %v9883 = vunpack.c.l.b16 %v8352
      %v9884 = vunpack.c.l.b16 %v8353
      %v9885 = vunpack.c.l.b16 %v8354
      %v9886 = vunpack.c.l.b16 %v8355
      %v9887 = vunpack.c.l.b16 %v8356
      %v9888 = vunpack.c.l.b16 %v8357
      %v9889 = vunpack.c.l.b16 %v8358
      %v9890 = vunpack.c.l.b16 %v8359
      %v9891 = vunpack.c.l.b16 %v8360
      %v9892 = vunpack.c.l.b16 %v8361
      %v9893 = vunpack.c.l.b16 %v8362
      %v9894 = vunpack.c.l.b16 %v8363
      %v9895 = vunpack.c.l.b16 %v8364
      %v9896 = vunpack.c.l.b16 %v8365
      %v9897 = vunpack.c.l.b16 %v8366
      %v9898 = vunpack.c.l.b16 %v8367
      %v9899 = vunpack.c.l.b16 %v8368
      %v9900 = vunpack.c.l.b16 %v8369
      %v9901 = vunpack.c.l.b16 %v8370
      %v9902 = vunpack.c.l.b16 %v8371
      %v9903 = vunpack.c.l.b16 %v8372
      %v9904 = vunpack.c.l.b16 %v8373
      %v9905 = vunpack.c.l.b16 %v8374
      %v9906 = vunpack.c.l.b16 %v8375
      %v9907 = vunpack.c.l.b16 %v8376
      %v9908 = vunpack.c.l.b16 %v8377
      %v9909 = vunpack.c.l.b16 %v8378
      %v9910 = vunpack.c.l.b16 %v8379
      %v9911 = vunpack.c.l.b16 %v8380
      %v9912 = vunpack.c.l.b16 %v8381
      %v9913 = vunpack.c.l.b16 %v8382
      %v9914 = vunpack.c.l.b16 %v8383
      %v9915 = vunpack.c.l.b16 %v8384
      %v9916 = vunpack.c.l.b16 %v8385
      %v9917 = vunpack.c.l.b16 %v8386
      %v9918 = vunpack.c.l.b16 %v8387
      %v9919 = vunpack.c.l.b16 %v8388
      %v9920 = vunpack.c.l.b16 %v8389
      %v9921 = vunpack.c.l.b16 %v8390
      %v9922 = vunpack.c.l.b16 %v8391
      %v9923 = vunpack.c.l.b16 %v8392
      %v9924 = vunpack.c.l.b16 %v8393
      %v9925 = vunpack.c.l.b16 %v8394
      %v9926 = vunpack.c.l.b16 %v8395
      %v9927 = vunpack.c.l.b16 %v8396
      %v9928 = vunpack.c.l.b16 %v8397
      %v9929 = vunpack.c.l.b16 %v8398
      %v9930 = vunpack.c.l.b16 %v8399
      %v9931 = vunpack.c.l.b16 %v8400
      %v9932 = vunpack.c.l.b16 %v8401
      %v9933 = vunpack.c.l.b16 %v8402
      %v9934 = vunpack.c.l.b16 %v8403
      %v9935 = vunpack.c.l.b16 %v8404
      %v9936 = vunpack.c.l.b16 %v8405
      %v9937 = vunpack.c.l.b16 %v8406
      %v9938 = vunpack.c.l.b16 %v8407
      %v9939 = vunpack.c.l.b16 %v8408
      %v9940 = vunpack.c.l.b16 %v8409
      %v9941 = vunpack.c.l.b16 %v8410
      %v9942 = vunpack.c.l.b16 %v8411
      %v9943 = vunpack.c.l.b16 %v8412
      %v9944 = vunpack.c.l.b16 %v8413
      %v9945 = vunpack.c.l.b16 %v8414
      %v9946 = vunpack.c.l.b16 %v8415
      %v9947 = vunpack.c.l.b16 %v8416
      %v9948 = vunpack.c.l.b16 %v8417
      %v9949 = vunpack.c.l.b16 %v8418
      %v9950 = vunpack.c.l.b16 %v8419
      %v9951 = vunpack.c.l.b16 %v8420
      %v9952 = vunpack.c.l.b16 %v8421
      %v9953 = vunpack.c.l.b16 %v8422
      %v9954 = vunpack.c.l.b16 %v8423
      %v9955 = vunpack.c.l.b16 %v8424
      %v9956 = vunpack.c.l.b16 %v8425
      %v9957 = vunpack.c.l.b16 %v8426
      %v9958 = vunpack.c.l.b16 %v8427
      %v9959 = vunpack.c.l.b16 %v8428
      %v9960 = vunpack.c.l.b16 %v8429
      %v9961 = vunpack.c.l.b16 %v8430
      %v9962 = vunpack.c.l.b16 %v8431
      %v9963 = vunpack.c.l.b16 %v8432
      %v9964 = vunpack.c.l.b16 %v8433
      %v9965 = vunpack.c.l.b16 %v8434
      %v9966 = vunpack.c.l.b16 %v8435
      %v9967 = vunpack.c.l.b16 %v8436
      %v9968 = vunpack.c.l.b16 %v8437
      %v9969 = vunpack.c.l.b16 %v8438
      %v9970 = vunpack.c.l.b16 %v8439
      %v9971 = vunpack.c.l.b16 %v8440
      %v9972 = vunpack.c.l.b16 %v8441
      %v9973 = vunpack.c.l.b16 %v8442
      %v9974 = vunpack.c.l.b16 %v8443
      %v9975 = vunpack.c.l.b16 %v8444
      %v9976 = vunpack.c.l.b16 %v8445
      %v9977 = vunpack.c.l.b16 %v8446
      %v9978 = vunpack.c.l.b16 %v8447
      %v9979 = vunpack.c.l.b16 %v8448
      %v9980 = vunpack.c.l.b16 %v8449
      %v9981 = vunpack.c.l.b16 %v8450
      %v9982 = vunpack.c.l.b16 %v8451
      %v9983 = vunpack.c.l.b16 %v8452
      %v9984 = vunpack.c.l.b16 %v8453
      %v9985 = vunpack.c.l.b16 %v8454
      %v9986 = vunpack.c.l.b16 %v8455
      %v9987 = vunpack.c.l.b16 %v8456
      %v9988 = vunpack.c.l.b16 %v8457
      %v9989 = vunpack.c.l.b16 %v8458
      %v9990 = vunpack.c.l.b16 %v8459
      %v9991 = vunpack.c.l.b16 %v8460
      %v9992 = vunpack.c.l.b16 %v8461
      %v9993 = vunpack.c.l.b16 %v8462
      %v9994 = vunpack.c.l.b16 %v8463
      %v9995 = vunpack.c.l.b16 %v8464
      %v9996 = vunpack.c.l.b16 %v8465
      %v9997 = vunpack.c.l.b16 %v8466
      %v9998 = vunpack.c.l.b16 %v8467
      %v9999 = vunpack.c.l.b16 %v8468
      %v10000 = vunpack.c.l.b16 %v8469
      %v10001 = vunpack.c.l.b16 %v8470
      %v10002 = vunpack.c.l.b16 %v8471
      %v10003 = vunpack.c.l.b16 %v8472
      %v10004 = vunpack.c.l.b16 %v8473
      %v10005 = vunpack.c.l.b16 %v8474
      %v10006 = vunpack.c.l.b16 %v8475
      %v10007 = vunpack.c.l.b16 %v8476
      %v10008 = vunpack.c.l.b16 %v8477
      %v10009 = vunpack.c.l.b16 %v8478
      %v10010 = vunpack.c.l.b16 %v8479
      %v10011 = vunpack.c.l.b16 %v8480
      %v10012 = vunpack.c.l.b16 %v8481
      %v10013 = vunpack.c.l.b16 %v8482
      %v10014 = vunpack.c.l.b16 %v8483
      %v10015 = vunpack.c.l.b16 %v8484
      %v10016 = vunpack.c.l.b16 %v8485
      %v10017 = vunpack.c.l.b16 %v8486
      %v10018 = vunpack.c.l.b16 %v8487
      %v10019 = vunpack.c.l.b16 %v8488
      %v10020 = vunpack.c.l.b16 %v8489
      %v10021 = vunpack.c.l.b16 %v8490
      %v10022 = vpack.c.b16 %v9623, %v9622
      %v10023 = vpack.c.b16 %v9625, %v9624
      %v10024 = vpack.c.b16 %v9627, %v9626
      %v10025 = vpack.c.b16 %v9629, %v9628
      %v10026 = vpack.c.b16 %v9631, %v9630
      %v10027 = vpack.c.b16 %v9633, %v9632
      %v10028 = vpack.c.b16 %v9635, %v9634
      %v10029 = vpack.c.b16 %v9637, %v9636
      %v10030 = vpack.c.b16 %v9639, %v9638
      %v10031 = vpack.c.b16 %v9641, %v9640
      %v10032 = vpack.c.b16 %v9643, %v9642
      %v10033 = vpack.c.b16 %v9645, %v9644
      %v10034 = vpack.c.b16 %v9647, %v9646
      %v10035 = vpack.c.b16 %v9649, %v9648
      %v10036 = vpack.c.b16 %v9651, %v9650
      %v10037 = vpack.c.b16 %v9653, %v9652
      %v10038 = vpack.c.b16 %v9655, %v9654
      %v10039 = vpack.c.b16 %v9657, %v9656
      %v10040 = vpack.c.b16 %v9659, %v9658
      %v10041 = vpack.c.b16 %v9661, %v9660
      %v10042 = vpack.c.b16 %v9663, %v9662
      %v10043 = vpack.c.b16 %v9665, %v9664
      %v10044 = vpack.c.b16 %v9667, %v9666
      %v10045 = vpack.c.b16 %v9669, %v9668
      %v10046 = vpack.c.b16 %v9671, %v9670
      %v10047 = vpack.c.b16 %v9673, %v9672
      %v10048 = vpack.c.b16 %v9675, %v9674
      %v10049 = vpack.c.b16 %v9677, %v9676
      %v10050 = vpack.c.b16 %v9679, %v9678
      %v10051 = vpack.c.b16 %v9681, %v9680
      %v10052 = vpack.c.b16 %v9683, %v9682
      %v10053 = vpack.c.b16 %v9685, %v9684
      %v10054 = vpack.c.b16 %v9687, %v9686
      %v10055 = vpack.c.b16 %v9689, %v9688
      %v10056 = vpack.c.b16 %v9691, %v9690
      %v10057 = vpack.c.b16 %v9693, %v9692
      %v10058 = vpack.c.b16 %v9695, %v9694
      %v10059 = vpack.c.b16 %v9697, %v9696
      %v10060 = vpack.c.b16 %v9699, %v9698
      %v10061 = vpack.c.b16 %v9701, %v9700
      %v10062 = vpack.c.b16 %v9703, %v9702
      %v10063 = vpack.c.b16 %v9705, %v9704
      %v10064 = vpack.c.b16 %v9707, %v9706
      %v10065 = vpack.c.b16 %v9709, %v9708
      %v10066 = vpack.c.b16 %v9711, %v9710
      %v10067 = vpack.c.b16 %v9713, %v9712
      %v10068 = vpack.c.b16 %v9715, %v9714
      %v10069 = vpack.c.b16 %v9717, %v9716
      %v10070 = vpack.c.b16 %v9719, %v9718
      %v10071 = vpack.c.b16 %v9721, %v9720
      %v10072 = vpack.c.b16 %v9723, %v9722
      %v10073 = vpack.c.b16 %v9725, %v9724
      %v10074 = vpack.c.b16 %v9727, %v9726
      %v10075 = vpack.c.b16 %v9729, %v9728
      %v10076 = vpack.c.b16 %v9731, %v9730
      %v10077 = vpack.c.b16 %v9733, %v9732
      %v10078 = vpack.c.b16 %v9735, %v9734
      %v10079 = vpack.c.b16 %v9737, %v9736
      %v10080 = vpack.c.b16 %v9739, %v9738
      %v10081 = vpack.c.b16 %v9741, %v9740
      %v10082 = vpack.c.b16 %v9743, %v9742
      %v10083 = vpack.c.b16 %v9745, %v9744
      %v10084 = vpack.c.b16 %v9747, %v9746
      %v10085 = vpack.c.b16 %v9749, %v9748
      %v10086 = vpack.c.b16 %v9751, %v9750
      %v10087 = vpack.c.b16 %v9753, %v9752
      %v10088 = vpack.c.b16 %v9755, %v9754
      %v10089 = vpack.c.b16 %v9757, %v9756
      %v10090 = vpack.c.b16 %v9759, %v9758
      %v10091 = vpack.c.b16 %v9761, %v9760
      %v10092 = vpack.c.b16 %v9763, %v9762
      %v10093 = vpack.c.b16 %v9765, %v9764
      %v10094 = vpack.c.b16 %v9767, %v9766
      %v10095 = vpack.c.b16 %v9769, %v9768
      %v10096 = vpack.c.b16 %v9771, %v9770
      %v10097 = vpack.c.b16 %v9773, %v9772
      %v10098 = vpack.c.b16 %v9775, %v9774
      %v10099 = vpack.c.b16 %v9777, %v9776
      %v10100 = vpack.c.b16 %v9779, %v9778
      %v10101 = vpack.c.b16 %v9781, %v9780
      %v10102 = vpack.c.b16 %v9783, %v9782
      %v10103 = vpack.c.b16 %v9785, %v9784
      %v10104 = vpack.c.b16 %v9787, %v9786
      %v10105 = vpack.c.b16 %v9789, %v9788
      %v10106 = vpack.c.b16 %v9791, %v9790
      %v10107 = vpack.c.b16 %v9793, %v9792
      %v10108 = vpack.c.b16 %v9795, %v9794
      %v10109 = vpack.c.b16 %v9797, %v9796
      %v10110 = vpack.c.b16 %v9799, %v9798
      %v10111 = vpack.c.b16 %v9801, %v9800
      %v10112 = vpack.c.b16 %v9803, %v9802
      %v10113 = vpack.c.b16 %v9805, %v9804
      %v10114 = vpack.c.b16 %v9807, %v9806
      %v10115 = vpack.c.b16 %v9809, %v9808
      %v10116 = vpack.c.b16 %v9811, %v9810
      %v10117 = vpack.c.b16 %v9813, %v9812
      %v10118 = vpack.c.b16 %v9815, %v9814
      %v10119 = vpack.c.b16 %v9817, %v9816
      %v10120 = vpack.c.b16 %v9819, %v9818
      %v10121 = vpack.c.b16 %v9821, %v9820
      %v10122 = vpack.c.b16 %v9823, %v9822
      %v10123 = vpack.c.b16 %v9825, %v9824
      %v10124 = vpack.c.b16 %v9827, %v9826
      %v10125 = vpack.c.b16 %v9829, %v9828
      %v10126 = vpack.c.b16 %v9831, %v9830
      %v10127 = vpack.c.b16 %v9833, %v9832
      %v10128 = vpack.c.b16 %v9835, %v9834
      %v10129 = vpack.c.b16 %v9837, %v9836
      %v10130 = vpack.c.b16 %v9839, %v9838
      %v10131 = vpack.c.b16 %v9841, %v9840
      %v10132 = vpack.c.b16 %v9843, %v9842
      %v10133 = vpack.c.b16 %v9845, %v9844
      %v10134 = vpack.c.b16 %v9847, %v9846
      %v10135 = vpack.c.b16 %v9849, %v9848
      %v10136 = vpack.c.b16 %v9851, %v9850
      %v10137 = vpack.c.b16 %v9853, %v9852
      %v10138 = vpack.c.b16 %v9855, %v9854
      %v10139 = vpack.c.b16 %v9857, %v9856
      %v10140 = vpack.c.b16 %v9859, %v9858
      %v10141 = vpack.c.b16 %v9861, %v9860
      %v10142 = vpack.c.b16 %v9863, %v9862
      %v10143 = vpack.c.b16 %v9865, %v9864
      %v10144 = vpack.c.b16 %v9867, %v9866
      %v10145 = vpack.c.b16 %v9869, %v9868
      %v10146 = vpack.c.b16 %v9871, %v9870
      %v10147 = vpack.c.b16 %v9873, %v9872
      %v10148 = vpack.c.b16 %v9875, %v9874
      %v10149 = vpack.c.b16 %v9877, %v9876
      %v10150 = vpack.c.b16 %v9879, %v9878
      %v10151 = vpack.c.b16 %v9881, %v9880
      %v10152 = vpack.c.b16 %v9883, %v9882
      %v10153 = vpack.c.b16 %v9885, %v9884
      %v10154 = vpack.c.b16 %v9887, %v9886
      %v10155 = vpack.c.b16 %v9889, %v9888
      %v10156 = vpack.c.b16 %v9891, %v9890
      %v10157 = vpack.c.b16 %v9893, %v9892
      %v10158 = vpack.c.b16 %v9895, %v9894
      %v10159 = vpack.c.b16 %v9897, %v9896
      %v10160 = vpack.c.b16 %v9899, %v9898
      %v10161 = vpack.c.b16 %v9901, %v9900
      %v10162 = vpack.c.b16 %v9903, %v9902
      %v10163 = vpack.c.b16 %v9905, %v9904
      %v10164 = vpack.c.b16 %v9907, %v9906
      %v10165 = vpack.c.b16 %v9909, %v9908
      %v10166 = vpack.c.b16 %v9911, %v9910
      %v10167 = vpack.c.b16 %v9913, %v9912
      %v10168 = vpack.c.b16 %v9915, %v9914
      %v10169 = vpack.c.b16 %v9917, %v9916
      %v10170 = vpack.c.b16 %v9919, %v9918
      %v10171 = vpack.c.b16 %v9921, %v9920
      %v10172 = vpack.c.b16 %v9923, %v9922
      %v10173 = vpack.c.b16 %v9925, %v9924
      %v10174 = vpack.c.b16 %v9927, %v9926
      %v10175 = vpack.c.b16 %v9929, %v9928
      %v10176 = vpack.c.b16 %v9931, %v9930
      %v10177 = vpack.c.b16 %v9933, %v9932
      %v10178 = vpack.c.b16 %v9935, %v9934
      %v10179 = vpack.c.b16 %v9937, %v9936
      %v10180 = vpack.c.b16 %v9939, %v9938
      %v10181 = vpack.c.b16 %v9941, %v9940
      %v10182 = vpack.c.b16 %v9943, %v9942
      %v10183 = vpack.c.b16 %v9945, %v9944
      %v10184 = vpack.c.b16 %v9947, %v9946
      %v10185 = vpack.c.b16 %v9949, %v9948
      %v10186 = vpack.c.b16 %v9951, %v9950
      %v10187 = vpack.c.b16 %v9953, %v9952
      %v10188 = vpack.c.b16 %v9955, %v9954
      %v10189 = vpack.c.b16 %v9957, %v9956
      %v10190 = vpack.c.b16 %v9959, %v9958
      %v10191 = vpack.c.b16 %v9961, %v9960
      %v10192 = vpack.c.b16 %v9963, %v9962
      %v10193 = vpack.c.b16 %v9965, %v9964
      %v10194 = vpack.c.b16 %v9967, %v9966
      %v10195 = vpack.c.b16 %v9969, %v9968
      %v10196 = vpack.c.b16 %v9971, %v9970
      %v10197 = vpack.c.b16 %v9973, %v9972
      %v10198 = vpack.c.b16 %v9975, %v9974
      %v10199 = vpack.c.b16 %v9977, %v9976
      %v10200 = vpack.c.b16 %v9979, %v9978
      %v10201 = vpack.c.b16 %v9981, %v9980
      %v10202 = vpack.c.b16 %v9983, %v9982
      %v10203 = vpack.c.b16 %v9985, %v9984
      %v10204 = vpack.c.b16 %v9987, %v9986
      %v10205 = vpack.c.b16 %v9989, %v9988
      %v10206 = vpack.c.b16 %v9991, %v9990
      %v10207 = vpack.c.b16 %v9993, %v9992
      %v10208 = vpack.c.b16 %v9995, %v9994
      %v10209 = vpack.c.b16 %v9997, %v9996
      %v10210 = vpack.c.b16 %v9999, %v9998
      %v10211 = vpack.c.b16 %v10001, %v10000
      %v10212 = vpack.c.b16 %v10003, %v10002
      %v10213 = vpack.c.b16 %v10005, %v10004
      %v10214 = vpack.c.b16 %v10007, %v10006
      %v10215 = vpack.c.b16 %v10009, %v10008
      %v10216 = vpack.c.b16 %v10011, %v10010
      %v10217 = vpack.c.b16 %v10013, %v10012
      %v10218 = vpack.c.b16 %v10015, %v10014
      %v10219 = vpack.c.b16 %v10017, %v10016
      %v10220 = vpack.c.b16 %v10019, %v10018
      %v10221 = vpack.c.b16 %v10021, %v10020
      %10422 = vmatpush.bf16.msra.mxu0 %v10029
      %10423 = vmatpush.bf16.msra.mxu0 %v10028
      %10424 = vmatpush.bf16.msra.mxu0 %v10027
      %10425 = vmatpush.bf16.msra.mxu0 %v10026
      %10426 = vmatpush.bf16.msra.mxu0 %v10025
      %10427 = vmatpush.bf16.msra.mxu0 %v10024
      %10428 = vmatpush.bf16.msra.mxu0 %v10023
      %10429 = vmatpush.bf16.msra.mxu0 %v10022
      %10430 = vmatmul.bf16.gmra.mxu0 %v8516
      %v10431 = vpop.f32.mrf.mxu0
      %v10432 = vadd.f32 %v8493, %v10431
      %v10433 = vpop.f32.mrf.mxu0
      %v10434 = vadd.f32 %v8493, %v10433
      %10435 = vmatmul.bf16.gmra.mxu0 %v8599
      %v10436 = vpop.f32.mrf.mxu0
      %v10437 = vadd.f32 %v8493, %v10436
      %v10438 = vpop.f32.mrf.mxu0
      %v10439 = vadd.f32 %v8493, %v10438
      %10440 = vmatmul.bf16.gmra.mxu0 %v8683
      %v10441 = vpop.f32.mrf.mxu0
      %v10442 = vadd.f32 %v8493, %v10441
      %v10443 = vpop.f32.mrf.mxu0
      %v10444 = vadd.f32 %v8493, %v10443
      %10445 = vmatmul.bf16.gmra.mxu0 %v8768
      %v10446 = vpop.f32.mrf.mxu0
      %v10447 = vadd.f32 %v8493, %v10446
      %v10448 = vpop.f32.mrf.mxu0
      %v10449 = vadd.f32 %v8493, %v10448
      %10450 = vmatmul.bf16.gmra.mxu0 %v8852
      %v10451 = vpop.f32.mrf.mxu0
      %v10452 = vadd.f32 %v8493, %v10451
      %v10453 = vpop.f32.mrf.mxu0
      %v10454 = vadd.f32 %v8493, %v10453
      %10455 = vmatmul.bf16.gmra.mxu0 %v8937
      %v10456 = vpop.f32.mrf.mxu0
      %v10457 = vadd.f32 %v8493, %v10456
      %v10458 = vpop.f32.mrf.mxu0
      %v10459 = vadd.f32 %v8493, %v10458
      %10460 = vmatmul.bf16.gmra.mxu0 %v9010
      %v10461 = vpop.f32.mrf.mxu0
      %v10462 = vadd.f32 %v8493, %v10461
      %v10463 = vpop.f32.mrf.mxu0
      %10464 = vdwg.mxu0
      %10465 = vmatpush.bf16.msra.mxu0 %v10037
      %10466 = vmatpush.bf16.msra.mxu0 %v10036
      %10467 = vmatpush.bf16.msra.mxu0 %v10035
      %10468 = vmatpush.bf16.msra.mxu0 %v10034
      %10469 = vmatpush.bf16.msra.mxu0 %v10033
      %10470 = vmatpush.bf16.msra.mxu0 %v10032
      %10471 = vmatpush.bf16.msra.mxu0 %v10031
      %10472 = vmatpush.bf16.msra.mxu0 %v10030
      %10473 = vmatmul.bf16.gmra.mxu0 %v8517
      %v10474 = vpop.f32.mrf.mxu0
      %v10475 = vadd.f32 %v10432, %v10474
      %v10476 = vpop.f32.mrf.mxu0
      %v10477 = vadd.f32 %v10434, %v10476
      %10478 = vmatmul.bf16.gmra.mxu0 %v8600
      %v10479 = vpop.f32.mrf.mxu0
      %v10480 = vadd.f32 %v10437, %v10479
      %v10481 = vpop.f32.mrf.mxu0
      %v10482 = vadd.f32 %v10439, %v10481
      %10483 = vmatmul.bf16.gmra.mxu0 %v8684
      %v10484 = vpop.f32.mrf.mxu0
      %v10485 = vadd.f32 %v10442, %v10484
      %v10486 = vpop.f32.mrf.mxu0
      %v10487 = vadd.f32 %v10444, %v10486
      %10488 = vmatmul.bf16.gmra.mxu0 %v8769
      %v10489 = vpop.f32.mrf.mxu0
      %v10490 = vadd.f32 %v10447, %v10489
      %v10491 = vpop.f32.mrf.mxu0
      %v10492 = vadd.f32 %v10449, %v10491
      %10493 = vmatmul.bf16.gmra.mxu0 %v8853
      %v10494 = vpop.f32.mrf.mxu0
      %v10495 = vadd.f32 %v10452, %v10494
      %v10496 = vpop.f32.mrf.mxu0
      %v10497 = vadd.f32 %v10454, %v10496
      %10498 = vmatmul.bf16.gmra.mxu0 %v8938
      %v10499 = vpop.f32.mrf.mxu0
      %v10500 = vadd.f32 %v10457, %v10499
      %v10501 = vpop.f32.mrf.mxu0
      %v10502 = vadd.f32 %v10459, %v10501
      %10503 = vmatmul.bf16.gmra.mxu0 %v9011
      %v10504 = vpop.f32.mrf.mxu0
      %v10505 = vadd.f32 %v10462, %v10504
      %v10506 = vpop.f32.mrf.mxu0
      %10507 = vdwg.mxu0
      %10508 = vmatpush.bf16.msra.mxu0 %v10045
      %10509 = vmatpush.bf16.msra.mxu0 %v10044
      %10510 = vmatpush.bf16.msra.mxu0 %v10043
      %10511 = vmatpush.bf16.msra.mxu0 %v10042
      %10512 = vmatpush.bf16.msra.mxu0 %v10041
      %10513 = vmatpush.bf16.msra.mxu0 %v10040
      %10514 = vmatpush.bf16.msra.mxu0 %v10039
      %10515 = vmatpush.bf16.msra.mxu0 %v10038
      %10516 = vmatmul.bf16.gmra.mxu0 %v8518
      %v10517 = vpop.f32.mrf.mxu0
      %v10518 = vadd.f32 %v10475, %v10517
      %v10519 = vpop.f32.mrf.mxu0
      %v10520 = vadd.f32 %v10477, %v10519
      %10521 = vmatmul.bf16.gmra.mxu0 %v8601
      %v10522 = vpop.f32.mrf.mxu0
      %v10523 = vadd.f32 %v10480, %v10522
      %v10524 = vpop.f32.mrf.mxu0
      %v10525 = vadd.f32 %v10482, %v10524
      %10526 = vmatmul.bf16.gmra.mxu0 %v8685
      %v10527 = vpop.f32.mrf.mxu0
      %v10528 = vadd.f32 %v10485, %v10527
      %v10529 = vpop.f32.mrf.mxu0
      %v10530 = vadd.f32 %v10487, %v10529
      %10531 = vmatmul.bf16.gmra.mxu0 %v8770
      %v10532 = vpop.f32.mrf.mxu0
      %v10533 = vadd.f32 %v10490, %v10532
      %v10534 = vpop.f32.mrf.mxu0
      %v10535 = vadd.f32 %v10492, %v10534
      %10536 = vmatmul.bf16.gmra.mxu0 %v8854
      %v10537 = vpop.f32.mrf.mxu0
      %v10538 = vadd.f32 %v10495, %v10537
      %v10539 = vpop.f32.mrf.mxu0
      %v10540 = vadd.f32 %v10497, %v10539
      %10541 = vmatmul.bf16.gmra.mxu0 %v8939
      %v10542 = vpop.f32.mrf.mxu0
      %v10543 = vadd.f32 %v10500, %v10542
      %v10544 = vpop.f32.mrf.mxu0
      %v10545 = vadd.f32 %v10502, %v10544
      %10546 = vmatmul.bf16.gmra.mxu0 %v9012
      %v10547 = vpop.f32.mrf.mxu0
      %v10548 = vadd.f32 %v10505, %v10547
      %v10549 = vpop.f32.mrf.mxu0
      %10550 = vdwg.mxu0
      %10551 = vmatpush.bf16.msra.mxu0 %v10053
      %10552 = vmatpush.bf16.msra.mxu0 %v10052
      %10553 = vmatpush.bf16.msra.mxu0 %v10051
      %10554 = vmatpush.bf16.msra.mxu0 %v10050
      %10555 = vmatpush.bf16.msra.mxu0 %v10049
      %10556 = vmatpush.bf16.msra.mxu0 %v10048
      %10557 = vmatpush.bf16.msra.mxu0 %v10047
      %10558 = vmatpush.bf16.msra.mxu0 %v10046
      %10559 = vmatmul.bf16.gmra.mxu0 %v8519
      %v10560 = vpop.f32.mrf.mxu0
      %v10561 = vadd.f32 %v10518, %v10560
      %v10562 = vpop.f32.mrf.mxu0
      %v10563 = vadd.f32 %v10520, %v10562
      %10564 = vmatmul.bf16.gmra.mxu0 %v8602
      %v10565 = vpop.f32.mrf.mxu0
      %v10566 = vadd.f32 %v10523, %v10565
      %v10567 = vpop.f32.mrf.mxu0
      %v10568 = vadd.f32 %v10525, %v10567
      %10569 = vmatmul.bf16.gmra.mxu0 %v8686
      %v10570 = vpop.f32.mrf.mxu0
      %v10571 = vadd.f32 %v10528, %v10570
      %v10572 = vpop.f32.mrf.mxu0
      %v10573 = vadd.f32 %v10530, %v10572
      %10574 = vmatmul.bf16.gmra.mxu0 %v8771
      %v10575 = vpop.f32.mrf.mxu0
      %v10576 = vadd.f32 %v10533, %v10575
      %v10577 = vpop.f32.mrf.mxu0
      %v10578 = vadd.f32 %v10535, %v10577
      %10579 = vmatmul.bf16.gmra.mxu0 %v8855
      %v10580 = vpop.f32.mrf.mxu0
      %v10581 = vadd.f32 %v10538, %v10580
      %v10582 = vpop.f32.mrf.mxu0
      %v10583 = vadd.f32 %v10540, %v10582
      %10584 = vmatmul.bf16.gmra.mxu0 %v8940
      %v10585 = vpop.f32.mrf.mxu0
      %v10586 = vadd.f32 %v10543, %v10585
      %v10587 = vpop.f32.mrf.mxu0
      %v10588 = vadd.f32 %v10545, %v10587
      %10589 = vmatmul.bf16.gmra.mxu0 %v9013
      %v10590 = vpop.f32.mrf.mxu0
      %v10591 = vadd.f32 %v10548, %v10590
      %v10592 = vpop.f32.mrf.mxu0
      %10593 = vdwg.mxu0
      %10594 = vmatpush.bf16.msra.mxu0 %v10061
      %10595 = vmatpush.bf16.msra.mxu0 %v10060
      %10596 = vmatpush.bf16.msra.mxu0 %v10059
      %10597 = vmatpush.bf16.msra.mxu0 %v10058
      %10598 = vmatpush.bf16.msra.mxu0 %v10057
      %10599 = vmatpush.bf16.msra.mxu0 %v10056
      %10600 = vmatpush.bf16.msra.mxu0 %v10055
      %10601 = vmatpush.bf16.msra.mxu0 %v10054
      %10602 = vmatmul.bf16.gmra.mxu0 %v8520
      %v10603 = vpop.f32.mrf.mxu0
      %v10604 = vadd.f32 %v10561, %v10603
      %v10605 = vpop.f32.mrf.mxu0
      %v10606 = vadd.f32 %v10563, %v10605
      %10607 = vmatmul.bf16.gmra.mxu0 %v8603
      %v10608 = vpop.f32.mrf.mxu0
      %v10609 = vadd.f32 %v10566, %v10608
      %v10610 = vpop.f32.mrf.mxu0
      %v10611 = vadd.f32 %v10568, %v10610
      %10612 = vmatmul.bf16.gmra.mxu0 %v8687
      %v10613 = vpop.f32.mrf.mxu0
      %v10614 = vadd.f32 %v10571, %v10613
      %v10615 = vpop.f32.mrf.mxu0
      %v10616 = vadd.f32 %v10573, %v10615
      %10617 = vmatmul.bf16.gmra.mxu0 %v8772
      %v10618 = vpop.f32.mrf.mxu0
      %v10619 = vadd.f32 %v10576, %v10618
      %v10620 = vpop.f32.mrf.mxu0
      %v10621 = vadd.f32 %v10578, %v10620
      %10622 = vmatmul.bf16.gmra.mxu0 %v8856
      %v10623 = vpop.f32.mrf.mxu0
      %v10624 = vadd.f32 %v10581, %v10623
      %v10625 = vpop.f32.mrf.mxu0
      %v10626 = vadd.f32 %v10583, %v10625
      %10627 = vmatmul.bf16.gmra.mxu0 %v8941
      %v10628 = vpop.f32.mrf.mxu0
      %v10629 = vadd.f32 %v10586, %v10628
      %v10630 = vpop.f32.mrf.mxu0
      %v10631 = vadd.f32 %v10588, %v10630
      %10632 = vmatmul.bf16.gmra.mxu0 %v9014
      %v10633 = vpop.f32.mrf.mxu0
      %v10634 = vadd.f32 %v10591, %v10633
      %v10635 = vpop.f32.mrf.mxu0
      %10636 = vdwg.mxu0
      %10637 = vmatpush.bf16.msra.mxu0 %v10069
      %10638 = vmatpush.bf16.msra.mxu0 %v10068
      %10639 = vmatpush.bf16.msra.mxu0 %v10067
      %10640 = vmatpush.bf16.msra.mxu0 %v10066
      %10641 = vmatpush.bf16.msra.mxu0 %v10065
      %10642 = vmatpush.bf16.msra.mxu0 %v10064
      %10643 = vmatpush.bf16.msra.mxu0 %v10063
      %10644 = vmatpush.bf16.msra.mxu0 %v10062
      %10645 = vmatmul.bf16.gmra.mxu0 %v8521
      %v10646 = vpop.f32.mrf.mxu0
      %v10647 = vadd.f32 %v10604, %v10646
      %v10648 = vpop.f32.mrf.mxu0
      %v10649 = vadd.f32 %v10606, %v10648
      %10650 = vmatmul.bf16.gmra.mxu0 %v8604
      %v10651 = vpop.f32.mrf.mxu0
      %v10652 = vadd.f32 %v10609, %v10651
      %v10653 = vpop.f32.mrf.mxu0
      %v10654 = vadd.f32 %v10611, %v10653
      %10655 = vmatmul.bf16.gmra.mxu0 %v8688
      %v10656 = vpop.f32.mrf.mxu0
      %v10657 = vadd.f32 %v10614, %v10656
      %v10658 = vpop.f32.mrf.mxu0
      %v10659 = vadd.f32 %v10616, %v10658
      %10660 = vmatmul.bf16.gmra.mxu0 %v8773
      %v10661 = vpop.f32.mrf.mxu0
      %v10662 = vadd.f32 %v10619, %v10661
      %v10663 = vpop.f32.mrf.mxu0
      %v10664 = vadd.f32 %v10621, %v10663
      %10665 = vmatmul.bf16.gmra.mxu0 %v8857
      %v10666 = vpop.f32.mrf.mxu0
      %v10667 = vadd.f32 %v10624, %v10666
      %v10668 = vpop.f32.mrf.mxu0
      %v10669 = vadd.f32 %v10626, %v10668
      %10670 = vmatmul.bf16.gmra.mxu0 %v8942
      %v10671 = vpop.f32.mrf.mxu0
      %v10672 = vadd.f32 %v10629, %v10671
      %v10673 = vpop.f32.mrf.mxu0
      %v10674 = vadd.f32 %v10631, %v10673
      %10675 = vmatmul.bf16.gmra.mxu0 %v9015
      %v10676 = vpop.f32.mrf.mxu0
      %v10677 = vadd.f32 %v10634, %v10676
      %v10678 = vpop.f32.mrf.mxu0
      %10679 = vdwg.mxu0
      %10680 = vmatpush.bf16.msra.mxu0 %v10077
      %10681 = vmatpush.bf16.msra.mxu0 %v10076
      %10682 = vmatpush.bf16.msra.mxu0 %v10075
      %10683 = vmatpush.bf16.msra.mxu0 %v10074
      %10684 = vmatpush.bf16.msra.mxu0 %v10073
      %10685 = vmatpush.bf16.msra.mxu0 %v10072
      %10686 = vmatpush.bf16.msra.mxu0 %v10071
      %10687 = vmatpush.bf16.msra.mxu0 %v10070
      %10688 = vmatmul.bf16.gmra.mxu0 %v8522
      %v10689 = vpop.f32.mrf.mxu0
      %v10690 = vadd.f32 %v10647, %v10689
      %v10691 = vpop.f32.mrf.mxu0
      %v10692 = vadd.f32 %v10649, %v10691
      %10693 = vmatmul.bf16.gmra.mxu0 %v8605
      %v10694 = vpop.f32.mrf.mxu0
      %v10695 = vadd.f32 %v10652, %v10694
      %v10696 = vpop.f32.mrf.mxu0
      %v10697 = vadd.f32 %v10654, %v10696
      %10698 = vmatmul.bf16.gmra.mxu0 %v8689
      %v10699 = vpop.f32.mrf.mxu0
      %v10700 = vadd.f32 %v10657, %v10699
      %v10701 = vpop.f32.mrf.mxu0
      %v10702 = vadd.f32 %v10659, %v10701
      %10703 = vmatmul.bf16.gmra.mxu0 %v8774
      %v10704 = vpop.f32.mrf.mxu0
      %v10705 = vadd.f32 %v10662, %v10704
      %v10706 = vpop.f32.mrf.mxu0
      %v10707 = vadd.f32 %v10664, %v10706
      %10708 = vmatmul.bf16.gmra.mxu0 %v8858
      %v10709 = vpop.f32.mrf.mxu0
      %v10710 = vadd.f32 %v10667, %v10709
      %v10711 = vpop.f32.mrf.mxu0
      %v10712 = vadd.f32 %v10669, %v10711
      %10713 = vmatmul.bf16.gmra.mxu0 %v8943
      %v10714 = vpop.f32.mrf.mxu0
      %v10715 = vadd.f32 %v10672, %v10714
      %v10716 = vpop.f32.mrf.mxu0
      %v10717 = vadd.f32 %v10674, %v10716
      %10718 = vmatmul.bf16.gmra.mxu0 %v9016
      %v10719 = vpop.f32.mrf.mxu0
      %v10720 = vadd.f32 %v10677, %v10719
      %v10721 = vpop.f32.mrf.mxu0
      %10722 = vdwg.mxu0
      %10723 = vmatpush.bf16.msra.mxu0 %v10085
      %10724 = vmatpush.bf16.msra.mxu0 %v10084
      %10725 = vmatpush.bf16.msra.mxu0 %v10083
      %10726 = vmatpush.bf16.msra.mxu0 %v10082
      %10727 = vmatpush.bf16.msra.mxu0 %v10081
      %10728 = vmatpush.bf16.msra.mxu0 %v10080
      %10729 = vmatpush.bf16.msra.mxu0 %v10079
      %10730 = vmatpush.bf16.msra.mxu0 %v10078
      %10731 = vmatmul.bf16.gmra.mxu0 %v8523
      %v10732 = vpop.f32.mrf.mxu0
      %v10733 = vadd.f32 %v10690, %v10732
      %v10734 = vpop.f32.mrf.mxu0
      %v10735 = vadd.f32 %v10692, %v10734
      %10736 = vmatmul.bf16.gmra.mxu0 %v8606
      %v10737 = vpop.f32.mrf.mxu0
      %v10738 = vadd.f32 %v10695, %v10737
      %v10739 = vpop.f32.mrf.mxu0
      %v10740 = vadd.f32 %v10697, %v10739
      %10741 = vmatmul.bf16.gmra.mxu0 %v8690
      %v10742 = vpop.f32.mrf.mxu0
      %v10743 = vadd.f32 %v10700, %v10742
      %v10744 = vpop.f32.mrf.mxu0
      %v10745 = vadd.f32 %v10702, %v10744
      %10746 = vmatmul.bf16.gmra.mxu0 %v8775
      %v10747 = vpop.f32.mrf.mxu0
      %v10748 = vadd.f32 %v10705, %v10747
      %v10749 = vpop.f32.mrf.mxu0
      %v10750 = vadd.f32 %v10707, %v10749
      %10751 = vmatmul.bf16.gmra.mxu0 %v8859
      %v10752 = vpop.f32.mrf.mxu0
      %v10753 = vadd.f32 %v10710, %v10752
      %v10754 = vpop.f32.mrf.mxu0
      %v10755 = vadd.f32 %v10712, %v10754
      %10756 = vmatmul.bf16.gmra.mxu0 %v8944
      %v10757 = vpop.f32.mrf.mxu0
      %v10758 = vadd.f32 %v10715, %v10757
      %v10759 = vpop.f32.mrf.mxu0
      %v10760 = vadd.f32 %v10717, %v10759
      %10761 = vmatmul.bf16.gmra.mxu0 %v9017
      %v10762 = vpop.f32.mrf.mxu0
      %v10763 = vadd.f32 %v10720, %v10762
      %v10764 = vpop.f32.mrf.mxu0
      %10765 = vdwg.mxu0
      %10766 = vmatpush.bf16.msra.mxu0 %v10093
      %10767 = vmatpush.bf16.msra.mxu0 %v10092
      %10768 = vmatpush.bf16.msra.mxu0 %v10091
      %10769 = vmatpush.bf16.msra.mxu0 %v10090
      %10770 = vmatpush.bf16.msra.mxu0 %v10089
      %10771 = vmatpush.bf16.msra.mxu0 %v10088
      %10772 = vmatpush.bf16.msra.mxu0 %v10087
      %10773 = vmatpush.bf16.msra.mxu0 %v10086
      %10774 = vmatmul.bf16.gmra.mxu0 %v8538
      %v10775 = vpop.f32.mrf.mxu0
      %v10776 = vadd.f32 %v10733, %v10775
      %v10777 = vpop.f32.mrf.mxu0
      %v10778 = vadd.f32 %v10735, %v10777
      %10779 = vmatmul.bf16.gmra.mxu0 %v8621
      %v10780 = vpop.f32.mrf.mxu0
      %v10781 = vadd.f32 %v10738, %v10780
      %v10782 = vpop.f32.mrf.mxu0
      %v10783 = vadd.f32 %v10740, %v10782
      %10784 = vmatmul.bf16.gmra.mxu0 %v8706
      %v10785 = vpop.f32.mrf.mxu0
      %v10786 = vadd.f32 %v10743, %v10785
      %v10787 = vpop.f32.mrf.mxu0
      %v10788 = vadd.f32 %v10745, %v10787
      %10789 = vmatmul.bf16.gmra.mxu0 %v8790
      %v10790 = vpop.f32.mrf.mxu0
      %v10791 = vadd.f32 %v10748, %v10790
      %v10792 = vpop.f32.mrf.mxu0
      %v10793 = vadd.f32 %v10750, %v10792
      %10794 = vmatmul.bf16.gmra.mxu0 %v8875
      %v10795 = vpop.f32.mrf.mxu0
      %v10796 = vadd.f32 %v10753, %v10795
      %v10797 = vpop.f32.mrf.mxu0
      %v10798 = vadd.f32 %v10755, %v10797
      %10799 = vmatmul.bf16.gmra.mxu0 %v8959
      %v10800 = vpop.f32.mrf.mxu0
      %v10801 = vadd.f32 %v10758, %v10800
      %v10802 = vpop.f32.mrf.mxu0
      %v10803 = vadd.f32 %v10760, %v10802
      %10804 = vmatmul.bf16.gmra.mxu0 %v9022
      %v10805 = vpop.f32.mrf.mxu0
      %v10806 = vadd.f32 %v10763, %v10805
      %v10807 = vpop.f32.mrf.mxu0
      %10808 = vdwg.mxu0
      %10809 = vmatpush.bf16.msra.mxu0 %v10101
      %10810 = vmatpush.bf16.msra.mxu0 %v10100
      %10811 = vmatpush.bf16.msra.mxu0 %v10099
      %10812 = vmatpush.bf16.msra.mxu0 %v10098
      %10813 = vmatpush.bf16.msra.mxu0 %v10097
      %10814 = vmatpush.bf16.msra.mxu0 %v10096
      %10815 = vmatpush.bf16.msra.mxu0 %v10095
      %10816 = vmatpush.bf16.msra.mxu0 %v10094
      %10817 = vmatmul.bf16.gmra.mxu0 %v8539
      %v10818 = vpop.f32.mrf.mxu0
      %v10819 = vadd.f32 %v10776, %v10818
      %v10820 = vpop.f32.mrf.mxu0
      %v10821 = vadd.f32 %v10778, %v10820
      %10822 = vmatmul.bf16.gmra.mxu0 %v8622
      %v10823 = vpop.f32.mrf.mxu0
      %v10824 = vadd.f32 %v10781, %v10823
      %v10825 = vpop.f32.mrf.mxu0
      %v10826 = vadd.f32 %v10783, %v10825
      %10827 = vmatmul.bf16.gmra.mxu0 %v8707
      %v10828 = vpop.f32.mrf.mxu0
      %v10829 = vadd.f32 %v10786, %v10828
      %v10830 = vpop.f32.mrf.mxu0
      %v10831 = vadd.f32 %v10788, %v10830
      %10832 = vmatmul.bf16.gmra.mxu0 %v8791
      %v10833 = vpop.f32.mrf.mxu0
      %v10834 = vadd.f32 %v10791, %v10833
      %v10835 = vpop.f32.mrf.mxu0
      %v10836 = vadd.f32 %v10793, %v10835
      %10837 = vmatmul.bf16.gmra.mxu0 %v8876
      %v10838 = vpop.f32.mrf.mxu0
      %v10839 = vadd.f32 %v10796, %v10838
      %v10840 = vpop.f32.mrf.mxu0
      %v10841 = vadd.f32 %v10798, %v10840
      %10842 = vmatmul.bf16.gmra.mxu0 %v8960
      %v10843 = vpop.f32.mrf.mxu0
      %v10844 = vadd.f32 %v10801, %v10843
      %v10845 = vpop.f32.mrf.mxu0
      %v10846 = vadd.f32 %v10803, %v10845
      %10847 = vmatmul.bf16.gmra.mxu0 %v9023
      %v10848 = vpop.f32.mrf.mxu0
      %v10849 = vadd.f32 %v10806, %v10848
      %v10850 = vpop.f32.mrf.mxu0
      %10851 = vdwg.mxu0
      %10852 = vmatpush.bf16.msra.mxu0 %v10109
      %10853 = vmatpush.bf16.msra.mxu0 %v10108
      %10854 = vmatpush.bf16.msra.mxu0 %v10107
      %10855 = vmatpush.bf16.msra.mxu0 %v10106
      %10856 = vmatpush.bf16.msra.mxu0 %v10105
      %10857 = vmatpush.bf16.msra.mxu0 %v10104
      %10858 = vmatpush.bf16.msra.mxu0 %v10103
      %10859 = vmatpush.bf16.msra.mxu0 %v10102
      %10860 = vmatmul.bf16.gmra.mxu0 %v8540
      %v10861 = vpop.f32.mrf.mxu0
      %v10862 = vadd.f32 %v10819, %v10861
      %v10863 = vpop.f32.mrf.mxu0
      %v10864 = vadd.f32 %v10821, %v10863
      %10865 = vmatmul.bf16.gmra.mxu0 %v8623
      %v10866 = vpop.f32.mrf.mxu0
      %v10867 = vadd.f32 %v10824, %v10866
      %v10868 = vpop.f32.mrf.mxu0
      %v10869 = vadd.f32 %v10826, %v10868
      %10870 = vmatmul.bf16.gmra.mxu0 %v8708
      %v10871 = vpop.f32.mrf.mxu0
      %v10872 = vadd.f32 %v10829, %v10871
      %v10873 = vpop.f32.mrf.mxu0
      %v10874 = vadd.f32 %v10831, %v10873
      %10875 = vmatmul.bf16.gmra.mxu0 %v8792
      %v10876 = vpop.f32.mrf.mxu0
      %v10877 = vadd.f32 %v10834, %v10876
      %v10878 = vpop.f32.mrf.mxu0
      %v10879 = vadd.f32 %v10836, %v10878
      %10880 = vmatmul.bf16.gmra.mxu0 %v8877
      %v10881 = vpop.f32.mrf.mxu0
      %v10882 = vadd.f32 %v10839, %v10881
      %v10883 = vpop.f32.mrf.mxu0
      %v10884 = vadd.f32 %v10841, %v10883
      %10885 = vmatmul.bf16.gmra.mxu0 %v8961
      %v10886 = vpop.f32.mrf.mxu0
      %v10887 = vadd.f32 %v10844, %v10886
      %v10888 = vpop.f32.mrf.mxu0
      %v10889 = vadd.f32 %v10846, %v10888
      %10890 = vmatmul.bf16.gmra.mxu0 %v9024
      %v10891 = vpop.f32.mrf.mxu0
      %v10892 = vadd.f32 %v10849, %v10891
      %v10893 = vpop.f32.mrf.mxu0
      %10894 = vdwg.mxu0
      %10895 = vmatpush.bf16.msra.mxu0 %v10117
      %10896 = vmatpush.bf16.msra.mxu0 %v10116
      %10897 = vmatpush.bf16.msra.mxu0 %v10115
      %10898 = vmatpush.bf16.msra.mxu0 %v10114
      %10899 = vmatpush.bf16.msra.mxu0 %v10113
      %10900 = vmatpush.bf16.msra.mxu0 %v10112
      %10901 = vmatpush.bf16.msra.mxu0 %v10111
      %10902 = vmatpush.bf16.msra.mxu0 %v10110
      %10903 = vmatmul.bf16.gmra.mxu0 %v8541
      %v10904 = vpop.f32.mrf.mxu0
      %v10905 = vadd.f32 %v10862, %v10904
      %v10906 = vpop.f32.mrf.mxu0
      %v10907 = vadd.f32 %v10864, %v10906
      %10908 = vmatmul.bf16.gmra.mxu0 %v8624
      %v10909 = vpop.f32.mrf.mxu0
      %v10910 = vadd.f32 %v10867, %v10909
      %v10911 = vpop.f32.mrf.mxu0
      %v10912 = vadd.f32 %v10869, %v10911
      %10913 = vmatmul.bf16.gmra.mxu0 %v8709
      %v10914 = vpop.f32.mrf.mxu0
      %v10915 = vadd.f32 %v10872, %v10914
      %v10916 = vpop.f32.mrf.mxu0
      %v10917 = vadd.f32 %v10874, %v10916
      %10918 = vmatmul.bf16.gmra.mxu0 %v8793
      %v10919 = vpop.f32.mrf.mxu0
      %v10920 = vadd.f32 %v10877, %v10919
      %v10921 = vpop.f32.mrf.mxu0
      %v10922 = vadd.f32 %v10879, %v10921
      %10923 = vmatmul.bf16.gmra.mxu0 %v8878
      %v10924 = vpop.f32.mrf.mxu0
      %v10925 = vadd.f32 %v10882, %v10924
      %v10926 = vpop.f32.mrf.mxu0
      %v10927 = vadd.f32 %v10884, %v10926
      %10928 = vmatmul.bf16.gmra.mxu0 %v8962
      %v10929 = vpop.f32.mrf.mxu0
      %v10930 = vadd.f32 %v10887, %v10929
      %v10931 = vpop.f32.mrf.mxu0
      %v10932 = vadd.f32 %v10889, %v10931
      %10933 = vmatmul.bf16.gmra.mxu0 %v9025
      %v10934 = vpop.f32.mrf.mxu0
      %v10935 = vadd.f32 %v10892, %v10934
      %v10936 = vpop.f32.mrf.mxu0
      %10937 = vdwg.mxu0
      %10938 = vmatpush.bf16.msra.mxu0 %v10125
      %10939 = vmatpush.bf16.msra.mxu0 %v10124
      %10940 = vmatpush.bf16.msra.mxu0 %v10123
      %10941 = vmatpush.bf16.msra.mxu0 %v10122
      %10942 = vmatpush.bf16.msra.mxu0 %v10121
      %10943 = vmatpush.bf16.msra.mxu0 %v10120
      %10944 = vmatpush.bf16.msra.mxu0 %v10119
      %10945 = vmatpush.bf16.msra.mxu0 %v10118
      %10946 = vmatmul.bf16.gmra.mxu0 %v8542
      %v10947 = vpop.f32.mrf.mxu0
      %v10948 = vadd.f32 %v10905, %v10947
      %v10949 = vpop.f32.mrf.mxu0
      %v10950 = vadd.f32 %v10907, %v10949
      %10951 = vmatmul.bf16.gmra.mxu0 %v8625
      %v10952 = vpop.f32.mrf.mxu0
      %v10953 = vadd.f32 %v10910, %v10952
      %v10954 = vpop.f32.mrf.mxu0
      %v10955 = vadd.f32 %v10912, %v10954
      %10956 = vmatmul.bf16.gmra.mxu0 %v8710
      %v10957 = vpop.f32.mrf.mxu0
      %v10958 = vadd.f32 %v10915, %v10957
      %v10959 = vpop.f32.mrf.mxu0
      %v10960 = vadd.f32 %v10917, %v10959
      %10961 = vmatmul.bf16.gmra.mxu0 %v8794
      %v10962 = vpop.f32.mrf.mxu0
      %v10963 = vadd.f32 %v10920, %v10962
      %v10964 = vpop.f32.mrf.mxu0
      %v10965 = vadd.f32 %v10922, %v10964
      %10966 = vmatmul.bf16.gmra.mxu0 %v8879
      %v10967 = vpop.f32.mrf.mxu0
      %v10968 = vadd.f32 %v10925, %v10967
      %v10969 = vpop.f32.mrf.mxu0
      %v10970 = vadd.f32 %v10927, %v10969
      %10971 = vmatmul.bf16.gmra.mxu0 %v8963
      %v10972 = vpop.f32.mrf.mxu0
      %v10973 = vadd.f32 %v10930, %v10972
      %v10974 = vpop.f32.mrf.mxu0
      %v10975 = vadd.f32 %v10932, %v10974
      %10976 = vmatmul.bf16.gmra.mxu0 %v9026
      %v10977 = vpop.f32.mrf.mxu0
      %v10978 = vadd.f32 %v10935, %v10977
      %v10979 = vpop.f32.mrf.mxu0
      %10980 = vdwg.mxu0
      %10981 = vmatpush.bf16.msra.mxu0 %v10133
      %10982 = vmatpush.bf16.msra.mxu0 %v10132
      %10983 = vmatpush.bf16.msra.mxu0 %v10131
      %10984 = vmatpush.bf16.msra.mxu0 %v10130
      %10985 = vmatpush.bf16.msra.mxu0 %v10129
      %10986 = vmatpush.bf16.msra.mxu0 %v10128
      %10987 = vmatpush.bf16.msra.mxu0 %v10127
      %10988 = vmatpush.bf16.msra.mxu0 %v10126
      %10989 = vmatmul.bf16.gmra.mxu0 %v8543
      %v10990 = vpop.f32.mrf.mxu0
      %v10991 = vadd.f32 %v10948, %v10990
      %v10992 = vpop.f32.mrf.mxu0
      %v10993 = vadd.f32 %v10950, %v10992
      %10994 = vmatmul.bf16.gmra.mxu0 %v8626
      %v10995 = vpop.f32.mrf.mxu0
      %v10996 = vadd.f32 %v10953, %v10995
      %v10997 = vpop.f32.mrf.mxu0
      %v10998 = vadd.f32 %v10955, %v10997
      %10999 = vmatmul.bf16.gmra.mxu0 %v8711
      %v11000 = vpop.f32.mrf.mxu0
      %v11001 = vadd.f32 %v10958, %v11000
      %v11002 = vpop.f32.mrf.mxu0
      %v11003 = vadd.f32 %v10960, %v11002
      %11004 = vmatmul.bf16.gmra.mxu0 %v8795
      %v11005 = vpop.f32.mrf.mxu0
      %v11006 = vadd.f32 %v10963, %v11005
      %v11007 = vpop.f32.mrf.mxu0
      %v11008 = vadd.f32 %v10965, %v11007
      %11009 = vmatmul.bf16.gmra.mxu0 %v8880
      %v11010 = vpop.f32.mrf.mxu0
      %v11011 = vadd.f32 %v10968, %v11010
      %v11012 = vpop.f32.mrf.mxu0
      %v11013 = vadd.f32 %v10970, %v11012
      %11014 = vmatmul.bf16.gmra.mxu0 %v8964
      %v11015 = vpop.f32.mrf.mxu0
      %v11016 = vadd.f32 %v10973, %v11015
      %v11017 = vpop.f32.mrf.mxu0
      %v11018 = vadd.f32 %v10975, %v11017
      %11019 = vmatmul.bf16.gmra.mxu0 %v9027
      %v11020 = vpop.f32.mrf.mxu0
      %v11021 = vadd.f32 %v10978, %v11020
      %v11022 = vpop.f32.mrf.mxu0
      %11023 = vdwg.mxu0
      %11024 = vmatpush.bf16.msra.mxu0 %v10141
      %11025 = vmatpush.bf16.msra.mxu0 %v10140
      %11026 = vmatpush.bf16.msra.mxu0 %v10139
      %11027 = vmatpush.bf16.msra.mxu0 %v10138
      %11028 = vmatpush.bf16.msra.mxu0 %v10137
      %11029 = vmatpush.bf16.msra.mxu0 %v10136
      %11030 = vmatpush.bf16.msra.mxu0 %v10135
      %11031 = vmatpush.bf16.msra.mxu0 %v10134
      %11032 = vmatmul.bf16.gmra.mxu0 %v8544
      %v11033 = vpop.f32.mrf.mxu0
      %v11034 = vadd.f32 %v10991, %v11033
      %v11035 = vpop.f32.mrf.mxu0
      %v11036 = vadd.f32 %v10993, %v11035
      %11037 = vmatmul.bf16.gmra.mxu0 %v8627
      %v11038 = vpop.f32.mrf.mxu0
      %v11039 = vadd.f32 %v10996, %v11038
      %v11040 = vpop.f32.mrf.mxu0
      %v11041 = vadd.f32 %v10998, %v11040
      %11042 = vmatmul.bf16.gmra.mxu0 %v8712
      %v11043 = vpop.f32.mrf.mxu0
      %v11044 = vadd.f32 %v11001, %v11043
      %v11045 = vpop.f32.mrf.mxu0
      %v11046 = vadd.f32 %v11003, %v11045
      %11047 = vmatmul.bf16.gmra.mxu0 %v8796
      %v11048 = vpop.f32.mrf.mxu0
      %v11049 = vadd.f32 %v11006, %v11048
      %v11050 = vpop.f32.mrf.mxu0
      %v11051 = vadd.f32 %v11008, %v11050
      %11052 = vmatmul.bf16.gmra.mxu0 %v8881
      %v11053 = vpop.f32.mrf.mxu0
      %v11054 = vadd.f32 %v11011, %v11053
      %v11055 = vpop.f32.mrf.mxu0
      %v11056 = vadd.f32 %v11013, %v11055
      %11057 = vmatmul.bf16.gmra.mxu0 %v8965
      %v11058 = vpop.f32.mrf.mxu0
      %v11059 = vadd.f32 %v11016, %v11058
      %v11060 = vpop.f32.mrf.mxu0
      %v11061 = vadd.f32 %v11018, %v11060
      %11062 = vmatmul.bf16.gmra.mxu0 %v9028
      %v11063 = vpop.f32.mrf.mxu0
      %v11064 = vadd.f32 %v11021, %v11063
      %v11065 = vpop.f32.mrf.mxu0
      %11066 = vdwg.mxu0
      %11067 = vmatpush.bf16.msra.mxu0 %v10149
      %11068 = vmatpush.bf16.msra.mxu0 %v10148
      %11069 = vmatpush.bf16.msra.mxu0 %v10147
      %11070 = vmatpush.bf16.msra.mxu0 %v10146
      %11071 = vmatpush.bf16.msra.mxu0 %v10145
      %11072 = vmatpush.bf16.msra.mxu0 %v10144
      %11073 = vmatpush.bf16.msra.mxu0 %v10143
      %11074 = vmatpush.bf16.msra.mxu0 %v10142
      %11075 = vmatmul.bf16.gmra.mxu0 %v8545
      %v11076 = vpop.f32.mrf.mxu0
      %v11077 = vadd.f32 %v11034, %v11076
      %v11078 = vpop.f32.mrf.mxu0
      %v11079 = vadd.f32 %v11036, %v11078
      %11080 = vmatmul.bf16.gmra.mxu0 %v8628
      %v11081 = vpop.f32.mrf.mxu0
      %v11082 = vadd.f32 %v11039, %v11081
      %v11083 = vpop.f32.mrf.mxu0
      %v11084 = vadd.f32 %v11041, %v11083
      %11085 = vmatmul.bf16.gmra.mxu0 %v8713
      %v11086 = vpop.f32.mrf.mxu0
      %v11087 = vadd.f32 %v11044, %v11086
      %v11088 = vpop.f32.mrf.mxu0
      %v11089 = vadd.f32 %v11046, %v11088
      %11090 = vmatmul.bf16.gmra.mxu0 %v8797
      %v11091 = vpop.f32.mrf.mxu0
      %v11092 = vadd.f32 %v11049, %v11091
      %v11093 = vpop.f32.mrf.mxu0
      %v11094 = vadd.f32 %v11051, %v11093
      %11095 = vmatmul.bf16.gmra.mxu0 %v8882
      %v11096 = vpop.f32.mrf.mxu0
      %v11097 = vadd.f32 %v11054, %v11096
      %v11098 = vpop.f32.mrf.mxu0
      %v11099 = vadd.f32 %v11056, %v11098
      %11100 = vmatmul.bf16.gmra.mxu0 %v8966
      %v11101 = vpop.f32.mrf.mxu0
      %v11102 = vadd.f32 %v11059, %v11101
      %v11103 = vpop.f32.mrf.mxu0
      %v11104 = vadd.f32 %v11061, %v11103
      %11105 = vmatmul.bf16.gmra.mxu0 %v9029
      %v11106 = vpop.f32.mrf.mxu0
      %v11107 = vadd.f32 %v11064, %v11106
      %v11108 = vpop.f32.mrf.mxu0
      %11109 = vdwg.mxu0
      %11110 = vmatpush.bf16.msra.mxu0 %v10157
      %11111 = vmatpush.bf16.msra.mxu0 %v10156
      %11112 = vmatpush.bf16.msra.mxu0 %v10155
      %11113 = vmatpush.bf16.msra.mxu0 %v10154
      %11114 = vmatpush.bf16.msra.mxu0 %v10153
      %11115 = vmatpush.bf16.msra.mxu0 %v10152
      %11116 = vmatpush.bf16.msra.mxu0 %v10151
      %11117 = vmatpush.bf16.msra.mxu0 %v10150
      %11118 = vmatmul.bf16.gmra.mxu0 %v8560
      %v11119 = vpop.f32.mrf.mxu0
      %v11120 = vadd.f32 %v11077, %v11119
      %v11121 = vpop.f32.mrf.mxu0
      %v11122 = vadd.f32 %v11079, %v11121
      %11123 = vmatmul.bf16.gmra.mxu0 %v8643
      %v11124 = vpop.f32.mrf.mxu0
      %v11125 = vadd.f32 %v11082, %v11124
      %v11126 = vpop.f32.mrf.mxu0
      %v11127 = vadd.f32 %v11084, %v11126
      %11128 = vmatmul.bf16.gmra.mxu0 %v8729
      %v11129 = vpop.f32.mrf.mxu0
      %v11130 = vadd.f32 %v11087, %v11129
      %v11131 = vpop.f32.mrf.mxu0
      %v11132 = vadd.f32 %v11089, %v11131
      %11133 = vmatmul.bf16.gmra.mxu0 %v8812
      %v11134 = vpop.f32.mrf.mxu0
      %v11135 = vadd.f32 %v11092, %v11134
      %v11136 = vpop.f32.mrf.mxu0
      %v11137 = vadd.f32 %v11094, %v11136
      %11138 = vmatmul.bf16.gmra.mxu0 %v8898
      %v11139 = vpop.f32.mrf.mxu0
      %v11140 = vadd.f32 %v11097, %v11139
      %v11141 = vpop.f32.mrf.mxu0
      %v11142 = vadd.f32 %v11099, %v11141
      %11143 = vmatmul.bf16.gmra.mxu0 %v8981
      %v11144 = vpop.f32.mrf.mxu0
      %v11145 = vadd.f32 %v11102, %v11144
      %v11146 = vpop.f32.mrf.mxu0
      %v11147 = vadd.f32 %v11104, %v11146
      %11148 = vmatmul.bf16.gmra.mxu0 %v9034
      %v11149 = vpop.f32.mrf.mxu0
      %v11150 = vadd.f32 %v11107, %v11149
      %v11151 = vpop.f32.mrf.mxu0
      %11152 = vdwg.mxu0
      %11153 = vmatpush.bf16.msra.mxu0 %v10165
      %11154 = vmatpush.bf16.msra.mxu0 %v10164
      %11155 = vmatpush.bf16.msra.mxu0 %v10163
      %11156 = vmatpush.bf16.msra.mxu0 %v10162
      %11157 = vmatpush.bf16.msra.mxu0 %v10161
      %11158 = vmatpush.bf16.msra.mxu0 %v10160
      %11159 = vmatpush.bf16.msra.mxu0 %v10159
      %11160 = vmatpush.bf16.msra.mxu0 %v10158
      %11161 = vmatmul.bf16.gmra.mxu0 %v8561
      %v11162 = vpop.f32.mrf.mxu0
      %v11163 = vadd.f32 %v11120, %v11162
      %v11164 = vpop.f32.mrf.mxu0
      %v11165 = vadd.f32 %v11122, %v11164
      %11166 = vmatmul.bf16.gmra.mxu0 %v8644
      %v11167 = vpop.f32.mrf.mxu0
      %v11168 = vadd.f32 %v11125, %v11167
      %v11169 = vpop.f32.mrf.mxu0
      %v11170 = vadd.f32 %v11127, %v11169
      %11171 = vmatmul.bf16.gmra.mxu0 %v8730
      %v11172 = vpop.f32.mrf.mxu0
      %v11173 = vadd.f32 %v11130, %v11172
      %v11174 = vpop.f32.mrf.mxu0
      %v11175 = vadd.f32 %v11132, %v11174
      %11176 = vmatmul.bf16.gmra.mxu0 %v8813
      %v11177 = vpop.f32.mrf.mxu0
      %v11178 = vadd.f32 %v11135, %v11177
      %v11179 = vpop.f32.mrf.mxu0
      %v11180 = vadd.f32 %v11137, %v11179
      %11181 = vmatmul.bf16.gmra.mxu0 %v8899
      %v11182 = vpop.f32.mrf.mxu0
      %v11183 = vadd.f32 %v11140, %v11182
      %v11184 = vpop.f32.mrf.mxu0
      %v11185 = vadd.f32 %v11142, %v11184
      %11186 = vmatmul.bf16.gmra.mxu0 %v8982
      %v11187 = vpop.f32.mrf.mxu0
      %v11188 = vadd.f32 %v11145, %v11187
      %v11189 = vpop.f32.mrf.mxu0
      %v11190 = vadd.f32 %v11147, %v11189
      %11191 = vmatmul.bf16.gmra.mxu0 %v9035
      %v11192 = vpop.f32.mrf.mxu0
      %v11193 = vadd.f32 %v11150, %v11192
      %v11194 = vpop.f32.mrf.mxu0
      %11195 = vdwg.mxu0
      %11196 = vmatpush.bf16.msra.mxu0 %v10173
      %11197 = vmatpush.bf16.msra.mxu0 %v10172
      %11198 = vmatpush.bf16.msra.mxu0 %v10171
      %11199 = vmatpush.bf16.msra.mxu0 %v10170
      %11200 = vmatpush.bf16.msra.mxu0 %v10169
      %11201 = vmatpush.bf16.msra.mxu0 %v10168
      %11202 = vmatpush.bf16.msra.mxu0 %v10167
      %11203 = vmatpush.bf16.msra.mxu0 %v10166
      %11204 = vmatmul.bf16.gmra.mxu0 %v8562
      %v11205 = vpop.f32.mrf.mxu0
      %v11206 = vadd.f32 %v11163, %v11205
      %v11207 = vpop.f32.mrf.mxu0
      %v11208 = vadd.f32 %v11165, %v11207
      %11209 = vmatmul.bf16.gmra.mxu0 %v8645
      %v11210 = vpop.f32.mrf.mxu0
      %v11211 = vadd.f32 %v11168, %v11210
      %v11212 = vpop.f32.mrf.mxu0
      %v11213 = vadd.f32 %v11170, %v11212
      %11214 = vmatmul.bf16.gmra.mxu0 %v8731
      %v11215 = vpop.f32.mrf.mxu0
      %v11216 = vadd.f32 %v11173, %v11215
      %v11217 = vpop.f32.mrf.mxu0
      %v11218 = vadd.f32 %v11175, %v11217
      %11219 = vmatmul.bf16.gmra.mxu0 %v8814
      %v11220 = vpop.f32.mrf.mxu0
      %v11221 = vadd.f32 %v11178, %v11220
      %v11222 = vpop.f32.mrf.mxu0
      %v11223 = vadd.f32 %v11180, %v11222
      %11224 = vmatmul.bf16.gmra.mxu0 %v8900
      %v11225 = vpop.f32.mrf.mxu0
      %v11226 = vadd.f32 %v11183, %v11225
      %v11227 = vpop.f32.mrf.mxu0
      %v11228 = vadd.f32 %v11185, %v11227
      %11229 = vmatmul.bf16.gmra.mxu0 %v8983
      %v11230 = vpop.f32.mrf.mxu0
      %v11231 = vadd.f32 %v11188, %v11230
      %v11232 = vpop.f32.mrf.mxu0
      %v11233 = vadd.f32 %v11190, %v11232
      %11234 = vmatmul.bf16.gmra.mxu0 %v9036
      %v11235 = vpop.f32.mrf.mxu0
      %v11236 = vadd.f32 %v11193, %v11235
      %v11237 = vpop.f32.mrf.mxu0
      %11238 = vdwg.mxu0
      %11239 = vmatpush.bf16.msra.mxu0 %v10181
      %11240 = vmatpush.bf16.msra.mxu0 %v10180
      %11241 = vmatpush.bf16.msra.mxu0 %v10179
      %11242 = vmatpush.bf16.msra.mxu0 %v10178
      %11243 = vmatpush.bf16.msra.mxu0 %v10177
      %11244 = vmatpush.bf16.msra.mxu0 %v10176
      %11245 = vmatpush.bf16.msra.mxu0 %v10175
      %11246 = vmatpush.bf16.msra.mxu0 %v10174
      %11247 = vmatmul.bf16.gmra.mxu0 %v8563
      %v11248 = vpop.f32.mrf.mxu0
      %v11249 = vadd.f32 %v11206, %v11248
      %v11250 = vpop.f32.mrf.mxu0
      %v11251 = vadd.f32 %v11208, %v11250
      %11252 = vmatmul.bf16.gmra.mxu0 %v8646
      %v11253 = vpop.f32.mrf.mxu0
      %v11254 = vadd.f32 %v11211, %v11253
      %v11255 = vpop.f32.mrf.mxu0
      %v11256 = vadd.f32 %v11213, %v11255
      %11257 = vmatmul.bf16.gmra.mxu0 %v8732
      %v11258 = vpop.f32.mrf.mxu0
      %v11259 = vadd.f32 %v11216, %v11258
      %v11260 = vpop.f32.mrf.mxu0
      %v11261 = vadd.f32 %v11218, %v11260
      %11262 = vmatmul.bf16.gmra.mxu0 %v8815
      %v11263 = vpop.f32.mrf.mxu0
      %v11264 = vadd.f32 %v11221, %v11263
      %v11265 = vpop.f32.mrf.mxu0
      %v11266 = vadd.f32 %v11223, %v11265
      %11267 = vmatmul.bf16.gmra.mxu0 %v8901
      %v11268 = vpop.f32.mrf.mxu0
      %v11269 = vadd.f32 %v11226, %v11268
      %v11270 = vpop.f32.mrf.mxu0
      %v11271 = vadd.f32 %v11228, %v11270
      %11272 = vmatmul.bf16.gmra.mxu0 %v8984
      %v11273 = vpop.f32.mrf.mxu0
      %v11274 = vadd.f32 %v11231, %v11273
      %v11275 = vpop.f32.mrf.mxu0
      %v11276 = vadd.f32 %v11233, %v11275
      %11277 = vmatmul.bf16.gmra.mxu0 %v9037
      %v11278 = vpop.f32.mrf.mxu0
      %v11279 = vadd.f32 %v11236, %v11278
      %v11280 = vpop.f32.mrf.mxu0
      %11281 = vdwg.mxu0
      %11282 = vmatpush.bf16.msra.mxu0 %v10189
      %11283 = vmatpush.bf16.msra.mxu0 %v10188
      %11284 = vmatpush.bf16.msra.mxu0 %v10187
      %11285 = vmatpush.bf16.msra.mxu0 %v10186
      %11286 = vmatpush.bf16.msra.mxu0 %v10185
      %11287 = vmatpush.bf16.msra.mxu0 %v10184
      %11288 = vmatpush.bf16.msra.mxu0 %v10183
      %11289 = vmatpush.bf16.msra.mxu0 %v10182
      %11290 = vmatmul.bf16.gmra.mxu0 %v8564
      %v11291 = vpop.f32.mrf.mxu0
      %v11292 = vadd.f32 %v11249, %v11291
      %v11293 = vpop.f32.mrf.mxu0
      %v11294 = vadd.f32 %v11251, %v11293
      %11295 = vmatmul.bf16.gmra.mxu0 %v8647
      %v11296 = vpop.f32.mrf.mxu0
      %v11297 = vadd.f32 %v11254, %v11296
      %v11298 = vpop.f32.mrf.mxu0
      %v11299 = vadd.f32 %v11256, %v11298
      %11300 = vmatmul.bf16.gmra.mxu0 %v8733
      %v11301 = vpop.f32.mrf.mxu0
      %v11302 = vadd.f32 %v11259, %v11301
      %v11303 = vpop.f32.mrf.mxu0
      %v11304 = vadd.f32 %v11261, %v11303
      %11305 = vmatmul.bf16.gmra.mxu0 %v8816
      %v11306 = vpop.f32.mrf.mxu0
      %v11307 = vadd.f32 %v11264, %v11306
      %v11308 = vpop.f32.mrf.mxu0
      %v11309 = vadd.f32 %v11266, %v11308
      %11310 = vmatmul.bf16.gmra.mxu0 %v8902
      %v11311 = vpop.f32.mrf.mxu0
      %v11312 = vadd.f32 %v11269, %v11311
      %v11313 = vpop.f32.mrf.mxu0
      %v11314 = vadd.f32 %v11271, %v11313
      %11315 = vmatmul.bf16.gmra.mxu0 %v8985
      %v11316 = vpop.f32.mrf.mxu0
      %v11317 = vadd.f32 %v11274, %v11316
      %v11318 = vpop.f32.mrf.mxu0
      %v11319 = vadd.f32 %v11276, %v11318
      %11320 = vmatmul.bf16.gmra.mxu0 %v9038
      %v11321 = vpop.f32.mrf.mxu0
      %v11322 = vadd.f32 %v11279, %v11321
      %v11323 = vpop.f32.mrf.mxu0
      %11324 = vdwg.mxu0
      %11325 = vmatpush.bf16.msra.mxu0 %v10197
      %11326 = vmatpush.bf16.msra.mxu0 %v10196
      %11327 = vmatpush.bf16.msra.mxu0 %v10195
      %11328 = vmatpush.bf16.msra.mxu0 %v10194
      %11329 = vmatpush.bf16.msra.mxu0 %v10193
      %11330 = vmatpush.bf16.msra.mxu0 %v10192
      %11331 = vmatpush.bf16.msra.mxu0 %v10191
      %11332 = vmatpush.bf16.msra.mxu0 %v10190
      %11333 = vmatmul.bf16.gmra.mxu0 %v8565
      %v11334 = vpop.f32.mrf.mxu0
      %v11335 = vadd.f32 %v11292, %v11334
      %v11336 = vpop.f32.mrf.mxu0
      %v11337 = vadd.f32 %v11294, %v11336
      %11338 = vmatmul.bf16.gmra.mxu0 %v8648
      %v11339 = vpop.f32.mrf.mxu0
      %v11340 = vadd.f32 %v11297, %v11339
      %v11341 = vpop.f32.mrf.mxu0
      %v11342 = vadd.f32 %v11299, %v11341
      %11343 = vmatmul.bf16.gmra.mxu0 %v8734
      %v11344 = vpop.f32.mrf.mxu0
      %v11345 = vadd.f32 %v11302, %v11344
      %v11346 = vpop.f32.mrf.mxu0
      %v11347 = vadd.f32 %v11304, %v11346
      %11348 = vmatmul.bf16.gmra.mxu0 %v8817
      %v11349 = vpop.f32.mrf.mxu0
      %v11350 = vadd.f32 %v11307, %v11349
      %v11351 = vpop.f32.mrf.mxu0
      %v11352 = vadd.f32 %v11309, %v11351
      %11353 = vmatmul.bf16.gmra.mxu0 %v8903
      %v11354 = vpop.f32.mrf.mxu0
      %v11355 = vadd.f32 %v11312, %v11354
      %v11356 = vpop.f32.mrf.mxu0
      %v11357 = vadd.f32 %v11314, %v11356
      %11358 = vmatmul.bf16.gmra.mxu0 %v8986
      %v11359 = vpop.f32.mrf.mxu0
      %v11360 = vadd.f32 %v11317, %v11359
      %v11361 = vpop.f32.mrf.mxu0
      %v11362 = vadd.f32 %v11319, %v11361
      %11363 = vmatmul.bf16.gmra.mxu0 %v9039
      %v11364 = vpop.f32.mrf.mxu0
      %v11365 = vadd.f32 %v11322, %v11364
      %v11366 = vpop.f32.mrf.mxu0
      %11367 = vdwg.mxu0
      %11368 = vmatpush.bf16.msra.mxu0 %v10205
      %11369 = vmatpush.bf16.msra.mxu0 %v10204
      %11370 = vmatpush.bf16.msra.mxu0 %v10203
      %11371 = vmatpush.bf16.msra.mxu0 %v10202
      %11372 = vmatpush.bf16.msra.mxu0 %v10201
      %11373 = vmatpush.bf16.msra.mxu0 %v10200
      %11374 = vmatpush.bf16.msra.mxu0 %v10199
      %11375 = vmatpush.bf16.msra.mxu0 %v10198
      %11376 = vmatmul.bf16.gmra.mxu0 %v8566
      %v11377 = vpop.f32.mrf.mxu0
      %v11378 = vadd.f32 %v11335, %v11377
      %v11379 = vpop.f32.mrf.mxu0
      %v11380 = vadd.f32 %v11337, %v11379
      %11381 = vmatmul.bf16.gmra.mxu0 %v8649
      %v11382 = vpop.f32.mrf.mxu0
      %v11383 = vadd.f32 %v11340, %v11382
      %v11384 = vpop.f32.mrf.mxu0
      %v11385 = vadd.f32 %v11342, %v11384
      %11386 = vmatmul.bf16.gmra.mxu0 %v8735
      %v11387 = vpop.f32.mrf.mxu0
      %v11388 = vadd.f32 %v11345, %v11387
      %v11389 = vpop.f32.mrf.mxu0
      %v11390 = vadd.f32 %v11347, %v11389
      %11391 = vmatmul.bf16.gmra.mxu0 %v8818
      %v11392 = vpop.f32.mrf.mxu0
      %v11393 = vadd.f32 %v11350, %v11392
      %v11394 = vpop.f32.mrf.mxu0
      %v11395 = vadd.f32 %v11352, %v11394
      %11396 = vmatmul.bf16.gmra.mxu0 %v8904
      %v11397 = vpop.f32.mrf.mxu0
      %v11398 = vadd.f32 %v11355, %v11397
      %v11399 = vpop.f32.mrf.mxu0
      %v11400 = vadd.f32 %v11357, %v11399
      %11401 = vmatmul.bf16.gmra.mxu0 %v8987
      %v11402 = vpop.f32.mrf.mxu0
      %v11403 = vadd.f32 %v11360, %v11402
      %v11404 = vpop.f32.mrf.mxu0
      %v11405 = vadd.f32 %v11362, %v11404
      %11406 = vmatmul.bf16.gmra.mxu0 %v9040
      %v11407 = vpop.f32.mrf.mxu0
      %v11408 = vadd.f32 %v11365, %v11407
      %v11409 = vpop.f32.mrf.mxu0
      %11410 = vdwg.mxu0
      %11411 = vmatpush.bf16.msra.mxu0 %v10213
      %11412 = vmatpush.bf16.msra.mxu0 %v10212
      %11413 = vmatpush.bf16.msra.mxu0 %v10211
      %11414 = vmatpush.bf16.msra.mxu0 %v10210
      %11415 = vmatpush.bf16.msra.mxu0 %v10209
      %11416 = vmatpush.bf16.msra.mxu0 %v10208
      %11417 = vmatpush.bf16.msra.mxu0 %v10207
      %11418 = vmatpush.bf16.msra.mxu0 %v10206
      %11419 = vmatmul.bf16.gmra.mxu0 %v8567
      %v11420 = vpop.f32.mrf.mxu0
      %v11421 = vadd.f32 %v11378, %v11420
      %v11422 = vpop.f32.mrf.mxu0
      %v11423 = vadd.f32 %v11380, %v11422
      %11424 = vmatmul.bf16.gmra.mxu0 %v8650
      %v11425 = vpop.f32.mrf.mxu0
      %v11426 = vadd.f32 %v11383, %v11425
      %v11427 = vpop.f32.mrf.mxu0
      %v11428 = vadd.f32 %v11385, %v11427
      %11429 = vmatmul.bf16.gmra.mxu0 %v8736
      %v11430 = vpop.f32.mrf.mxu0
      %v11431 = vadd.f32 %v11388, %v11430
      %v11432 = vpop.f32.mrf.mxu0
      %v11433 = vadd.f32 %v11390, %v11432
      %11434 = vmatmul.bf16.gmra.mxu0 %v8819
      %v11435 = vpop.f32.mrf.mxu0
      %v11436 = vadd.f32 %v11393, %v11435
      %v11437 = vpop.f32.mrf.mxu0
      %v11438 = vadd.f32 %v11395, %v11437
      %11439 = vmatmul.bf16.gmra.mxu0 %v8905
      %v11440 = vpop.f32.mrf.mxu0
      %v11441 = vadd.f32 %v11398, %v11440
      %v11442 = vpop.f32.mrf.mxu0
      %v11443 = vadd.f32 %v11400, %v11442
      %11444 = vmatmul.bf16.gmra.mxu0 %v8988
      %v11445 = vpop.f32.mrf.mxu0
      %v11446 = vadd.f32 %v11403, %v11445
      %v11447 = vpop.f32.mrf.mxu0
      %v11448 = vadd.f32 %v11405, %v11447
      %11449 = vmatmul.bf16.gmra.mxu0 %v9041
      %v11450 = vpop.f32.mrf.mxu0
      %v11451 = vadd.f32 %v11408, %v11450
      %v11452 = vpop.f32.mrf.mxu0
      %11453 = vdwg.mxu0
      %11454 = vmatpush.bf16.msra.mxu0 %v10221
      %11455 = vmatpush.bf16.msra.mxu0 %v10220
      %11456 = vmatpush.bf16.msra.mxu0 %v10219
      %11457 = vmatpush.bf16.msra.mxu0 %v10218
      %11458 = vmatpush.bf16.msra.mxu0 %v10217
      %11459 = vmatpush.bf16.msra.mxu0 %v10216
      %11460 = vmatpush.bf16.msra.mxu0 %v10215
      %11461 = vmatpush.bf16.msra.mxu0 %v10214
      %11462 = vmatmul.bf16.gmra.mxu0 %v8584
      %v11463 = vpop.f32.mrf.mxu0
      %v11464 = vadd.f32 %v11421, %v11463
      %v11465 = vpop.f32.mrf.mxu0
      %v11466 = vadd.f32 %v11423, %v11465
      %11467 = vmatmul.bf16.gmra.mxu0 %v8667
      %v11468 = vpop.f32.mrf.mxu0
      %v11469 = vadd.f32 %v11426, %v11468
      %v11470 = vpop.f32.mrf.mxu0
      %v11471 = vadd.f32 %v11428, %v11470
      %11472 = vmatmul.bf16.gmra.mxu0 %v8753
      %v11473 = vpop.f32.mrf.mxu0
      %v11474 = vadd.f32 %v11431, %v11473
      %v11475 = vpop.f32.mrf.mxu0
      %v11476 = vadd.f32 %v11433, %v11475
      %11477 = vmatmul.bf16.gmra.mxu0 %v8836
      %v11478 = vpop.f32.mrf.mxu0
      %v11479 = vadd.f32 %v11436, %v11478
      %v11480 = vpop.f32.mrf.mxu0
      %v11481 = vadd.f32 %v11438, %v11480
      %11482 = vmatmul.bf16.gmra.mxu0 %v8922
      %v11483 = vpop.f32.mrf.mxu0
      %v11484 = vadd.f32 %v11441, %v11483
      %v11485 = vpop.f32.mrf.mxu0
      %v11486 = vadd.f32 %v11443, %v11485
      %11487 = vmatmul.bf16.gmra.mxu0 %v9005
      %v11488 = vpop.f32.mrf.mxu0
      %v11489 = vadd.f32 %v11446, %v11488
      %v11490 = vpop.f32.mrf.mxu0
      %v11491 = vadd.f32 %v11448, %v11490
      %11492 = vmatmul.bf16.gmra.mxu0 %v9046
      %v11493 = vpop.f32.mrf.mxu0
      %v11494 = vadd.f32 %v11451, %v11493
      %v11495 = vpop.f32.mrf.mxu0
      %11496 = vdwg.mxu0
      %v11497 = vmax.f32 %v11464, 0.0
      %v11498 = vmax.f32 %v11466, 0.0
      %v11499 = vmax.f32 %v11469, 0.0
      %v11500 = vmax.f32 %v11471, 0.0
      %v11501 = vmax.f32 %v11474, 0.0
      %v11502 = vmax.f32 %v11476, 0.0
      %v11503 = vmax.f32 %v11479, 0.0
      %v11504 = vmax.f32 %v11481, 0.0
      %v11505 = vmax.f32 %v11484, 0.0
      %v11506 = vmax.f32 %v11486, 0.0
      %v11507 = vmax.f32 %v11489, 0.0
      %v11508 = vmax.f32 %v11491, 0.0
      %v11509 = vmax.f32 %v11494, 0.0
      %v11523 = vrot.slane %v11497, 2
      %v11524 = vrot.slane %v11497, 4
      %v11525 = vrot.slane %v11497, 6
      %v11526 = vrot.slane %v11498, 2
      %v11527 = vrot.slane %v11498, 4
      %v11528 = vrot.slane %v11498, 6
      %v11529 = vrot.slane %v11499, 2
      %v11530 = vrot.slane %v11499, 4
      %v11531 = vrot.slane %v11499, 6
      %v11532 = vrot.slane %v11500, 2
      %v11533 = vrot.slane %v11500, 4
      %v11534 = vrot.slane %v11500, 6
      %v11535 = vrot.slane %v11501, 2
      %v11536 = vrot.slane %v11501, 4
      %v11537 = vrot.slane %v11501, 6
      %v11538 = vrot.slane %v11502, 2
      %v11539 = vrot.slane %v11502, 4
      %v11540 = vrot.slane %v11502, 6
      %v11541 = vrot.slane %v11503, 2
      %v11542 = vrot.slane %v11503, 4
      %v11543 = vrot.slane %v11503, 6
      %v11544 = vrot.slane %v11504, 2
      %v11545 = vrot.slane %v11504, 4
      %v11546 = vrot.slane %v11504, 6
      %v11547 = vrot.slane %v11505, 2
      %v11548 = vrot.slane %v11505, 4
      %v11549 = vrot.slane %v11505, 6
      %v11550 = vrot.slane %v11506, 2
      %v11551 = vrot.slane %v11506, 4
      %v11552 = vrot.slane %v11506, 6
      %v11553 = vrot.slane %v11507, 2
      %v11554 = vrot.slane %v11507, 4
      %v11555 = vrot.slane %v11507, 6
      %v11556 = vrot.slane %v11508, 2
      %v11557 = vrot.slane %v11508, 4
      %v11558 = vrot.slane %v11508, 6
      %v11559 = vrot.slane %v11509, 2
      %v11597 = vsel %vm1331, %v11497, -inf
      %v11598 = vsel %vm1331, %v11526, -inf
      %v11599 = vmax.f32 %v11597, %v11598
      %v11600 = vsel %vm1331, %v11523, -inf
      %v11601 = vsel %vm1331, %v11527, -inf
      %v11602 = vmax.f32 %v11600, %v11601
      %v11603 = vsel %vm1331, %v11524, -inf
      %v11604 = vsel %vm1331, %v11528, -inf
      %v11605 = vmax.f32 %v11603, %v11604
      %v11606 = vsel %vm1331, %v11525, -inf
      %v11607 = vsel %vm1331, %v11499, -inf
      %v11608 = vmax.f32 %v11606, %v11607
      %v11609 = vsel %vm1331, %v11498, -inf
      %v11610 = vsel %vm1331, %v11529, -inf
      %v11611 = vmax.f32 %v11609, %v11610
      %v11612 = vsel %vm1331, %v11530, -inf
      %v11613 = vsel %vm1331, %v11534, -inf
      %v11614 = vmax.f32 %v11612, %v11613
      %v11615 = vsel %vm1331, %v11531, -inf
      %v11616 = vsel %vm1331, %v11501, -inf
      %v11617 = vmax.f32 %v11615, %v11616
      %v11618 = vsel %vm1331, %v11500, -inf
      %v11619 = vsel %vm1331, %v11535, -inf
      %v11620 = vmax.f32 %v11618, %v11619
      %v11621 = vsel %vm1331, %v11532, -inf
      %v11622 = vsel %vm1331, %v11536, -inf
      %v11623 = vmax.f32 %v11621, %v11622
      %v11624 = vsel %vm1331, %v11533, -inf
      %v11625 = vsel %vm1331, %v11537, -inf
      %v11626 = vmax.f32 %v11624, %v11625
      %v11627 = vsel %vm1331, %v11502, -inf
      %v11628 = vsel %vm1331, %v11541, -inf
      %v11629 = vmax.f32 %v11627, %v11628
      %v11630 = vsel %vm1331, %v11538, -inf
      %v11631 = vsel %vm1331, %v11542, -inf
      %v11632 = vmax.f32 %v11630, %v11631
      %v11633 = vsel %vm1331, %v11539, -inf
      %v11634 = vsel %vm1331, %v11543, -inf
      %v11635 = vmax.f32 %v11633, %v11634
      %v11636 = vsel %vm1331, %v11540, -inf
      %v11637 = vsel %vm1331, %v11504, -inf
      %v11638 = vmax.f32 %v11636, %v11637
      %v11639 = vsel %vm1331, %v11503, -inf
      %v11640 = vsel %vm1331, %v11544, -inf
      %v11641 = vmax.f32 %v11639, %v11640
      %v11642 = vsel %vm1331, %v11545, -inf
      %v11643 = vsel %vm1331, %v11549, -inf
      %v11644 = vmax.f32 %v11642, %v11643
      %v11645 = vsel %vm1331, %v11546, -inf
      %v11646 = vsel %vm1331, %v11506, -inf
      %v11647 = vmax.f32 %v11645, %v11646
      %v11648 = vsel %vm1331, %v11505, -inf
      %v11649 = vsel %vm1331, %v11550, -inf
      %v11650 = vmax.f32 %v11648, %v11649
      %v11651 = vsel %vm1331, %v11547, -inf
      %v11652 = vsel %vm1331, %v11551, -inf
      %v11653 = vmax.f32 %v11651, %v11652
      %v11654 = vsel %vm1331, %v11548, -inf
      %v11655 = vsel %vm1331, %v11552, -inf
      %v11656 = vmax.f32 %v11654, %v11655
      %v11657 = vsel %vm1331, %v11507, -inf
      %v11658 = vsel %vm1331, %v11556, -inf
      %v11659 = vmax.f32 %v11657, %v11658
      %v11660 = vsel %vm1331, %v11553, -inf
      %v11661 = vsel %vm1331, %v11557, -inf
      %v11662 = vmax.f32 %v11660, %v11661
      %v11663 = vsel %vm1331, %v11554, -inf
      %v11664 = vsel %vm1331, %v11558, -inf
      %v11665 = vmax.f32 %v11663, %v11664
      %v11666 = vsel %vm1331, %v11555, -inf
      %v11667 = vsel %vm1331, %v11509, -inf
      %v11668 = vmax.f32 %v11666, %v11667
      %v11669 = vsel %vm1331, %v11508, -inf
      %v11670 = vsel %vm1331, %v11559, -inf
      %v11671 = vmax.f32 %v11669, %v11670
      %v11672 = vsel %vm1331, %v11599, -inf
      %v11673 = vrot.slane %v11672, 4
      %v11674 = vmax.f32 %v11672, %v11673
      %v11675 = vrot.slane %v11674, 2
      %v11676 = vmax.f32 %v11674, %v11675
      %v11677 = vrot.slane %v11676, 1
      %v11678 = vmax.f32 %v11676, %v11677
      %v11679 = vsel %vm1331, %v11602, -inf
      %v11680 = vrot.slane %v11679, 4
      %v11681 = vmax.f32 %v11679, %v11680
      %v11682 = vrot.slane %v11681, 2
      %v11683 = vmax.f32 %v11681, %v11682
      %v11684 = vrot.slane %v11683, 1
      %v11685 = vmax.f32 %v11683, %v11684
      %v11686 = vsel %vm1331, %v11605, -inf
      %v11687 = vrot.slane %v11686, 4
      %v11688 = vmax.f32 %v11686, %v11687
      %v11689 = vrot.slane %v11688, 2
      %v11690 = vmax.f32 %v11688, %v11689
      %v11691 = vrot.slane %v11690, 1
      %v11692 = vmax.f32 %v11690, %v11691
      %v11693 = vsel %vm1331, %v11608, -inf
      %v11694 = vrot.slane %v11693, 4
      %v11695 = vmax.f32 %v11693, %v11694
      %v11696 = vrot.slane %v11695, 2
      %v11697 = vmax.f32 %v11695, %v11696
      %v11698 = vrot.slane %v11697, 1
      %v11699 = vmax.f32 %v11697, %v11698
      %v11700 = vsel %vm1331, %v11611, -inf
      %v11701 = vrot.slane %v11700, 4
      %v11702 = vmax.f32 %v11700, %v11701
      %v11703 = vrot.slane %v11702, 2
      %v11704 = vmax.f32 %v11702, %v11703
      %v11705 = vrot.slane %v11704, 1
      %v11706 = vmax.f32 %v11704, %v11705
      %v11707 = vsel %vm1331, %v11614, -inf
      %v11708 = vrot.slane %v11707, 4
      %v11709 = vmax.f32 %v11707, %v11708
      %v11710 = vrot.slane %v11709, 2
      %v11711 = vmax.f32 %v11709, %v11710
      %v11712 = vrot.slane %v11711, 1
      %v11713 = vmax.f32 %v11711, %v11712
      %v11714 = vsel %vm1331, %v11617, -inf
      %v11715 = vrot.slane %v11714, 4
      %v11716 = vmax.f32 %v11714, %v11715
      %v11717 = vrot.slane %v11716, 2
      %v11718 = vmax.f32 %v11716, %v11717
      %v11719 = vrot.slane %v11718, 1
      %v11720 = vmax.f32 %v11718, %v11719
      %v11721 = vsel %vm1331, %v11620, -inf
      %v11722 = vrot.slane %v11721, 4
      %v11723 = vmax.f32 %v11721, %v11722
      %v11724 = vrot.slane %v11723, 2
      %v11725 = vmax.f32 %v11723, %v11724
      %v11726 = vrot.slane %v11725, 1
      %v11727 = vmax.f32 %v11725, %v11726
      %v11728 = vsel %vm1331, %v11623, -inf
      %v11729 = vrot.slane %v11728, 4
      %v11730 = vmax.f32 %v11728, %v11729
      %v11731 = vrot.slane %v11730, 2
      %v11732 = vmax.f32 %v11730, %v11731
      %v11733 = vrot.slane %v11732, 1
      %v11734 = vmax.f32 %v11732, %v11733
      %v11735 = vsel %vm1331, %v11626, -inf
      %v11736 = vrot.slane %v11735, 4
      %v11737 = vmax.f32 %v11735, %v11736
      %v11738 = vrot.slane %v11737, 2
      %v11739 = vmax.f32 %v11737, %v11738
      %v11740 = vrot.slane %v11739, 1
      %v11741 = vmax.f32 %v11739, %v11740
      %v11742 = vsel %vm1331, %v11629, -inf
      %v11743 = vrot.slane %v11742, 4
      %v11744 = vmax.f32 %v11742, %v11743
      %v11745 = vrot.slane %v11744, 2
      %v11746 = vmax.f32 %v11744, %v11745
      %v11747 = vrot.slane %v11746, 1
      %v11748 = vmax.f32 %v11746, %v11747
      %v11749 = vsel %vm1331, %v11632, -inf
      %v11750 = vrot.slane %v11749, 4
      %v11751 = vmax.f32 %v11749, %v11750
      %v11752 = vrot.slane %v11751, 2
      %v11753 = vmax.f32 %v11751, %v11752
      %v11754 = vrot.slane %v11753, 1
      %v11755 = vmax.f32 %v11753, %v11754
      %v11756 = vsel %vm1331, %v11635, -inf
      %v11757 = vrot.slane %v11756, 4
      %v11758 = vmax.f32 %v11756, %v11757
      %v11759 = vrot.slane %v11758, 2
      %v11760 = vmax.f32 %v11758, %v11759
      %v11761 = vrot.slane %v11760, 1
      %v11762 = vmax.f32 %v11760, %v11761
      %v11763 = vsel %vm1331, %v11638, -inf
      %v11764 = vrot.slane %v11763, 4
      %v11765 = vmax.f32 %v11763, %v11764
      %v11766 = vrot.slane %v11765, 2
      %v11767 = vmax.f32 %v11765, %v11766
      %v11768 = vrot.slane %v11767, 1
      %v11769 = vmax.f32 %v11767, %v11768
      %v11770 = vsel %vm1331, %v11641, -inf
      %v11771 = vrot.slane %v11770, 4
      %v11772 = vmax.f32 %v11770, %v11771
      %v11773 = vrot.slane %v11772, 2
      %v11774 = vmax.f32 %v11772, %v11773
      %v11775 = vrot.slane %v11774, 1
      %v11776 = vmax.f32 %v11774, %v11775
      %v11777 = vsel %vm1331, %v11644, -inf
      %v11778 = vrot.slane %v11777, 4
      %v11779 = vmax.f32 %v11777, %v11778
      %v11780 = vrot.slane %v11779, 2
      %v11781 = vmax.f32 %v11779, %v11780
      %v11782 = vrot.slane %v11781, 1
      %v11783 = vmax.f32 %v11781, %v11782
      %v11784 = vsel %vm1331, %v11647, -inf
      %v11785 = vrot.slane %v11784, 4
      %v11786 = vmax.f32 %v11784, %v11785
      %v11787 = vrot.slane %v11786, 2
      %v11788 = vmax.f32 %v11786, %v11787
      %v11789 = vrot.slane %v11788, 1
      %v11790 = vmax.f32 %v11788, %v11789
      %v11791 = vsel %vm1331, %v11650, -inf
      %v11792 = vrot.slane %v11791, 4
      %v11793 = vmax.f32 %v11791, %v11792
      %v11794 = vrot.slane %v11793, 2
      %v11795 = vmax.f32 %v11793, %v11794
      %v11796 = vrot.slane %v11795, 1
      %v11797 = vmax.f32 %v11795, %v11796
      %v11798 = vsel %vm1331, %v11653, -inf
      %v11799 = vrot.slane %v11798, 4
      %v11800 = vmax.f32 %v11798, %v11799
      %v11801 = vrot.slane %v11800, 2
      %v11802 = vmax.f32 %v11800, %v11801
      %v11803 = vrot.slane %v11802, 1
      %v11804 = vmax.f32 %v11802, %v11803
      %v11805 = vsel %vm1331, %v11656, -inf
      %v11806 = vrot.slane %v11805, 4
      %v11807 = vmax.f32 %v11805, %v11806
      %v11808 = vrot.slane %v11807, 2
      %v11809 = vmax.f32 %v11807, %v11808
      %v11810 = vrot.slane %v11809, 1
      %v11811 = vmax.f32 %v11809, %v11810
      %v11812 = vsel %vm1331, %v11659, -inf
      %v11813 = vrot.slane %v11812, 4
      %v11814 = vmax.f32 %v11812, %v11813
      %v11815 = vrot.slane %v11814, 2
      %v11816 = vmax.f32 %v11814, %v11815
      %v11817 = vrot.slane %v11816, 1
      %v11818 = vmax.f32 %v11816, %v11817
      %v11819 = vsel %vm1331, %v11662, -inf
      %v11820 = vrot.slane %v11819, 4
      %v11821 = vmax.f32 %v11819, %v11820
      %v11822 = vrot.slane %v11821, 2
      %v11823 = vmax.f32 %v11821, %v11822
      %v11824 = vrot.slane %v11823, 1
      %v11825 = vmax.f32 %v11823, %v11824
      %v11826 = vsel %vm1331, %v11665, -inf
      %v11827 = vrot.slane %v11826, 4
      %v11828 = vmax.f32 %v11826, %v11827
      %v11829 = vrot.slane %v11828, 2
      %v11830 = vmax.f32 %v11828, %v11829
      %v11831 = vrot.slane %v11830, 1
      %v11832 = vmax.f32 %v11830, %v11831
      %v11833 = vsel %vm1331, %v11668, -inf
      %v11834 = vrot.slane %v11833, 4
      %v11835 = vmax.f32 %v11833, %v11834
      %v11836 = vrot.slane %v11835, 2
      %v11837 = vmax.f32 %v11835, %v11836
      %v11838 = vrot.slane %v11837, 1
      %v11839 = vmax.f32 %v11837, %v11838
      %v11840 = vsel %vm1331, %v11671, -inf
      %v11841 = vrot.slane %v11840, 4
      %v11842 = vmax.f32 %v11840, %v11841
      %v11843 = vrot.slane %v11842, 2
      %v11844 = vmax.f32 %v11842, %v11843
      %v11845 = vrot.slane %v11844, 1
      %v11846 = vmax.f32 %v11844, %v11845
      %v11872 = vsel %vm2891, %v11685, %v11678
      %v11873 = vsel %vm2895, %v11692, %v11872
      %v11874 = vsel %vm2899, %v11699, %v11873
      %v11875 = vsel %vm6524, %v11706, %v11874
      %v11876 = vsel %vm6569, %v11713, %v11875
      %v11877 = vsel %vm6528, %v11720, %v11876
      %vm11878 = vcmask 1047559
      %v11879 = vsel %vm11878, %v11727, %v11877
      %v11880 = vsel %vm2891, %v11741, %v11734
      %v11881 = vsel %vm2895, %v11748, %v11880
      %v11882 = vsel %vm2899, %v11755, %v11881
      %v11883 = vsel %vm6524, %v11762, %v11882
      %v11884 = vsel %vm6569, %v11769, %v11883
      %v11885 = vsel %vm6528, %v11776, %v11884
      %v11886 = vsel %vm11878, %v11783, %v11885
      %v11887 = vsel %vm2891, %v11797, %v11790
      %v11888 = vsel %vm2895, %v11804, %v11887
      %v11889 = vsel %vm2899, %v11811, %v11888
      %v11890 = vsel %vm6524, %v11818, %v11889
      %v11891 = vsel %vm6569, %v11825, %v11890
      %v11892 = vsel %vm6528, %v11832, %v11891
      %v11893 = vsel %vm11878, %v11839, %v11892
      %11898 = vst [vmem:[%s224] sm:$0xff] %v11879
      %11899 = vst [vmem:[%s224 + $0x8] sm:$0xff] %v11886
      %11900 = vst [vmem:[%s224 + $0x10] sm:$0xff] %v11893
      %11901 = vst [vmem:[%s224 + $0x18] sm:$0x1] %v11846
      %p11902 = scmp.lt.s32.totalorder %s16, 1
      %s11903 = scalar_select %p11902, %s16, 1
      %s11904 = smul.addr %s11903, 4
      %s11905 = smul.addr %s11904, 8
      %s11906 = scalar_lea.vmem %s5, %s11905
      // Predicated region
      $region41: #{net_forward.1} parent=39 // pred_check
        %p11907 = pneg %p144
      $region42: #{net_forward.1} parent=39 // pred_check_branch
        %11909 = sbr.rel (%p11907) target = $region44
      $region43: #{net_forward.1} parent=39 // pred_region
        _
      $region44: #{net_forward.1} parent=39 // pred_fallthru
        _
    $region40: #{net_forward.1} parent=5 // pred_fallthru
      _
    %p11910 = scmp.le.s32.totalorder 2, %s11
    // Predicated region
    $region45: #{net_forward.1} parent=5 // pred_check
      %p11911 = pneg %p11910
    $region46: #{net_forward.1} parent=5 // pred_check_branch
      %11913 = sbr.rel (%p11911) target = $region48
    $region47: #{net_forward.1} parent=5 // pred_region
      %s11914 = ssub.s32 %s11, 2
      // Predicated region
      $region49: #{net_forward.1} parent=47 // pred_check
        %p11915 = pneg %p150
      $region50: #{net_forward.1} parent=47 // pred_check_branch
        %11917 = sbr.rel (%p11915) target = $region52
      $region51: #{net_forward.1} parent=47 // pred_region
        %p11918 = scmp.lt.s32.totalorder %s17, 1
        %s11919 = scalar_select %p11918, %s17, 1
        %s11920 = smul.addr %s11919, 4
        %s11921 = smul.addr %s11920, 8
        %s11922 = scalar_lea.vmem %s5, %s11921
      $region52: #{net_forward.1} parent=47 // pred_fallthru
        _
    $region48: #{net_forward.1} parent=5 // pred_fallthru
      _
  $region6: #{net_forward.1} parent=0 // loop_footer
    %s15 = sadd.s32 1, %s11
  $region7: #{net_forward.1} parent=0 // loop_footer_branch
    %10 = sbr.rel target = $region3
  $region8: #{net_forward.1} parent=0 // loop_exit
    _

</llo_original>
